<compile_context>
chip_gen: v6e
topology: v6e:2x2x1
jax: 0.10.0
libtpu: 0.0.40
codegen_flags: <defaults>
</compile_context>

<pallas_src>
import functools

import jax
import jax.numpy as jnp
from jax import lax
from jax.experimental import pallas as pl
from jax.experimental.pallas import tpu as pltpu

_UNROLL_THRESHOLD = 16  # <= this: static Python unroll; above: lax.fori_loop


# ---------------------------------------------------------------------------
# Pallas kernel
# ---------------------------------------------------------------------------
def gru_attention_decoder_kernel(
    enc_states_ref,                     # (B, S, E_att)
    enc_hidden_ref,                     # (B, E_dec)
    prev_frames_ref,                    # (B, T_prev, F)
    w_e2d_ref, b_e2d_ref,               # (E_dec, H), (1, H)
    w_bn1_ref, b_bn1_ref,               # (F, BN),   (1, BN)
    w_ir_ref, w_iz_ref, w_in_ref,       # (BN, H) x3  (bn2 folded into w_ih per gate)
    b_ir_ref, b_iz_ref, b_in_ref,       # (1, H)  x3  (fused biases)
    w_hr_ref, w_hz_ref, w_hn_ref,       # (H, H)  x3
    b_hr_ref, b_hz_ref, b_hn_ref,       # (1, H)  x3
    w_att_ref, b_att_ref,               # (E_att, H), (1, H)
    w_outh_ref, w_outa_ref, b_out_ref,  # (H, F), (H, F), (1, F)
    out_ref,                            # (B, seq_len, F)   batch-major
    *, hidden_dim, seq_len, hist_len,
):
    H = hidden_dim
    B = enc_hidden_ref.shape[0]
    F = prev_frames_ref.shape[2]
    BN = w_bn1_ref.shape[1]
    f32 = jnp.float32

    def dot(a, b):
        return jnp.dot(a, b, preferred_element_type=f32)

    # ---- hoist weights and loop-invariant bias broadcasts (JAX does not CSE
    #      broadcast_in_dim, so re-emitting per step wastes VALU slots) ----
    w_bn1 = w_bn1_ref[...]
    w_ir, w_iz, w_in_ = w_ir_ref[...], w_iz_ref[...], w_in_ref[...]
    w_hr, w_hz, w_hn = w_hr_ref[...], w_hz_ref[...], w_hn_ref[...]
    w_outh, w_outa = w_outh_ref[...], w_outa_ref[...]

    b_bn1_b = jnp.broadcast_to(b_bn1_ref[...], (B, BN))
    b_ir_b = jnp.broadcast_to(b_ir_ref[...], (B, H))
    b_iz_b = jnp.broadcast_to(b_iz_ref[...], (B, H))
    b_in_b = jnp.broadcast_to(b_in_ref[...], (B, H))
    b_hr_b = jnp.broadcast_to(b_hr_ref[...], (B, H))
    b_hz_b = jnp.broadcast_to(b_hz_ref[...], (B, H))
    b_hn_b = jnp.broadcast_to(b_hn_ref[...], (B, H))
    b_out_b = jnp.broadcast_to(b_out_ref[...], (B, F))

    # ---- initial decoder hidden: enc_to_dec(flattened encoder hidden) ----
    h = dot(enc_hidden_ref[...], w_e2d_ref[...]) + b_e2d_ref[...]        # (B, H)

    # ---- project encoder states once (attention.enc_to_dec) ----
    es = enc_states_ref[...]                                             # (B, S, E)
    _, S, E = es.shape
    es_proj = (dot(es.reshape(B * S, E), w_att_ref[...])
               + b_att_ref[...]).reshape(B, S, H)                        # (B, S, H)

    def gru_step(gi_r, gi_z, gi_n, h):
        # per-gate h-projections: each output lane-aligned, no sub-vreg slicing
        gh_r = dot(h, w_hr) + b_hr_b
        gh_z = dot(h, w_hz) + b_hz_b
        gh_n = dot(h, w_hn) + b_hn_b
        r = jax.nn.sigmoid(gi_r + gh_r)
        z = jax.nn.sigmoid(gi_z + gh_z)
        n = jnp.tanh(gi_n + r * gh_n)
        return (1.0 - z) * n + z * h

    prev = prev_frames_ref[...]                                          # (B, T_prev, F)

    # ---- warm-up over prev_frames[:, :-1, :]: batch all input-side matmuls
    #      into one MXU pass; only the h-recurrence remains serial ----
    if hist_len > 0:
        hist = prev[:, :hist_len, :].reshape(B * hist_len, F)
        x1 = jnp.maximum(dot(hist, w_bn1) + b_bn1_ref[...], 0.0)         # (B*T, BN)
        gi_r_all = (dot(x1, w_ir) + b_ir_ref[...]).reshape(B, hist_len, H)
        gi_z_all = (dot(x1, w_iz) + b_iz_ref[...]).reshape(B, hist_len, H)
        gi_n_all = (dot(x1, w_in_) + b_in_ref[...]).reshape(B, hist_len, H)
        # TODO(synk): for very long histories move this to fori_loop + VMEM scratch.
        for t in range(hist_len):
            h = gru_step(gi_r_all[:, t, :], gi_z_all[:, t, :],
                         gi_n_all[:, t, :], h)

    # ---- autoregressive decode loop ----
    def decode_step(t, h, in_frame):
        # fused bottleneck + input projection: relu(frame@W1 + b1) @ (W2 @ W_ih_gate)
        x1 = jnp.maximum(dot(in_frame, w_bn1) + b_bn1_b, 0.0)            # (B, BN)
        gi_r = dot(x1, w_ir) + b_ir_b
        gi_z = dot(x1, w_iz) + b_iz_b
        gi_n = dot(x1, w_in_) + b_in_b
        h = gru_step(gi_r, gi_z, gi_n, h)

        # dot-product attention over projected encoder states, deferred softmax norm
        s = jnp.sum(es_proj * h[:, None, :], axis=-1)                    # (B, S)
        s = s - jnp.max(s, axis=1, keepdims=True)
        e = jnp.exp(s)
        attn_un = jnp.sum(es_proj * e[:, :, None], axis=1)               # (B, H)
        inv = pl.reciprocal(jnp.sum(e, axis=1, keepdims=True), approx=True)
        attn = attn_un * inv                                             # (B, H)

        # split output linear: avoids the lane-concat of (h, attn)
        out_frame = dot(h, w_outh) + dot(attn, w_outa) + b_out_b         # (B, F)
        out_ref[:, pl.ds(t, 1), :] = out_frame[:, None, :]
        return h, out_frame

    in_frame = prev[:, hist_len, :]                                      # last prev frame (B, F)
    if seq_len <= _UNROLL_THRESHOLD:
        for t in range(seq_len):
            h, in_frame = decode_step(t, h, in_frame)
    else:
        def body(t, carry):
            return decode_step(t, *carry)
        h, in_frame = lax.fori_loop(0, seq_len, body, (h, in_frame))


# ---------------------------------------------------------------------------
# Param prep: algebraic fusions done once, outside the kernel
# ---------------------------------------------------------------------------
def _prepare_params(params, hidden_dim):
    H = hidden_dim
    w_ih, w_hh = params["w_ih"], params["w_hh"]          # (H, 3H)
    b_ih, b_hh = params["b_ih"], params["b_hh"]          # (1, 3H)
    w_bn2, b_bn2 = params["w_bn2"], params["b_bn2"]      # (BN, H), (1, H)

    def g(x, k):                                          # gate slice k in {r,z,n}
        return x[:, k * H:(k + 1) * H]

    # fold bottleneck Linear#2 into the per-gate input projection (exact: linear o linear)
    w_i = tuple(w_bn2 @ g(w_ih, k) for k in range(3))                  # (BN, H) x3
    b_i = tuple(b_bn2 @ g(w_ih, k) + g(b_ih, k) for k in range(3))     # (1, H)  x3
    w_h = tuple(g(w_hh, k) for k in range(3))                          # (H, H)  x3
    b_h = tuple(g(b_hh, k) for k in range(3))                          # (1, H)  x3
    w_out_h = params["w_out"][:H, :]                                   # (H, F)
    w_out_a = params["w_out"][H:, :]                                   # (H, F)

    return (params["w_e2d"], params["b_e2d"],
            params["w_bn1"], params["b_bn1"],
            *w_i, *b_i, *w_h, *b_h,
            params["w_att"], params["b_att"],
            w_out_h, w_out_a, params["b_out"])


# ---------------------------------------------------------------------------
# Wrapper
# ---------------------------------------------------------------------------
def gru_attention_decoder(encoder_states, encoder_hidden, prev_frames, params,
                          *, hidden_dim, seq_len):
    B, _, _ = encoder_states.shape
    T_prev, F = prev_frames.shape[1], prev_frames.shape[2]
    hist_len = T_prev - 1

    # glue: (layers*dirs, B, eh) -> (B, layers*dirs*eh)  (matches the
    # unsqueeze/transpose/reshape in the PyTorch forward)
    enc_hidden_flat = jnp.transpose(encoder_hidden, (1, 0, 2)).reshape(B, -1)

    args = (encoder_states, enc_hidden_flat, prev_frames) + _prepare_params(params, hidden_dim)

    # Everything fits whole-array in VMEM at this config.
    # TODO(synk): at production B / S_enc / seq_len add a batch grid
    #   (BlockSpec batch tile multiple of 8, dimension_semantics=("parallel",)) and
    #   an explicit vmem_limit_bytes so it fits v7x's 64 MiB VMEM and shards across
    #   both TensorCores; also pack >=8 sequences per call to fill vreg sublanes.
    out = pl.pallas_call(
        functools.partial(gru_attention_decoder_kernel,
                          hidden_dim=hidden_dim, seq_len=seq_len,
                          hist_len=hist_len),
        out_shape=jax.ShapeDtypeStruct((B, seq_len, F), jnp.float32),
        in_specs=[pl.BlockSpec(memory_space=pltpu.MemorySpace.VMEM)] * len(args),
        out_specs=pl.BlockSpec(memory_space=pltpu.MemorySpace.VMEM),
    )(*args)
    return out  # already (B, seq_len, F); no wrapper transpose


# ---------------------------------------------------------------------------
# Pure-JAX reference (original, unfused math) for correctness check
# ---------------------------------------------------------------------------
def reference(encoder_states, encoder_hidden, prev_frames, params,
              *, hidden_dim, seq_len):
    H = hidden_dim
    B, _, _ = encoder_states.shape
    hist_len = prev_frames.shape[1] - 1

    def gru(x, h):
        gi = x @ params["w_ih"] + params["b_ih"]
        gh = h @ params["w_hh"] + params["b_hh"]
        r = jax.nn.sigmoid(gi[:, :H] + gh[:, :H])
        z = jax.nn.sigmoid(gi[:, H:2 * H] + gh[:, H:2 * H])
        n = jnp.tanh(gi[:, 2 * H:] + r * gh[:, 2 * H:])
        return (1 - z) * n + z * h

    def bn(x):
        y = jnp.maximum(x @ params["w_bn1"] + params["b_bn1"], 0.0)
        return y @ params["w_bn2"] + params["b_bn2"]

    enc_hidden_flat = jnp.transpose(encoder_hidden, (1, 0, 2)).reshape(B, -1)
    h = enc_hidden_flat @ params["w_e2d"] + params["b_e2d"]
    es_proj = encoder_states @ params["w_att"] + params["b_att"]  # (B, S, H)

    for t in range(hist_len):
        h = gru(bn(prev_frames[:, t, :]), h)

    in_frame = prev_frames[:, -1, :]
    outs = []
    for _ in range(seq_len):
        h = gru(bn(in_frame), h)
        w = jnp.einsum("bsh,bh->bs", es_proj, h)
        scores = jax.nn.softmax(w, axis=1)
        attn = jnp.einsum("bsh,bs->bh", es_proj, scores)
        out_frame = jnp.concatenate([h, attn], -1) @ params["w_out"] + params["b_out"]
        outs.append(out_frame)
        in_frame = out_frame
    return jnp.stack(outs, axis=1)


# ---------------------------------------------------------------------------
# Main
# ---------------------------------------------------------------------------
if __name__ == "__main__":
    # small config consistent with the module
    B = 2
    enc_hidden = 8
    encoder_directions = 2
    encoder_layers = 2
    hidden_dim = 32
    out_features = 12
    bottle_neck = 16
    seq_len = 6          # decoder output length
    S_enc = 8            # encoder sequence length
    T_prev = 5           # previous frames fed to the decoder

    E_att = encoder_directions * enc_hidden                    # 16
    E_dec = enc_hidden * encoder_directions * encoder_layers   # 32

    key = jax.random.PRNGKey(0)
    ks = jax.random.split(key, 20)

    def w(k, shape):
        return (0.1 * jax.random.normal(k, shape)).astype(jnp.float32)

    params = {
        # all weights pre-transposed to (in_dim, out_dim); biases as (1, out)
        "w_e2d": w(ks[0], (E_dec, hidden_dim)),
        "b_e2d": w(ks[1], (1, hidden_dim)),
        "w_bn1": w(ks[2], (out_features, bottle_neck)),
        "b_bn1": w(ks[3], (1, bottle_neck)),
        "w_bn2": w(ks[4], (bottle_neck, hidden_dim)),
        "b_bn2": w(ks[5], (1, hidden_dim)),
        "w_ih": w(ks[6], (hidden_dim, 3 * hidden_dim)),
        "w_hh": w(ks[7], (hidden_dim, 3 * hidden_dim)),
        "b_ih": w(ks[8], (1, 3 * hidden_dim)),
        "b_hh": w(ks[9], (1, 3 * hidden_dim)),
        "w_att": w(ks[10], (E_att, hidden_dim)),
        "b_att": w(ks[11], (1, hidden_dim)),
        "w_out": w(ks[12], (2 * hidden_dim, out_features)),
        "b_out": w(ks[13], (1, out_features)),
    }

    encoder_states = jax.random.normal(ks[14], (B, S_enc, E_att), jnp.float32)
    encoder_hidden = jax.random.normal(
        ks[15], (encoder_layers * encoder_directions, B, enc_hidden), jnp.float32)
    prev_frames = jax.random.normal(ks[16], (B, T_prev, out_features), jnp.float32)

    out = gru_attention_decoder(encoder_states, encoder_hidden, prev_frames,
                                params, hidden_dim=hidden_dim, seq_len=seq_len)
    out = jax.block_until_ready(out)

    ref = reference(encoder_states, encoder_hidden, prev_frames, params,
                    hidden_dim=hidden_dim, seq_len=seq_len)

    assert out.shape == (B, seq_len, out_features), out.shape
    assert jnp.allclose(out, ref, atol=5e-3, rtol=5e-3), (
        float(jnp.max(jnp.abs(out - ref))))

    print("KERNEL_OK")
</pallas_src>

<mosaic_0001>
module attributes {stable_mosaic.version = 11 : i64} {
  func.func @gru_attention_decoder_kernel(%arg0: memref<2x8x16xf32, #tpu.memory_space<vmem>>, %arg1: memref<2x32xf32, #tpu.memory_space<vmem>>, %arg2: memref<2x5x12xf32, #tpu.memory_space<vmem>>, %arg3: memref<32x32xf32, #tpu.memory_space<vmem>>, %arg4: memref<1x32xf32, #tpu.memory_space<vmem>>, %arg5: memref<12x16xf32, #tpu.memory_space<vmem>>, %arg6: memref<1x16xf32, #tpu.memory_space<vmem>>, %arg7: memref<16x32xf32, #tpu.memory_space<vmem>>, %arg8: memref<16x32xf32, #tpu.memory_space<vmem>>, %arg9: memref<16x32xf32, #tpu.memory_space<vmem>>, %arg10: memref<1x32xf32, #tpu.memory_space<vmem>>, %arg11: memref<1x32xf32, #tpu.memory_space<vmem>>, %arg12: memref<1x32xf32, #tpu.memory_space<vmem>>, %arg13: memref<32x32xf32, #tpu.memory_space<vmem>>, %arg14: memref<32x32xf32, #tpu.memory_space<vmem>>, %arg15: memref<32x32xf32, #tpu.memory_space<vmem>>, %arg16: memref<1x32xf32, #tpu.memory_space<vmem>>, %arg17: memref<1x32xf32, #tpu.memory_space<vmem>>, %arg18: memref<1x32xf32, #tpu.memory_space<vmem>>, %arg19: memref<16x32xf32, #tpu.memory_space<vmem>>, %arg20: memref<1x32xf32, #tpu.memory_space<vmem>>, %arg21: memref<32x12xf32, #tpu.memory_space<vmem>>, %arg22: memref<32x12xf32, #tpu.memory_space<vmem>>, %arg23: memref<1x12xf32, #tpu.memory_space<vmem>>, %arg24: memref<2x6x12xf32, #tpu.memory_space<vmem>>) attributes {dimension_semantics = [], scalar_prefetch = 0 : i64, scratch_operands = 0 : i64, tpu.core_type = #tpu.core_type<tc>} {
    %c0 = arith.constant 0 : index
    %c0_0 = arith.constant 0 : index
    %0 = vector.load %arg5[%c0, %c0_0] : memref<12x16xf32, #tpu.memory_space<vmem>>, vector<12x16xf32>
    %c0_1 = arith.constant 0 : index
    %c0_2 = arith.constant 0 : index
    %1 = vector.load %arg7[%c0_1, %c0_2] : memref<16x32xf32, #tpu.memory_space<vmem>>, vector<16x32xf32>
    %c0_3 = arith.constant 0 : index
    %c0_4 = arith.constant 0 : index
    %2 = vector.load %arg8[%c0_3, %c0_4] : memref<16x32xf32, #tpu.memory_space<vmem>>, vector<16x32xf32>
    %c0_5 = arith.constant 0 : index
    %c0_6 = arith.constant 0 : index
    %3 = vector.load %arg9[%c0_5, %c0_6] : memref<16x32xf32, #tpu.memory_space<vmem>>, vector<16x32xf32>
    %c0_7 = arith.constant 0 : index
    %c0_8 = arith.constant 0 : index
    %4 = vector.load %arg13[%c0_7, %c0_8] : memref<32x32xf32, #tpu.memory_space<vmem>>, vector<32x32xf32>
    %c0_9 = arith.constant 0 : index
    %c0_10 = arith.constant 0 : index
    %5 = vector.load %arg14[%c0_9, %c0_10] : memref<32x32xf32, #tpu.memory_space<vmem>>, vector<32x32xf32>
    %c0_11 = arith.constant 0 : index
    %c0_12 = arith.constant 0 : index
    %6 = vector.load %arg15[%c0_11, %c0_12] : memref<32x32xf32, #tpu.memory_space<vmem>>, vector<32x32xf32>
    %c0_13 = arith.constant 0 : index
    %c0_14 = arith.constant 0 : index
    %7 = vector.load %arg21[%c0_13, %c0_14] : memref<32x12xf32, #tpu.memory_space<vmem>>, vector<32x12xf32>
    %c0_15 = arith.constant 0 : index
    %c0_16 = arith.constant 0 : index
    %8 = vector.load %arg22[%c0_15, %c0_16] : memref<32x12xf32, #tpu.memory_space<vmem>>, vector<32x12xf32>
    %c0_17 = arith.constant 0 : index
    %c0_18 = arith.constant 0 : index
    %9 = vector.load %arg6[%c0_17, %c0_18] : memref<1x16xf32, #tpu.memory_space<vmem>>, vector<1x16xf32>
    %10 = vector.shape_cast %9 : vector<1x16xf32> to vector<1x16xf32>
    %11 = vector.broadcast %10 : vector<1x16xf32> to vector<2x16xf32>
    %c0_19 = arith.constant 0 : index
    %c0_20 = arith.constant 0 : index
    %12 = vector.load %arg10[%c0_19, %c0_20] : memref<1x32xf32, #tpu.memory_space<vmem>>, vector<1x32xf32>
    %13 = vector.shape_cast %12 : vector<1x32xf32> to vector<1x32xf32>
    %14 = vector.broadcast %13 : vector<1x32xf32> to vector<2x32xf32>
    %c0_21 = arith.constant 0 : index
    %c0_22 = arith.constant 0 : index
    %15 = vector.load %arg11[%c0_21, %c0_22] : memref<1x32xf32, #tpu.memory_space<vmem>>, vector<1x32xf32>
    %16 = vector.shape_cast %15 : vector<1x32xf32> to vector<1x32xf32>
    %17 = vector.broadcast %16 : vector<1x32xf32> to vector<2x32xf32>
    %c0_23 = arith.constant 0 : index
    %c0_24 = arith.constant 0 : index
    %18 = vector.load %arg12[%c0_23, %c0_24] : memref<1x32xf32, #tpu.memory_space<vmem>>, vector<1x32xf32>
    %19 = vector.shape_cast %18 : vector<1x32xf32> to vector<1x32xf32>
    %20 = vector.broadcast %19 : vector<1x32xf32> to vector<2x32xf32>
    %c0_25 = arith.constant 0 : index
    %c0_26 = arith.constant 0 : index
    %21 = vector.load %arg16[%c0_25, %c0_26] : memref<1x32xf32, #tpu.memory_space<vmem>>, vector<1x32xf32>
    %22 = vector.shape_cast %21 : vector<1x32xf32> to vector<1x32xf32>
    %23 = vector.broadcast %22 : vector<1x32xf32> to vector<2x32xf32>
    %c0_27 = arith.constant 0 : index
    %c0_28 = arith.constant 0 : index
    %24 = vector.load %arg17[%c0_27, %c0_28] : memref<1x32xf32, #tpu.memory_space<vmem>>, vector<1x32xf32>
    %25 = vector.shape_cast %24 : vector<1x32xf32> to vector<1x32xf32>
    %26 = vector.broadcast %25 : vector<1x32xf32> to vector<2x32xf32>
    %c0_29 = arith.constant 0 : index
    %c0_30 = arith.constant 0 : index
    %27 = vector.load %arg18[%c0_29, %c0_30] : memref<1x32xf32, #tpu.memory_space<vmem>>, vector<1x32xf32>
    %28 = vector.shape_cast %27 : vector<1x32xf32> to vector<1x32xf32>
    %29 = vector.broadcast %28 : vector<1x32xf32> to vector<2x32xf32>
    %c0_31 = arith.constant 0 : index
    %c0_32 = arith.constant 0 : index
    %30 = vector.load %arg23[%c0_31, %c0_32] : memref<1x12xf32, #tpu.memory_space<vmem>>, vector<1x12xf32>
    %31 = vector.shape_cast %30 : vector<1x12xf32> to vector<1x12xf32>
    %32 = vector.broadcast %31 : vector<1x12xf32> to vector<2x12xf32>
    %c0_33 = arith.constant 0 : index
    %c0_34 = arith.constant 0 : index
    %33 = vector.load %arg1[%c0_33, %c0_34] : memref<2x32xf32, #tpu.memory_space<vmem>>, vector<2x32xf32>
    %c0_35 = arith.constant 0 : index
    %c0_36 = arith.constant 0 : index
    %34 = vector.load %arg3[%c0_35, %c0_36] : memref<32x32xf32, #tpu.memory_space<vmem>>, vector<32x32xf32>
    %cst = arith.constant dense<0.000000e+00> : vector<2x32xf32>
    %35 = tpu.matmul %33, %34, %cst {dimension_numbers = #tpu.dot_dimension_numbers<[1], [0], [0], [1], [0, 0, 1, 1], [], []>} : vector<2x32xf32>, vector<32x32xf32>, vector<2x32xf32> -> vector<2x32xf32>
    %c0_37 = arith.constant 0 : index
    %c0_38 = arith.constant 0 : index
    %36 = vector.load %arg4[%c0_37, %c0_38] : memref<1x32xf32, #tpu.memory_space<vmem>>, vector<1x32xf32>
    %37 = vector.broadcast %36 : vector<1x32xf32> to vector<2x32xf32>
    %38 = arith.addf %35, %37 : vector<2x32xf32>
    %c0_39 = arith.constant 0 : index
    %c0_40 = arith.constant 0 : index
    %c0_41 = arith.constant 0 : index
    %39 = vector.load %arg0[%c0_39, %c0_40, %c0_41] : memref<2x8x16xf32, #tpu.memory_space<vmem>>, vector<2x8x16xf32>
    %40 = vector.shape_cast %39 : vector<2x8x16xf32> to vector<16x16xf32>
    %c0_42 = arith.constant 0 : index
    %c0_43 = arith.constant 0 : index
    %41 = vector.load %arg19[%c0_42, %c0_43] : memref<16x32xf32, #tpu.memory_space<vmem>>, vector<16x32xf32>
    %cst_44 = arith.constant dense<0.000000e+00> : vector<16x32xf32>
    %42 = tpu.matmul %40, %41, %cst_44 {dimension_numbers = #tpu.dot_dimension_numbers<[1], [0], [0], [1], [0, 0, 1, 1], [], []>} : vector<16x16xf32>, vector<16x32xf32>, vector<16x32xf32> -> vector<16x32xf32>
    %c0_45 = arith.constant 0 : index
    %c0_46 = arith.constant 0 : index
    %43 = vector.load %arg20[%c0_45, %c0_46] : memref<1x32xf32, #tpu.memory_space<vmem>>, vector<1x32xf32>
    %44 = vector.broadcast %43 : vector<1x32xf32> to vector<16x32xf32>
    %45 = arith.addf %42, %44 : vector<16x32xf32>
    %46 = vector.shape_cast %45 : vector<16x32xf32> to vector<2x8x32xf32>
    %c0_47 = arith.constant 0 : index
    %c0_48 = arith.constant 0 : index
    %c0_49 = arith.constant 0 : index
    %47 = vector.load %arg2[%c0_47, %c0_48, %c0_49] : memref<2x5x12xf32, #tpu.memory_space<vmem>>, vector<2x5x12xf32>
    %48 = vector.extract_strided_slice %47 {offsets = [0, 0, 0], sizes = [2, 4, 12], strides = [1, 1, 1]} : vector<2x5x12xf32> to vector<2x4x12xf32>
    %49 = vector.shape_cast %48 : vector<2x4x12xf32> to vector<8x12xf32>
    %cst_50 = arith.constant dense<0.000000e+00> : vector<8x16xf32>
    %50 = tpu.matmul %49, %0, %cst_50 {dimension_numbers = #tpu.dot_dimension_numbers<[1], [0], [0], [1], [0, 0, 1, 1], [], []>} : vector<8x12xf32>, vector<12x16xf32>, vector<8x16xf32> -> vector<8x16xf32>
    %c0_51 = arith.constant 0 : index
    %c0_52 = arith.constant 0 : index
    %51 = vector.load %arg6[%c0_51, %c0_52] : memref<1x16xf32, #tpu.memory_space<vmem>>, vector<1x16xf32>
    %52 = vector.broadcast %51 : vector<1x16xf32> to vector<8x16xf32>
    %53 = arith.addf %50, %52 : vector<8x16xf32>
    %cst_53 = arith.constant 0.000000e+00 : f32
    %54 = vector.broadcast %cst_53 : f32 to vector<8x16xf32>
    %55 = arith.maximumf %53, %54 : vector<8x16xf32>
    %cst_54 = arith.constant dense<0.000000e+00> : vector<8x32xf32>
    %56 = tpu.matmul %55, %1, %cst_54 {dimension_numbers = #tpu.dot_dimension_numbers<[1], [0], [0], [1], [0, 0, 1, 1], [], []>} : vector<8x16xf32>, vector<16x32xf32>, vector<8x32xf32> -> vector<8x32xf32>
    %c0_55 = arith.constant 0 : index
    %c0_56 = arith.constant 0 : index
    %57 = vector.load %arg10[%c0_55, %c0_56] : memref<1x32xf32, #tpu.memory_space<vmem>>, vector<1x32xf32>
    %58 = vector.broadcast %57 : vector<1x32xf32> to vector<8x32xf32>
    %59 = arith.addf %56, %58 : vector<8x32xf32>
    %60 = vector.shape_cast %59 : vector<8x32xf32> to vector<2x4x32xf32>
    %cst_57 = arith.constant dense<0.000000e+00> : vector<8x32xf32>
    %61 = tpu.matmul %55, %2, %cst_57 {dimension_numbers = #tpu.dot_dimension_numbers<[1], [0], [0], [1], [0, 0, 1, 1], [], []>} : vector<8x16xf32>, vector<16x32xf32>, vector<8x32xf32> -> vector<8x32xf32>
    %c0_58 = arith.constant 0 : index
    %c0_59 = arith.constant 0 : index
    %62 = vector.load %arg11[%c0_58, %c0_59] : memref<1x32xf32, #tpu.memory_space<vmem>>, vector<1x32xf32>
    %63 = vector.broadcast %62 : vector<1x32xf32> to vector<8x32xf32>
    %64 = arith.addf %61, %63 : vector<8x32xf32>
    %65 = vector.shape_cast %64 : vector<8x32xf32> to vector<2x4x32xf32>
    %cst_60 = arith.constant dense<0.000000e+00> : vector<8x32xf32>
    %66 = tpu.matmul %55, %3, %cst_60 {dimension_numbers = #tpu.dot_dimension_numbers<[1], [0], [0], [1], [0, 0, 1, 1], [], []>} : vector<8x16xf32>, vector<16x32xf32>, vector<8x32xf32> -> vector<8x32xf32>
    %c0_61 = arith.constant 0 : index
    %c0_62 = arith.constant 0 : index
    %67 = vector.load %arg12[%c0_61, %c0_62] : memref<1x32xf32, #tpu.memory_space<vmem>>, vector<1x32xf32>
    %68 = vector.broadcast %67 : vector<1x32xf32> to vector<8x32xf32>
    %69 = arith.addf %66, %68 : vector<8x32xf32>
    %70 = vector.shape_cast %69 : vector<8x32xf32> to vector<2x4x32xf32>
    %71 = vector.extract_strided_slice %60 {offsets = [0, 0, 0], sizes = [2, 1, 32], strides = [1, 1, 1]} : vector<2x4x32xf32> to vector<2x1x32xf32>
    %72 = vector.shape_cast %71 : vector<2x1x32xf32> to vector<2x32xf32>
    %73 = vector.extract_strided_slice %65 {offsets = [0, 0, 0], sizes = [2, 1, 32], strides = [1, 1, 1]} : vector<2x4x32xf32> to vector<2x1x32xf32>
    %74 = vector.shape_cast %73 : vector<2x1x32xf32> to vector<2x32xf32>
    %75 = vector.extract_strided_slice %70 {offsets = [0, 0, 0], sizes = [2, 1, 32], strides = [1, 1, 1]} : vector<2x4x32xf32> to vector<2x1x32xf32>
    %76 = vector.shape_cast %75 : vector<2x1x32xf32> to vector<2x32xf32>
    %cst_63 = arith.constant dense<0.000000e+00> : vector<2x32xf32>
    %77 = tpu.matmul %38, %4, %cst_63 {dimension_numbers = #tpu.dot_dimension_numbers<[1], [0], [0], [1], [0, 0, 1, 1], [], []>} : vector<2x32xf32>, vector<32x32xf32>, vector<2x32xf32> -> vector<2x32xf32>
    %78 = arith.addf %77, %23 : vector<2x32xf32>
    %cst_64 = arith.constant dense<0.000000e+00> : vector<2x32xf32>
    %79 = tpu.matmul %38, %5, %cst_64 {dimension_numbers = #tpu.dot_dimension_numbers<[1], [0], [0], [1], [0, 0, 1, 1], [], []>} : vector<2x32xf32>, vector<32x32xf32>, vector<2x32xf32> -> vector<2x32xf32>
    %80 = arith.addf %79, %26 : vector<2x32xf32>
    %cst_65 = arith.constant dense<0.000000e+00> : vector<2x32xf32>
    %81 = tpu.matmul %38, %6, %cst_65 {dimension_numbers = #tpu.dot_dimension_numbers<[1], [0], [0], [1], [0, 0, 1, 1], [], []>} : vector<2x32xf32>, vector<32x32xf32>, vector<2x32xf32> -> vector<2x32xf32>
    %82 = arith.addf %81, %29 : vector<2x32xf32>
    %83 = arith.addf %72, %78 : vector<2x32xf32>
    %84 = arith.negf %83 : vector<2x32xf32>
    %85 = math.exp %84 : vector<2x32xf32>
    %cst_66 = arith.constant 1.000000e+00 : f32
    %86 = vector.broadcast %cst_66 : f32 to vector<2x32xf32>
    %87 = arith.addf %86, %85 : vector<2x32xf32>
    %88 = arith.divf %86, %87 : vector<2x32xf32>
    %89 = arith.addf %74, %80 : vector<2x32xf32>
    %90 = arith.negf %89 : vector<2x32xf32>
    %91 = math.exp %90 : vector<2x32xf32>
    %cst_67 = arith.constant 1.000000e+00 : f32
    %92 = vector.broadcast %cst_67 : f32 to vector<2x32xf32>
    %93 = arith.addf %92, %91 : vector<2x32xf32>
    %94 = arith.divf %92, %93 : vector<2x32xf32>
    %95 = arith.mulf %88, %82 : vector<2x32xf32>
    %96 = arith.addf %76, %95 : vector<2x32xf32>
    %97 = math.tanh %96 : vector<2x32xf32>
    %cst_68 = arith.constant 1.000000e+00 : f32
    %98 = vector.broadcast %cst_68 : f32 to vector<2x32xf32>
    %99 = arith.subf %98, %94 : vector<2x32xf32>
    %100 = arith.mulf %99, %97 : vector<2x32xf32>
    %101 = arith.mulf %94, %38 : vector<2x32xf32>
    %102 = arith.addf %100, %101 : vector<2x32xf32>
    %103 = vector.extract_strided_slice %60 {offsets = [0, 1, 0], sizes = [2, 1, 32], strides = [1, 1, 1]} : vector<2x4x32xf32> to vector<2x1x32xf32>
    %104 = vector.shape_cast %103 : vector<2x1x32xf32> to vector<2x32xf32>
    %105 = vector.extract_strided_slice %65 {offsets = [0, 1, 0], sizes = [2, 1, 32], strides = [1, 1, 1]} : vector<2x4x32xf32> to vector<2x1x32xf32>
    %106 = vector.shape_cast %105 : vector<2x1x32xf32> to vector<2x32xf32>
    %107 = vector.extract_strided_slice %70 {offsets = [0, 1, 0], sizes = [2, 1, 32], strides = [1, 1, 1]} : vector<2x4x32xf32> to vector<2x1x32xf32>
    %108 = vector.shape_cast %107 : vector<2x1x32xf32> to vector<2x32xf32>
    %cst_69 = arith.constant dense<0.000000e+00> : vector<2x32xf32>
    %109 = tpu.matmul %102, %4, %cst_69 {dimension_numbers = #tpu.dot_dimension_numbers<[1], [0], [0], [1], [0, 0, 1, 1], [], []>} : vector<2x32xf32>, vector<32x32xf32>, vector<2x32xf32> -> vector<2x32xf32>
    %110 = arith.addf %109, %23 : vector<2x32xf32>
    %cst_70 = arith.constant dense<0.000000e+00> : vector<2x32xf32>
    %111 = tpu.matmul %102, %5, %cst_70 {dimension_numbers = #tpu.dot_dimension_numbers<[1], [0], [0], [1], [0, 0, 1, 1], [], []>} : vector<2x32xf32>, vector<32x32xf32>, vector<2x32xf32> -> vector<2x32xf32>
    %112 = arith.addf %111, %26 : vector<2x32xf32>
    %cst_71 = arith.constant dense<0.000000e+00> : vector<2x32xf32>
    %113 = tpu.matmul %102, %6, %cst_71 {dimension_numbers = #tpu.dot_dimension_numbers<[1], [0], [0], [1], [0, 0, 1, 1], [], []>} : vector<2x32xf32>, vector<32x32xf32>, vector<2x32xf32> -> vector<2x32xf32>
    %114 = arith.addf %113, %29 : vector<2x32xf32>
    %115 = arith.addf %104, %110 : vector<2x32xf32>
    %116 = arith.negf %115 : vector<2x32xf32>
    %117 = math.exp %116 : vector<2x32xf32>
    %cst_72 = arith.constant 1.000000e+00 : f32
    %118 = vector.broadcast %cst_72 : f32 to vector<2x32xf32>
    %119 = arith.addf %118, %117 : vector<2x32xf32>
    %120 = arith.divf %118, %119 : vector<2x32xf32>
    %121 = arith.addf %106, %112 : vector<2x32xf32>
    %122 = arith.negf %121 : vector<2x32xf32>
    %123 = math.exp %122 : vector<2x32xf32>
    %cst_73 = arith.constant 1.000000e+00 : f32
    %124 = vector.broadcast %cst_73 : f32 to vector<2x32xf32>
    %125 = arith.addf %124, %123 : vector<2x32xf32>
    %126 = arith.divf %124, %125 : vector<2x32xf32>
    %127 = arith.mulf %120, %114 : vector<2x32xf32>
    %128 = arith.addf %108, %127 : vector<2x32xf32>
    %129 = math.tanh %128 : vector<2x32xf32>
    %cst_74 = arith.constant 1.000000e+00 : f32
    %130 = vector.broadcast %cst_74 : f32 to vector<2x32xf32>
    %131 = arith.subf %130, %126 : vector<2x32xf32>
    %132 = arith.mulf %131, %129 : vector<2x32xf32>
    %133 = arith.mulf %126, %102 : vector<2x32xf32>
    %134 = arith.addf %132, %133 : vector<2x32xf32>
    %135 = vector.extract_strided_slice %60 {offsets = [0, 2, 0], sizes = [2, 1, 32], strides = [1, 1, 1]} : vector<2x4x32xf32> to vector<2x1x32xf32>
    %136 = vector.shape_cast %135 : vector<2x1x32xf32> to vector<2x32xf32>
    %137 = vector.extract_strided_slice %65 {offsets = [0, 2, 0], sizes = [2, 1, 32], strides = [1, 1, 1]} : vector<2x4x32xf32> to vector<2x1x32xf32>
    %138 = vector.shape_cast %137 : vector<2x1x32xf32> to vector<2x32xf32>
    %139 = vector.extract_strided_slice %70 {offsets = [0, 2, 0], sizes = [2, 1, 32], strides = [1, 1, 1]} : vector<2x4x32xf32> to vector<2x1x32xf32>
    %140 = vector.shape_cast %139 : vector<2x1x32xf32> to vector<2x32xf32>
    %cst_75 = arith.constant dense<0.000000e+00> : vector<2x32xf32>
    %141 = tpu.matmul %134, %4, %cst_75 {dimension_numbers = #tpu.dot_dimension_numbers<[1], [0], [0], [1], [0, 0, 1, 1], [], []>} : vector<2x32xf32>, vector<32x32xf32>, vector<2x32xf32> -> vector<2x32xf32>
    %142 = arith.addf %141, %23 : vector<2x32xf32>
    %cst_76 = arith.constant dense<0.000000e+00> : vector<2x32xf32>
    %143 = tpu.matmul %134, %5, %cst_76 {dimension_numbers = #tpu.dot_dimension_numbers<[1], [0], [0], [1], [0, 0, 1, 1], [], []>} : vector<2x32xf32>, vector<32x32xf32>, vector<2x32xf32> -> vector<2x32xf32>
    %144 = arith.addf %143, %26 : vector<2x32xf32>
    %cst_77 = arith.constant dense<0.000000e+00> : vector<2x32xf32>
    %145 = tpu.matmul %134, %6, %cst_77 {dimension_numbers = #tpu.dot_dimension_numbers<[1], [0], [0], [1], [0, 0, 1, 1], [], []>} : vector<2x32xf32>, vector<32x32xf32>, vector<2x32xf32> -> vector<2x32xf32>
    %146 = arith.addf %145, %29 : vector<2x32xf32>
    %147 = arith.addf %136, %142 : vector<2x32xf32>
    %148 = arith.negf %147 : vector<2x32xf32>
    %149 = math.exp %148 : vector<2x32xf32>
    %cst_78 = arith.constant 1.000000e+00 : f32
    %150 = vector.broadcast %cst_78 : f32 to vector<2x32xf32>
    %151 = arith.addf %150, %149 : vector<2x32xf32>
    %152 = arith.divf %150, %151 : vector<2x32xf32>
    %153 = arith.addf %138, %144 : vector<2x32xf32>
    %154 = arith.negf %153 : vector<2x32xf32>
    %155 = math.exp %154 : vector<2x32xf32>
    %cst_79 = arith.constant 1.000000e+00 : f32
    %156 = vector.broadcast %cst_79 : f32 to vector<2x32xf32>
    %157 = arith.addf %156, %155 : vector<2x32xf32>
    %158 = arith.divf %156, %157 : vector<2x32xf32>
    %159 = arith.mulf %152, %146 : vector<2x32xf32>
    %160 = arith.addf %140, %159 : vector<2x32xf32>
    %161 = math.tanh %160 : vector<2x32xf32>
    %cst_80 = arith.constant 1.000000e+00 : f32
    %162 = vector.broadcast %cst_80 : f32 to vector<2x32xf32>
    %163 = arith.subf %162, %158 : vector<2x32xf32>
    %164 = arith.mulf %163, %161 : vector<2x32xf32>
    %165 = arith.mulf %158, %134 : vector<2x32xf32>
    %166 = arith.addf %164, %165 : vector<2x32xf32>
    %167 = vector.extract_strided_slice %60 {offsets = [0, 3, 0], sizes = [2, 1, 32], strides = [1, 1, 1]} : vector<2x4x32xf32> to vector<2x1x32xf32>
    %168 = vector.shape_cast %167 : vector<2x1x32xf32> to vector<2x32xf32>
    %169 = vector.extract_strided_slice %65 {offsets = [0, 3, 0], sizes = [2, 1, 32], strides = [1, 1, 1]} : vector<2x4x32xf32> to vector<2x1x32xf32>
    %170 = vector.shape_cast %169 : vector<2x1x32xf32> to vector<2x32xf32>
    %171 = vector.extract_strided_slice %70 {offsets = [0, 3, 0], sizes = [2, 1, 32], strides = [1, 1, 1]} : vector<2x4x32xf32> to vector<2x1x32xf32>
    %172 = vector.shape_cast %171 : vector<2x1x32xf32> to vector<2x32xf32>
    %cst_81 = arith.constant dense<0.000000e+00> : vector<2x32xf32>
    %173 = tpu.matmul %166, %4, %cst_81 {dimension_numbers = #tpu.dot_dimension_numbers<[1], [0], [0], [1], [0, 0, 1, 1], [], []>} : vector<2x32xf32>, vector<32x32xf32>, vector<2x32xf32> -> vector<2x32xf32>
    %174 = arith.addf %173, %23 : vector<2x32xf32>
    %cst_82 = arith.constant dense<0.000000e+00> : vector<2x32xf32>
    %175 = tpu.matmul %166, %5, %cst_82 {dimension_numbers = #tpu.dot_dimension_numbers<[1], [0], [0], [1], [0, 0, 1, 1], [], []>} : vector<2x32xf32>, vector<32x32xf32>, vector<2x32xf32> -> vector<2x32xf32>
    %176 = arith.addf %175, %26 : vector<2x32xf32>
    %cst_83 = arith.constant dense<0.000000e+00> : vector<2x32xf32>
    %177 = tpu.matmul %166, %6, %cst_83 {dimension_numbers = #tpu.dot_dimension_numbers<[1], [0], [0], [1], [0, 0, 1, 1], [], []>} : vector<2x32xf32>, vector<32x32xf32>, vector<2x32xf32> -> vector<2x32xf32>
    %178 = arith.addf %177, %29 : vector<2x32xf32>
    %179 = arith.addf %168, %174 : vector<2x32xf32>
    %180 = arith.negf %179 : vector<2x32xf32>
    %181 = math.exp %180 : vector<2x32xf32>
    %cst_84 = arith.constant 1.000000e+00 : f32
    %182 = vector.broadcast %cst_84 : f32 to vector<2x32xf32>
    %183 = arith.addf %182, %181 : vector<2x32xf32>
    %184 = arith.divf %182, %183 : vector<2x32xf32>
    %185 = arith.addf %170, %176 : vector<2x32xf32>
    %186 = arith.negf %185 : vector<2x32xf32>
    %187 = math.exp %186 : vector<2x32xf32>
    %cst_85 = arith.constant 1.000000e+00 : f32
    %188 = vector.broadcast %cst_85 : f32 to vector<2x32xf32>
    %189 = arith.addf %188, %187 : vector<2x32xf32>
    %190 = arith.divf %188, %189 : vector<2x32xf32>
    %191 = arith.mulf %184, %178 : vector<2x32xf32>
    %192 = arith.addf %172, %191 : vector<2x32xf32>
    %193 = math.tanh %192 : vector<2x32xf32>
    %cst_86 = arith.constant 1.000000e+00 : f32
    %194 = vector.broadcast %cst_86 : f32 to vector<2x32xf32>
    %195 = arith.subf %194, %190 : vector<2x32xf32>
    %196 = arith.mulf %195, %193 : vector<2x32xf32>
    %197 = arith.mulf %190, %166 : vector<2x32xf32>
    %198 = arith.addf %196, %197 : vector<2x32xf32>
    %199 = vector.extract_strided_slice %47 {offsets = [0, 4, 0], sizes = [2, 1, 12], strides = [1, 1, 1]} : vector<2x5x12xf32> to vector<2x1x12xf32>
    %200 = vector.shape_cast %199 : vector<2x1x12xf32> to vector<2x12xf32>
    %cst_87 = arith.constant dense<0.000000e+00> : vector<2x16xf32>
    %201 = tpu.matmul %200, %0, %cst_87 {dimension_numbers = #tpu.dot_dimension_numbers<[1], [0], [0], [1], [0, 0, 1, 1], [], []>} : vector<2x12xf32>, vector<12x16xf32>, vector<2x16xf32> -> vector<2x16xf32>
    %202 = arith.addf %201, %11 : vector<2x16xf32>
    %cst_88 = arith.constant 0.000000e+00 : f32
    %203 = vector.broadcast %cst_88 : f32 to vector<2x16xf32>
    %204 = arith.maximumf %202, %203 : vector<2x16xf32>
    %cst_89 = arith.constant dense<0.000000e+00> : vector<2x32xf32>
    %205 = tpu.matmul %204, %1, %cst_89 {dimension_numbers = #tpu.dot_dimension_numbers<[1], [0], [0], [1], [0, 0, 1, 1], [], []>} : vector<2x16xf32>, vector<16x32xf32>, vector<2x32xf32> -> vector<2x32xf32>
    %206 = arith.addf %205, %14 : vector<2x32xf32>
    %cst_90 = arith.constant dense<0.000000e+00> : vector<2x32xf32>
    %207 = tpu.matmul %204, %2, %cst_90 {dimension_numbers = #tpu.dot_dimension_numbers<[1], [0], [0], [1], [0, 0, 1, 1], [], []>} : vector<2x16xf32>, vector<16x32xf32>, vector<2x32xf32> -> vector<2x32xf32>
    %208 = arith.addf %207, %17 : vector<2x32xf32>
    %cst_91 = arith.constant dense<0.000000e+00> : vector<2x32xf32>
    %209 = tpu.matmul %204, %3, %cst_91 {dimension_numbers = #tpu.dot_dimension_numbers<[1], [0], [0], [1], [0, 0, 1, 1], [], []>} : vector<2x16xf32>, vector<16x32xf32>, vector<2x32xf32> -> vector<2x32xf32>
    %210 = arith.addf %209, %20 : vector<2x32xf32>
    %cst_92 = arith.constant dense<0.000000e+00> : vector<2x32xf32>
    %211 = tpu.matmul %198, %4, %cst_92 {dimension_numbers = #tpu.dot_dimension_numbers<[1], [0], [0], [1], [0, 0, 1, 1], [], []>} : vector<2x32xf32>, vector<32x32xf32>, vector<2x32xf32> -> vector<2x32xf32>
    %212 = arith.addf %211, %23 : vector<2x32xf32>
    %cst_93 = arith.constant dense<0.000000e+00> : vector<2x32xf32>
    %213 = tpu.matmul %198, %5, %cst_93 {dimension_numbers = #tpu.dot_dimension_numbers<[1], [0], [0], [1], [0, 0, 1, 1], [], []>} : vector<2x32xf32>, vector<32x32xf32>, vector<2x32xf32> -> vector<2x32xf32>
    %214 = arith.addf %213, %26 : vector<2x32xf32>
    %cst_94 = arith.constant dense<0.000000e+00> : vector<2x32xf32>
    %215 = tpu.matmul %198, %6, %cst_94 {dimension_numbers = #tpu.dot_dimension_numbers<[1], [0], [0], [1], [0, 0, 1, 1], [], []>} : vector<2x32xf32>, vector<32x32xf32>, vector<2x32xf32> -> vector<2x32xf32>
    %216 = arith.addf %215, %29 : vector<2x32xf32>
    %217 = arith.addf %206, %212 : vector<2x32xf32>
    %218 = arith.negf %217 : vector<2x32xf32>
    %219 = math.exp %218 : vector<2x32xf32>
    %cst_95 = arith.constant 1.000000e+00 : f32
    %220 = vector.broadcast %cst_95 : f32 to vector<2x32xf32>
    %221 = arith.addf %220, %219 : vector<2x32xf32>
    %222 = arith.divf %220, %221 : vector<2x32xf32>
    %223 = arith.addf %208, %214 : vector<2x32xf32>
    %224 = arith.negf %223 : vector<2x32xf32>
    %225 = math.exp %224 : vector<2x32xf32>
    %cst_96 = arith.constant 1.000000e+00 : f32
    %226 = vector.broadcast %cst_96 : f32 to vector<2x32xf32>
    %227 = arith.addf %226, %225 : vector<2x32xf32>
    %228 = arith.divf %226, %227 : vector<2x32xf32>
    %229 = arith.mulf %222, %216 : vector<2x32xf32>
    %230 = arith.addf %210, %229 : vector<2x32xf32>
    %231 = math.tanh %230 : vector<2x32xf32>
    %cst_97 = arith.constant 1.000000e+00 : f32
    %232 = vector.broadcast %cst_97 : f32 to vector<2x32xf32>
    %233 = arith.subf %232, %228 : vector<2x32xf32>
    %234 = arith.mulf %233, %231 : vector<2x32xf32>
    %235 = arith.mulf %228, %198 : vector<2x32xf32>
    %236 = arith.addf %234, %235 : vector<2x32xf32>
    %237 = vector.shape_cast %236 : vector<2x32xf32> to vector<2x1x32xf32>
    %238 = vector.broadcast %237 : vector<2x1x32xf32> to vector<2x8x32xf32>
    %239 = arith.mulf %46, %238 : vector<2x8x32xf32>
    %cst_98 = arith.constant dense<0.000000e+00> : vector<2x8xf32>
    %240 = vector.multi_reduction <add>, %239, %cst_98 [2] : vector<2x8x32xf32> to vector<2x8xf32>
    %cst_99 = arith.constant dense<0xFF800000> : vector<2xf32>
    %241 = vector.multi_reduction <maximumf>, %240, %cst_99 [1] : vector<2x8xf32> to vector<2xf32>
    %242 = vector.shape_cast %241 : vector<2xf32> to vector<2x1xf32>
    %243 = vector.broadcast %242 : vector<2x1xf32> to vector<2x8xf32>
    %244 = arith.subf %240, %243 : vector<2x8xf32>
    %245 = math.exp %244 : vector<2x8xf32>
    %246 = vector.shape_cast %245 : vector<2x8xf32> to vector<2x8x1xf32>
    %247 = vector.broadcast %246 : vector<2x8x1xf32> to vector<2x8x32xf32>
    %248 = arith.mulf %46, %247 : vector<2x8x32xf32>
    %cst_100 = arith.constant dense<0.000000e+00> : vector<2x32xf32>
    %249 = vector.multi_reduction <add>, %248, %cst_100 [1] : vector<2x8x32xf32> to vector<2x32xf32>
    %cst_101 = arith.constant dense<0.000000e+00> : vector<2xf32>
    %250 = vector.multi_reduction <add>, %245, %cst_101 [1] : vector<2x8xf32> to vector<2xf32>
    %251 = vector.shape_cast %250 : vector<2xf32> to vector<2x1xf32>
    %252 = tpu.reciprocal %251 {approx = true} : vector<2x1xf32> -> vector<2x1xf32>
    %253 = vector.broadcast %252 : vector<2x1xf32> to vector<2x32xf32>
    %254 = arith.mulf %249, %253 : vector<2x32xf32>
    %cst_102 = arith.constant dense<0.000000e+00> : vector<2x12xf32>
    %255 = tpu.matmul %236, %7, %cst_102 {dimension_numbers = #tpu.dot_dimension_numbers<[1], [0], [0], [1], [0, 0, 1, 1], [], []>} : vector<2x32xf32>, vector<32x12xf32>, vector<2x12xf32> -> vector<2x12xf32>
    %cst_103 = arith.constant dense<0.000000e+00> : vector<2x12xf32>
    %256 = tpu.matmul %254, %8, %cst_103 {dimension_numbers = #tpu.dot_dimension_numbers<[1], [0], [0], [1], [0, 0, 1, 1], [], []>} : vector<2x32xf32>, vector<32x12xf32>, vector<2x12xf32> -> vector<2x12xf32>
    %257 = arith.addf %255, %256 : vector<2x12xf32>
    %258 = arith.addf %257, %32 : vector<2x12xf32>
    %259 = vector.shape_cast %258 : vector<2x12xf32> to vector<2x1x12xf32>
    %c0_104 = arith.constant 0 : index
    %c0_105 = arith.constant 0 : index
    %c0_106 = arith.constant 0 : index
    %260 = vector.load %arg24[%c0_104, %c0_105, %c0_106] : memref<2x6x12xf32, #tpu.memory_space<vmem>>, vector<2x1x12xf32>
    tpu.vector_store %arg24[%c0_104, %c0_105, %c0_106], %259 {strides = array<i32>} : memref<2x6x12xf32, #tpu.memory_space<vmem>>, vector<2x1x12xf32>,
    %cst_107 = arith.constant dense<0.000000e+00> : vector<2x16xf32>
    %261 = tpu.matmul %258, %0, %cst_107 {dimension_numbers = #tpu.dot_dimension_numbers<[1], [0], [0], [1], [0, 0, 1, 1], [], []>} : vector<2x12xf32>, vector<12x16xf32>, vector<2x16xf32> -> vector<2x16xf32>
    %262 = arith.addf %261, %11 : vector<2x16xf32>
    %cst_108 = arith.constant 0.000000e+00 : f32
    %263 = vector.broadcast %cst_108 : f32 to vector<2x16xf32>
    %264 = arith.maximumf %262, %263 : vector<2x16xf32>
    %cst_109 = arith.constant dense<0.000000e+00> : vector<2x32xf32>
    %265 = tpu.matmul %264, %1, %cst_109 {dimension_numbers = #tpu.dot_dimension_numbers<[1], [0], [0], [1], [0, 0, 1, 1], [], []>} : vector<2x16xf32>, vector<16x32xf32>, vector<2x32xf32> -> vector<2x32xf32>
    %266 = arith.addf %265, %14 : vector<2x32xf32>
    %cst_110 = arith.constant dense<0.000000e+00> : vector<2x32xf32>
    %267 = tpu.matmul %264, %2, %cst_110 {dimension_numbers = #tpu.dot_dimension_numbers<[1], [0], [0], [1], [0, 0, 1, 1], [], []>} : vector<2x16xf32>, vector<16x32xf32>, vector<2x32xf32> -> vector<2x32xf32>
    %268 = arith.addf %267, %17 : vector<2x32xf32>
    %cst_111 = arith.constant dense<0.000000e+00> : vector<2x32xf32>
    %269 = tpu.matmul %264, %3, %cst_111 {dimension_numbers = #tpu.dot_dimension_numbers<[1], [0], [0], [1], [0, 0, 1, 1], [], []>} : vector<2x16xf32>, vector<16x32xf32>, vector<2x32xf32> -> vector<2x32xf32>
    %270 = arith.addf %269, %20 : vector<2x32xf32>
    %cst_112 = arith.constant dense<0.000000e+00> : vector<2x32xf32>
    %271 = tpu.matmul %236, %4, %cst_112 {dimension_numbers = #tpu.dot_dimension_numbers<[1], [0], [0], [1], [0, 0, 1, 1], [], []>} : vector<2x32xf32>, vector<32x32xf32>, vector<2x32xf32> -> vector<2x32xf32>
    %272 = arith.addf %271, %23 : vector<2x32xf32>
    %cst_113 = arith.constant dense<0.000000e+00> : vector<2x32xf32>
    %273 = tpu.matmul %236, %5, %cst_113 {dimension_numbers = #tpu.dot_dimension_numbers<[1], [0], [0], [1], [0, 0, 1, 1], [], []>} : vector<2x32xf32>, vector<32x32xf32>, vector<2x32xf32> -> vector<2x32xf32>
    %274 = arith.addf %273, %26 : vector<2x32xf32>
    %cst_114 = arith.constant dense<0.000000e+00> : vector<2x32xf32>
    %275 = tpu.matmul %236, %6, %cst_114 {dimension_numbers = #tpu.dot_dimension_numbers<[1], [0], [0], [1], [0, 0, 1, 1], [], []>} : vector<2x32xf32>, vector<32x32xf32>, vector<2x32xf32> -> vector<2x32xf32>
    %276 = arith.addf %275, %29 : vector<2x32xf32>
    %277 = arith.addf %266, %272 : vector<2x32xf32>
    %278 = arith.negf %277 : vector<2x32xf32>
    %279 = math.exp %278 : vector<2x32xf32>
    %cst_115 = arith.constant 1.000000e+00 : f32
    %280 = vector.broadcast %cst_115 : f32 to vector<2x32xf32>
    %281 = arith.addf %280, %279 : vector<2x32xf32>
    %282 = arith.divf %280, %281 : vector<2x32xf32>
    %283 = arith.addf %268, %274 : vector<2x32xf32>
    %284 = arith.negf %283 : vector<2x32xf32>
    %285 = math.exp %284 : vector<2x32xf32>
    %cst_116 = arith.constant 1.000000e+00 : f32
    %286 = vector.broadcast %cst_116 : f32 to vector<2x32xf32>
    %287 = arith.addf %286, %285 : vector<2x32xf32>
    %288 = arith.divf %286, %287 : vector<2x32xf32>
    %289 = arith.mulf %282, %276 : vector<2x32xf32>
    %290 = arith.addf %270, %289 : vector<2x32xf32>
    %291 = math.tanh %290 : vector<2x32xf32>
    %cst_117 = arith.constant 1.000000e+00 : f32
    %292 = vector.broadcast %cst_117 : f32 to vector<2x32xf32>
    %293 = arith.subf %292, %288 : vector<2x32xf32>
    %294 = arith.mulf %293, %291 : vector<2x32xf32>
    %295 = arith.mulf %288, %236 : vector<2x32xf32>
    %296 = arith.addf %294, %295 : vector<2x32xf32>
    %297 = vector.shape_cast %296 : vector<2x32xf32> to vector<2x1x32xf32>
    %298 = vector.broadcast %297 : vector<2x1x32xf32> to vector<2x8x32xf32>
    %299 = arith.mulf %46, %298 : vector<2x8x32xf32>
    %cst_118 = arith.constant dense<0.000000e+00> : vector<2x8xf32>
    %300 = vector.multi_reduction <add>, %299, %cst_118 [2] : vector<2x8x32xf32> to vector<2x8xf32>
    %cst_119 = arith.constant dense<0xFF800000> : vector<2xf32>
    %301 = vector.multi_reduction <maximumf>, %300, %cst_119 [1] : vector<2x8xf32> to vector<2xf32>
    %302 = vector.shape_cast %301 : vector<2xf32> to vector<2x1xf32>
    %303 = vector.broadcast %302 : vector<2x1xf32> to vector<2x8xf32>
    %304 = arith.subf %300, %303 : vector<2x8xf32>
    %305 = math.exp %304 : vector<2x8xf32>
    %306 = vector.shape_cast %305 : vector<2x8xf32> to vector<2x8x1xf32>
    %307 = vector.broadcast %306 : vector<2x8x1xf32> to vector<2x8x32xf32>
    %308 = arith.mulf %46, %307 : vector<2x8x32xf32>
    %cst_120 = arith.constant dense<0.000000e+00> : vector<2x32xf32>
    %309 = vector.multi_reduction <add>, %308, %cst_120 [1] : vector<2x8x32xf32> to vector<2x32xf32>
    %cst_121 = arith.constant dense<0.000000e+00> : vector<2xf32>
    %310 = vector.multi_reduction <add>, %305, %cst_121 [1] : vector<2x8xf32> to vector<2xf32>
    %311 = vector.shape_cast %310 : vector<2xf32> to vector<2x1xf32>
    %312 = tpu.reciprocal %311 {approx = true} : vector<2x1xf32> -> vector<2x1xf32>
    %313 = vector.broadcast %312 : vector<2x1xf32> to vector<2x32xf32>
    %314 = arith.mulf %309, %313 : vector<2x32xf32>
    %cst_122 = arith.constant dense<0.000000e+00> : vector<2x12xf32>
    %315 = tpu.matmul %296, %7, %cst_122 {dimension_numbers = #tpu.dot_dimension_numbers<[1], [0], [0], [1], [0, 0, 1, 1], [], []>} : vector<2x32xf32>, vector<32x12xf32>, vector<2x12xf32> -> vector<2x12xf32>
    %cst_123 = arith.constant dense<0.000000e+00> : vector<2x12xf32>
    %316 = tpu.matmul %314, %8, %cst_123 {dimension_numbers = #tpu.dot_dimension_numbers<[1], [0], [0], [1], [0, 0, 1, 1], [], []>} : vector<2x32xf32>, vector<32x12xf32>, vector<2x12xf32> -> vector<2x12xf32>
    %317 = arith.addf %315, %316 : vector<2x12xf32>
    %318 = arith.addf %317, %32 : vector<2x12xf32>
    %319 = vector.shape_cast %318 : vector<2x12xf32> to vector<2x1x12xf32>
    %c0_124 = arith.constant 0 : index
    %c1 = arith.constant 1 : index
    %c0_125 = arith.constant 0 : index
    %320 = vector.load %arg24[%c0_124, %c1, %c0_125] : memref<2x6x12xf32, #tpu.memory_space<vmem>>, vector<2x1x12xf32>
    tpu.vector_store %arg24[%c0_124, %c1, %c0_125], %319 {strides = array<i32>} : memref<2x6x12xf32, #tpu.memory_space<vmem>>, vector<2x1x12xf32>,
    %cst_126 = arith.constant dense<0.000000e+00> : vector<2x16xf32>
    %321 = tpu.matmul %318, %0, %cst_126 {dimension_numbers = #tpu.dot_dimension_numbers<[1], [0], [0], [1], [0, 0, 1, 1], [], []>} : vector<2x12xf32>, vector<12x16xf32>, vector<2x16xf32> -> vector<2x16xf32>
    %322 = arith.addf %321, %11 : vector<2x16xf32>
    %cst_127 = arith.constant 0.000000e+00 : f32
    %323 = vector.broadcast %cst_127 : f32 to vector<2x16xf32>
    %324 = arith.maximumf %322, %323 : vector<2x16xf32>
    %cst_128 = arith.constant dense<0.000000e+00> : vector<2x32xf32>
    %325 = tpu.matmul %324, %1, %cst_128 {dimension_numbers = #tpu.dot_dimension_numbers<[1], [0], [0], [1], [0, 0, 1, 1], [], []>} : vector<2x16xf32>, vector<16x32xf32>, vector<2x32xf32> -> vector<2x32xf32>
    %326 = arith.addf %325, %14 : vector<2x32xf32>
    %cst_129 = arith.constant dense<0.000000e+00> : vector<2x32xf32>
    %327 = tpu.matmul %324, %2, %cst_129 {dimension_numbers = #tpu.dot_dimension_numbers<[1], [0], [0], [1], [0, 0, 1, 1], [], []>} : vector<2x16xf32>, vector<16x32xf32>, vector<2x32xf32> -> vector<2x32xf32>
    %328 = arith.addf %327, %17 : vector<2x32xf32>
    %cst_130 = arith.constant dense<0.000000e+00> : vector<2x32xf32>
    %329 = tpu.matmul %324, %3, %cst_130 {dimension_numbers = #tpu.dot_dimension_numbers<[1], [0], [0], [1], [0, 0, 1, 1], [], []>} : vector<2x16xf32>, vector<16x32xf32>, vector<2x32xf32> -> vector<2x32xf32>
    %330 = arith.addf %329, %20 : vector<2x32xf32>
    %cst_131 = arith.constant dense<0.000000e+00> : vector<2x32xf32>
    %331 = tpu.matmul %296, %4, %cst_131 {dimension_numbers = #tpu.dot_dimension_numbers<[1], [0], [0], [1], [0, 0, 1, 1], [], []>} : vector<2x32xf32>, vector<32x32xf32>, vector<2x32xf32> -> vector<2x32xf32>
    %332 = arith.addf %331, %23 : vector<2x32xf32>
    %cst_132 = arith.constant dense<0.000000e+00> : vector<2x32xf32>
    %333 = tpu.matmul %296, %5, %cst_132 {dimension_numbers = #tpu.dot_dimension_numbers<[1], [0], [0], [1], [0, 0, 1, 1], [], []>} : vector<2x32xf32>, vector<32x32xf32>, vector<2x32xf32> -> vector<2x32xf32>
    %334 = arith.addf %333, %26 : vector<2x32xf32>
    %cst_133 = arith.constant dense<0.000000e+00> : vector<2x32xf32>
    %335 = tpu.matmul %296, %6, %cst_133 {dimension_numbers = #tpu.dot_dimension_numbers<[1], [0], [0], [1], [0, 0, 1, 1], [], []>} : vector<2x32xf32>, vector<32x32xf32>, vector<2x32xf32> -> vector<2x32xf32>
    %336 = arith.addf %335, %29 : vector<2x32xf32>
    %337 = arith.addf %326, %332 : vector<2x32xf32>
    %338 = arith.negf %337 : vector<2x32xf32>
    %339 = math.exp %338 : vector<2x32xf32>
    %cst_134 = arith.constant 1.000000e+00 : f32
    %340 = vector.broadcast %cst_134 : f32 to vector<2x32xf32>
    %341 = arith.addf %340, %339 : vector<2x32xf32>
    %342 = arith.divf %340, %341 : vector<2x32xf32>
    %343 = arith.addf %328, %334 : vector<2x32xf32>
    %344 = arith.negf %343 : vector<2x32xf32>
    %345 = math.exp %344 : vector<2x32xf32>
    %cst_135 = arith.constant 1.000000e+00 : f32
    %346 = vector.broadcast %cst_135 : f32 to vector<2x32xf32>
    %347 = arith.addf %346, %345 : vector<2x32xf32>
    %348 = arith.divf %346, %347 : vector<2x32xf32>
    %349 = arith.mulf %342, %336 : vector<2x32xf32>
    %350 = arith.addf %330, %349 : vector<2x32xf32>
    %351 = math.tanh %350 : vector<2x32xf32>
    %cst_136 = arith.constant 1.000000e+00 : f32
    %352 = vector.broadcast %cst_136 : f32 to vector<2x32xf32>
    %353 = arith.subf %352, %348 : vector<2x32xf32>
    %354 = arith.mulf %353, %351 : vector<2x32xf32>
    %355 = arith.mulf %348, %296 : vector<2x32xf32>
    %356 = arith.addf %354, %355 : vector<2x32xf32>
    %357 = vector.shape_cast %356 : vector<2x32xf32> to vector<2x1x32xf32>
    %358 = vector.broadcast %357 : vector<2x1x32xf32> to vector<2x8x32xf32>
    %359 = arith.mulf %46, %358 : vector<2x8x32xf32>
    %cst_137 = arith.constant dense<0.000000e+00> : vector<2x8xf32>
    %360 = vector.multi_reduction <add>, %359, %cst_137 [2] : vector<2x8x32xf32> to vector<2x8xf32>
    %cst_138 = arith.constant dense<0xFF800000> : vector<2xf32>
    %361 = vector.multi_reduction <maximumf>, %360, %cst_138 [1] : vector<2x8xf32> to vector<2xf32>
    %362 = vector.shape_cast %361 : vector<2xf32> to vector<2x1xf32>
    %363 = vector.broadcast %362 : vector<2x1xf32> to vector<2x8xf32>
    %364 = arith.subf %360, %363 : vector<2x8xf32>
    %365 = math.exp %364 : vector<2x8xf32>
    %366 = vector.shape_cast %365 : vector<2x8xf32> to vector<2x8x1xf32>
    %367 = vector.broadcast %366 : vector<2x8x1xf32> to vector<2x8x32xf32>
    %368 = arith.mulf %46, %367 : vector<2x8x32xf32>
    %cst_139 = arith.constant dense<0.000000e+00> : vector<2x32xf32>
    %369 = vector.multi_reduction <add>, %368, %cst_139 [1] : vector<2x8x32xf32> to vector<2x32xf32>
    %cst_140 = arith.constant dense<0.000000e+00> : vector<2xf32>
    %370 = vector.multi_reduction <add>, %365, %cst_140 [1] : vector<2x8xf32> to vector<2xf32>
    %371 = vector.shape_cast %370 : vector<2xf32> to vector<2x1xf32>
    %372 = tpu.reciprocal %371 {approx = true} : vector<2x1xf32> -> vector<2x1xf32>
    %373 = vector.broadcast %372 : vector<2x1xf32> to vector<2x32xf32>
    %374 = arith.mulf %369, %373 : vector<2x32xf32>
    %cst_141 = arith.constant dense<0.000000e+00> : vector<2x12xf32>
    %375 = tpu.matmul %356, %7, %cst_141 {dimension_numbers = #tpu.dot_dimension_numbers<[1], [0], [0], [1], [0, 0, 1, 1], [], []>} : vector<2x32xf32>, vector<32x12xf32>, vector<2x12xf32> -> vector<2x12xf32>
    %cst_142 = arith.constant dense<0.000000e+00> : vector<2x12xf32>
    %376 = tpu.matmul %374, %8, %cst_142 {dimension_numbers = #tpu.dot_dimension_numbers<[1], [0], [0], [1], [0, 0, 1, 1], [], []>} : vector<2x32xf32>, vector<32x12xf32>, vector<2x12xf32> -> vector<2x12xf32>
    %377 = arith.addf %375, %376 : vector<2x12xf32>
    %378 = arith.addf %377, %32 : vector<2x12xf32>
    %379 = vector.shape_cast %378 : vector<2x12xf32> to vector<2x1x12xf32>
    %c0_143 = arith.constant 0 : index
    %c2 = arith.constant 2 : index
    %c0_144 = arith.constant 0 : index
    %380 = vector.load %arg24[%c0_143, %c2, %c0_144] : memref<2x6x12xf32, #tpu.memory_space<vmem>>, vector<2x1x12xf32>
    tpu.vector_store %arg24[%c0_143, %c2, %c0_144], %379 {strides = array<i32>} : memref<2x6x12xf32, #tpu.memory_space<vmem>>, vector<2x1x12xf32>,
    %cst_145 = arith.constant dense<0.000000e+00> : vector<2x16xf32>
    %381 = tpu.matmul %378, %0, %cst_145 {dimension_numbers = #tpu.dot_dimension_numbers<[1], [0], [0], [1], [0, 0, 1, 1], [], []>} : vector<2x12xf32>, vector<12x16xf32>, vector<2x16xf32> -> vector<2x16xf32>
    %382 = arith.addf %381, %11 : vector<2x16xf32>
    %cst_146 = arith.constant 0.000000e+00 : f32
    %383 = vector.broadcast %cst_146 : f32 to vector<2x16xf32>
    %384 = arith.maximumf %382, %383 : vector<2x16xf32>
    %cst_147 = arith.constant dense<0.000000e+00> : vector<2x32xf32>
    %385 = tpu.matmul %384, %1, %cst_147 {dimension_numbers = #tpu.dot_dimension_numbers<[1], [0], [0], [1], [0, 0, 1, 1], [], []>} : vector<2x16xf32>, vector<16x32xf32>, vector<2x32xf32> -> vector<2x32xf32>
    %386 = arith.addf %385, %14 : vector<2x32xf32>
    %cst_148 = arith.constant dense<0.000000e+00> : vector<2x32xf32>
    %387 = tpu.matmul %384, %2, %cst_148 {dimension_numbers = #tpu.dot_dimension_numbers<[1], [0], [0], [1], [0, 0, 1, 1], [], []>} : vector<2x16xf32>, vector<16x32xf32>, vector<2x32xf32> -> vector<2x32xf32>
    %388 = arith.addf %387, %17 : vector<2x32xf32>
    %cst_149 = arith.constant dense<0.000000e+00> : vector<2x32xf32>
    %389 = tpu.matmul %384, %3, %cst_149 {dimension_numbers = #tpu.dot_dimension_numbers<[1], [0], [0], [1], [0, 0, 1, 1], [], []>} : vector<2x16xf32>, vector<16x32xf32>, vector<2x32xf32> -> vector<2x32xf32>
    %390 = arith.addf %389, %20 : vector<2x32xf32>
    %cst_150 = arith.constant dense<0.000000e+00> : vector<2x32xf32>
    %391 = tpu.matmul %356, %4, %cst_150 {dimension_numbers = #tpu.dot_dimension_numbers<[1], [0], [0], [1], [0, 0, 1, 1], [], []>} : vector<2x32xf32>, vector<32x32xf32>, vector<2x32xf32> -> vector<2x32xf32>
    %392 = arith.addf %391, %23 : vector<2x32xf32>
    %cst_151 = arith.constant dense<0.000000e+00> : vector<2x32xf32>
    %393 = tpu.matmul %356, %5, %cst_151 {dimension_numbers = #tpu.dot_dimension_numbers<[1], [0], [0], [1], [0, 0, 1, 1], [], []>} : vector<2x32xf32>, vector<32x32xf32>, vector<2x32xf32> -> vector<2x32xf32>
    %394 = arith.addf %393, %26 : vector<2x32xf32>
    %cst_152 = arith.constant dense<0.000000e+00> : vector<2x32xf32>
    %395 = tpu.matmul %356, %6, %cst_152 {dimension_numbers = #tpu.dot_dimension_numbers<[1], [0], [0], [1], [0, 0, 1, 1], [], []>} : vector<2x32xf32>, vector<32x32xf32>, vector<2x32xf32> -> vector<2x32xf32>
    %396 = arith.addf %395, %29 : vector<2x32xf32>
    %397 = arith.addf %386, %392 : vector<2x32xf32>
    %398 = arith.negf %397 : vector<2x32xf32>
    %399 = math.exp %398 : vector<2x32xf32>
    %cst_153 = arith.constant 1.000000e+00 : f32
    %400 = vector.broadcast %cst_153 : f32 to vector<2x32xf32>
    %401 = arith.addf %400, %399 : vector<2x32xf32>
    %402 = arith.divf %400, %401 : vector<2x32xf32>
    %403 = arith.addf %388, %394 : vector<2x32xf32>
    %404 = arith.negf %403 : vector<2x32xf32>
    %405 = math.exp %404 : vector<2x32xf32>
    %cst_154 = arith.constant 1.000000e+00 : f32
    %406 = vector.broadcast %cst_154 : f32 to vector<2x32xf32>
    %407 = arith.addf %406, %405 : vector<2x32xf32>
    %408 = arith.divf %406, %407 : vector<2x32xf32>
    %409 = arith.mulf %402, %396 : vector<2x32xf32>
    %410 = arith.addf %390, %409 : vector<2x32xf32>
    %411 = math.tanh %410 : vector<2x32xf32>
    %cst_155 = arith.constant 1.000000e+00 : f32
    %412 = vector.broadcast %cst_155 : f32 to vector<2x32xf32>
    %413 = arith.subf %412, %408 : vector<2x32xf32>
    %414 = arith.mulf %413, %411 : vector<2x32xf32>
    %415 = arith.mulf %408, %356 : vector<2x32xf32>
    %416 = arith.addf %414, %415 : vector<2x32xf32>
    %417 = vector.shape_cast %416 : vector<2x32xf32> to vector<2x1x32xf32>
    %418 = vector.broadcast %417 : vector<2x1x32xf32> to vector<2x8x32xf32>
    %419 = arith.mulf %46, %418 : vector<2x8x32xf32>
    %cst_156 = arith.constant dense<0.000000e+00> : vector<2x8xf32>
    %420 = vector.multi_reduction <add>, %419, %cst_156 [2] : vector<2x8x32xf32> to vector<2x8xf32>
    %cst_157 = arith.constant dense<0xFF800000> : vector<2xf32>
    %421 = vector.multi_reduction <maximumf>, %420, %cst_157 [1] : vector<2x8xf32> to vector<2xf32>
    %422 = vector.shape_cast %421 : vector<2xf32> to vector<2x1xf32>
    %423 = vector.broadcast %422 : vector<2x1xf32> to vector<2x8xf32>
    %424 = arith.subf %420, %423 : vector<2x8xf32>
    %425 = math.exp %424 : vector<2x8xf32>
    %426 = vector.shape_cast %425 : vector<2x8xf32> to vector<2x8x1xf32>
    %427 = vector.broadcast %426 : vector<2x8x1xf32> to vector<2x8x32xf32>
    %428 = arith.mulf %46, %427 : vector<2x8x32xf32>
    %cst_158 = arith.constant dense<0.000000e+00> : vector<2x32xf32>
    %429 = vector.multi_reduction <add>, %428, %cst_158 [1] : vector<2x8x32xf32> to vector<2x32xf32>
    %cst_159 = arith.constant dense<0.000000e+00> : vector<2xf32>
    %430 = vector.multi_reduction <add>, %425, %cst_159 [1] : vector<2x8xf32> to vector<2xf32>
    %431 = vector.shape_cast %430 : vector<2xf32> to vector<2x1xf32>
    %432 = tpu.reciprocal %431 {approx = true} : vector<2x1xf32> -> vector<2x1xf32>
    %433 = vector.broadcast %432 : vector<2x1xf32> to vector<2x32xf32>
    %434 = arith.mulf %429, %433 : vector<2x32xf32>
    %cst_160 = arith.constant dense<0.000000e+00> : vector<2x12xf32>
    %435 = tpu.matmul %416, %7, %cst_160 {dimension_numbers = #tpu.dot_dimension_numbers<[1], [0], [0], [1], [0, 0, 1, 1], [], []>} : vector<2x32xf32>, vector<32x12xf32>, vector<2x12xf32> -> vector<2x12xf32>
    %cst_161 = arith.constant dense<0.000000e+00> : vector<2x12xf32>
    %436 = tpu.matmul %434, %8, %cst_161 {dimension_numbers = #tpu.dot_dimension_numbers<[1], [0], [0], [1], [0, 0, 1, 1], [], []>} : vector<2x32xf32>, vector<32x12xf32>, vector<2x12xf32> -> vector<2x12xf32>
    %437 = arith.addf %435, %436 : vector<2x12xf32>
    %438 = arith.addf %437, %32 : vector<2x12xf32>
    %439 = vector.shape_cast %438 : vector<2x12xf32> to vector<2x1x12xf32>
    %c0_162 = arith.constant 0 : index
    %c3 = arith.constant 3 : index
    %c0_163 = arith.constant 0 : index
    %440 = vector.load %arg24[%c0_162, %c3, %c0_163] : memref<2x6x12xf32, #tpu.memory_space<vmem>>, vector<2x1x12xf32>
    tpu.vector_store %arg24[%c0_162, %c3, %c0_163], %439 {strides = array<i32>} : memref<2x6x12xf32, #tpu.memory_space<vmem>>, vector<2x1x12xf32>,
    %cst_164 = arith.constant dense<0.000000e+00> : vector<2x16xf32>
    %441 = tpu.matmul %438, %0, %cst_164 {dimension_numbers = #tpu.dot_dimension_numbers<[1], [0], [0], [1], [0, 0, 1, 1], [], []>} : vector<2x12xf32>, vector<12x16xf32>, vector<2x16xf32> -> vector<2x16xf32>
    %442 = arith.addf %441, %11 : vector<2x16xf32>
    %cst_165 = arith.constant 0.000000e+00 : f32
    %443 = vector.broadcast %cst_165 : f32 to vector<2x16xf32>
    %444 = arith.maximumf %442, %443 : vector<2x16xf32>
    %cst_166 = arith.constant dense<0.000000e+00> : vector<2x32xf32>
    %445 = tpu.matmul %444, %1, %cst_166 {dimension_numbers = #tpu.dot_dimension_numbers<[1], [0], [0], [1], [0, 0, 1, 1], [], []>} : vector<2x16xf32>, vector<16x32xf32>, vector<2x32xf32> -> vector<2x32xf32>
    %446 = arith.addf %445, %14 : vector<2x32xf32>
    %cst_167 = arith.constant dense<0.000000e+00> : vector<2x32xf32>
    %447 = tpu.matmul %444, %2, %cst_167 {dimension_numbers = #tpu.dot_dimension_numbers<[1], [0], [0], [1], [0, 0, 1, 1], [], []>} : vector<2x16xf32>, vector<16x32xf32>, vector<2x32xf32> -> vector<2x32xf32>
    %448 = arith.addf %447, %17 : vector<2x32xf32>
    %cst_168 = arith.constant dense<0.000000e+00> : vector<2x32xf32>
    %449 = tpu.matmul %444, %3, %cst_168 {dimension_numbers = #tpu.dot_dimension_numbers<[1], [0], [0], [1], [0, 0, 1, 1], [], []>} : vector<2x16xf32>, vector<16x32xf32>, vector<2x32xf32> -> vector<2x32xf32>
    %450 = arith.addf %449, %20 : vector<2x32xf32>
    %cst_169 = arith.constant dense<0.000000e+00> : vector<2x32xf32>
    %451 = tpu.matmul %416, %4, %cst_169 {dimension_numbers = #tpu.dot_dimension_numbers<[1], [0], [0], [1], [0, 0, 1, 1], [], []>} : vector<2x32xf32>, vector<32x32xf32>, vector<2x32xf32> -> vector<2x32xf32>
    %452 = arith.addf %451, %23 : vector<2x32xf32>
    %cst_170 = arith.constant dense<0.000000e+00> : vector<2x32xf32>
    %453 = tpu.matmul %416, %5, %cst_170 {dimension_numbers = #tpu.dot_dimension_numbers<[1], [0], [0], [1], [0, 0, 1, 1], [], []>} : vector<2x32xf32>, vector<32x32xf32>, vector<2x32xf32> -> vector<2x32xf32>
    %454 = arith.addf %453, %26 : vector<2x32xf32>
    %cst_171 = arith.constant dense<0.000000e+00> : vector<2x32xf32>
    %455 = tpu.matmul %416, %6, %cst_171 {dimension_numbers = #tpu.dot_dimension_numbers<[1], [0], [0], [1], [0, 0, 1, 1], [], []>} : vector<2x32xf32>, vector<32x32xf32>, vector<2x32xf32> -> vector<2x32xf32>
    %456 = arith.addf %455, %29 : vector<2x32xf32>
    %457 = arith.addf %446, %452 : vector<2x32xf32>
    %458 = arith.negf %457 : vector<2x32xf32>
    %459 = math.exp %458 : vector<2x32xf32>
    %cst_172 = arith.constant 1.000000e+00 : f32
    %460 = vector.broadcast %cst_172 : f32 to vector<2x32xf32>
    %461 = arith.addf %460, %459 : vector<2x32xf32>
    %462 = arith.divf %460, %461 : vector<2x32xf32>
    %463 = arith.addf %448, %454 : vector<2x32xf32>
    %464 = arith.negf %463 : vector<2x32xf32>
    %465 = math.exp %464 : vector<2x32xf32>
    %cst_173 = arith.constant 1.000000e+00 : f32
    %466 = vector.broadcast %cst_173 : f32 to vector<2x32xf32>
    %467 = arith.addf %466, %465 : vector<2x32xf32>
    %468 = arith.divf %466, %467 : vector<2x32xf32>
    %469 = arith.mulf %462, %456 : vector<2x32xf32>
    %470 = arith.addf %450, %469 : vector<2x32xf32>
    %471 = math.tanh %470 : vector<2x32xf32>
    %cst_174 = arith.constant 1.000000e+00 : f32
    %472 = vector.broadcast %cst_174 : f32 to vector<2x32xf32>
    %473 = arith.subf %472, %468 : vector<2x32xf32>
    %474 = arith.mulf %473, %471 : vector<2x32xf32>
    %475 = arith.mulf %468, %416 : vector<2x32xf32>
    %476 = arith.addf %474, %475 : vector<2x32xf32>
    %477 = vector.shape_cast %476 : vector<2x32xf32> to vector<2x1x32xf32>
    %478 = vector.broadcast %477 : vector<2x1x32xf32> to vector<2x8x32xf32>
    %479 = arith.mulf %46, %478 : vector<2x8x32xf32>
    %cst_175 = arith.constant dense<0.000000e+00> : vector<2x8xf32>
    %480 = vector.multi_reduction <add>, %479, %cst_175 [2] : vector<2x8x32xf32> to vector<2x8xf32>
    %cst_176 = arith.constant dense<0xFF800000> : vector<2xf32>
    %481 = vector.multi_reduction <maximumf>, %480, %cst_176 [1] : vector<2x8xf32> to vector<2xf32>
    %482 = vector.shape_cast %481 : vector<2xf32> to vector<2x1xf32>
    %483 = vector.broadcast %482 : vector<2x1xf32> to vector<2x8xf32>
    %484 = arith.subf %480, %483 : vector<2x8xf32>
    %485 = math.exp %484 : vector<2x8xf32>
    %486 = vector.shape_cast %485 : vector<2x8xf32> to vector<2x8x1xf32>
    %487 = vector.broadcast %486 : vector<2x8x1xf32> to vector<2x8x32xf32>
    %488 = arith.mulf %46, %487 : vector<2x8x32xf32>
    %cst_177 = arith.constant dense<0.000000e+00> : vector<2x32xf32>
    %489 = vector.multi_reduction <add>, %488, %cst_177 [1] : vector<2x8x32xf32> to vector<2x32xf32>
    %cst_178 = arith.constant dense<0.000000e+00> : vector<2xf32>
    %490 = vector.multi_reduction <add>, %485, %cst_178 [1] : vector<2x8xf32> to vector<2xf32>
    %491 = vector.shape_cast %490 : vector<2xf32> to vector<2x1xf32>
    %492 = tpu.reciprocal %491 {approx = true} : vector<2x1xf32> -> vector<2x1xf32>
    %493 = vector.broadcast %492 : vector<2x1xf32> to vector<2x32xf32>
    %494 = arith.mulf %489, %493 : vector<2x32xf32>
    %cst_179 = arith.constant dense<0.000000e+00> : vector<2x12xf32>
    %495 = tpu.matmul %476, %7, %cst_179 {dimension_numbers = #tpu.dot_dimension_numbers<[1], [0], [0], [1], [0, 0, 1, 1], [], []>} : vector<2x32xf32>, vector<32x12xf32>, vector<2x12xf32> -> vector<2x12xf32>
    %cst_180 = arith.constant dense<0.000000e+00> : vector<2x12xf32>
    %496 = tpu.matmul %494, %8, %cst_180 {dimension_numbers = #tpu.dot_dimension_numbers<[1], [0], [0], [1], [0, 0, 1, 1], [], []>} : vector<2x32xf32>, vector<32x12xf32>, vector<2x12xf32> -> vector<2x12xf32>
    %497 = arith.addf %495, %496 : vector<2x12xf32>
    %498 = arith.addf %497, %32 : vector<2x12xf32>
    %499 = vector.shape_cast %498 : vector<2x12xf32> to vector<2x1x12xf32>
    %c0_181 = arith.constant 0 : index
    %c4 = arith.constant 4 : index
    %c0_182 = arith.constant 0 : index
    %500 = vector.load %arg24[%c0_181, %c4, %c0_182] : memref<2x6x12xf32, #tpu.memory_space<vmem>>, vector<2x1x12xf32>
    tpu.vector_store %arg24[%c0_181, %c4, %c0_182], %499 {strides = array<i32>} : memref<2x6x12xf32, #tpu.memory_space<vmem>>, vector<2x1x12xf32>,
    %cst_183 = arith.constant dense<0.000000e+00> : vector<2x16xf32>
    %501 = tpu.matmul %498, %0, %cst_183 {dimension_numbers = #tpu.dot_dimension_numbers<[1], [0], [0], [1], [0, 0, 1, 1], [], []>} : vector<2x12xf32>, vector<12x16xf32>, vector<2x16xf32> -> vector<2x16xf32>
    %502 = arith.addf %501, %11 : vector<2x16xf32>
    %cst_184 = arith.constant 0.000000e+00 : f32
    %503 = vector.broadcast %cst_184 : f32 to vector<2x16xf32>
    %504 = arith.maximumf %502, %503 : vector<2x16xf32>
    %cst_185 = arith.constant dense<0.000000e+00> : vector<2x32xf32>
    %505 = tpu.matmul %504, %1, %cst_185 {dimension_numbers = #tpu.dot_dimension_numbers<[1], [0], [0], [1], [0, 0, 1, 1], [], []>} : vector<2x16xf32>, vector<16x32xf32>, vector<2x32xf32> -> vector<2x32xf32>
    %506 = arith.addf %505, %14 : vector<2x32xf32>
    %cst_186 = arith.constant dense<0.000000e+00> : vector<2x32xf32>
    %507 = tpu.matmul %504, %2, %cst_186 {dimension_numbers = #tpu.dot_dimension_numbers<[1], [0], [0], [1], [0, 0, 1, 1], [], []>} : vector<2x16xf32>, vector<16x32xf32>, vector<2x32xf32> -> vector<2x32xf32>
    %508 = arith.addf %507, %17 : vector<2x32xf32>
    %cst_187 = arith.constant dense<0.000000e+00> : vector<2x32xf32>
    %509 = tpu.matmul %504, %3, %cst_187 {dimension_numbers = #tpu.dot_dimension_numbers<[1], [0], [0], [1], [0, 0, 1, 1], [], []>} : vector<2x16xf32>, vector<16x32xf32>, vector<2x32xf32> -> vector<2x32xf32>
    %510 = arith.addf %509, %20 : vector<2x32xf32>
    %cst_188 = arith.constant dense<0.000000e+00> : vector<2x32xf32>
    %511 = tpu.matmul %476, %4, %cst_188 {dimension_numbers = #tpu.dot_dimension_numbers<[1], [0], [0], [1], [0, 0, 1, 1], [], []>} : vector<2x32xf32>, vector<32x32xf32>, vector<2x32xf32> -> vector<2x32xf32>
    %512 = arith.addf %511, %23 : vector<2x32xf32>
    %cst_189 = arith.constant dense<0.000000e+00> : vector<2x32xf32>
    %513 = tpu.matmul %476, %5, %cst_189 {dimension_numbers = #tpu.dot_dimension_numbers<[1], [0], [0], [1], [0, 0, 1, 1], [], []>} : vector<2x32xf32>, vector<32x32xf32>, vector<2x32xf32> -> vector<2x32xf32>
    %514 = arith.addf %513, %26 : vector<2x32xf32>
    %cst_190 = arith.constant dense<0.000000e+00> : vector<2x32xf32>
    %515 = tpu.matmul %476, %6, %cst_190 {dimension_numbers = #tpu.dot_dimension_numbers<[1], [0], [0], [1], [0, 0, 1, 1], [], []>} : vector<2x32xf32>, vector<32x32xf32>, vector<2x32xf32> -> vector<2x32xf32>
    %516 = arith.addf %515, %29 : vector<2x32xf32>
    %517 = arith.addf %506, %512 : vector<2x32xf32>
    %518 = arith.negf %517 : vector<2x32xf32>
    %519 = math.exp %518 : vector<2x32xf32>
    %cst_191 = arith.constant 1.000000e+00 : f32
    %520 = vector.broadcast %cst_191 : f32 to vector<2x32xf32>
    %521 = arith.addf %520, %519 : vector<2x32xf32>
    %522 = arith.divf %520, %521 : vector<2x32xf32>
    %523 = arith.addf %508, %514 : vector<2x32xf32>
    %524 = arith.negf %523 : vector<2x32xf32>
    %525 = math.exp %524 : vector<2x32xf32>
    %cst_192 = arith.constant 1.000000e+00 : f32
    %526 = vector.broadcast %cst_192 : f32 to vector<2x32xf32>
    %527 = arith.addf %526, %525 : vector<2x32xf32>
    %528 = arith.divf %526, %527 : vector<2x32xf32>
    %529 = arith.mulf %522, %516 : vector<2x32xf32>
    %530 = arith.addf %510, %529 : vector<2x32xf32>
    %531 = math.tanh %530 : vector<2x32xf32>
    %cst_193 = arith.constant 1.000000e+00 : f32
    %532 = vector.broadcast %cst_193 : f32 to vector<2x32xf32>
    %533 = arith.subf %532, %528 : vector<2x32xf32>
    %534 = arith.mulf %533, %531 : vector<2x32xf32>
    %535 = arith.mulf %528, %476 : vector<2x32xf32>
    %536 = arith.addf %534, %535 : vector<2x32xf32>
    %537 = vector.shape_cast %536 : vector<2x32xf32> to vector<2x1x32xf32>
    %538 = vector.broadcast %537 : vector<2x1x32xf32> to vector<2x8x32xf32>
    %539 = arith.mulf %46, %538 : vector<2x8x32xf32>
    %cst_194 = arith.constant dense<0.000000e+00> : vector<2x8xf32>
    %540 = vector.multi_reduction <add>, %539, %cst_194 [2] : vector<2x8x32xf32> to vector<2x8xf32>
    %cst_195 = arith.constant dense<0xFF800000> : vector<2xf32>
    %541 = vector.multi_reduction <maximumf>, %540, %cst_195 [1] : vector<2x8xf32> to vector<2xf32>
    %542 = vector.shape_cast %541 : vector<2xf32> to vector<2x1xf32>
    %543 = vector.broadcast %542 : vector<2x1xf32> to vector<2x8xf32>
    %544 = arith.subf %540, %543 : vector<2x8xf32>
    %545 = math.exp %544 : vector<2x8xf32>
    %546 = vector.shape_cast %545 : vector<2x8xf32> to vector<2x8x1xf32>
    %547 = vector.broadcast %546 : vector<2x8x1xf32> to vector<2x8x32xf32>
    %548 = arith.mulf %46, %547 : vector<2x8x32xf32>
    %cst_196 = arith.constant dense<0.000000e+00> : vector<2x32xf32>
    %549 = vector.multi_reduction <add>, %548, %cst_196 [1] : vector<2x8x32xf32> to vector<2x32xf32>
    %cst_197 = arith.constant dense<0.000000e+00> : vector<2xf32>
    %550 = vector.multi_reduction <add>, %545, %cst_197 [1] : vector<2x8xf32> to vector<2xf32>
    %551 = vector.shape_cast %550 : vector<2xf32> to vector<2x1xf32>
    %552 = tpu.reciprocal %551 {approx = true} : vector<2x1xf32> -> vector<2x1xf32>
    %553 = vector.broadcast %552 : vector<2x1xf32> to vector<2x32xf32>
    %554 = arith.mulf %549, %553 : vector<2x32xf32>
    %cst_198 = arith.constant dense<0.000000e+00> : vector<2x12xf32>
    %555 = tpu.matmul %536, %7, %cst_198 {dimension_numbers = #tpu.dot_dimension_numbers<[1], [0], [0], [1], [0, 0, 1, 1], [], []>} : vector<2x32xf32>, vector<32x12xf32>, vector<2x12xf32> -> vector<2x12xf32>
    %cst_199 = arith.constant dense<0.000000e+00> : vector<2x12xf32>
    %556 = tpu.matmul %554, %8, %cst_199 {dimension_numbers = #tpu.dot_dimension_numbers<[1], [0], [0], [1], [0, 0, 1, 1], [], []>} : vector<2x32xf32>, vector<32x12xf32>, vector<2x12xf32> -> vector<2x12xf32>
    %557 = arith.addf %555, %556 : vector<2x12xf32>
    %558 = arith.addf %557, %32 : vector<2x12xf32>
    %559 = vector.shape_cast %558 : vector<2x12xf32> to vector<2x1x12xf32>
    %c0_200 = arith.constant 0 : index
    %c5 = arith.constant 5 : index
    %c0_201 = arith.constant 0 : index
    %560 = vector.load %arg24[%c0_200, %c5, %c0_201] : memref<2x6x12xf32, #tpu.memory_space<vmem>>, vector<2x1x12xf32>
    tpu.vector_store %arg24[%c0_200, %c5, %c0_201], %559 {strides = array<i32>} : memref<2x6x12xf32, #tpu.memory_space<vmem>>, vector<2x1x12xf32>,
    return
  }
}

</mosaic_0001>

<llo_original>
// kernel: tpu_custom_call.1
$region0: #{tpu_custom_call.1}
  #allocation0 [shape = 'u32[]', space=smem, size = 0x4, offset = 0x4, fixed_abs, tag = 'smem constant byte address 0x4 - core index']
  #allocation1 [shape = 'u32[144,128]{1,0:T(1,128)}', space=vmem, size = 0x12000, scoped, tag = 'internal scratch']
  %s0 = inlined_call_operand.hbm [shape: f32[2,8,16], index: 0, kind: input, shape index: {}]
  %s1 = inlined_call_operand.hbm [shape: f32[2,32], index: 1, kind: input, shape index: {}]
  %s2 = inlined_call_operand.vmem [shape: f32[2,5,12], index: 2, kind: input, shape index: {}]
  %s3 = inlined_call_operand.vmem [shape: f32[32,32], index: 3, kind: input, shape index: {}]
  %s4 = inlined_call_operand.hbm [shape: f32[1,32], index: 4, kind: input, shape index: {}]
  %s5 = inlined_call_operand.hbm [shape: f32[12,16], index: 5, kind: input, shape index: {}]
  %s6 = inlined_call_operand.hbm [shape: f32[1,16], index: 6, kind: input, shape index: {}]
  %s7 = inlined_call_operand.hbm [shape: f32[16,32], index: 7, kind: input, shape index: {}]
  %s8 = inlined_call_operand.hbm [shape: f32[16,32], index: 8, kind: input, shape index: {}]
  %s9 = inlined_call_operand.hbm [shape: f32[16,32], index: 9, kind: input, shape index: {}]
  %s10 = inlined_call_operand.hbm [shape: f32[1,32], index: 10, kind: input, shape index: {}]
  %s11 = inlined_call_operand.hbm [shape: f32[1,32], index: 11, kind: input, shape index: {}]
  %s12 = inlined_call_operand.hbm [shape: f32[1,32], index: 12, kind: input, shape index: {}]
  %s13 = inlined_call_operand.vmem [shape: f32[32,32], index: 13, kind: input, shape index: {}]
  %s14 = inlined_call_operand.vmem [shape: f32[32,32], index: 14, kind: input, shape index: {}]
  %s15 = inlined_call_operand.vmem [shape: f32[32,32], index: 15, kind: input, shape index: {}]
  %s16 = inlined_call_operand.hbm [shape: f32[1,32], index: 16, kind: input, shape index: {}]
  %s17 = inlined_call_operand.hbm [shape: f32[1,32], index: 17, kind: input, shape index: {}]
  %s18 = inlined_call_operand.hbm [shape: f32[1,32], index: 18, kind: input, shape index: {}]
  %s19 = inlined_call_operand.hbm [shape: f32[16,32], index: 19, kind: input, shape index: {}]
  %s20 = inlined_call_operand.hbm [shape: f32[1,32], index: 20, kind: input, shape index: {}]
  %s21 = inlined_call_operand.vmem [shape: f32[32,12], index: 21, kind: input, shape index: {}]
  %s22 = inlined_call_operand.vmem [shape: f32[32,12], index: 22, kind: input, shape index: {}]
  %s23 = inlined_call_operand.vmem [shape: f32[1,12], index: 23, kind: input, shape index: {}]
  %s24 = inlined_call_operand.vmem [shape: f32[2,6,12], index: 24, kind: output, shape index: {}]
  %s25 = sld [smem:[#allocation0]]
  $region170: #{tpu_custom_call.1} parent=0
    _
  %s27 = ssub.s32 1, %s25
  %s28 = scalar_select 0, %s27, %s25
  $region1: #{tpu_custom_call.1} parent=0
    #allocation2 [shape = 'u8[8192]{0}', space=vmem, size = 0x2000, scoped, tag = 'input window, operand 0, single buffered']
    #allocation3 [shape = 's32[1]{0}', space=sflag, size = 0x4, scoped, tag = 'scoped memory for tpu_custom_call.1']
    #allocation4 [shape = 'u8[1024]{0}', space=vmem, size = 0x400, scoped, tag = 'input window, operand 1, single buffered']
    #allocation5 [shape = 's32[1]{0}', space=sflag, size = 0x4, scoped, tag = 'scoped memory for tpu_custom_call.1']
    #allocation6 [shape = 'u8[512]{0}', space=vmem, size = 0x400, scoped, tag = 'input window, operand 4, single buffered']
    #allocation7 [shape = 'u8[8192]{0}', space=vmem, size = 0x2000, scoped, tag = 'input window, operand 5, single buffered']
    #allocation8 [shape = 's32[1]{0}', space=sflag, size = 0x4, scoped, tag = 'scoped memory for tpu_custom_call.1']
    #allocation9 [shape = 'u8[512]{0}', space=vmem, size = 0x400, scoped, tag = 'input window, operand 6, single buffered']
    #allocation10 [shape = 'u8[8192]{0}', space=vmem, size = 0x2000, scoped, tag = 'input window, operand 7, single buffered']
    #allocation11 [shape = 's32[1]{0}', space=sflag, size = 0x4, scoped, tag = 'scoped memory for tpu_custom_call.1']
    #allocation12 [shape = 'u8[8192]{0}', space=vmem, size = 0x2000, scoped, tag = 'input window, operand 8, single buffered']
    #allocation13 [shape = 'u8[8192]{0}', space=vmem, size = 0x2000, scoped, tag = 'input window, operand 9, single buffered']
    #allocation14 [shape = 's32[1]{0}', space=sflag, size = 0x4, scoped, tag = 'scoped memory for tpu_custom_call.1']
    #allocation15 [shape = 'u8[512]{0}', space=vmem, size = 0x400, scoped, tag = 'input window, operand 10, single buffered']
    #allocation16 [shape = 'u8[512]{0}', space=vmem, size = 0x400, scoped, tag = 'input window, operand 11, single buffered']
    #allocation17 [shape = 's32[1]{0}', space=sflag, size = 0x4, scoped, tag = 'scoped memory for tpu_custom_call.1']
    #allocation18 [shape = 'u8[512]{0}', space=vmem, size = 0x400, scoped, tag = 'input window, operand 12, single buffered']
    #allocation19 [shape = 'u8[512]{0}', space=vmem, size = 0x400, scoped, tag = 'input window, operand 16, single buffered']
    #allocation20 [shape = 's32[1]{0}', space=sflag, size = 0x4, scoped, tag = 'scoped memory for tpu_custom_call.1']
    #allocation21 [shape = 'u8[512]{0}', space=vmem, size = 0x400, scoped, tag = 'input window, operand 17, single buffered']
    #allocation22 [shape = 'u8[512]{0}', space=vmem, size = 0x400, scoped, tag = 'input window, operand 18, single buffered']
    #allocation23 [shape = 's32[1]{0}', space=sflag, size = 0x4, scoped, tag = 'scoped memory for tpu_custom_call.1']
    #allocation24 [shape = 'u8[8192]{0}', space=vmem, size = 0x2000, scoped, tag = 'input window, operand 19, single buffered']
    #allocation25 [shape = 'u8[512]{0}', space=vmem, size = 0x400, scoped, tag = 'input window, operand 20, single buffered']
    #allocation26 [shape = 's32[1]{0}', space=sflag, size = 0x4, scoped, tag = 'scoped memory for tpu_custom_call.1']
    %29 = vsyncpa [#allocation3], 0
    %30 = vsyncpa [#allocation5], 0
    %31 = vsyncpa [#allocation8], 0
    %32 = vsyncpa [#allocation11], 0
    %33 = vsyncpa [#allocation14], 0
    %34 = vsyncpa [#allocation17], 0
    %35 = vsyncpa [#allocation20], 0
    %36 = vsyncpa [#allocation23], 0
    %37 = vsyncpa [#allocation26], 0
    // Predicated region
    $region2: #{tpu_custom_call.1} parent=1 // pred_check
      _
    $region3: #{tpu_custom_call.1} parent=1 // pred_check_branch
      %39 = sbr.rel (0) target = $region5
    $region4: #{tpu_custom_call.1} parent=1 // pred_region
      %s41 = ssub.s32 256, 256
      %42 = vsyncadd [#allocation3], %s41
      %s43 = sshll.u32 [#allocation2], 4
      %s44 = int_to_ptr.vmem [resolvable:$true] %s43
      %49 = dma.hbm_to_vmem [thread:$0]  %s0, 256, %s44, [#allocation3], 128, 128, 8
    $region5: #{tpu_custom_call.1} parent=1 // pred_fallthru
      _
    // Predicated region
    $region6: #{tpu_custom_call.1} parent=1 // pred_check
      _
    $region7: #{tpu_custom_call.1} parent=1 // pred_check_branch
      %51 = sbr.rel (0) target = $region9
    $region8: #{tpu_custom_call.1} parent=1 // pred_region
      %s53 = ssub.s32 32, 32
      %54 = vsyncadd [#allocation5], %s53
      %s56 = sshll.u32 [#allocation4], 4
      %s57 = int_to_ptr.vmem [resolvable:$true] %s56
      %59 = dma.hbm_to_vmem [thread:$0]  %s1, 32, %s57, [#allocation5]
    $region9: #{tpu_custom_call.1} parent=1 // pred_fallthru
      _
    // Predicated region
    $region10: #{tpu_custom_call.1} parent=1 // pred_check
      _
    $region11: #{tpu_custom_call.1} parent=1 // pred_check_branch
      %61 = sbr.rel (0) target = $region13
    $region12: #{tpu_custom_call.1} parent=1 // pred_region
      _
    $region13: #{tpu_custom_call.1} parent=1 // pred_fallthru
      _
    // Predicated region
    $region14: #{tpu_custom_call.1} parent=1 // pred_check
      _
    $region15: #{tpu_custom_call.1} parent=1 // pred_check_branch
      %63 = sbr.rel (0) target = $region17
    $region16: #{tpu_custom_call.1} parent=1 // pred_region
      _
    $region17: #{tpu_custom_call.1} parent=1 // pred_fallthru
      _
    // Predicated region
    $region18: #{tpu_custom_call.1} parent=1 // pred_check
      _
    $region19: #{tpu_custom_call.1} parent=1 // pred_check_branch
      %65 = sbr.rel (0) target = $region21
    $region20: #{tpu_custom_call.1} parent=1 // pred_region
      %s67 = ssub.s32 16, 16
      %68 = vsyncadd [#allocation5], %s67
      %s70 = sshll.u32 [#allocation6], 4
      %s71 = int_to_ptr.vmem [resolvable:$true] %s70
      %73 = dma.hbm_to_vmem [thread:$0]  %s4, 16, %s71, [#allocation5]
    $region21: #{tpu_custom_call.1} parent=1 // pred_fallthru
      _
    // Predicated region
    $region22: #{tpu_custom_call.1} parent=1 // pred_check
      _
    $region23: #{tpu_custom_call.1} parent=1 // pred_check_branch
      %75 = sbr.rel (0) target = $region25
    $region24: #{tpu_custom_call.1} parent=1 // pred_region
      %s77 = ssub.s32 256, 256
      %78 = vsyncadd [#allocation8], %s77
      %s79 = sshll.u32 [#allocation7], 4
      %s80 = int_to_ptr.vmem [resolvable:$true] %s79
      %85 = dma.hbm_to_vmem [thread:$0]  %s5, 256, %s80, [#allocation8], 128, 128, 8
    $region25: #{tpu_custom_call.1} parent=1 // pred_fallthru
      _
    // Predicated region
    $region26: #{tpu_custom_call.1} parent=1 // pred_check
      _
    $region27: #{tpu_custom_call.1} parent=1 // pred_check_branch
      %87 = sbr.rel (0) target = $region29
    $region28: #{tpu_custom_call.1} parent=1 // pred_region
      %s89 = ssub.s32 16, 16
      %90 = vsyncadd [#allocation8], %s89
      %s92 = sshll.u32 [#allocation9], 4
      %s93 = int_to_ptr.vmem [resolvable:$true] %s92
      %95 = dma.hbm_to_vmem [thread:$0]  %s6, 16, %s93, [#allocation8]
    $region29: #{tpu_custom_call.1} parent=1 // pred_fallthru
      _
    // Predicated region
    $region30: #{tpu_custom_call.1} parent=1 // pred_check
      _
    $region31: #{tpu_custom_call.1} parent=1 // pred_check_branch
      %97 = sbr.rel (0) target = $region33
    $region32: #{tpu_custom_call.1} parent=1 // pred_region
      %s99 = ssub.s32 256, 256
      %100 = vsyncadd [#allocation11], %s99
      %s101 = sshll.u32 [#allocation10], 4
      %s102 = int_to_ptr.vmem [resolvable:$true] %s101
      %107 = dma.hbm_to_vmem [thread:$0]  %s7, 256, %s102, [#allocation11], 128, 128, 8
    $region33: #{tpu_custom_call.1} parent=1 // pred_fallthru
      _
    // Predicated region
    $region34: #{tpu_custom_call.1} parent=1 // pred_check
      _
    $region35: #{tpu_custom_call.1} parent=1 // pred_check_branch
      %109 = sbr.rel (0) target = $region37
    $region36: #{tpu_custom_call.1} parent=1 // pred_region
      %s111 = ssub.s32 256, 256
      %112 = vsyncadd [#allocation11], %s111
      %s113 = sshll.u32 [#allocation12], 4
      %s114 = int_to_ptr.vmem [resolvable:$true] %s113
      %119 = dma.hbm_to_vmem [thread:$0]  %s8, 256, %s114, [#allocation11], 128, 128, 8
    $region37: #{tpu_custom_call.1} parent=1 // pred_fallthru
      _
    // Predicated region
    $region38: #{tpu_custom_call.1} parent=1 // pred_check
      _
    $region39: #{tpu_custom_call.1} parent=1 // pred_check_branch
      %121 = sbr.rel (0) target = $region41
    $region40: #{tpu_custom_call.1} parent=1 // pred_region
      %s123 = ssub.s32 256, 256
      %124 = vsyncadd [#allocation14], %s123
      %s125 = sshll.u32 [#allocation13], 4
      %s126 = int_to_ptr.vmem [resolvable:$true] %s125
      %131 = dma.hbm_to_vmem [thread:$0]  %s9, 256, %s126, [#allocation14], 128, 128, 8
    $region41: #{tpu_custom_call.1} parent=1 // pred_fallthru
      _
    // Predicated region
    $region42: #{tpu_custom_call.1} parent=1 // pred_check
      _
    $region43: #{tpu_custom_call.1} parent=1 // pred_check_branch
      %133 = sbr.rel (0) target = $region45
    $region44: #{tpu_custom_call.1} parent=1 // pred_region
      %s135 = ssub.s32 16, 16
      %136 = vsyncadd [#allocation14], %s135
      %s138 = sshll.u32 [#allocation15], 4
      %s139 = int_to_ptr.vmem [resolvable:$true] %s138
      %141 = dma.hbm_to_vmem [thread:$0]  %s10, 16, %s139, [#allocation14]
    $region45: #{tpu_custom_call.1} parent=1 // pred_fallthru
      _
    // Predicated region
    $region46: #{tpu_custom_call.1} parent=1 // pred_check
      _
    $region47: #{tpu_custom_call.1} parent=1 // pred_check_branch
      %143 = sbr.rel (0) target = $region49
    $region48: #{tpu_custom_call.1} parent=1 // pred_region
      %s145 = ssub.s32 16, 16
      %146 = vsyncadd [#allocation17], %s145
      %s148 = sshll.u32 [#allocation16], 4
      %s149 = int_to_ptr.vmem [resolvable:$true] %s148
      %151 = dma.hbm_to_vmem [thread:$0]  %s11, 16, %s149, [#allocation17]
    $region49: #{tpu_custom_call.1} parent=1 // pred_fallthru
      _
    // Predicated region
    $region50: #{tpu_custom_call.1} parent=1 // pred_check
      _
    $region51: #{tpu_custom_call.1} parent=1 // pred_check_branch
      %153 = sbr.rel (0) target = $region53
    $region52: #{tpu_custom_call.1} parent=1 // pred_region
      %s155 = ssub.s32 16, 16
      %156 = vsyncadd [#allocation17], %s155
      %s158 = sshll.u32 [#allocation18], 4
      %s159 = int_to_ptr.vmem [resolvable:$true] %s158
      %161 = dma.hbm_to_vmem [thread:$0]  %s12, 16, %s159, [#allocation17]
    $region53: #{tpu_custom_call.1} parent=1 // pred_fallthru
      _
    // Predicated region
    $region54: #{tpu_custom_call.1} parent=1 // pred_check
      _
    $region55: #{tpu_custom_call.1} parent=1 // pred_check_branch
      %163 = sbr.rel (0) target = $region57
    $region56: #{tpu_custom_call.1} parent=1 // pred_region
      _
    $region57: #{tpu_custom_call.1} parent=1 // pred_fallthru
      _
    // Predicated region
    $region58: #{tpu_custom_call.1} parent=1 // pred_check
      _
    $region59: #{tpu_custom_call.1} parent=1 // pred_check_branch
      %165 = sbr.rel (0) target = $region61
    $region60: #{tpu_custom_call.1} parent=1 // pred_region
      _
    $region61: #{tpu_custom_call.1} parent=1 // pred_fallthru
      _
    // Predicated region
    $region62: #{tpu_custom_call.1} parent=1 // pred_check
      _
    $region63: #{tpu_custom_call.1} parent=1 // pred_check_branch
      %167 = sbr.rel (0) target = $region65
    $region64: #{tpu_custom_call.1} parent=1 // pred_region
      _
    $region65: #{tpu_custom_call.1} parent=1 // pred_fallthru
      _
    // Predicated region
    $region66: #{tpu_custom_call.1} parent=1 // pred_check
      _
    $region67: #{tpu_custom_call.1} parent=1 // pred_check_branch
      %169 = sbr.rel (0) target = $region69
    $region68: #{tpu_custom_call.1} parent=1 // pred_region
      %s171 = ssub.s32 16, 16
      %172 = vsyncadd [#allocation20], %s171
      %s174 = sshll.u32 [#allocation19], 4
      %s175 = int_to_ptr.vmem [resolvable:$true] %s174
      %177 = dma.hbm_to_vmem [thread:$0]  %s16, 16, %s175, [#allocation20]
    $region69: #{tpu_custom_call.1} parent=1 // pred_fallthru
      _
    // Predicated region
    $region70: #{tpu_custom_call.1} parent=1 // pred_check
      _
    $region71: #{tpu_custom_call.1} parent=1 // pred_check_branch
      %179 = sbr.rel (0) target = $region73
    $region72: #{tpu_custom_call.1} parent=1 // pred_region
      %s181 = ssub.s32 16, 16
      %182 = vsyncadd [#allocation20], %s181
      %s184 = sshll.u32 [#allocation21], 4
      %s185 = int_to_ptr.vmem [resolvable:$true] %s184
      %187 = dma.hbm_to_vmem [thread:$0]  %s17, 16, %s185, [#allocation20]
    $region73: #{tpu_custom_call.1} parent=1 // pred_fallthru
      _
    // Predicated region
    $region74: #{tpu_custom_call.1} parent=1 // pred_check
      _
    $region75: #{tpu_custom_call.1} parent=1 // pred_check_branch
      %189 = sbr.rel (0) target = $region77
    $region76: #{tpu_custom_call.1} parent=1 // pred_region
      %s191 = ssub.s32 16, 16
      %192 = vsyncadd [#allocation23], %s191
      %s194 = sshll.u32 [#allocation22], 4
      %s195 = int_to_ptr.vmem [resolvable:$true] %s194
      %197 = dma.hbm_to_vmem [thread:$0]  %s18, 16, %s195, [#allocation23]
    $region77: #{tpu_custom_call.1} parent=1 // pred_fallthru
      _
    // Predicated region
    $region78: #{tpu_custom_call.1} parent=1 // pred_check
      _
    $region79: #{tpu_custom_call.1} parent=1 // pred_check_branch
      %199 = sbr.rel (0) target = $region81
    $region80: #{tpu_custom_call.1} parent=1 // pred_region
      %s201 = ssub.s32 256, 256
      %202 = vsyncadd [#allocation23], %s201
      %s203 = sshll.u32 [#allocation24], 4
      %s204 = int_to_ptr.vmem [resolvable:$true] %s203
      %209 = dma.hbm_to_vmem [thread:$0]  %s19, 256, %s204, [#allocation23], 128, 128, 8
    $region81: #{tpu_custom_call.1} parent=1 // pred_fallthru
      _
    // Predicated region
    $region82: #{tpu_custom_call.1} parent=1 // pred_check
      _
    $region83: #{tpu_custom_call.1} parent=1 // pred_check_branch
      %211 = sbr.rel (0) target = $region85
    $region84: #{tpu_custom_call.1} parent=1 // pred_region
      %s213 = ssub.s32 16, 16
      %214 = vsyncadd [#allocation26], %s213
      %s216 = sshll.u32 [#allocation25], 4
      %s217 = int_to_ptr.vmem [resolvable:$true] %s216
      %219 = dma.hbm_to_vmem [thread:$0]  %s20, 16, %s217, [#allocation26]
    $region85: #{tpu_custom_call.1} parent=1 // pred_fallthru
      _
    // Predicated region
    $region86: #{tpu_custom_call.1} parent=1 // pred_check
      _
    $region87: #{tpu_custom_call.1} parent=1 // pred_check_branch
      %221 = sbr.rel (0) target = $region89
    $region88: #{tpu_custom_call.1} parent=1 // pred_region
      _
    $region89: #{tpu_custom_call.1} parent=1 // pred_fallthru
      _
    // Predicated region
    $region90: #{tpu_custom_call.1} parent=1 // pred_check
      _
    $region91: #{tpu_custom_call.1} parent=1 // pred_check_branch
      %223 = sbr.rel (0) target = $region93
    $region92: #{tpu_custom_call.1} parent=1 // pred_region
      _
    $region93: #{tpu_custom_call.1} parent=1 // pred_fallthru
      _
    // Predicated region
    $region94: #{tpu_custom_call.1} parent=1 // pred_check
      _
    $region95: #{tpu_custom_call.1} parent=1 // pred_check_branch
      %225 = sbr.rel (0) target = $region97
    $region96: #{tpu_custom_call.1} parent=1 // pred_region
      _
    $region97: #{tpu_custom_call.1} parent=1 // pred_fallthru
      _
    // Predicated region
    $region98: #{tpu_custom_call.1} parent=1 // pred_check
      _
    $region99: #{tpu_custom_call.1} parent=1 // pred_check_branch
      %227 = sbr.rel (0) target = $region101
    $region100: #{tpu_custom_call.1} parent=1 // pred_region
      %228 = dma.done [#allocation3], 256
    $region101: #{tpu_custom_call.1} parent=1 // pred_fallthru
      _
    // Predicated region
    $region102: #{tpu_custom_call.1} parent=1 // pred_check
      _
    $region103: #{tpu_custom_call.1} parent=1 // pred_check_branch
      %230 = sbr.rel (0) target = $region105
    $region104: #{tpu_custom_call.1} parent=1 // pred_region
      %231 = dma.done [#allocation5], 32
    $region105: #{tpu_custom_call.1} parent=1 // pred_fallthru
      _
    // Predicated region
    $region106: #{tpu_custom_call.1} parent=1 // pred_check
      _
    $region107: #{tpu_custom_call.1} parent=1 // pred_check_branch
      %233 = sbr.rel (0) target = $region109
    $region108: #{tpu_custom_call.1} parent=1 // pred_region
      %234 = dma.done [#allocation5], 16
    $region109: #{tpu_custom_call.1} parent=1 // pred_fallthru
      _
    // Predicated region
    $region110: #{tpu_custom_call.1} parent=1 // pred_check
      _
    $region111: #{tpu_custom_call.1} parent=1 // pred_check_branch
      %236 = sbr.rel (0) target = $region113
    $region112: #{tpu_custom_call.1} parent=1 // pred_region
      %237 = dma.done [#allocation8], 256
    $region113: #{tpu_custom_call.1} parent=1 // pred_fallthru
      _
    // Predicated region
    $region114: #{tpu_custom_call.1} parent=1 // pred_check
      _
    $region115: #{tpu_custom_call.1} parent=1 // pred_check_branch
      %239 = sbr.rel (0) target = $region117
    $region116: #{tpu_custom_call.1} parent=1 // pred_region
      %240 = dma.done [#allocation8], 16
    $region117: #{tpu_custom_call.1} parent=1 // pred_fallthru
      _
    // Predicated region
    $region118: #{tpu_custom_call.1} parent=1 // pred_check
      _
    $region119: #{tpu_custom_call.1} parent=1 // pred_check_branch
      %242 = sbr.rel (0) target = $region121
    $region120: #{tpu_custom_call.1} parent=1 // pred_region
      %243 = dma.done [#allocation11], 256
    $region121: #{tpu_custom_call.1} parent=1 // pred_fallthru
      _
    // Predicated region
    $region122: #{tpu_custom_call.1} parent=1 // pred_check
      _
    $region123: #{tpu_custom_call.1} parent=1 // pred_check_branch
      %245 = sbr.rel (0) target = $region125
    $region124: #{tpu_custom_call.1} parent=1 // pred_region
      %246 = dma.done [#allocation11], 256
    $region125: #{tpu_custom_call.1} parent=1 // pred_fallthru
      _
    // Predicated region
    $region126: #{tpu_custom_call.1} parent=1 // pred_check
      _
    $region127: #{tpu_custom_call.1} parent=1 // pred_check_branch
      %248 = sbr.rel (0) target = $region129
    $region128: #{tpu_custom_call.1} parent=1 // pred_region
      %249 = dma.done [#allocation14], 256
    $region129: #{tpu_custom_call.1} parent=1 // pred_fallthru
      _
    // Predicated region
    $region130: #{tpu_custom_call.1} parent=1 // pred_check
      _
    $region131: #{tpu_custom_call.1} parent=1 // pred_check_branch
      %251 = sbr.rel (0) target = $region133
    $region132: #{tpu_custom_call.1} parent=1 // pred_region
      %252 = dma.done [#allocation14], 16
    $region133: #{tpu_custom_call.1} parent=1 // pred_fallthru
      _
    // Predicated region
    $region134: #{tpu_custom_call.1} parent=1 // pred_check
      _
    $region135: #{tpu_custom_call.1} parent=1 // pred_check_branch
      %254 = sbr.rel (0) target = $region137
    $region136: #{tpu_custom_call.1} parent=1 // pred_region
      %255 = dma.done [#allocation17], 16
    $region137: #{tpu_custom_call.1} parent=1 // pred_fallthru
      _
    // Predicated region
    $region138: #{tpu_custom_call.1} parent=1 // pred_check
      _
    $region139: #{tpu_custom_call.1} parent=1 // pred_check_branch
      %257 = sbr.rel (0) target = $region141
    $region140: #{tpu_custom_call.1} parent=1 // pred_region
      %258 = dma.done [#allocation17], 16
    $region141: #{tpu_custom_call.1} parent=1 // pred_fallthru
      _
    // Predicated region
    $region142: #{tpu_custom_call.1} parent=1 // pred_check
      _
    $region143: #{tpu_custom_call.1} parent=1 // pred_check_branch
      %260 = sbr.rel (0) target = $region145
    $region144: #{tpu_custom_call.1} parent=1 // pred_region
      %261 = dma.done [#allocation20], 16
    $region145: #{tpu_custom_call.1} parent=1 // pred_fallthru
      _
    // Predicated region
    $region146: #{tpu_custom_call.1} parent=1 // pred_check
      _
    $region147: #{tpu_custom_call.1} parent=1 // pred_check_branch
      %263 = sbr.rel (0) target = $region149
    $region148: #{tpu_custom_call.1} parent=1 // pred_region
      %264 = dma.done [#allocation20], 16
    $region149: #{tpu_custom_call.1} parent=1 // pred_fallthru
      _
    // Predicated region
    $region150: #{tpu_custom_call.1} parent=1 // pred_check
      _
    $region151: #{tpu_custom_call.1} parent=1 // pred_check_branch
      %266 = sbr.rel (0) target = $region153
    $region152: #{tpu_custom_call.1} parent=1 // pred_region
      %267 = dma.done [#allocation23], 16
    $region153: #{tpu_custom_call.1} parent=1 // pred_fallthru
      _
    // Predicated region
    $region154: #{tpu_custom_call.1} parent=1 // pred_check
      _
    $region155: #{tpu_custom_call.1} parent=1 // pred_check_branch
      %269 = sbr.rel (0) target = $region157
    $region156: #{tpu_custom_call.1} parent=1 // pred_region
      %270 = dma.done [#allocation23], 256
    $region157: #{tpu_custom_call.1} parent=1 // pred_fallthru
      _
    // Predicated region
    $region158: #{tpu_custom_call.1} parent=1 // pred_check
      _
    $region159: #{tpu_custom_call.1} parent=1 // pred_check_branch
      %272 = sbr.rel (0) target = $region161
    $region160: #{tpu_custom_call.1} parent=1 // pred_region
      %273 = dma.done [#allocation26], 16
    $region161: #{tpu_custom_call.1} parent=1 // pred_fallthru
      _
    %v274 = vld [vmem:[#allocation7] sm:$0xff]
    %v275 = vld [vmem:[#allocation7 + $0x8] sm:$0xf]
    %v276 = vld [vmem:[#allocation10] sm:$0xff]
    %v277 = vld [vmem:[#allocation10 + $0x8] sm:$0xff]
    %v278 = vld [vmem:[#allocation12] sm:$0xff]
    %v279 = vld [vmem:[#allocation12 + $0x8] sm:$0xff]
    %v280 = vld [vmem:[#allocation13] sm:$0xff]
    %v281 = vld [vmem:[#allocation13 + $0x8] sm:$0xff]
    %v282 = vld [vmem:[%s13] sm:$0xff]
    %v283 = vld [vmem:[%s13 + $0x8] sm:$0xff]
    %v284 = vld [vmem:[%s13 + $0x10] sm:$0xff]
    %v285 = vld [vmem:[%s13 + $0x18] sm:$0xff]
    %v286 = vld [vmem:[%s14] sm:$0xff]
    %v287 = vld [vmem:[%s14 + $0x8] sm:$0xff]
    %v288 = vld [vmem:[%s14 + $0x10] sm:$0xff]
    %v289 = vld [vmem:[%s14 + $0x18] sm:$0xff]
    %v290 = vld [vmem:[%s15] sm:$0xff]
    %v291 = vld [vmem:[%s15 + $0x8] sm:$0xff]
    %v292 = vld [vmem:[%s15 + $0x10] sm:$0xff]
    %v293 = vld [vmem:[%s15 + $0x18] sm:$0xff]
    %v294 = vld [vmem:[%s21] sm:$0xff]
    %v295 = vld [vmem:[%s21 + $0x8] sm:$0xff]
    %v296 = vld [vmem:[%s21 + $0x10] sm:$0xff]
    %v297 = vld [vmem:[%s21 + $0x18] sm:$0xff]
    %v298 = vld [vmem:[%s22] sm:$0xff]
    %v299 = vld [vmem:[%s22 + $0x8] sm:$0xff]
    %v300 = vld [vmem:[%s22 + $0x10] sm:$0xff]
    %v301 = vld [vmem:[%s22 + $0x18] sm:$0xff]
    %v302 = vld [vmem:[#allocation9] sm:$0x1]
    %v304 = vlaneseq
    %v305 = vshrl.u32 %v304, 7
    %v306 = vsub.s32 0, %v305
    %v307 = vrot.slane %v302, %v306
    %v309 = vld [vmem:[#allocation15] sm:$0x1]
    %v311 = vlaneseq
    %v312 = vshrl.u32 %v311, 7
    %v313 = vsub.s32 0, %v312
    %v314 = vrot.slane %v309, %v313
    %v316 = vld [vmem:[#allocation16] sm:$0x1]
    %v318 = vlaneseq
    %v319 = vshrl.u32 %v318, 7
    %v320 = vsub.s32 0, %v319
    %v321 = vrot.slane %v316, %v320
    %v323 = vld [vmem:[#allocation18] sm:$0x1]
    %v325 = vlaneseq
    %v326 = vshrl.u32 %v325, 7
    %v327 = vsub.s32 0, %v326
    %v328 = vrot.slane %v323, %v327
    %v330 = vld [vmem:[#allocation19] sm:$0x1]
    %v332 = vlaneseq
    %v333 = vshrl.u32 %v332, 7
    %v334 = vsub.s32 0, %v333
    %v335 = vrot.slane %v330, %v334
    %v337 = vld [vmem:[#allocation21] sm:$0x1]
    %v339 = vlaneseq
    %v340 = vshrl.u32 %v339, 7
    %v341 = vsub.s32 0, %v340
    %v342 = vrot.slane %v337, %v341
    %v344 = vld [vmem:[#allocation22] sm:$0x1]
    %v346 = vlaneseq
    %v347 = vshrl.u32 %v346, 7
    %v348 = vsub.s32 0, %v347
    %v349 = vrot.slane %v344, %v348
    %v351 = vld [vmem:[%s23] sm:$0x1]
    %v353 = vlaneseq
    %v354 = vshrl.u32 %v353, 7
    %v355 = vsub.s32 0, %v354
    %v356 = vrot.slane %v351, %v355
    %v358 = vld [vmem:[#allocation4] sm:$0x3]
    %v359 = vld [vmem:[%s3] sm:$0xff]
    %v360 = vld [vmem:[%s3 + $0x8] sm:$0xff]
    %v361 = vld [vmem:[%s3 + $0x10] sm:$0xff]
    %v362 = vld [vmem:[%s3 + $0x18] sm:$0xff]
    %v363 = vld [vmem:[#allocation6] sm:$0x1]
    %v365 = vlaneseq
    %v366 = vshrl.u32 %v365, 7
    %v367 = vsub.s32 0, %v366
    %v368 = vrot.slane %v363, %v367
    %vm370 = vcmask 261120
    %v372 = vsel %vm370, %v358, 0
    %374 = vmatprep.subr.mxu0 0.0
    %375 = vmatpush1.msra.mxu0 0.0
    %376 = vmatprep.subr.mxu0 0.0
    %377 = vmatpush1.msra.mxu0 0.0
    %378 = vmatprep.subr.mxu0 0.0
    %379 = vmatpush1.msra.mxu0 0.0
    %380 = vmatprep.subr.mxu0 0.0
    %381 = vmatpush1.msra.mxu0 0.0
    %382 = vmatprep.subr.mxu0 0.0
    %383 = vmatpush1.msra.mxu0 0.0
    %384 = vmatprep.subr.mxu0 0.0
    %385 = vmatpush1.msra.mxu0 0.0
    %386 = vmatprep.subr.mxu0 0.0
    %387 = vmatpush1.msra.mxu0 0.0
    %388 = vmatprep.subr.mxu0 0.0
    %389 = vmatpush1.msra.mxu0 0.0
    %390 = vmatprep.subr.mxu0 0.0
    %391 = vmatpush1.msra.mxu0 0.0
    %392 = vmatprep.subr.mxu0 0.0
    %393 = vmatpush1.msra.mxu0 0.0
    %394 = vmatprep.subr.mxu0 0.0
    %395 = vmatpush1.msra.mxu0 0.0
    %396 = vmatprep.subr.mxu0 0.0
    %397 = vmatpush1.msra.mxu0 0.0
    %398 = vmatprep.subr.mxu0 0.0
    %399 = vmatpush1.msra.mxu0 %v362
    %400 = vmatprep.subr.mxu0 0.0
    %401 = vmatpush1.msra.mxu0 %v361
    %402 = vmatprep.subr.mxu0 0.0
    %403 = vmatpush1.msra.mxu0 %v360
    %404 = vmatprep.subr.mxu0 0.0
    %405 = vmatpush1.msra.mxu0 %v359
    %406 = vmatprep.subr.mxu0 0.0
    %407 = vmatpush2.msra.mxu0 0.0
    %408 = vmatprep.subr.mxu0 0.0
    %409 = vmatpush2.msra.mxu0 0.0
    %410 = vmatprep.subr.mxu0 0.0
    %411 = vmatpush2.msra.mxu0 0.0
    %412 = vmatprep.subr.mxu0 0.0
    %413 = vmatpush2.msra.mxu0 0.0
    %414 = vmatprep.subr.mxu0 0.0
    %415 = vmatpush2.msra.mxu0 0.0
    %416 = vmatprep.subr.mxu0 0.0
    %417 = vmatpush2.msra.mxu0 0.0
    %418 = vmatprep.subr.mxu0 0.0
    %419 = vmatpush2.msra.mxu0 0.0
    %420 = vmatprep.subr.mxu0 0.0
    %421 = vmatpush2.msra.mxu0 0.0
    %422 = vmatprep.subr.mxu0 0.0
    %423 = vmatpush2.msra.mxu0 0.0
    %424 = vmatprep.subr.mxu0 0.0
    %425 = vmatpush2.msra.mxu0 0.0
    %426 = vmatprep.subr.mxu0 0.0
    %427 = vmatpush2.msra.mxu0 0.0
    %428 = vmatprep.subr.mxu0 0.0
    %429 = vmatpush2.msra.mxu0 0.0
    %430 = vmatprep.subr.mxu0 0.0
    %431 = vmatpush2.msra.mxu0 0.0
    %432 = vmatprep.subr.mxu0 0.0
    %433 = vmatpush2.msra.mxu0 0.0
    %434 = vmatprep.subr.mxu0 0.0
    %435 = vmatpush2.msra.mxu0 0.0
    %436 = vmatprep.subr.mxu0 0.0
    %437 = vmatpush2.msra.mxu0 0.0
    %438 = vmatprep.mubr.f32.mxu0 0.0
    %439 = vmatmul.mubr.f32.gmra.mxu0 %v372
    %v440 = vpop.f32.mrf.mxu0
    %v441 = vadd.f32 %v368, %v440
    %v442 = vpop.f32.mrf.mxu0
    %443 = vdwg.mxu0
    %v444 = vld [vmem:[#allocation2] sm:$0xff]
    %v445 = vld [vmem:[#allocation2 + $0x8] sm:$0xff]
    %v446 = vld [vmem:[#allocation24] sm:$0xff]
    %v447 = vld [vmem:[#allocation24 + $0x8] sm:$0xff]
    %v448 = vld [vmem:[#allocation25] sm:$0x1]
    %v450 = vlaneseq
    %v451 = vshrl.u32 %v450, 7
    %v452 = vsub.s32 0, %v451
    %v453 = vrot.slane %v448, %v452
    %vm455 = vcmask 130048
    %v457 = vsel %vm455, %v444, 0
    %v460 = vsel %vm455, %v445, 0
    %462 = vmatprep.subr.mxu0 0.0
    %463 = vmatpush1.msra.mxu0 0.0
    %464 = vmatprep.subr.mxu0 0.0
    %465 = vmatpush1.msra.mxu0 0.0
    %466 = vmatprep.subr.mxu0 0.0
    %467 = vmatpush1.msra.mxu0 0.0
    %468 = vmatprep.subr.mxu0 0.0
    %469 = vmatpush1.msra.mxu0 0.0
    %470 = vmatprep.subr.mxu0 0.0
    %471 = vmatpush1.msra.mxu0 0.0
    %472 = vmatprep.subr.mxu0 0.0
    %473 = vmatpush1.msra.mxu0 0.0
    %474 = vmatprep.subr.mxu0 0.0
    %475 = vmatpush1.msra.mxu0 0.0
    %476 = vmatprep.subr.mxu0 0.0
    %477 = vmatpush1.msra.mxu0 0.0
    %478 = vmatprep.subr.mxu0 0.0
    %479 = vmatpush1.msra.mxu0 0.0
    %480 = vmatprep.subr.mxu0 0.0
    %481 = vmatpush1.msra.mxu0 0.0
    %482 = vmatprep.subr.mxu0 0.0
    %483 = vmatpush1.msra.mxu0 0.0
    %484 = vmatprep.subr.mxu0 0.0
    %485 = vmatpush1.msra.mxu0 0.0
    %486 = vmatprep.subr.mxu0 0.0
    %487 = vmatpush1.msra.mxu0 0.0
    %488 = vmatprep.subr.mxu0 0.0
    %489 = vmatpush1.msra.mxu0 0.0
    %490 = vmatprep.subr.mxu0 0.0
    %491 = vmatpush1.msra.mxu0 %v447
    %492 = vmatprep.subr.mxu0 0.0
    %493 = vmatpush1.msra.mxu0 %v446
    %494 = vmatprep.subr.mxu0 0.0
    %495 = vmatpush2.msra.mxu0 0.0
    %496 = vmatprep.subr.mxu0 0.0
    %497 = vmatpush2.msra.mxu0 0.0
    %498 = vmatprep.subr.mxu0 0.0
    %499 = vmatpush2.msra.mxu0 0.0
    %500 = vmatprep.subr.mxu0 0.0
    %501 = vmatpush2.msra.mxu0 0.0
    %502 = vmatprep.subr.mxu0 0.0
    %503 = vmatpush2.msra.mxu0 0.0
    %504 = vmatprep.subr.mxu0 0.0
    %505 = vmatpush2.msra.mxu0 0.0
    %506 = vmatprep.subr.mxu0 0.0
    %507 = vmatpush2.msra.mxu0 0.0
    %508 = vmatprep.subr.mxu0 0.0
    %509 = vmatpush2.msra.mxu0 0.0
    %510 = vmatprep.subr.mxu0 0.0
    %511 = vmatpush2.msra.mxu0 0.0
    %512 = vmatprep.subr.mxu0 0.0
    %513 = vmatpush2.msra.mxu0 0.0
    %514 = vmatprep.subr.mxu0 0.0
    %515 = vmatpush2.msra.mxu0 0.0
    %516 = vmatprep.subr.mxu0 0.0
    %517 = vmatpush2.msra.mxu0 0.0
    %518 = vmatprep.subr.mxu0 0.0
    %519 = vmatpush2.msra.mxu0 0.0
    %520 = vmatprep.subr.mxu0 0.0
    %521 = vmatpush2.msra.mxu0 0.0
    %522 = vmatprep.subr.mxu0 0.0
    %523 = vmatpush2.msra.mxu0 0.0
    %524 = vmatprep.subr.mxu0 0.0
    %525 = vmatpush2.msra.mxu0 0.0
    %526 = vmatprep.mubr.f32.mxu0 0.0
    %527 = vmatmul.mubr.f32.gmra.mxu0 %v457
    %v528 = vpop.f32.mrf.mxu0
    %v529 = vadd.f32 %v453, %v528
    %v530 = vpop.f32.mrf.mxu0
    %531 = vmatprep.mubr.f32.mxu0 0.0
    %532 = vmatmul.mubr.f32.gmra.mxu0 %v460
    %v533 = vpop.f32.mrf.mxu0
    %v534 = vadd.f32 %v453, %v533
    %v535 = vpop.f32.mrf.mxu0
    %536 = vdwg.mxu0
    %v537 = vld [vmem:[%s2] sm:$0x1f]
    %v538 = vld [vmem:[%s2 + $0x8] sm:$0x1f]
    %v541 = vcombine.low %v537, %v538
    %vm542 = vcmask 97280
    %v543 = vsel %vm542, %v541, 0
    %vm545 = vcmask 1043456
    %v547 = vsel %vm545, %v275, 0
    %549 = vmatprep.subr.mxu0 0.0
    %550 = vmatpush1.msra.mxu0 0.0
    %551 = vmatprep.subr.mxu0 0.0
    %552 = vmatpush1.msra.mxu0 0.0
    %553 = vmatprep.subr.mxu0 0.0
    %554 = vmatpush1.msra.mxu0 0.0
    %555 = vmatprep.subr.mxu0 0.0
    %556 = vmatpush1.msra.mxu0 0.0
    %557 = vmatprep.subr.mxu0 0.0
    %558 = vmatpush1.msra.mxu0 0.0
    %559 = vmatprep.subr.mxu0 0.0
    %560 = vmatpush1.msra.mxu0 0.0
    %561 = vmatprep.subr.mxu0 0.0
    %562 = vmatpush1.msra.mxu0 0.0
    %563 = vmatprep.subr.mxu0 0.0
    %564 = vmatpush1.msra.mxu0 0.0
    %565 = vmatprep.subr.mxu0 0.0
    %566 = vmatpush1.msra.mxu0 0.0
    %567 = vmatprep.subr.mxu0 0.0
    %568 = vmatpush1.msra.mxu0 0.0
    %569 = vmatprep.subr.mxu0 0.0
    %570 = vmatpush1.msra.mxu0 0.0
    %571 = vmatprep.subr.mxu0 0.0
    %572 = vmatpush1.msra.mxu0 0.0
    %573 = vmatprep.subr.mxu0 0.0
    %574 = vmatpush1.msra.mxu0 0.0
    %575 = vmatprep.subr.mxu0 0.0
    %576 = vmatpush1.msra.mxu0 0.0
    %577 = vmatprep.subr.mxu0 0.0
    %578 = vmatpush1.msra.mxu0 %v547
    %579 = vmatprep.subr.mxu0 0.0
    %580 = vmatpush1.msra.mxu0 %v274
    %581 = vmatprep.subr.mxu0 0.0
    %582 = vmatpush2.msra.mxu0 0.0
    %583 = vmatprep.subr.mxu0 0.0
    %584 = vmatpush2.msra.mxu0 0.0
    %585 = vmatprep.subr.mxu0 0.0
    %586 = vmatpush2.msra.mxu0 0.0
    %587 = vmatprep.subr.mxu0 0.0
    %588 = vmatpush2.msra.mxu0 0.0
    %589 = vmatprep.subr.mxu0 0.0
    %590 = vmatpush2.msra.mxu0 0.0
    %591 = vmatprep.subr.mxu0 0.0
    %592 = vmatpush2.msra.mxu0 0.0
    %593 = vmatprep.subr.mxu0 0.0
    %594 = vmatpush2.msra.mxu0 0.0
    %595 = vmatprep.subr.mxu0 0.0
    %596 = vmatpush2.msra.mxu0 0.0
    %597 = vmatprep.subr.mxu0 0.0
    %598 = vmatpush2.msra.mxu0 0.0
    %599 = vmatprep.subr.mxu0 0.0
    %600 = vmatpush2.msra.mxu0 0.0
    %601 = vmatprep.subr.mxu0 0.0
    %602 = vmatpush2.msra.mxu0 0.0
    %603 = vmatprep.subr.mxu0 0.0
    %604 = vmatpush2.msra.mxu0 0.0
    %605 = vmatprep.subr.mxu0 0.0
    %606 = vmatpush2.msra.mxu0 0.0
    %607 = vmatprep.subr.mxu0 0.0
    %608 = vmatpush2.msra.mxu0 0.0
    %609 = vmatprep.subr.mxu0 0.0
    %610 = vmatpush2.msra.mxu0 0.0
    %611 = vmatprep.subr.mxu0 0.0
    %612 = vmatpush2.msra.mxu0 0.0
    %613 = vmatprep.mubr.f32.mxu0 0.0
    %614 = vmatmul.mubr.f32.gmra.mxu0 %v543
    %v615 = vpop.f32.mrf.mxu0
    %v616 = vadd.f32 %v307, %v615
    %v617 = vpop.f32.mrf.mxu0
    %618 = vdwg.mxu0
    %v619 = vmax.f32 %v616, 0.0
    %v621 = vsel %vm455, %v619, 0
    %623 = vmatprep.subr.mxu0 0.0
    %624 = vmatpush1.msra.mxu0 0.0
    %625 = vmatprep.subr.mxu0 0.0
    %626 = vmatpush1.msra.mxu0 0.0
    %627 = vmatprep.subr.mxu0 0.0
    %628 = vmatpush1.msra.mxu0 0.0
    %629 = vmatprep.subr.mxu0 0.0
    %630 = vmatpush1.msra.mxu0 0.0
    %631 = vmatprep.subr.mxu0 0.0
    %632 = vmatpush1.msra.mxu0 0.0
    %633 = vmatprep.subr.mxu0 0.0
    %634 = vmatpush1.msra.mxu0 0.0
    %635 = vmatprep.subr.mxu0 0.0
    %636 = vmatpush1.msra.mxu0 0.0
    %637 = vmatprep.subr.mxu0 0.0
    %638 = vmatpush1.msra.mxu0 0.0
    %639 = vmatprep.subr.mxu0 0.0
    %640 = vmatpush1.msra.mxu0 0.0
    %641 = vmatprep.subr.mxu0 0.0
    %642 = vmatpush1.msra.mxu0 0.0
    %643 = vmatprep.subr.mxu0 0.0
    %644 = vmatpush1.msra.mxu0 0.0
    %645 = vmatprep.subr.mxu0 0.0
    %646 = vmatpush1.msra.mxu0 0.0
    %647 = vmatprep.subr.mxu0 0.0
    %648 = vmatpush1.msra.mxu0 0.0
    %649 = vmatprep.subr.mxu0 0.0
    %650 = vmatpush1.msra.mxu0 0.0
    %651 = vmatprep.subr.mxu0 0.0
    %652 = vmatpush1.msra.mxu0 %v277
    %653 = vmatprep.subr.mxu0 0.0
    %654 = vmatpush1.msra.mxu0 %v276
    %655 = vmatprep.subr.mxu0 0.0
    %656 = vmatpush2.msra.mxu0 0.0
    %657 = vmatprep.subr.mxu0 0.0
    %658 = vmatpush2.msra.mxu0 0.0
    %659 = vmatprep.subr.mxu0 0.0
    %660 = vmatpush2.msra.mxu0 0.0
    %661 = vmatprep.subr.mxu0 0.0
    %662 = vmatpush2.msra.mxu0 0.0
    %663 = vmatprep.subr.mxu0 0.0
    %664 = vmatpush2.msra.mxu0 0.0
    %665 = vmatprep.subr.mxu0 0.0
    %666 = vmatpush2.msra.mxu0 0.0
    %667 = vmatprep.subr.mxu0 0.0
    %668 = vmatpush2.msra.mxu0 0.0
    %669 = vmatprep.subr.mxu0 0.0
    %670 = vmatpush2.msra.mxu0 0.0
    %671 = vmatprep.subr.mxu0 0.0
    %672 = vmatpush2.msra.mxu0 0.0
    %673 = vmatprep.subr.mxu0 0.0
    %674 = vmatpush2.msra.mxu0 0.0
    %675 = vmatprep.subr.mxu0 0.0
    %676 = vmatpush2.msra.mxu0 0.0
    %677 = vmatprep.subr.mxu0 0.0
    %678 = vmatpush2.msra.mxu0 0.0
    %679 = vmatprep.subr.mxu0 0.0
    %680 = vmatpush2.msra.mxu0 0.0
    %681 = vmatprep.subr.mxu0 0.0
    %682 = vmatpush2.msra.mxu0 0.0
    %683 = vmatprep.subr.mxu0 0.0
    %684 = vmatpush2.msra.mxu0 0.0
    %685 = vmatprep.subr.mxu0 0.0
    %686 = vmatpush2.msra.mxu0 0.0
    %687 = vmatprep.mubr.f32.mxu0 0.0
    %688 = vmatmul.mubr.f32.gmra.mxu0 %v621
    %v689 = vpop.f32.mrf.mxu0
    %v690 = vadd.f32 %v314, %v689
    %v691 = vpop.f32.mrf.mxu0
    %692 = vdwg.mxu0
    %v694 = vcombine.high %v690, %v690
    %696 = vmatprep.subr.mxu0 0.0
    %697 = vmatpush1.msra.mxu0 0.0
    %698 = vmatprep.subr.mxu0 0.0
    %699 = vmatpush1.msra.mxu0 0.0
    %700 = vmatprep.subr.mxu0 0.0
    %701 = vmatpush1.msra.mxu0 0.0
    %702 = vmatprep.subr.mxu0 0.0
    %703 = vmatpush1.msra.mxu0 0.0
    %704 = vmatprep.subr.mxu0 0.0
    %705 = vmatpush1.msra.mxu0 0.0
    %706 = vmatprep.subr.mxu0 0.0
    %707 = vmatpush1.msra.mxu0 0.0
    %708 = vmatprep.subr.mxu0 0.0
    %709 = vmatpush1.msra.mxu0 0.0
    %710 = vmatprep.subr.mxu0 0.0
    %711 = vmatpush1.msra.mxu0 0.0
    %712 = vmatprep.subr.mxu0 0.0
    %713 = vmatpush1.msra.mxu0 0.0
    %714 = vmatprep.subr.mxu0 0.0
    %715 = vmatpush1.msra.mxu0 0.0
    %716 = vmatprep.subr.mxu0 0.0
    %717 = vmatpush1.msra.mxu0 0.0
    %718 = vmatprep.subr.mxu0 0.0
    %719 = vmatpush1.msra.mxu0 0.0
    %720 = vmatprep.subr.mxu0 0.0
    %721 = vmatpush1.msra.mxu0 0.0
    %722 = vmatprep.subr.mxu0 0.0
    %723 = vmatpush1.msra.mxu0 0.0
    %724 = vmatprep.subr.mxu0 0.0
    %725 = vmatpush1.msra.mxu0 %v279
    %726 = vmatprep.subr.mxu0 0.0
    %727 = vmatpush1.msra.mxu0 %v278
    %728 = vmatprep.subr.mxu0 0.0
    %729 = vmatpush2.msra.mxu0 0.0
    %730 = vmatprep.subr.mxu0 0.0
    %731 = vmatpush2.msra.mxu0 0.0
    %732 = vmatprep.subr.mxu0 0.0
    %733 = vmatpush2.msra.mxu0 0.0
    %734 = vmatprep.subr.mxu0 0.0
    %735 = vmatpush2.msra.mxu0 0.0
    %736 = vmatprep.subr.mxu0 0.0
    %737 = vmatpush2.msra.mxu0 0.0
    %738 = vmatprep.subr.mxu0 0.0
    %739 = vmatpush2.msra.mxu0 0.0
    %740 = vmatprep.subr.mxu0 0.0
    %741 = vmatpush2.msra.mxu0 0.0
    %742 = vmatprep.subr.mxu0 0.0
    %743 = vmatpush2.msra.mxu0 0.0
    %744 = vmatprep.subr.mxu0 0.0
    %745 = vmatpush2.msra.mxu0 0.0
    %746 = vmatprep.subr.mxu0 0.0
    %747 = vmatpush2.msra.mxu0 0.0
    %748 = vmatprep.subr.mxu0 0.0
    %749 = vmatpush2.msra.mxu0 0.0
    %750 = vmatprep.subr.mxu0 0.0
    %751 = vmatpush2.msra.mxu0 0.0
    %752 = vmatprep.subr.mxu0 0.0
    %753 = vmatpush2.msra.mxu0 0.0
    %754 = vmatprep.subr.mxu0 0.0
    %755 = vmatpush2.msra.mxu0 0.0
    %756 = vmatprep.subr.mxu0 0.0
    %757 = vmatpush2.msra.mxu0 0.0
    %758 = vmatprep.subr.mxu0 0.0
    %759 = vmatpush2.msra.mxu0 0.0
    %760 = vmatprep.mubr.f32.mxu0 0.0
    %761 = vmatmul.mubr.f32.gmra.mxu0 %v621
    %v762 = vpop.f32.mrf.mxu0
    %v763 = vadd.f32 %v321, %v762
    %v764 = vpop.f32.mrf.mxu0
    %765 = vdwg.mxu0
    %v767 = vcombine.high %v763, %v763
    %769 = vmatprep.subr.mxu0 0.0
    %770 = vmatpush1.msra.mxu0 0.0
    %771 = vmatprep.subr.mxu0 0.0
    %772 = vmatpush1.msra.mxu0 0.0
    %773 = vmatprep.subr.mxu0 0.0
    %774 = vmatpush1.msra.mxu0 0.0
    %775 = vmatprep.subr.mxu0 0.0
    %776 = vmatpush1.msra.mxu0 0.0
    %777 = vmatprep.subr.mxu0 0.0
    %778 = vmatpush1.msra.mxu0 0.0
    %779 = vmatprep.subr.mxu0 0.0
    %780 = vmatpush1.msra.mxu0 0.0
    %781 = vmatprep.subr.mxu0 0.0
    %782 = vmatpush1.msra.mxu0 0.0
    %783 = vmatprep.subr.mxu0 0.0
    %784 = vmatpush1.msra.mxu0 0.0
    %785 = vmatprep.subr.mxu0 0.0
    %786 = vmatpush1.msra.mxu0 0.0
    %787 = vmatprep.subr.mxu0 0.0
    %788 = vmatpush1.msra.mxu0 0.0
    %789 = vmatprep.subr.mxu0 0.0
    %790 = vmatpush1.msra.mxu0 0.0
    %791 = vmatprep.subr.mxu0 0.0
    %792 = vmatpush1.msra.mxu0 0.0
    %793 = vmatprep.subr.mxu0 0.0
    %794 = vmatpush1.msra.mxu0 0.0
    %795 = vmatprep.subr.mxu0 0.0
    %796 = vmatpush1.msra.mxu0 0.0
    %797 = vmatprep.subr.mxu0 0.0
    %798 = vmatpush1.msra.mxu0 %v281
    %799 = vmatprep.subr.mxu0 0.0
    %800 = vmatpush1.msra.mxu0 %v280
    %801 = vmatprep.subr.mxu0 0.0
    %802 = vmatpush2.msra.mxu0 0.0
    %803 = vmatprep.subr.mxu0 0.0
    %804 = vmatpush2.msra.mxu0 0.0
    %805 = vmatprep.subr.mxu0 0.0
    %806 = vmatpush2.msra.mxu0 0.0
    %807 = vmatprep.subr.mxu0 0.0
    %808 = vmatpush2.msra.mxu0 0.0
    %809 = vmatprep.subr.mxu0 0.0
    %810 = vmatpush2.msra.mxu0 0.0
    %811 = vmatprep.subr.mxu0 0.0
    %812 = vmatpush2.msra.mxu0 0.0
    %813 = vmatprep.subr.mxu0 0.0
    %814 = vmatpush2.msra.mxu0 0.0
    %815 = vmatprep.subr.mxu0 0.0
    %816 = vmatpush2.msra.mxu0 0.0
    %817 = vmatprep.subr.mxu0 0.0
    %818 = vmatpush2.msra.mxu0 0.0
    %819 = vmatprep.subr.mxu0 0.0
    %820 = vmatpush2.msra.mxu0 0.0
    %821 = vmatprep.subr.mxu0 0.0
    %822 = vmatpush2.msra.mxu0 0.0
    %823 = vmatprep.subr.mxu0 0.0
    %824 = vmatpush2.msra.mxu0 0.0
    %825 = vmatprep.subr.mxu0 0.0
    %826 = vmatpush2.msra.mxu0 0.0
    %827 = vmatprep.subr.mxu0 0.0
    %828 = vmatpush2.msra.mxu0 0.0
    %829 = vmatprep.subr.mxu0 0.0
    %830 = vmatpush2.msra.mxu0 0.0
    %831 = vmatprep.subr.mxu0 0.0
    %832 = vmatpush2.msra.mxu0 0.0
    %833 = vmatprep.mubr.f32.mxu0 0.0
    %834 = vmatmul.mubr.f32.gmra.mxu0 %v621
    %v835 = vpop.f32.mrf.mxu0
    %v836 = vadd.f32 %v328, %v835
    %v837 = vpop.f32.mrf.mxu0
    %838 = vdwg.mxu0
    %v840 = vcombine.high %v836, %v836
    %v843 = vsel %vm370, %v441, 0
    %845 = vmatprep.subr.mxu0 0.0
    %846 = vmatpush1.msra.mxu0 0.0
    %847 = vmatprep.subr.mxu0 0.0
    %848 = vmatpush1.msra.mxu0 0.0
    %849 = vmatprep.subr.mxu0 0.0
    %850 = vmatpush1.msra.mxu0 0.0
    %851 = vmatprep.subr.mxu0 0.0
    %852 = vmatpush1.msra.mxu0 0.0
    %853 = vmatprep.subr.mxu0 0.0
    %854 = vmatpush1.msra.mxu0 0.0
    %855 = vmatprep.subr.mxu0 0.0
    %856 = vmatpush1.msra.mxu0 0.0
    %857 = vmatprep.subr.mxu0 0.0
    %858 = vmatpush1.msra.mxu0 0.0
    %859 = vmatprep.subr.mxu0 0.0
    %860 = vmatpush1.msra.mxu0 0.0
    %861 = vmatprep.subr.mxu0 0.0
    %862 = vmatpush1.msra.mxu0 0.0
    %863 = vmatprep.subr.mxu0 0.0
    %864 = vmatpush1.msra.mxu0 0.0
    %865 = vmatprep.subr.mxu0 0.0
    %866 = vmatpush1.msra.mxu0 0.0
    %867 = vmatprep.subr.mxu0 0.0
    %868 = vmatpush1.msra.mxu0 0.0
    %869 = vmatprep.subr.mxu0 0.0
    %870 = vmatpush1.msra.mxu0 %v285
    %871 = vmatprep.subr.mxu0 0.0
    %872 = vmatpush1.msra.mxu0 %v284
    %873 = vmatprep.subr.mxu0 0.0
    %874 = vmatpush1.msra.mxu0 %v283
    %875 = vmatprep.subr.mxu0 0.0
    %876 = vmatpush1.msra.mxu0 %v282
    %877 = vmatprep.subr.mxu0 0.0
    %878 = vmatpush2.msra.mxu0 0.0
    %879 = vmatprep.subr.mxu0 0.0
    %880 = vmatpush2.msra.mxu0 0.0
    %881 = vmatprep.subr.mxu0 0.0
    %882 = vmatpush2.msra.mxu0 0.0
    %883 = vmatprep.subr.mxu0 0.0
    %884 = vmatpush2.msra.mxu0 0.0
    %885 = vmatprep.subr.mxu0 0.0
    %886 = vmatpush2.msra.mxu0 0.0
    %887 = vmatprep.subr.mxu0 0.0
    %888 = vmatpush2.msra.mxu0 0.0
    %889 = vmatprep.subr.mxu0 0.0
    %890 = vmatpush2.msra.mxu0 0.0
    %891 = vmatprep.subr.mxu0 0.0
    %892 = vmatpush2.msra.mxu0 0.0
    %893 = vmatprep.subr.mxu0 0.0
    %894 = vmatpush2.msra.mxu0 0.0
    %895 = vmatprep.subr.mxu0 0.0
    %896 = vmatpush2.msra.mxu0 0.0
    %897 = vmatprep.subr.mxu0 0.0
    %898 = vmatpush2.msra.mxu0 0.0
    %899 = vmatprep.subr.mxu0 0.0
    %900 = vmatpush2.msra.mxu0 0.0
    %901 = vmatprep.subr.mxu0 0.0
    %902 = vmatpush2.msra.mxu0 0.0
    %903 = vmatprep.subr.mxu0 0.0
    %904 = vmatpush2.msra.mxu0 0.0
    %905 = vmatprep.subr.mxu0 0.0
    %906 = vmatpush2.msra.mxu0 0.0
    %907 = vmatprep.subr.mxu0 0.0
    %908 = vmatpush2.msra.mxu0 0.0
    %909 = vmatprep.mubr.f32.mxu0 0.0
    %910 = vmatmul.mubr.f32.gmra.mxu0 %v843
    %v911 = vpop.f32.mrf.mxu0
    %v912 = vadd.f32 %v335, %v911
    %v913 = vpop.f32.mrf.mxu0
    %914 = vdwg.mxu0
    %915 = vmatprep.subr.mxu0 0.0
    %916 = vmatpush1.msra.mxu0 0.0
    %917 = vmatprep.subr.mxu0 0.0
    %918 = vmatpush1.msra.mxu0 0.0
    %919 = vmatprep.subr.mxu0 0.0
    %920 = vmatpush1.msra.mxu0 0.0
    %921 = vmatprep.subr.mxu0 0.0
    %922 = vmatpush1.msra.mxu0 0.0
    %923 = vmatprep.subr.mxu0 0.0
    %924 = vmatpush1.msra.mxu0 0.0
    %925 = vmatprep.subr.mxu0 0.0
    %926 = vmatpush1.msra.mxu0 0.0
    %927 = vmatprep.subr.mxu0 0.0
    %928 = vmatpush1.msra.mxu0 0.0
    %929 = vmatprep.subr.mxu0 0.0
    %930 = vmatpush1.msra.mxu0 0.0
    %931 = vmatprep.subr.mxu0 0.0
    %932 = vmatpush1.msra.mxu0 0.0
    %933 = vmatprep.subr.mxu0 0.0
    %934 = vmatpush1.msra.mxu0 0.0
    %935 = vmatprep.subr.mxu0 0.0
    %936 = vmatpush1.msra.mxu0 0.0
    %937 = vmatprep.subr.mxu0 0.0
    %938 = vmatpush1.msra.mxu0 0.0
    %939 = vmatprep.subr.mxu0 0.0
    %940 = vmatpush1.msra.mxu0 %v289
    %941 = vmatprep.subr.mxu0 0.0
    %942 = vmatpush1.msra.mxu0 %v288
    %943 = vmatprep.subr.mxu0 0.0
    %944 = vmatpush1.msra.mxu0 %v287
    %945 = vmatprep.subr.mxu0 0.0
    %946 = vmatpush1.msra.mxu0 %v286
    %947 = vmatprep.subr.mxu0 0.0
    %948 = vmatpush2.msra.mxu0 0.0
    %949 = vmatprep.subr.mxu0 0.0
    %950 = vmatpush2.msra.mxu0 0.0
    %951 = vmatprep.subr.mxu0 0.0
    %952 = vmatpush2.msra.mxu0 0.0
    %953 = vmatprep.subr.mxu0 0.0
    %954 = vmatpush2.msra.mxu0 0.0
    %955 = vmatprep.subr.mxu0 0.0
    %956 = vmatpush2.msra.mxu0 0.0
    %957 = vmatprep.subr.mxu0 0.0
    %958 = vmatpush2.msra.mxu0 0.0
    %959 = vmatprep.subr.mxu0 0.0
    %960 = vmatpush2.msra.mxu0 0.0
    %961 = vmatprep.subr.mxu0 0.0
    %962 = vmatpush2.msra.mxu0 0.0
    %963 = vmatprep.subr.mxu0 0.0
    %964 = vmatpush2.msra.mxu0 0.0
    %965 = vmatprep.subr.mxu0 0.0
    %966 = vmatpush2.msra.mxu0 0.0
    %967 = vmatprep.subr.mxu0 0.0
    %968 = vmatpush2.msra.mxu0 0.0
    %969 = vmatprep.subr.mxu0 0.0
    %970 = vmatpush2.msra.mxu0 0.0
    %971 = vmatprep.subr.mxu0 0.0
    %972 = vmatpush2.msra.mxu0 0.0
    %973 = vmatprep.subr.mxu0 0.0
    %974 = vmatpush2.msra.mxu0 0.0
    %975 = vmatprep.subr.mxu0 0.0
    %976 = vmatpush2.msra.mxu0 0.0
    %977 = vmatprep.subr.mxu0 0.0
    %978 = vmatpush2.msra.mxu0 0.0
    %979 = vmatprep.mubr.f32.mxu0 0.0
    %980 = vmatmul.mubr.f32.gmra.mxu0 %v843
    %v981 = vpop.f32.mrf.mxu0
    %v982 = vadd.f32 %v342, %v981
    %v983 = vpop.f32.mrf.mxu0
    %984 = vdwg.mxu0
    %985 = vmatprep.subr.mxu0 0.0
    %986 = vmatpush1.msra.mxu0 0.0
    %987 = vmatprep.subr.mxu0 0.0
    %988 = vmatpush1.msra.mxu0 0.0
    %989 = vmatprep.subr.mxu0 0.0
    %990 = vmatpush1.msra.mxu0 0.0
    %991 = vmatprep.subr.mxu0 0.0
    %992 = vmatpush1.msra.mxu0 0.0
    %993 = vmatprep.subr.mxu0 0.0
    %994 = vmatpush1.msra.mxu0 0.0
    %995 = vmatprep.subr.mxu0 0.0
    %996 = vmatpush1.msra.mxu0 0.0
    %997 = vmatprep.subr.mxu0 0.0
    %998 = vmatpush1.msra.mxu0 0.0
    %999 = vmatprep.subr.mxu0 0.0
    %1000 = vmatpush1.msra.mxu0 0.0
    %1001 = vmatprep.subr.mxu0 0.0
    %1002 = vmatpush1.msra.mxu0 0.0
    %1003 = vmatprep.subr.mxu0 0.0
    %1004 = vmatpush1.msra.mxu0 0.0
    %1005 = vmatprep.subr.mxu0 0.0
    %1006 = vmatpush1.msra.mxu0 0.0
    %1007 = vmatprep.subr.mxu0 0.0
    %1008 = vmatpush1.msra.mxu0 0.0
    %1009 = vmatprep.subr.mxu0 0.0
    %1010 = vmatpush1.msra.mxu0 %v293
    %1011 = vmatprep.subr.mxu0 0.0
    %1012 = vmatpush1.msra.mxu0 %v292
    %1013 = vmatprep.subr.mxu0 0.0
    %1014 = vmatpush1.msra.mxu0 %v291
    %1015 = vmatprep.subr.mxu0 0.0
    %1016 = vmatpush1.msra.mxu0 %v290
    %1017 = vmatprep.subr.mxu0 0.0
    %1018 = vmatpush2.msra.mxu0 0.0
    %1019 = vmatprep.subr.mxu0 0.0
    %1020 = vmatpush2.msra.mxu0 0.0
    %1021 = vmatprep.subr.mxu0 0.0
    %1022 = vmatpush2.msra.mxu0 0.0
    %1023 = vmatprep.subr.mxu0 0.0
    %1024 = vmatpush2.msra.mxu0 0.0
    %1025 = vmatprep.subr.mxu0 0.0
    %1026 = vmatpush2.msra.mxu0 0.0
    %1027 = vmatprep.subr.mxu0 0.0
    %1028 = vmatpush2.msra.mxu0 0.0
    %1029 = vmatprep.subr.mxu0 0.0
    %1030 = vmatpush2.msra.mxu0 0.0
    %1031 = vmatprep.subr.mxu0 0.0
    %1032 = vmatpush2.msra.mxu0 0.0
    %1033 = vmatprep.subr.mxu0 0.0
    %1034 = vmatpush2.msra.mxu0 0.0
    %1035 = vmatprep.subr.mxu0 0.0
    %1036 = vmatpush2.msra.mxu0 0.0
    %1037 = vmatprep.subr.mxu0 0.0
    %1038 = vmatpush2.msra.mxu0 0.0
    %1039 = vmatprep.subr.mxu0 0.0
    %1040 = vmatpush2.msra.mxu0 0.0
    %1041 = vmatprep.subr.mxu0 0.0
    %1042 = vmatpush2.msra.mxu0 0.0
    %1043 = vmatprep.subr.mxu0 0.0
    %1044 = vmatpush2.msra.mxu0 0.0
    %1045 = vmatprep.subr.mxu0 0.0
    %1046 = vmatpush2.msra.mxu0 0.0
    %1047 = vmatprep.subr.mxu0 0.0
    %1048 = vmatpush2.msra.mxu0 0.0
    %1049 = vmatprep.mubr.f32.mxu0 0.0
    %1050 = vmatmul.mubr.f32.gmra.mxu0 %v843
    %v1051 = vpop.f32.mrf.mxu0
    %v1052 = vadd.f32 %v349, %v1051
    %v1053 = vpop.f32.mrf.mxu0
    %1054 = vdwg.mxu0
    %v1056 = vrot.slane %v912, 1
    %v1059 = vadd.f32 %v690, %v912
    %v1060 = vadd.f32 %v694, %v1056
    %v1061 = vxor.u32 %v1059, 2147483648
    %v1062 = vxor.u32 %v1060, 2147483648
    %v1063 = vmul.f32 %v1061, 1.442695
    %v1064 = vpow.pop %v1063
    %v1065 = vmul.f32 %v1062, 1.442695
    %v1066 = vpow.pop %v1065
    %v1067 = vadd.f32 %v1064, 1.0
    %v1068 = vadd.f32 %v1066, 1.0
    %v1069 = vrcp.pop %v1067
    %v1070 = vmul.f32 1.0, %v1069
    %v1071 = vrcp.pop %v1068
    %v1072 = vmul.f32 1.0, %v1071
    %v1074 = vrot.slane %v982, 1
    %v1077 = vadd.f32 %v763, %v982
    %v1078 = vadd.f32 %v767, %v1074
    %v1079 = vxor.u32 %v1077, 2147483648
    %v1080 = vxor.u32 %v1078, 2147483648
    %v1081 = vmul.f32 %v1079, 1.442695
    %v1082 = vpow.pop %v1081
    %v1083 = vmul.f32 %v1080, 1.442695
    %v1084 = vpow.pop %v1083
    %v1085 = vadd.f32 %v1082, 1.0
    %v1086 = vadd.f32 %v1084, 1.0
    %v1087 = vrcp.pop %v1085
    %v1088 = vmul.f32 1.0, %v1087
    %v1089 = vrcp.pop %v1086
    %v1090 = vmul.f32 1.0, %v1089
    %v1092 = vrot.slane %v1052, 1
    %v1095 = vmul.f32 %v1070, %v1052
    %v1096 = vmul.f32 %v1072, %v1092
    %v1097 = vadd.f32 %v836, %v1095
    %v1098 = vadd.f32 %v840, %v1096
    %v1099 = vtanh.pop %v1097
    %v1100 = vtanh.pop %v1098
    %v1101 = vsub.f32 1.0, %v1088
    %v1102 = vsub.f32 1.0, %v1090
    %v1103 = vmul.f32 %v1101, %v1099
    %v1104 = vmul.f32 %v1102, %v1100
    %v1105 = vrot.slane %v441, 1
    %v1108 = vmul.f32 %v1088, %v441
    %v1109 = vmul.f32 %v1090, %v1105
    %v1110 = vadd.f32 %v1103, %v1108
    %v1111 = vadd.f32 %v1104, %v1109
    %v1114 = vlaneseq
    %v1115 = vshrl.u32 %v1114, 7
    %v1116 = vsub.s32 0, %v1115
    %v1117 = vrot.slane %v1110, %v1116
    %v1118 = vlaneseq
    %v1119 = vshrl.u32 %v1118, 7
    %v1120 = vsub.s32 0, %v1119
    %v1121 = vrot.slane %v1111, %v1120
    %vm1122 = vcmask 1041409
    %v1123 = vsel %vm1122, %v1121, %v1117
    %v1124 = vsel %vm370, %v1123, 0
    %1126 = vmatprep.subr.mxu0 0.0
    %1127 = vmatpush1.msra.mxu0 0.0
    %1128 = vmatprep.subr.mxu0 0.0
    %1129 = vmatpush1.msra.mxu0 0.0
    %1130 = vmatprep.subr.mxu0 0.0
    %1131 = vmatpush1.msra.mxu0 0.0
    %1132 = vmatprep.subr.mxu0 0.0
    %1133 = vmatpush1.msra.mxu0 0.0
    %1134 = vmatprep.subr.mxu0 0.0
    %1135 = vmatpush1.msra.mxu0 0.0
    %1136 = vmatprep.subr.mxu0 0.0
    %1137 = vmatpush1.msra.mxu0 0.0
    %1138 = vmatprep.subr.mxu0 0.0
    %1139 = vmatpush1.msra.mxu0 0.0
    %1140 = vmatprep.subr.mxu0 0.0
    %1141 = vmatpush1.msra.mxu0 0.0
    %1142 = vmatprep.subr.mxu0 0.0
    %1143 = vmatpush1.msra.mxu0 0.0
    %1144 = vmatprep.subr.mxu0 0.0
    %1145 = vmatpush1.msra.mxu0 0.0
    %1146 = vmatprep.subr.mxu0 0.0
    %1147 = vmatpush1.msra.mxu0 0.0
    %1148 = vmatprep.subr.mxu0 0.0
    %1149 = vmatpush1.msra.mxu0 0.0
    %1150 = vmatprep.subr.mxu0 0.0
    %1151 = vmatpush1.msra.mxu0 %v285
    %1152 = vmatprep.subr.mxu0 0.0
    %1153 = vmatpush1.msra.mxu0 %v284
    %1154 = vmatprep.subr.mxu0 0.0
    %1155 = vmatpush1.msra.mxu0 %v283
    %1156 = vmatprep.subr.mxu0 0.0
    %1157 = vmatpush1.msra.mxu0 %v282
    %1158 = vmatprep.subr.mxu0 0.0
    %1159 = vmatpush2.msra.mxu0 0.0
    %1160 = vmatprep.subr.mxu0 0.0
    %1161 = vmatpush2.msra.mxu0 0.0
    %1162 = vmatprep.subr.mxu0 0.0
    %1163 = vmatpush2.msra.mxu0 0.0
    %1164 = vmatprep.subr.mxu0 0.0
    %1165 = vmatpush2.msra.mxu0 0.0
    %1166 = vmatprep.subr.mxu0 0.0
    %1167 = vmatpush2.msra.mxu0 0.0
    %1168 = vmatprep.subr.mxu0 0.0
    %1169 = vmatpush2.msra.mxu0 0.0
    %1170 = vmatprep.subr.mxu0 0.0
    %1171 = vmatpush2.msra.mxu0 0.0
    %1172 = vmatprep.subr.mxu0 0.0
    %1173 = vmatpush2.msra.mxu0 0.0
    %1174 = vmatprep.subr.mxu0 0.0
    %1175 = vmatpush2.msra.mxu0 0.0
    %1176 = vmatprep.subr.mxu0 0.0
    %1177 = vmatpush2.msra.mxu0 0.0
    %1178 = vmatprep.subr.mxu0 0.0
    %1179 = vmatpush2.msra.mxu0 0.0
    %1180 = vmatprep.subr.mxu0 0.0
    %1181 = vmatpush2.msra.mxu0 0.0
    %1182 = vmatprep.subr.mxu0 0.0
    %1183 = vmatpush2.msra.mxu0 0.0
    %1184 = vmatprep.subr.mxu0 0.0
    %1185 = vmatpush2.msra.mxu0 0.0
    %1186 = vmatprep.subr.mxu0 0.0
    %1187 = vmatpush2.msra.mxu0 0.0
    %1188 = vmatprep.subr.mxu0 0.0
    %1189 = vmatpush2.msra.mxu0 0.0
    %1190 = vmatprep.mubr.f32.mxu0 0.0
    %1191 = vmatmul.mubr.f32.gmra.mxu0 %v1124
    %v1192 = vpop.f32.mrf.mxu0
    %v1193 = vadd.f32 %v335, %v1192
    %v1194 = vpop.f32.mrf.mxu0
    %1195 = vdwg.mxu0
    %1196 = vmatprep.subr.mxu0 0.0
    %1197 = vmatpush1.msra.mxu0 0.0
    %1198 = vmatprep.subr.mxu0 0.0
    %1199 = vmatpush1.msra.mxu0 0.0
    %1200 = vmatprep.subr.mxu0 0.0
    %1201 = vmatpush1.msra.mxu0 0.0
    %1202 = vmatprep.subr.mxu0 0.0
    %1203 = vmatpush1.msra.mxu0 0.0
    %1204 = vmatprep.subr.mxu0 0.0
    %1205 = vmatpush1.msra.mxu0 0.0
    %1206 = vmatprep.subr.mxu0 0.0
    %1207 = vmatpush1.msra.mxu0 0.0
    %1208 = vmatprep.subr.mxu0 0.0
    %1209 = vmatpush1.msra.mxu0 0.0
    %1210 = vmatprep.subr.mxu0 0.0
    %1211 = vmatpush1.msra.mxu0 0.0
    %1212 = vmatprep.subr.mxu0 0.0
    %1213 = vmatpush1.msra.mxu0 0.0
    %1214 = vmatprep.subr.mxu0 0.0
    %1215 = vmatpush1.msra.mxu0 0.0
    %1216 = vmatprep.subr.mxu0 0.0
    %1217 = vmatpush1.msra.mxu0 0.0
    %1218 = vmatprep.subr.mxu0 0.0
    %1219 = vmatpush1.msra.mxu0 0.0
    %1220 = vmatprep.subr.mxu0 0.0
    %1221 = vmatpush1.msra.mxu0 %v289
    %1222 = vmatprep.subr.mxu0 0.0
    %1223 = vmatpush1.msra.mxu0 %v288
    %1224 = vmatprep.subr.mxu0 0.0
    %1225 = vmatpush1.msra.mxu0 %v287
    %1226 = vmatprep.subr.mxu0 0.0
    %1227 = vmatpush1.msra.mxu0 %v286
    %1228 = vmatprep.subr.mxu0 0.0
    %1229 = vmatpush2.msra.mxu0 0.0
    %1230 = vmatprep.subr.mxu0 0.0
    %1231 = vmatpush2.msra.mxu0 0.0
    %1232 = vmatprep.subr.mxu0 0.0
    %1233 = vmatpush2.msra.mxu0 0.0
    %1234 = vmatprep.subr.mxu0 0.0
    %1235 = vmatpush2.msra.mxu0 0.0
    %1236 = vmatprep.subr.mxu0 0.0
    %1237 = vmatpush2.msra.mxu0 0.0
    %1238 = vmatprep.subr.mxu0 0.0
    %1239 = vmatpush2.msra.mxu0 0.0
    %1240 = vmatprep.subr.mxu0 0.0
    %1241 = vmatpush2.msra.mxu0 0.0
    %1242 = vmatprep.subr.mxu0 0.0
    %1243 = vmatpush2.msra.mxu0 0.0
    %1244 = vmatprep.subr.mxu0 0.0
    %1245 = vmatpush2.msra.mxu0 0.0
    %1246 = vmatprep.subr.mxu0 0.0
    %1247 = vmatpush2.msra.mxu0 0.0
    %1248 = vmatprep.subr.mxu0 0.0
    %1249 = vmatpush2.msra.mxu0 0.0
    %1250 = vmatprep.subr.mxu0 0.0
    %1251 = vmatpush2.msra.mxu0 0.0
    %1252 = vmatprep.subr.mxu0 0.0
    %1253 = vmatpush2.msra.mxu0 0.0
    %1254 = vmatprep.subr.mxu0 0.0
    %1255 = vmatpush2.msra.mxu0 0.0
    %1256 = vmatprep.subr.mxu0 0.0
    %1257 = vmatpush2.msra.mxu0 0.0
    %1258 = vmatprep.subr.mxu0 0.0
    %1259 = vmatpush2.msra.mxu0 0.0
    %1260 = vmatprep.mubr.f32.mxu0 0.0
    %1261 = vmatmul.mubr.f32.gmra.mxu0 %v1124
    %v1262 = vpop.f32.mrf.mxu0
    %v1263 = vadd.f32 %v342, %v1262
    %v1264 = vpop.f32.mrf.mxu0
    %1265 = vdwg.mxu0
    %1266 = vmatprep.subr.mxu0 0.0
    %1267 = vmatpush1.msra.mxu0 0.0
    %1268 = vmatprep.subr.mxu0 0.0
    %1269 = vmatpush1.msra.mxu0 0.0
    %1270 = vmatprep.subr.mxu0 0.0
    %1271 = vmatpush1.msra.mxu0 0.0
    %1272 = vmatprep.subr.mxu0 0.0
    %1273 = vmatpush1.msra.mxu0 0.0
    %1274 = vmatprep.subr.mxu0 0.0
    %1275 = vmatpush1.msra.mxu0 0.0
    %1276 = vmatprep.subr.mxu0 0.0
    %1277 = vmatpush1.msra.mxu0 0.0
    %1278 = vmatprep.subr.mxu0 0.0
    %1279 = vmatpush1.msra.mxu0 0.0
    %1280 = vmatprep.subr.mxu0 0.0
    %1281 = vmatpush1.msra.mxu0 0.0
    %1282 = vmatprep.subr.mxu0 0.0
    %1283 = vmatpush1.msra.mxu0 0.0
    %1284 = vmatprep.subr.mxu0 0.0
    %1285 = vmatpush1.msra.mxu0 0.0
    %1286 = vmatprep.subr.mxu0 0.0
    %1287 = vmatpush1.msra.mxu0 0.0
    %1288 = vmatprep.subr.mxu0 0.0
    %1289 = vmatpush1.msra.mxu0 0.0
    %1290 = vmatprep.subr.mxu0 0.0
    %1291 = vmatpush1.msra.mxu0 %v293
    %1292 = vmatprep.subr.mxu0 0.0
    %1293 = vmatpush1.msra.mxu0 %v292
    %1294 = vmatprep.subr.mxu0 0.0
    %1295 = vmatpush1.msra.mxu0 %v291
    %1296 = vmatprep.subr.mxu0 0.0
    %1297 = vmatpush1.msra.mxu0 %v290
    %1298 = vmatprep.subr.mxu0 0.0
    %1299 = vmatpush2.msra.mxu0 0.0
    %1300 = vmatprep.subr.mxu0 0.0
    %1301 = vmatpush2.msra.mxu0 0.0
    %1302 = vmatprep.subr.mxu0 0.0
    %1303 = vmatpush2.msra.mxu0 0.0
    %1304 = vmatprep.subr.mxu0 0.0
    %1305 = vmatpush2.msra.mxu0 0.0
    %1306 = vmatprep.subr.mxu0 0.0
    %1307 = vmatpush2.msra.mxu0 0.0
    %1308 = vmatprep.subr.mxu0 0.0
    %1309 = vmatpush2.msra.mxu0 0.0
    %1310 = vmatprep.subr.mxu0 0.0
    %1311 = vmatpush2.msra.mxu0 0.0
    %1312 = vmatprep.subr.mxu0 0.0
    %1313 = vmatpush2.msra.mxu0 0.0
    %1314 = vmatprep.subr.mxu0 0.0
    %1315 = vmatpush2.msra.mxu0 0.0
    %1316 = vmatprep.subr.mxu0 0.0
    %1317 = vmatpush2.msra.mxu0 0.0
    %1318 = vmatprep.subr.mxu0 0.0
    %1319 = vmatpush2.msra.mxu0 0.0
    %1320 = vmatprep.subr.mxu0 0.0
    %1321 = vmatpush2.msra.mxu0 0.0
    %1322 = vmatprep.subr.mxu0 0.0
    %1323 = vmatpush2.msra.mxu0 0.0
    %1324 = vmatprep.subr.mxu0 0.0
    %1325 = vmatpush2.msra.mxu0 0.0
    %1326 = vmatprep.subr.mxu0 0.0
    %1327 = vmatpush2.msra.mxu0 0.0
    %1328 = vmatprep.subr.mxu0 0.0
    %1329 = vmatpush2.msra.mxu0 0.0
    %1330 = vmatprep.mubr.f32.mxu0 0.0
    %1331 = vmatmul.mubr.f32.gmra.mxu0 %v1124
    %v1332 = vpop.f32.mrf.mxu0
    %v1333 = vadd.f32 %v349, %v1332
    %v1334 = vpop.f32.mrf.mxu0
    %1335 = vdwg.mxu0
    %v1337 = vrot.slane %v1193, 7
    %v1340 = vadd.f32 %v690, %v1337
    %v1341 = vadd.f32 %v694, %v1193
    %v1342 = vxor.u32 %v1340, 2147483648
    %v1343 = vxor.u32 %v1341, 2147483648
    %v1344 = vmul.f32 %v1342, 1.442695
    %v1345 = vpow.pop %v1344
    %v1346 = vmul.f32 %v1343, 1.442695
    %v1347 = vpow.pop %v1346
    %v1348 = vadd.f32 %v1345, 1.0
    %v1349 = vadd.f32 %v1347, 1.0
    %v1350 = vrcp.pop %v1348
    %v1351 = vmul.f32 1.0, %v1350
    %v1352 = vrcp.pop %v1349
    %v1353 = vmul.f32 1.0, %v1352
    %v1355 = vrot.slane %v1263, 7
    %v1358 = vadd.f32 %v763, %v1355
    %v1359 = vadd.f32 %v767, %v1263
    %v1360 = vxor.u32 %v1358, 2147483648
    %v1361 = vxor.u32 %v1359, 2147483648
    %v1362 = vmul.f32 %v1360, 1.442695
    %v1363 = vpow.pop %v1362
    %v1364 = vmul.f32 %v1361, 1.442695
    %v1365 = vpow.pop %v1364
    %v1366 = vadd.f32 %v1363, 1.0
    %v1367 = vadd.f32 %v1365, 1.0
    %v1368 = vrcp.pop %v1366
    %v1369 = vmul.f32 1.0, %v1368
    %v1370 = vrcp.pop %v1367
    %v1371 = vmul.f32 1.0, %v1370
    %v1373 = vrot.slane %v1333, 7
    %v1376 = vmul.f32 %v1351, %v1373
    %v1377 = vmul.f32 %v1353, %v1333
    %v1378 = vadd.f32 %v836, %v1376
    %v1379 = vadd.f32 %v840, %v1377
    %v1380 = vtanh.pop %v1378
    %v1381 = vtanh.pop %v1379
    %v1382 = vsub.f32 1.0, %v1369
    %v1383 = vsub.f32 1.0, %v1371
    %v1384 = vmul.f32 %v1382, %v1380
    %v1385 = vmul.f32 %v1383, %v1381
    %v1386 = vrot.slane %v1110, 7
    %v1387 = vrot.slane %v1111, 7
    %v1390 = vmul.f32 %v1369, %v1386
    %v1391 = vmul.f32 %v1371, %v1387
    %v1392 = vadd.f32 %v1384, %v1390
    %v1393 = vadd.f32 %v1385, %v1391
    %v1396 = vlaneseq
    %v1397 = vshrl.u32 %v1396, 7
    %v1398 = vsub.s32 1, %v1397
    %v1399 = vrot.slane %v1392, %v1398
    %v1400 = vlaneseq
    %v1401 = vshrl.u32 %v1400, 7
    %v1402 = vsub.s32 1, %v1401
    %v1403 = vrot.slane %v1393, %v1402
    %v1404 = vsel %vm1122, %v1403, %v1399
    %v1405 = vsel %vm370, %v1404, 0
    %1407 = vmatprep.subr.mxu0 0.0
    %1408 = vmatpush1.msra.mxu0 0.0
    %1409 = vmatprep.subr.mxu0 0.0
    %1410 = vmatpush1.msra.mxu0 0.0
    %1411 = vmatprep.subr.mxu0 0.0
    %1412 = vmatpush1.msra.mxu0 0.0
    %1413 = vmatprep.subr.mxu0 0.0
    %1414 = vmatpush1.msra.mxu0 0.0
    %1415 = vmatprep.subr.mxu0 0.0
    %1416 = vmatpush1.msra.mxu0 0.0
    %1417 = vmatprep.subr.mxu0 0.0
    %1418 = vmatpush1.msra.mxu0 0.0
    %1419 = vmatprep.subr.mxu0 0.0
    %1420 = vmatpush1.msra.mxu0 0.0
    %1421 = vmatprep.subr.mxu0 0.0
    %1422 = vmatpush1.msra.mxu0 0.0
    %1423 = vmatprep.subr.mxu0 0.0
    %1424 = vmatpush1.msra.mxu0 0.0
    %1425 = vmatprep.subr.mxu0 0.0
    %1426 = vmatpush1.msra.mxu0 0.0
    %1427 = vmatprep.subr.mxu0 0.0
    %1428 = vmatpush1.msra.mxu0 0.0
    %1429 = vmatprep.subr.mxu0 0.0
    %1430 = vmatpush1.msra.mxu0 0.0
    %1431 = vmatprep.subr.mxu0 0.0
    %1432 = vmatpush1.msra.mxu0 %v285
    %1433 = vmatprep.subr.mxu0 0.0
    %1434 = vmatpush1.msra.mxu0 %v284
    %1435 = vmatprep.subr.mxu0 0.0
    %1436 = vmatpush1.msra.mxu0 %v283
    %1437 = vmatprep.subr.mxu0 0.0
    %1438 = vmatpush1.msra.mxu0 %v282
    %1439 = vmatprep.subr.mxu0 0.0
    %1440 = vmatpush2.msra.mxu0 0.0
    %1441 = vmatprep.subr.mxu0 0.0
    %1442 = vmatpush2.msra.mxu0 0.0
    %1443 = vmatprep.subr.mxu0 0.0
    %1444 = vmatpush2.msra.mxu0 0.0
    %1445 = vmatprep.subr.mxu0 0.0
    %1446 = vmatpush2.msra.mxu0 0.0
    %1447 = vmatprep.subr.mxu0 0.0
    %1448 = vmatpush2.msra.mxu0 0.0
    %1449 = vmatprep.subr.mxu0 0.0
    %1450 = vmatpush2.msra.mxu0 0.0
    %1451 = vmatprep.subr.mxu0 0.0
    %1452 = vmatpush2.msra.mxu0 0.0
    %1453 = vmatprep.subr.mxu0 0.0
    %1454 = vmatpush2.msra.mxu0 0.0
    %1455 = vmatprep.subr.mxu0 0.0
    %1456 = vmatpush2.msra.mxu0 0.0
    %1457 = vmatprep.subr.mxu0 0.0
    %1458 = vmatpush2.msra.mxu0 0.0
    %1459 = vmatprep.subr.mxu0 0.0
    %1460 = vmatpush2.msra.mxu0 0.0
    %1461 = vmatprep.subr.mxu0 0.0
    %1462 = vmatpush2.msra.mxu0 0.0
    %1463 = vmatprep.subr.mxu0 0.0
    %1464 = vmatpush2.msra.mxu0 0.0
    %1465 = vmatprep.subr.mxu0 0.0
    %1466 = vmatpush2.msra.mxu0 0.0
    %1467 = vmatprep.subr.mxu0 0.0
    %1468 = vmatpush2.msra.mxu0 0.0
    %1469 = vmatprep.subr.mxu0 0.0
    %1470 = vmatpush2.msra.mxu0 0.0
    %1471 = vmatprep.mubr.f32.mxu0 0.0
    %1472 = vmatmul.mubr.f32.gmra.mxu0 %v1405
    %v1473 = vpop.f32.mrf.mxu0
    %v1474 = vadd.f32 %v335, %v1473
    %v1475 = vpop.f32.mrf.mxu0
    %1476 = vdwg.mxu0
    %1477 = vmatprep.subr.mxu0 0.0
    %1478 = vmatpush1.msra.mxu0 0.0
    %1479 = vmatprep.subr.mxu0 0.0
    %1480 = vmatpush1.msra.mxu0 0.0
    %1481 = vmatprep.subr.mxu0 0.0
    %1482 = vmatpush1.msra.mxu0 0.0
    %1483 = vmatprep.subr.mxu0 0.0
    %1484 = vmatpush1.msra.mxu0 0.0
    %1485 = vmatprep.subr.mxu0 0.0
    %1486 = vmatpush1.msra.mxu0 0.0
    %1487 = vmatprep.subr.mxu0 0.0
    %1488 = vmatpush1.msra.mxu0 0.0
    %1489 = vmatprep.subr.mxu0 0.0
    %1490 = vmatpush1.msra.mxu0 0.0
    %1491 = vmatprep.subr.mxu0 0.0
    %1492 = vmatpush1.msra.mxu0 0.0
    %1493 = vmatprep.subr.mxu0 0.0
    %1494 = vmatpush1.msra.mxu0 0.0
    %1495 = vmatprep.subr.mxu0 0.0
    %1496 = vmatpush1.msra.mxu0 0.0
    %1497 = vmatprep.subr.mxu0 0.0
    %1498 = vmatpush1.msra.mxu0 0.0
    %1499 = vmatprep.subr.mxu0 0.0
    %1500 = vmatpush1.msra.mxu0 0.0
    %1501 = vmatprep.subr.mxu0 0.0
    %1502 = vmatpush1.msra.mxu0 %v289
    %1503 = vmatprep.subr.mxu0 0.0
    %1504 = vmatpush1.msra.mxu0 %v288
    %1505 = vmatprep.subr.mxu0 0.0
    %1506 = vmatpush1.msra.mxu0 %v287
    %1507 = vmatprep.subr.mxu0 0.0
    %1508 = vmatpush1.msra.mxu0 %v286
    %1509 = vmatprep.subr.mxu0 0.0
    %1510 = vmatpush2.msra.mxu0 0.0
    %1511 = vmatprep.subr.mxu0 0.0
    %1512 = vmatpush2.msra.mxu0 0.0
    %1513 = vmatprep.subr.mxu0 0.0
    %1514 = vmatpush2.msra.mxu0 0.0
    %1515 = vmatprep.subr.mxu0 0.0
    %1516 = vmatpush2.msra.mxu0 0.0
    %1517 = vmatprep.subr.mxu0 0.0
    %1518 = vmatpush2.msra.mxu0 0.0
    %1519 = vmatprep.subr.mxu0 0.0
    %1520 = vmatpush2.msra.mxu0 0.0
    %1521 = vmatprep.subr.mxu0 0.0
    %1522 = vmatpush2.msra.mxu0 0.0
    %1523 = vmatprep.subr.mxu0 0.0
    %1524 = vmatpush2.msra.mxu0 0.0
    %1525 = vmatprep.subr.mxu0 0.0
    %1526 = vmatpush2.msra.mxu0 0.0
    %1527 = vmatprep.subr.mxu0 0.0
    %1528 = vmatpush2.msra.mxu0 0.0
    %1529 = vmatprep.subr.mxu0 0.0
    %1530 = vmatpush2.msra.mxu0 0.0
    %1531 = vmatprep.subr.mxu0 0.0
    %1532 = vmatpush2.msra.mxu0 0.0
    %1533 = vmatprep.subr.mxu0 0.0
    %1534 = vmatpush2.msra.mxu0 0.0
    %1535 = vmatprep.subr.mxu0 0.0
    %1536 = vmatpush2.msra.mxu0 0.0
    %1537 = vmatprep.subr.mxu0 0.0
    %1538 = vmatpush2.msra.mxu0 0.0
    %1539 = vmatprep.subr.mxu0 0.0
    %1540 = vmatpush2.msra.mxu0 0.0
    %1541 = vmatprep.mubr.f32.mxu0 0.0
    %1542 = vmatmul.mubr.f32.gmra.mxu0 %v1405
    %v1543 = vpop.f32.mrf.mxu0
    %v1544 = vadd.f32 %v342, %v1543
    %v1545 = vpop.f32.mrf.mxu0
    %1546 = vdwg.mxu0
    %1547 = vmatprep.subr.mxu0 0.0
    %1548 = vmatpush1.msra.mxu0 0.0
    %1549 = vmatprep.subr.mxu0 0.0
    %1550 = vmatpush1.msra.mxu0 0.0
    %1551 = vmatprep.subr.mxu0 0.0
    %1552 = vmatpush1.msra.mxu0 0.0
    %1553 = vmatprep.subr.mxu0 0.0
    %1554 = vmatpush1.msra.mxu0 0.0
    %1555 = vmatprep.subr.mxu0 0.0
    %1556 = vmatpush1.msra.mxu0 0.0
    %1557 = vmatprep.subr.mxu0 0.0
    %1558 = vmatpush1.msra.mxu0 0.0
    %1559 = vmatprep.subr.mxu0 0.0
    %1560 = vmatpush1.msra.mxu0 0.0
    %1561 = vmatprep.subr.mxu0 0.0
    %1562 = vmatpush1.msra.mxu0 0.0
    %1563 = vmatprep.subr.mxu0 0.0
    %1564 = vmatpush1.msra.mxu0 0.0
    %1565 = vmatprep.subr.mxu0 0.0
    %1566 = vmatpush1.msra.mxu0 0.0
    %1567 = vmatprep.subr.mxu0 0.0
    %1568 = vmatpush1.msra.mxu0 0.0
    %1569 = vmatprep.subr.mxu0 0.0
    %1570 = vmatpush1.msra.mxu0 0.0
    %1571 = vmatprep.subr.mxu0 0.0
    %1572 = vmatpush1.msra.mxu0 %v293
    %1573 = vmatprep.subr.mxu0 0.0
    %1574 = vmatpush1.msra.mxu0 %v292
    %1575 = vmatprep.subr.mxu0 0.0
    %1576 = vmatpush1.msra.mxu0 %v291
    %1577 = vmatprep.subr.mxu0 0.0
    %1578 = vmatpush1.msra.mxu0 %v290
    %1579 = vmatprep.subr.mxu0 0.0
    %1580 = vmatpush2.msra.mxu0 0.0
    %1581 = vmatprep.subr.mxu0 0.0
    %1582 = vmatpush2.msra.mxu0 0.0
    %1583 = vmatprep.subr.mxu0 0.0
    %1584 = vmatpush2.msra.mxu0 0.0
    %1585 = vmatprep.subr.mxu0 0.0
    %1586 = vmatpush2.msra.mxu0 0.0
    %1587 = vmatprep.subr.mxu0 0.0
    %1588 = vmatpush2.msra.mxu0 0.0
    %1589 = vmatprep.subr.mxu0 0.0
    %1590 = vmatpush2.msra.mxu0 0.0
    %1591 = vmatprep.subr.mxu0 0.0
    %1592 = vmatpush2.msra.mxu0 0.0
    %1593 = vmatprep.subr.mxu0 0.0
    %1594 = vmatpush2.msra.mxu0 0.0
    %1595 = vmatprep.subr.mxu0 0.0
    %1596 = vmatpush2.msra.mxu0 0.0
    %1597 = vmatprep.subr.mxu0 0.0
    %1598 = vmatpush2.msra.mxu0 0.0
    %1599 = vmatprep.subr.mxu0 0.0
    %1600 = vmatpush2.msra.mxu0 0.0
    %1601 = vmatprep.subr.mxu0 0.0
    %1602 = vmatpush2.msra.mxu0 0.0
    %1603 = vmatprep.subr.mxu0 0.0
    %1604 = vmatpush2.msra.mxu0 0.0
    %1605 = vmatprep.subr.mxu0 0.0
    %1606 = vmatpush2.msra.mxu0 0.0
    %1607 = vmatprep.subr.mxu0 0.0
    %1608 = vmatpush2.msra.mxu0 0.0
    %1609 = vmatprep.subr.mxu0 0.0
    %1610 = vmatpush2.msra.mxu0 0.0
    %1611 = vmatprep.mubr.f32.mxu0 0.0
    %1612 = vmatmul.mubr.f32.gmra.mxu0 %v1405
    %v1613 = vpop.f32.mrf.mxu0
    %v1614 = vadd.f32 %v349, %v1613
    %v1615 = vpop.f32.mrf.mxu0
    %1616 = vdwg.mxu0
    %v1618 = vrot.slane %v1474, 6
    %v1619 = vrot.slane %v1474, 7
    %v1622 = vadd.f32 %v690, %v1618
    %v1623 = vadd.f32 %v694, %v1619
    %v1624 = vxor.u32 %v1622, 2147483648
    %v1625 = vxor.u32 %v1623, 2147483648
    %v1626 = vmul.f32 %v1624, 1.442695
    %v1627 = vpow.pop %v1626
    %v1628 = vmul.f32 %v1625, 1.442695
    %v1629 = vpow.pop %v1628
    %v1630 = vadd.f32 %v1627, 1.0
    %v1631 = vadd.f32 %v1629, 1.0
    %v1632 = vrcp.pop %v1630
    %v1633 = vmul.f32 1.0, %v1632
    %v1634 = vrcp.pop %v1631
    %v1635 = vmul.f32 1.0, %v1634
    %v1637 = vrot.slane %v1544, 6
    %v1638 = vrot.slane %v1544, 7
    %v1641 = vadd.f32 %v763, %v1637
    %v1642 = vadd.f32 %v767, %v1638
    %v1643 = vxor.u32 %v1641, 2147483648
    %v1644 = vxor.u32 %v1642, 2147483648
    %v1645 = vmul.f32 %v1643, 1.442695
    %v1646 = vpow.pop %v1645
    %v1647 = vmul.f32 %v1644, 1.442695
    %v1648 = vpow.pop %v1647
    %v1649 = vadd.f32 %v1646, 1.0
    %v1650 = vadd.f32 %v1648, 1.0
    %v1651 = vrcp.pop %v1649
    %v1652 = vmul.f32 1.0, %v1651
    %v1653 = vrcp.pop %v1650
    %v1654 = vmul.f32 1.0, %v1653
    %v1656 = vrot.slane %v1614, 6
    %v1657 = vrot.slane %v1614, 7
    %v1660 = vmul.f32 %v1633, %v1656
    %v1661 = vmul.f32 %v1635, %v1657
    %v1662 = vadd.f32 %v836, %v1660
    %v1663 = vadd.f32 %v840, %v1661
    %v1664 = vtanh.pop %v1662
    %v1665 = vtanh.pop %v1663
    %v1666 = vsub.f32 1.0, %v1652
    %v1667 = vsub.f32 1.0, %v1654
    %v1668 = vmul.f32 %v1666, %v1664
    %v1669 = vmul.f32 %v1667, %v1665
    %v1670 = vrot.slane %v1392, 7
    %v1671 = vrot.slane %v1393, 7
    %v1674 = vmul.f32 %v1652, %v1670
    %v1675 = vmul.f32 %v1654, %v1671
    %v1676 = vadd.f32 %v1668, %v1674
    %v1677 = vadd.f32 %v1669, %v1675
    %v1680 = vlaneseq
    %v1681 = vshrl.u32 %v1680, 7
    %v1682 = vsub.s32 2, %v1681
    %v1683 = vrot.slane %v1676, %v1682
    %v1684 = vlaneseq
    %v1685 = vshrl.u32 %v1684, 7
    %v1686 = vsub.s32 2, %v1685
    %v1687 = vrot.slane %v1677, %v1686
    %v1688 = vsel %vm1122, %v1687, %v1683
    %v1689 = vsel %vm370, %v1688, 0
    %1691 = vmatprep.subr.mxu0 0.0
    %1692 = vmatpush1.msra.mxu0 0.0
    %1693 = vmatprep.subr.mxu0 0.0
    %1694 = vmatpush1.msra.mxu0 0.0
    %1695 = vmatprep.subr.mxu0 0.0
    %1696 = vmatpush1.msra.mxu0 0.0
    %1697 = vmatprep.subr.mxu0 0.0
    %1698 = vmatpush1.msra.mxu0 0.0
    %1699 = vmatprep.subr.mxu0 0.0
    %1700 = vmatpush1.msra.mxu0 0.0
    %1701 = vmatprep.subr.mxu0 0.0
    %1702 = vmatpush1.msra.mxu0 0.0
    %1703 = vmatprep.subr.mxu0 0.0
    %1704 = vmatpush1.msra.mxu0 0.0
    %1705 = vmatprep.subr.mxu0 0.0
    %1706 = vmatpush1.msra.mxu0 0.0
    %1707 = vmatprep.subr.mxu0 0.0
    %1708 = vmatpush1.msra.mxu0 0.0
    %1709 = vmatprep.subr.mxu0 0.0
    %1710 = vmatpush1.msra.mxu0 0.0
    %1711 = vmatprep.subr.mxu0 0.0
    %1712 = vmatpush1.msra.mxu0 0.0
    %1713 = vmatprep.subr.mxu0 0.0
    %1714 = vmatpush1.msra.mxu0 0.0
    %1715 = vmatprep.subr.mxu0 0.0
    %1716 = vmatpush1.msra.mxu0 %v285
    %1717 = vmatprep.subr.mxu0 0.0
    %1718 = vmatpush1.msra.mxu0 %v284
    %1719 = vmatprep.subr.mxu0 0.0
    %1720 = vmatpush1.msra.mxu0 %v283
    %1721 = vmatprep.subr.mxu0 0.0
    %1722 = vmatpush1.msra.mxu0 %v282
    %1723 = vmatprep.subr.mxu0 0.0
    %1724 = vmatpush2.msra.mxu0 0.0
    %1725 = vmatprep.subr.mxu0 0.0
    %1726 = vmatpush2.msra.mxu0 0.0
    %1727 = vmatprep.subr.mxu0 0.0
    %1728 = vmatpush2.msra.mxu0 0.0
    %1729 = vmatprep.subr.mxu0 0.0
    %1730 = vmatpush2.msra.mxu0 0.0
    %1731 = vmatprep.subr.mxu0 0.0
    %1732 = vmatpush2.msra.mxu0 0.0
    %1733 = vmatprep.subr.mxu0 0.0
    %1734 = vmatpush2.msra.mxu0 0.0
    %1735 = vmatprep.subr.mxu0 0.0
    %1736 = vmatpush2.msra.mxu0 0.0
    %1737 = vmatprep.subr.mxu0 0.0
    %1738 = vmatpush2.msra.mxu0 0.0
    %1739 = vmatprep.subr.mxu0 0.0
    %1740 = vmatpush2.msra.mxu0 0.0
    %1741 = vmatprep.subr.mxu0 0.0
    %1742 = vmatpush2.msra.mxu0 0.0
    %1743 = vmatprep.subr.mxu0 0.0
    %1744 = vmatpush2.msra.mxu0 0.0
    %1745 = vmatprep.subr.mxu0 0.0
    %1746 = vmatpush2.msra.mxu0 0.0
    %1747 = vmatprep.subr.mxu0 0.0
    %1748 = vmatpush2.msra.mxu0 0.0
    %1749 = vmatprep.subr.mxu0 0.0
    %1750 = vmatpush2.msra.mxu0 0.0
    %1751 = vmatprep.subr.mxu0 0.0
    %1752 = vmatpush2.msra.mxu0 0.0
    %1753 = vmatprep.subr.mxu0 0.0
    %1754 = vmatpush2.msra.mxu0 0.0
    %1755 = vmatprep.mubr.f32.mxu0 0.0
    %1756 = vmatmul.mubr.f32.gmra.mxu0 %v1689
    %v1757 = vpop.f32.mrf.mxu0
    %v1758 = vadd.f32 %v335, %v1757
    %v1759 = vpop.f32.mrf.mxu0
    %1760 = vdwg.mxu0
    %1761 = vmatprep.subr.mxu0 0.0
    %1762 = vmatpush1.msra.mxu0 0.0
    %1763 = vmatprep.subr.mxu0 0.0
    %1764 = vmatpush1.msra.mxu0 0.0
    %1765 = vmatprep.subr.mxu0 0.0
    %1766 = vmatpush1.msra.mxu0 0.0
    %1767 = vmatprep.subr.mxu0 0.0
    %1768 = vmatpush1.msra.mxu0 0.0
    %1769 = vmatprep.subr.mxu0 0.0
    %1770 = vmatpush1.msra.mxu0 0.0
    %1771 = vmatprep.subr.mxu0 0.0
    %1772 = vmatpush1.msra.mxu0 0.0
    %1773 = vmatprep.subr.mxu0 0.0
    %1774 = vmatpush1.msra.mxu0 0.0
    %1775 = vmatprep.subr.mxu0 0.0
    %1776 = vmatpush1.msra.mxu0 0.0
    %1777 = vmatprep.subr.mxu0 0.0
    %1778 = vmatpush1.msra.mxu0 0.0
    %1779 = vmatprep.subr.mxu0 0.0
    %1780 = vmatpush1.msra.mxu0 0.0
    %1781 = vmatprep.subr.mxu0 0.0
    %1782 = vmatpush1.msra.mxu0 0.0
    %1783 = vmatprep.subr.mxu0 0.0
    %1784 = vmatpush1.msra.mxu0 0.0
    %1785 = vmatprep.subr.mxu0 0.0
    %1786 = vmatpush1.msra.mxu0 %v289
    %1787 = vmatprep.subr.mxu0 0.0
    %1788 = vmatpush1.msra.mxu0 %v288
    %1789 = vmatprep.subr.mxu0 0.0
    %1790 = vmatpush1.msra.mxu0 %v287
    %1791 = vmatprep.subr.mxu0 0.0
    %1792 = vmatpush1.msra.mxu0 %v286
    %1793 = vmatprep.subr.mxu0 0.0
    %1794 = vmatpush2.msra.mxu0 0.0
    %1795 = vmatprep.subr.mxu0 0.0
    %1796 = vmatpush2.msra.mxu0 0.0
    %1797 = vmatprep.subr.mxu0 0.0
    %1798 = vmatpush2.msra.mxu0 0.0
    %1799 = vmatprep.subr.mxu0 0.0
    %1800 = vmatpush2.msra.mxu0 0.0
    %1801 = vmatprep.subr.mxu0 0.0
    %1802 = vmatpush2.msra.mxu0 0.0
    %1803 = vmatprep.subr.mxu0 0.0
    %1804 = vmatpush2.msra.mxu0 0.0
    %1805 = vmatprep.subr.mxu0 0.0
    %1806 = vmatpush2.msra.mxu0 0.0
    %1807 = vmatprep.subr.mxu0 0.0
    %1808 = vmatpush2.msra.mxu0 0.0
    %1809 = vmatprep.subr.mxu0 0.0
    %1810 = vmatpush2.msra.mxu0 0.0
    %1811 = vmatprep.subr.mxu0 0.0
    %1812 = vmatpush2.msra.mxu0 0.0
    %1813 = vmatprep.subr.mxu0 0.0
    %1814 = vmatpush2.msra.mxu0 0.0
    %1815 = vmatprep.subr.mxu0 0.0
    %1816 = vmatpush2.msra.mxu0 0.0
    %1817 = vmatprep.subr.mxu0 0.0
    %1818 = vmatpush2.msra.mxu0 0.0
    %1819 = vmatprep.subr.mxu0 0.0
    %1820 = vmatpush2.msra.mxu0 0.0
    %1821 = vmatprep.subr.mxu0 0.0
    %1822 = vmatpush2.msra.mxu0 0.0
    %1823 = vmatprep.subr.mxu0 0.0
    %1824 = vmatpush2.msra.mxu0 0.0
    %1825 = vmatprep.mubr.f32.mxu0 0.0
    %1826 = vmatmul.mubr.f32.gmra.mxu0 %v1689
    %v1827 = vpop.f32.mrf.mxu0
    %v1828 = vadd.f32 %v342, %v1827
    %v1829 = vpop.f32.mrf.mxu0
    %1830 = vdwg.mxu0
    %1831 = vmatprep.subr.mxu0 0.0
    %1832 = vmatpush1.msra.mxu0 0.0
    %1833 = vmatprep.subr.mxu0 0.0
    %1834 = vmatpush1.msra.mxu0 0.0
    %1835 = vmatprep.subr.mxu0 0.0
    %1836 = vmatpush1.msra.mxu0 0.0
    %1837 = vmatprep.subr.mxu0 0.0
    %1838 = vmatpush1.msra.mxu0 0.0
    %1839 = vmatprep.subr.mxu0 0.0
    %1840 = vmatpush1.msra.mxu0 0.0
    %1841 = vmatprep.subr.mxu0 0.0
    %1842 = vmatpush1.msra.mxu0 0.0
    %1843 = vmatprep.subr.mxu0 0.0
    %1844 = vmatpush1.msra.mxu0 0.0
    %1845 = vmatprep.subr.mxu0 0.0
    %1846 = vmatpush1.msra.mxu0 0.0
    %1847 = vmatprep.subr.mxu0 0.0
    %1848 = vmatpush1.msra.mxu0 0.0
    %1849 = vmatprep.subr.mxu0 0.0
    %1850 = vmatpush1.msra.mxu0 0.0
    %1851 = vmatprep.subr.mxu0 0.0
    %1852 = vmatpush1.msra.mxu0 0.0
    %1853 = vmatprep.subr.mxu0 0.0
    %1854 = vmatpush1.msra.mxu0 0.0
    %1855 = vmatprep.subr.mxu0 0.0
    %1856 = vmatpush1.msra.mxu0 %v293
    %1857 = vmatprep.subr.mxu0 0.0
    %1858 = vmatpush1.msra.mxu0 %v292
    %1859 = vmatprep.subr.mxu0 0.0
    %1860 = vmatpush1.msra.mxu0 %v291
    %1861 = vmatprep.subr.mxu0 0.0
    %1862 = vmatpush1.msra.mxu0 %v290
    %1863 = vmatprep.subr.mxu0 0.0
    %1864 = vmatpush2.msra.mxu0 0.0
    %1865 = vmatprep.subr.mxu0 0.0
    %1866 = vmatpush2.msra.mxu0 0.0
    %1867 = vmatprep.subr.mxu0 0.0
    %1868 = vmatpush2.msra.mxu0 0.0
    %1869 = vmatprep.subr.mxu0 0.0
    %1870 = vmatpush2.msra.mxu0 0.0
    %1871 = vmatprep.subr.mxu0 0.0
    %1872 = vmatpush2.msra.mxu0 0.0
    %1873 = vmatprep.subr.mxu0 0.0
    %1874 = vmatpush2.msra.mxu0 0.0
    %1875 = vmatprep.subr.mxu0 0.0
    %1876 = vmatpush2.msra.mxu0 0.0
    %1877 = vmatprep.subr.mxu0 0.0
    %1878 = vmatpush2.msra.mxu0 0.0
    %1879 = vmatprep.subr.mxu0 0.0
    %1880 = vmatpush2.msra.mxu0 0.0
    %1881 = vmatprep.subr.mxu0 0.0
    %1882 = vmatpush2.msra.mxu0 0.0
    %1883 = vmatprep.subr.mxu0 0.0
    %1884 = vmatpush2.msra.mxu0 0.0
    %1885 = vmatprep.subr.mxu0 0.0
    %1886 = vmatpush2.msra.mxu0 0.0
    %1887 = vmatprep.subr.mxu0 0.0
    %1888 = vmatpush2.msra.mxu0 0.0
    %1889 = vmatprep.subr.mxu0 0.0
    %1890 = vmatpush2.msra.mxu0 0.0
    %1891 = vmatprep.subr.mxu0 0.0
    %1892 = vmatpush2.msra.mxu0 0.0
    %1893 = vmatprep.subr.mxu0 0.0
    %1894 = vmatpush2.msra.mxu0 0.0
    %1895 = vmatprep.mubr.f32.mxu0 0.0
    %1896 = vmatmul.mubr.f32.gmra.mxu0 %v1689
    %v1897 = vpop.f32.mrf.mxu0
    %v1898 = vadd.f32 %v349, %v1897
    %v1899 = vpop.f32.mrf.mxu0
    %1900 = vdwg.mxu0
    %v1902 = vrot.slane %v1758, 5
    %v1903 = vrot.slane %v1758, 6
    %v1906 = vadd.f32 %v690, %v1902
    %v1907 = vadd.f32 %v694, %v1903
    %v1908 = vxor.u32 %v1906, 2147483648
    %v1909 = vxor.u32 %v1907, 2147483648
    %v1910 = vmul.f32 %v1908, 1.442695
    %v1911 = vpow.pop %v1910
    %v1912 = vmul.f32 %v1909, 1.442695
    %v1913 = vpow.pop %v1912
    %v1914 = vadd.f32 %v1911, 1.0
    %v1915 = vadd.f32 %v1913, 1.0
    %v1916 = vrcp.pop %v1914
    %v1917 = vmul.f32 1.0, %v1916
    %v1918 = vrcp.pop %v1915
    %v1919 = vmul.f32 1.0, %v1918
    %v1921 = vrot.slane %v1828, 5
    %v1922 = vrot.slane %v1828, 6
    %v1925 = vadd.f32 %v763, %v1921
    %v1926 = vadd.f32 %v767, %v1922
    %v1927 = vxor.u32 %v1925, 2147483648
    %v1928 = vxor.u32 %v1926, 2147483648
    %v1929 = vmul.f32 %v1927, 1.442695
    %v1930 = vpow.pop %v1929
    %v1931 = vmul.f32 %v1928, 1.442695
    %v1932 = vpow.pop %v1931
    %v1933 = vadd.f32 %v1930, 1.0
    %v1934 = vadd.f32 %v1932, 1.0
    %v1935 = vrcp.pop %v1933
    %v1936 = vmul.f32 1.0, %v1935
    %v1937 = vrcp.pop %v1934
    %v1938 = vmul.f32 1.0, %v1937
    %v1940 = vrot.slane %v1898, 5
    %v1941 = vrot.slane %v1898, 6
    %v1944 = vmul.f32 %v1917, %v1940
    %v1945 = vmul.f32 %v1919, %v1941
    %v1946 = vadd.f32 %v836, %v1944
    %v1947 = vadd.f32 %v840, %v1945
    %v1948 = vtanh.pop %v1946
    %v1949 = vtanh.pop %v1947
    %v1950 = vsub.f32 1.0, %v1936
    %v1951 = vsub.f32 1.0, %v1938
    %v1952 = vmul.f32 %v1950, %v1948
    %v1953 = vmul.f32 %v1951, %v1949
    %v1954 = vrot.slane %v1676, 7
    %v1955 = vrot.slane %v1677, 7
    %v1958 = vmul.f32 %v1936, %v1954
    %v1959 = vmul.f32 %v1938, %v1955
    %v1960 = vadd.f32 %v1952, %v1958
    %v1961 = vadd.f32 %v1953, %v1959
    %v1962 = vrot.slane %v537, 4
    %v1963 = vrot.slane %v538, 3
    %v1964 = vsel %vm1122, %v1963, %v1962
    %v1965 = vsel %vm542, %v1964, 0
    %1967 = vmatprep.subr.mxu0 0.0
    %1968 = vmatpush1.msra.mxu0 0.0
    %1969 = vmatprep.subr.mxu0 0.0
    %1970 = vmatpush1.msra.mxu0 0.0
    %1971 = vmatprep.subr.mxu0 0.0
    %1972 = vmatpush1.msra.mxu0 0.0
    %1973 = vmatprep.subr.mxu0 0.0
    %1974 = vmatpush1.msra.mxu0 0.0
    %1975 = vmatprep.subr.mxu0 0.0
    %1976 = vmatpush1.msra.mxu0 0.0
    %1977 = vmatprep.subr.mxu0 0.0
    %1978 = vmatpush1.msra.mxu0 0.0
    %1979 = vmatprep.subr.mxu0 0.0
    %1980 = vmatpush1.msra.mxu0 0.0
    %1981 = vmatprep.subr.mxu0 0.0
    %1982 = vmatpush1.msra.mxu0 0.0
    %1983 = vmatprep.subr.mxu0 0.0
    %1984 = vmatpush1.msra.mxu0 0.0
    %1985 = vmatprep.subr.mxu0 0.0
    %1986 = vmatpush1.msra.mxu0 0.0
    %1987 = vmatprep.subr.mxu0 0.0
    %1988 = vmatpush1.msra.mxu0 0.0
    %1989 = vmatprep.subr.mxu0 0.0
    %1990 = vmatpush1.msra.mxu0 0.0
    %1991 = vmatprep.subr.mxu0 0.0
    %1992 = vmatpush1.msra.mxu0 0.0
    %1993 = vmatprep.subr.mxu0 0.0
    %1994 = vmatpush1.msra.mxu0 0.0
    %1995 = vmatprep.subr.mxu0 0.0
    %1996 = vmatpush1.msra.mxu0 %v547
    %1997 = vmatprep.subr.mxu0 0.0
    %1998 = vmatpush1.msra.mxu0 %v274
    %1999 = vmatprep.subr.mxu0 0.0
    %2000 = vmatpush2.msra.mxu0 0.0
    %2001 = vmatprep.subr.mxu0 0.0
    %2002 = vmatpush2.msra.mxu0 0.0
    %2003 = vmatprep.subr.mxu0 0.0
    %2004 = vmatpush2.msra.mxu0 0.0
    %2005 = vmatprep.subr.mxu0 0.0
    %2006 = vmatpush2.msra.mxu0 0.0
    %2007 = vmatprep.subr.mxu0 0.0
    %2008 = vmatpush2.msra.mxu0 0.0
    %2009 = vmatprep.subr.mxu0 0.0
    %2010 = vmatpush2.msra.mxu0 0.0
    %2011 = vmatprep.subr.mxu0 0.0
    %2012 = vmatpush2.msra.mxu0 0.0
    %2013 = vmatprep.subr.mxu0 0.0
    %2014 = vmatpush2.msra.mxu0 0.0
    %2015 = vmatprep.subr.mxu0 0.0
    %2016 = vmatpush2.msra.mxu0 0.0
    %2017 = vmatprep.subr.mxu0 0.0
    %2018 = vmatpush2.msra.mxu0 0.0
    %2019 = vmatprep.subr.mxu0 0.0
    %2020 = vmatpush2.msra.mxu0 0.0
    %2021 = vmatprep.subr.mxu0 0.0
    %2022 = vmatpush2.msra.mxu0 0.0
    %2023 = vmatprep.subr.mxu0 0.0
    %2024 = vmatpush2.msra.mxu0 0.0
    %2025 = vmatprep.subr.mxu0 0.0
    %2026 = vmatpush2.msra.mxu0 0.0
    %2027 = vmatprep.subr.mxu0 0.0
    %2028 = vmatpush2.msra.mxu0 0.0
    %2029 = vmatprep.subr.mxu0 0.0
    %2030 = vmatpush2.msra.mxu0 0.0
    %2031 = vmatprep.mubr.f32.mxu0 0.0
    %2032 = vmatmul.mubr.f32.gmra.mxu0 %v1965
    %v2033 = vpop.f32.mrf.mxu0
    %v2034 = vadd.f32 %v307, %v2033
    %v2035 = vpop.f32.mrf.mxu0
    %2036 = vdwg.mxu0
    %v2037 = vmax.f32 %v2034, 0.0
    %v2039 = vsel %vm455, %v2037, 0
    %2041 = vmatprep.subr.mxu0 0.0
    %2042 = vmatpush1.msra.mxu0 0.0
    %2043 = vmatprep.subr.mxu0 0.0
    %2044 = vmatpush1.msra.mxu0 0.0
    %2045 = vmatprep.subr.mxu0 0.0
    %2046 = vmatpush1.msra.mxu0 0.0
    %2047 = vmatprep.subr.mxu0 0.0
    %2048 = vmatpush1.msra.mxu0 0.0
    %2049 = vmatprep.subr.mxu0 0.0
    %2050 = vmatpush1.msra.mxu0 0.0
    %2051 = vmatprep.subr.mxu0 0.0
    %2052 = vmatpush1.msra.mxu0 0.0
    %2053 = vmatprep.subr.mxu0 0.0
    %2054 = vmatpush1.msra.mxu0 0.0
    %2055 = vmatprep.subr.mxu0 0.0
    %2056 = vmatpush1.msra.mxu0 0.0
    %2057 = vmatprep.subr.mxu0 0.0
    %2058 = vmatpush1.msra.mxu0 0.0
    %2059 = vmatprep.subr.mxu0 0.0
    %2060 = vmatpush1.msra.mxu0 0.0
    %2061 = vmatprep.subr.mxu0 0.0
    %2062 = vmatpush1.msra.mxu0 0.0
    %2063 = vmatprep.subr.mxu0 0.0
    %2064 = vmatpush1.msra.mxu0 0.0
    %2065 = vmatprep.subr.mxu0 0.0
    %2066 = vmatpush1.msra.mxu0 0.0
    %2067 = vmatprep.subr.mxu0 0.0
    %2068 = vmatpush1.msra.mxu0 0.0
    %2069 = vmatprep.subr.mxu0 0.0
    %2070 = vmatpush1.msra.mxu0 %v277
    %2071 = vmatprep.subr.mxu0 0.0
    %2072 = vmatpush1.msra.mxu0 %v276
    %2073 = vmatprep.subr.mxu0 0.0
    %2074 = vmatpush2.msra.mxu0 0.0
    %2075 = vmatprep.subr.mxu0 0.0
    %2076 = vmatpush2.msra.mxu0 0.0
    %2077 = vmatprep.subr.mxu0 0.0
    %2078 = vmatpush2.msra.mxu0 0.0
    %2079 = vmatprep.subr.mxu0 0.0
    %2080 = vmatpush2.msra.mxu0 0.0
    %2081 = vmatprep.subr.mxu0 0.0
    %2082 = vmatpush2.msra.mxu0 0.0
    %2083 = vmatprep.subr.mxu0 0.0
    %2084 = vmatpush2.msra.mxu0 0.0
    %2085 = vmatprep.subr.mxu0 0.0
    %2086 = vmatpush2.msra.mxu0 0.0
    %2087 = vmatprep.subr.mxu0 0.0
    %2088 = vmatpush2.msra.mxu0 0.0
    %2089 = vmatprep.subr.mxu0 0.0
    %2090 = vmatpush2.msra.mxu0 0.0
    %2091 = vmatprep.subr.mxu0 0.0
    %2092 = vmatpush2.msra.mxu0 0.0
    %2093 = vmatprep.subr.mxu0 0.0
    %2094 = vmatpush2.msra.mxu0 0.0
    %2095 = vmatprep.subr.mxu0 0.0
    %2096 = vmatpush2.msra.mxu0 0.0
    %2097 = vmatprep.subr.mxu0 0.0
    %2098 = vmatpush2.msra.mxu0 0.0
    %2099 = vmatprep.subr.mxu0 0.0
    %2100 = vmatpush2.msra.mxu0 0.0
    %2101 = vmatprep.subr.mxu0 0.0
    %2102 = vmatpush2.msra.mxu0 0.0
    %2103 = vmatprep.subr.mxu0 0.0
    %2104 = vmatpush2.msra.mxu0 0.0
    %2105 = vmatprep.mubr.f32.mxu0 0.0
    %2106 = vmatmul.mubr.f32.gmra.mxu0 %v2039
    %v2107 = vpop.f32.mrf.mxu0
    %v2108 = vadd.f32 %v314, %v2107
    %v2109 = vpop.f32.mrf.mxu0
    %2110 = vdwg.mxu0
    %2111 = vmatprep.subr.mxu0 0.0
    %2112 = vmatpush1.msra.mxu0 0.0
    %2113 = vmatprep.subr.mxu0 0.0
    %2114 = vmatpush1.msra.mxu0 0.0
    %2115 = vmatprep.subr.mxu0 0.0
    %2116 = vmatpush1.msra.mxu0 0.0
    %2117 = vmatprep.subr.mxu0 0.0
    %2118 = vmatpush1.msra.mxu0 0.0
    %2119 = vmatprep.subr.mxu0 0.0
    %2120 = vmatpush1.msra.mxu0 0.0
    %2121 = vmatprep.subr.mxu0 0.0
    %2122 = vmatpush1.msra.mxu0 0.0
    %2123 = vmatprep.subr.mxu0 0.0
    %2124 = vmatpush1.msra.mxu0 0.0
    %2125 = vmatprep.subr.mxu0 0.0
    %2126 = vmatpush1.msra.mxu0 0.0
    %2127 = vmatprep.subr.mxu0 0.0
    %2128 = vmatpush1.msra.mxu0 0.0
    %2129 = vmatprep.subr.mxu0 0.0
    %2130 = vmatpush1.msra.mxu0 0.0
    %2131 = vmatprep.subr.mxu0 0.0
    %2132 = vmatpush1.msra.mxu0 0.0
    %2133 = vmatprep.subr.mxu0 0.0
    %2134 = vmatpush1.msra.mxu0 0.0
    %2135 = vmatprep.subr.mxu0 0.0
    %2136 = vmatpush1.msra.mxu0 0.0
    %2137 = vmatprep.subr.mxu0 0.0
    %2138 = vmatpush1.msra.mxu0 0.0
    %2139 = vmatprep.subr.mxu0 0.0
    %2140 = vmatpush1.msra.mxu0 %v279
    %2141 = vmatprep.subr.mxu0 0.0
    %2142 = vmatpush1.msra.mxu0 %v278
    %2143 = vmatprep.subr.mxu0 0.0
    %2144 = vmatpush2.msra.mxu0 0.0
    %2145 = vmatprep.subr.mxu0 0.0
    %2146 = vmatpush2.msra.mxu0 0.0
    %2147 = vmatprep.subr.mxu0 0.0
    %2148 = vmatpush2.msra.mxu0 0.0
    %2149 = vmatprep.subr.mxu0 0.0
    %2150 = vmatpush2.msra.mxu0 0.0
    %2151 = vmatprep.subr.mxu0 0.0
    %2152 = vmatpush2.msra.mxu0 0.0
    %2153 = vmatprep.subr.mxu0 0.0
    %2154 = vmatpush2.msra.mxu0 0.0
    %2155 = vmatprep.subr.mxu0 0.0
    %2156 = vmatpush2.msra.mxu0 0.0
    %2157 = vmatprep.subr.mxu0 0.0
    %2158 = vmatpush2.msra.mxu0 0.0
    %2159 = vmatprep.subr.mxu0 0.0
    %2160 = vmatpush2.msra.mxu0 0.0
    %2161 = vmatprep.subr.mxu0 0.0
    %2162 = vmatpush2.msra.mxu0 0.0
    %2163 = vmatprep.subr.mxu0 0.0
    %2164 = vmatpush2.msra.mxu0 0.0
    %2165 = vmatprep.subr.mxu0 0.0
    %2166 = vmatpush2.msra.mxu0 0.0
    %2167 = vmatprep.subr.mxu0 0.0
    %2168 = vmatpush2.msra.mxu0 0.0
    %2169 = vmatprep.subr.mxu0 0.0
    %2170 = vmatpush2.msra.mxu0 0.0
    %2171 = vmatprep.subr.mxu0 0.0
    %2172 = vmatpush2.msra.mxu0 0.0
    %2173 = vmatprep.subr.mxu0 0.0
    %2174 = vmatpush2.msra.mxu0 0.0
    %2175 = vmatprep.mubr.f32.mxu0 0.0
    %2176 = vmatmul.mubr.f32.gmra.mxu0 %v2039
    %v2177 = vpop.f32.mrf.mxu0
    %v2178 = vadd.f32 %v321, %v2177
    %v2179 = vpop.f32.mrf.mxu0
    %2180 = vdwg.mxu0
    %2181 = vmatprep.subr.mxu0 0.0
    %2182 = vmatpush1.msra.mxu0 0.0
    %2183 = vmatprep.subr.mxu0 0.0
    %2184 = vmatpush1.msra.mxu0 0.0
    %2185 = vmatprep.subr.mxu0 0.0
    %2186 = vmatpush1.msra.mxu0 0.0
    %2187 = vmatprep.subr.mxu0 0.0
    %2188 = vmatpush1.msra.mxu0 0.0
    %2189 = vmatprep.subr.mxu0 0.0
    %2190 = vmatpush1.msra.mxu0 0.0
    %2191 = vmatprep.subr.mxu0 0.0
    %2192 = vmatpush1.msra.mxu0 0.0
    %2193 = vmatprep.subr.mxu0 0.0
    %2194 = vmatpush1.msra.mxu0 0.0
    %2195 = vmatprep.subr.mxu0 0.0
    %2196 = vmatpush1.msra.mxu0 0.0
    %2197 = vmatprep.subr.mxu0 0.0
    %2198 = vmatpush1.msra.mxu0 0.0
    %2199 = vmatprep.subr.mxu0 0.0
    %2200 = vmatpush1.msra.mxu0 0.0
    %2201 = vmatprep.subr.mxu0 0.0
    %2202 = vmatpush1.msra.mxu0 0.0
    %2203 = vmatprep.subr.mxu0 0.0
    %2204 = vmatpush1.msra.mxu0 0.0
    %2205 = vmatprep.subr.mxu0 0.0
    %2206 = vmatpush1.msra.mxu0 0.0
    %2207 = vmatprep.subr.mxu0 0.0
    %2208 = vmatpush1.msra.mxu0 0.0
    %2209 = vmatprep.subr.mxu0 0.0
    %2210 = vmatpush1.msra.mxu0 %v281
    %2211 = vmatprep.subr.mxu0 0.0
    %2212 = vmatpush1.msra.mxu0 %v280
    %2213 = vmatprep.subr.mxu0 0.0
    %2214 = vmatpush2.msra.mxu0 0.0
    %2215 = vmatprep.subr.mxu0 0.0
    %2216 = vmatpush2.msra.mxu0 0.0
    %2217 = vmatprep.subr.mxu0 0.0
    %2218 = vmatpush2.msra.mxu0 0.0
    %2219 = vmatprep.subr.mxu0 0.0
    %2220 = vmatpush2.msra.mxu0 0.0
    %2221 = vmatprep.subr.mxu0 0.0
    %2222 = vmatpush2.msra.mxu0 0.0
    %2223 = vmatprep.subr.mxu0 0.0
    %2224 = vmatpush2.msra.mxu0 0.0
    %2225 = vmatprep.subr.mxu0 0.0
    %2226 = vmatpush2.msra.mxu0 0.0
    %2227 = vmatprep.subr.mxu0 0.0
    %2228 = vmatpush2.msra.mxu0 0.0
    %2229 = vmatprep.subr.mxu0 0.0
    %2230 = vmatpush2.msra.mxu0 0.0
    %2231 = vmatprep.subr.mxu0 0.0
    %2232 = vmatpush2.msra.mxu0 0.0
    %2233 = vmatprep.subr.mxu0 0.0
    %2234 = vmatpush2.msra.mxu0 0.0
    %2235 = vmatprep.subr.mxu0 0.0
    %2236 = vmatpush2.msra.mxu0 0.0
    %2237 = vmatprep.subr.mxu0 0.0
    %2238 = vmatpush2.msra.mxu0 0.0
    %2239 = vmatprep.subr.mxu0 0.0
    %2240 = vmatpush2.msra.mxu0 0.0
    %2241 = vmatprep.subr.mxu0 0.0
    %2242 = vmatpush2.msra.mxu0 0.0
    %2243 = vmatprep.subr.mxu0 0.0
    %2244 = vmatpush2.msra.mxu0 0.0
    %2245 = vmatprep.mubr.f32.mxu0 0.0
    %2246 = vmatmul.mubr.f32.gmra.mxu0 %v2039
    %v2247 = vpop.f32.mrf.mxu0
    %v2248 = vadd.f32 %v328, %v2247
    %v2249 = vpop.f32.mrf.mxu0
    %2250 = vdwg.mxu0
    %v2253 = vlaneseq
    %v2254 = vshrl.u32 %v2253, 7
    %v2255 = vsub.s32 3, %v2254
    %v2256 = vrot.slane %v1960, %v2255
    %v2257 = vlaneseq
    %v2258 = vshrl.u32 %v2257, 7
    %v2259 = vsub.s32 3, %v2258
    %v2260 = vrot.slane %v1961, %v2259
    %v2261 = vsel %vm1122, %v2260, %v2256
    %v2262 = vsel %vm370, %v2261, 0
    %2264 = vmatprep.subr.mxu0 0.0
    %2265 = vmatpush1.msra.mxu0 0.0
    %2266 = vmatprep.subr.mxu0 0.0
    %2267 = vmatpush1.msra.mxu0 0.0
    %2268 = vmatprep.subr.mxu0 0.0
    %2269 = vmatpush1.msra.mxu0 0.0
    %2270 = vmatprep.subr.mxu0 0.0
    %2271 = vmatpush1.msra.mxu0 0.0
    %2272 = vmatprep.subr.mxu0 0.0
    %2273 = vmatpush1.msra.mxu0 0.0
    %2274 = vmatprep.subr.mxu0 0.0
    %2275 = vmatpush1.msra.mxu0 0.0
    %2276 = vmatprep.subr.mxu0 0.0
    %2277 = vmatpush1.msra.mxu0 0.0
    %2278 = vmatprep.subr.mxu0 0.0
    %2279 = vmatpush1.msra.mxu0 0.0
    %2280 = vmatprep.subr.mxu0 0.0
    %2281 = vmatpush1.msra.mxu0 0.0
    %2282 = vmatprep.subr.mxu0 0.0
    %2283 = vmatpush1.msra.mxu0 0.0
    %2284 = vmatprep.subr.mxu0 0.0
    %2285 = vmatpush1.msra.mxu0 0.0
    %2286 = vmatprep.subr.mxu0 0.0
    %2287 = vmatpush1.msra.mxu0 0.0
    %2288 = vmatprep.subr.mxu0 0.0
    %2289 = vmatpush1.msra.mxu0 %v285
    %2290 = vmatprep.subr.mxu0 0.0
    %2291 = vmatpush1.msra.mxu0 %v284
    %2292 = vmatprep.subr.mxu0 0.0
    %2293 = vmatpush1.msra.mxu0 %v283
    %2294 = vmatprep.subr.mxu0 0.0
    %2295 = vmatpush1.msra.mxu0 %v282
    %2296 = vmatprep.subr.mxu0 0.0
    %2297 = vmatpush2.msra.mxu0 0.0
    %2298 = vmatprep.subr.mxu0 0.0
    %2299 = vmatpush2.msra.mxu0 0.0
    %2300 = vmatprep.subr.mxu0 0.0
    %2301 = vmatpush2.msra.mxu0 0.0
    %2302 = vmatprep.subr.mxu0 0.0
    %2303 = vmatpush2.msra.mxu0 0.0
    %2304 = vmatprep.subr.mxu0 0.0
    %2305 = vmatpush2.msra.mxu0 0.0
    %2306 = vmatprep.subr.mxu0 0.0
    %2307 = vmatpush2.msra.mxu0 0.0
    %2308 = vmatprep.subr.mxu0 0.0
    %2309 = vmatpush2.msra.mxu0 0.0
    %2310 = vmatprep.subr.mxu0 0.0
    %2311 = vmatpush2.msra.mxu0 0.0
    %2312 = vmatprep.subr.mxu0 0.0
    %2313 = vmatpush2.msra.mxu0 0.0
    %2314 = vmatprep.subr.mxu0 0.0
    %2315 = vmatpush2.msra.mxu0 0.0
    %2316 = vmatprep.subr.mxu0 0.0
    %2317 = vmatpush2.msra.mxu0 0.0
    %2318 = vmatprep.subr.mxu0 0.0
    %2319 = vmatpush2.msra.mxu0 0.0
    %2320 = vmatprep.subr.mxu0 0.0
    %2321 = vmatpush2.msra.mxu0 0.0
    %2322 = vmatprep.subr.mxu0 0.0
    %2323 = vmatpush2.msra.mxu0 0.0
    %2324 = vmatprep.subr.mxu0 0.0
    %2325 = vmatpush2.msra.mxu0 0.0
    %2326 = vmatprep.subr.mxu0 0.0
    %2327 = vmatpush2.msra.mxu0 0.0
    %2328 = vmatprep.mubr.f32.mxu0 0.0
    %2329 = vmatmul.mubr.f32.gmra.mxu0 %v2262
    %v2330 = vpop.f32.mrf.mxu0
    %v2331 = vadd.f32 %v335, %v2330
    %v2332 = vpop.f32.mrf.mxu0
    %2333 = vdwg.mxu0
    %2334 = vmatprep.subr.mxu0 0.0
    %2335 = vmatpush1.msra.mxu0 0.0
    %2336 = vmatprep.subr.mxu0 0.0
    %2337 = vmatpush1.msra.mxu0 0.0
    %2338 = vmatprep.subr.mxu0 0.0
    %2339 = vmatpush1.msra.mxu0 0.0
    %2340 = vmatprep.subr.mxu0 0.0
    %2341 = vmatpush1.msra.mxu0 0.0
    %2342 = vmatprep.subr.mxu0 0.0
    %2343 = vmatpush1.msra.mxu0 0.0
    %2344 = vmatprep.subr.mxu0 0.0
    %2345 = vmatpush1.msra.mxu0 0.0
    %2346 = vmatprep.subr.mxu0 0.0
    %2347 = vmatpush1.msra.mxu0 0.0
    %2348 = vmatprep.subr.mxu0 0.0
    %2349 = vmatpush1.msra.mxu0 0.0
    %2350 = vmatprep.subr.mxu0 0.0
    %2351 = vmatpush1.msra.mxu0 0.0
    %2352 = vmatprep.subr.mxu0 0.0
    %2353 = vmatpush1.msra.mxu0 0.0
    %2354 = vmatprep.subr.mxu0 0.0
    %2355 = vmatpush1.msra.mxu0 0.0
    %2356 = vmatprep.subr.mxu0 0.0
    %2357 = vmatpush1.msra.mxu0 0.0
    %2358 = vmatprep.subr.mxu0 0.0
    %2359 = vmatpush1.msra.mxu0 %v289
    %2360 = vmatprep.subr.mxu0 0.0
    %2361 = vmatpush1.msra.mxu0 %v288
    %2362 = vmatprep.subr.mxu0 0.0
    %2363 = vmatpush1.msra.mxu0 %v287
    %2364 = vmatprep.subr.mxu0 0.0
    %2365 = vmatpush1.msra.mxu0 %v286
    %2366 = vmatprep.subr.mxu0 0.0
    %2367 = vmatpush2.msra.mxu0 0.0
    %2368 = vmatprep.subr.mxu0 0.0
    %2369 = vmatpush2.msra.mxu0 0.0
    %2370 = vmatprep.subr.mxu0 0.0
    %2371 = vmatpush2.msra.mxu0 0.0
    %2372 = vmatprep.subr.mxu0 0.0
    %2373 = vmatpush2.msra.mxu0 0.0
    %2374 = vmatprep.subr.mxu0 0.0
    %2375 = vmatpush2.msra.mxu0 0.0
    %2376 = vmatprep.subr.mxu0 0.0
    %2377 = vmatpush2.msra.mxu0 0.0
    %2378 = vmatprep.subr.mxu0 0.0
    %2379 = vmatpush2.msra.mxu0 0.0
    %2380 = vmatprep.subr.mxu0 0.0
    %2381 = vmatpush2.msra.mxu0 0.0
    %2382 = vmatprep.subr.mxu0 0.0
    %2383 = vmatpush2.msra.mxu0 0.0
    %2384 = vmatprep.subr.mxu0 0.0
    %2385 = vmatpush2.msra.mxu0 0.0
    %2386 = vmatprep.subr.mxu0 0.0
    %2387 = vmatpush2.msra.mxu0 0.0
    %2388 = vmatprep.subr.mxu0 0.0
    %2389 = vmatpush2.msra.mxu0 0.0
    %2390 = vmatprep.subr.mxu0 0.0
    %2391 = vmatpush2.msra.mxu0 0.0
    %2392 = vmatprep.subr.mxu0 0.0
    %2393 = vmatpush2.msra.mxu0 0.0
    %2394 = vmatprep.subr.mxu0 0.0
    %2395 = vmatpush2.msra.mxu0 0.0
    %2396 = vmatprep.subr.mxu0 0.0
    %2397 = vmatpush2.msra.mxu0 0.0
    %2398 = vmatprep.mubr.f32.mxu0 0.0
    %2399 = vmatmul.mubr.f32.gmra.mxu0 %v2262
    %v2400 = vpop.f32.mrf.mxu0
    %v2401 = vadd.f32 %v342, %v2400
    %v2402 = vpop.f32.mrf.mxu0
    %2403 = vdwg.mxu0
    %2404 = vmatprep.subr.mxu0 0.0
    %2405 = vmatpush1.msra.mxu0 0.0
    %2406 = vmatprep.subr.mxu0 0.0
    %2407 = vmatpush1.msra.mxu0 0.0
    %2408 = vmatprep.subr.mxu0 0.0
    %2409 = vmatpush1.msra.mxu0 0.0
    %2410 = vmatprep.subr.mxu0 0.0
    %2411 = vmatpush1.msra.mxu0 0.0
    %2412 = vmatprep.subr.mxu0 0.0
    %2413 = vmatpush1.msra.mxu0 0.0
    %2414 = vmatprep.subr.mxu0 0.0
    %2415 = vmatpush1.msra.mxu0 0.0
    %2416 = vmatprep.subr.mxu0 0.0
    %2417 = vmatpush1.msra.mxu0 0.0
    %2418 = vmatprep.subr.mxu0 0.0
    %2419 = vmatpush1.msra.mxu0 0.0
    %2420 = vmatprep.subr.mxu0 0.0
    %2421 = vmatpush1.msra.mxu0 0.0
    %2422 = vmatprep.subr.mxu0 0.0
    %2423 = vmatpush1.msra.mxu0 0.0
    %2424 = vmatprep.subr.mxu0 0.0
    %2425 = vmatpush1.msra.mxu0 0.0
    %2426 = vmatprep.subr.mxu0 0.0
    %2427 = vmatpush1.msra.mxu0 0.0
    %2428 = vmatprep.subr.mxu0 0.0
    %2429 = vmatpush1.msra.mxu0 %v293
    %2430 = vmatprep.subr.mxu0 0.0
    %2431 = vmatpush1.msra.mxu0 %v292
    %2432 = vmatprep.subr.mxu0 0.0
    %2433 = vmatpush1.msra.mxu0 %v291
    %2434 = vmatprep.subr.mxu0 0.0
    %2435 = vmatpush1.msra.mxu0 %v290
    %2436 = vmatprep.subr.mxu0 0.0
    %2437 = vmatpush2.msra.mxu0 0.0
    %2438 = vmatprep.subr.mxu0 0.0
    %2439 = vmatpush2.msra.mxu0 0.0
    %2440 = vmatprep.subr.mxu0 0.0
    %2441 = vmatpush2.msra.mxu0 0.0
    %2442 = vmatprep.subr.mxu0 0.0
    %2443 = vmatpush2.msra.mxu0 0.0
    %2444 = vmatprep.subr.mxu0 0.0
    %2445 = vmatpush2.msra.mxu0 0.0
    %2446 = vmatprep.subr.mxu0 0.0
    %2447 = vmatpush2.msra.mxu0 0.0
    %2448 = vmatprep.subr.mxu0 0.0
    %2449 = vmatpush2.msra.mxu0 0.0
    %2450 = vmatprep.subr.mxu0 0.0
    %2451 = vmatpush2.msra.mxu0 0.0
    %2452 = vmatprep.subr.mxu0 0.0
    %2453 = vmatpush2.msra.mxu0 0.0
    %2454 = vmatprep.subr.mxu0 0.0
    %2455 = vmatpush2.msra.mxu0 0.0
    %2456 = vmatprep.subr.mxu0 0.0
    %2457 = vmatpush2.msra.mxu0 0.0
    %2458 = vmatprep.subr.mxu0 0.0
    %2459 = vmatpush2.msra.mxu0 0.0
    %2460 = vmatprep.subr.mxu0 0.0
    %2461 = vmatpush2.msra.mxu0 0.0
    %2462 = vmatprep.subr.mxu0 0.0
    %2463 = vmatpush2.msra.mxu0 0.0
    %2464 = vmatprep.subr.mxu0 0.0
    %2465 = vmatpush2.msra.mxu0 0.0
    %2466 = vmatprep.subr.mxu0 0.0
    %2467 = vmatpush2.msra.mxu0 0.0
    %2468 = vmatprep.mubr.f32.mxu0 0.0
    %2469 = vmatmul.mubr.f32.gmra.mxu0 %v2262
    %v2470 = vpop.f32.mrf.mxu0
    %v2471 = vadd.f32 %v349, %v2470
    %v2472 = vpop.f32.mrf.mxu0
    %2473 = vdwg.mxu0
    %v2474 = vadd.f32 %v2108, %v2331
    %v2475 = vxor.u32 %v2474, 2147483648
    %v2476 = vmul.f32 %v2475, 1.442695
    %v2477 = vpow.pop %v2476
    %v2478 = vadd.f32 %v2477, 1.0
    %v2479 = vrcp.pop %v2478
    %v2480 = vmul.f32 1.0, %v2479
    %v2481 = vadd.f32 %v2178, %v2401
    %v2482 = vxor.u32 %v2481, 2147483648
    %v2483 = vmul.f32 %v2482, 1.442695
    %v2484 = vpow.pop %v2483
    %v2485 = vadd.f32 %v2484, 1.0
    %v2486 = vrcp.pop %v2485
    %v2487 = vmul.f32 1.0, %v2486
    %v2488 = vmul.f32 %v2480, %v2471
    %v2489 = vadd.f32 %v2248, %v2488
    %v2490 = vtanh.pop %v2489
    %v2491 = vsub.f32 1.0, %v2487
    %v2492 = vmul.f32 %v2491, %v2490
    %v2494 = vmul.f32 %v2487, %v2261
    %v2495 = vadd.f32 %v2492, %v2494
    %v2498 = vunpack.c.l.s4 1966171168
    %v2499 = vunpack.c.0.s8 %v2498
    %v2500 = vlaneseq
    %v2501 = vshrl.u32 %v2500, 7
    %v2502 = vsub.s32 %v2499, %v2501
    %v2503 = vrot.slane %v2495, %v2502
    %v2504 = vcombine.high %v2503, %v2503
    %v2506 = vunpack.c.l.s4 1966171168
    %v2507 = vunpack.c.0.s8 %v2506
    %v2508 = vlaneseq
    %v2509 = vshrl.u32 %v2508, 7
    %v2510 = vsub.s32 %v2507, %v2509
    %v2511 = vrot.slane %v2503, %v2510
    %v2513 = vunpack.c.l.s4 1966171168
    %v2514 = vunpack.c.0.s8 %v2513
    %v2515 = vlaneseq
    %v2516 = vshrl.u32 %v2515, 7
    %v2517 = vsub.s32 %v2514, %v2516
    %v2518 = vrot.slane %v2504, %v2517
    %v2519 = vlaneseq
    %v2520 = vshrl.u32 %v2519, 7
    %v2521 = vsub.s32 0, %v2520
    %v2522 = vrot.slane %v2511, %v2521
    %v2523 = vlaneseq
    %v2524 = vshrl.u32 %v2523, 7
    %v2525 = vsub.s32 0, %v2524
    %v2526 = vrot.slane %v2518, %v2525
    %v2529 = vmul.f32 %v529, %v2522
    %v2530 = vmul.f32 %v534, %v2526
    %v2531 = vsel %vm370, %v2529, 0.0
    %2532 = vadd.xlane.f32.xlu0 %v2531
    %v2533 = vpop.xlane.xlu0 %2532
    %v2534 = vsel %vm370, %v2530, 0.0
    %2535 = vadd.xlane.f32.xlu0 %v2534
    %v2536 = vpop.xlane.xlu0 %2535
    %v2539 = vlaneseq
    %v2540 = vand.u32 %v2539, 127
    %v2541 = vlaneseq
    %v2542 = vshrl.u32 %v2541, 7
    %v2543 = vsub.s32 %v2540, %v2542
    %v2544 = vrot.slane %v2533, %v2543
    %v2545 = vlaneseq
    %v2546 = vshrl.u32 %v2545, 7
    %v2547 = vsub.s32 %v2540, %v2546
    %v2548 = vrot.slane %v2536, %v2547
    %v2549 = vsel %vm1122, %v2548, %v2544
    %vm2551 = vcmask 58368
    %v2552 = vsel %vm2551, %v2549, -inf
    %2553 = vmax.xlane.f32.xlu0 %v2552
    %v2554 = vpop.xlane.xlu0 %2553
    %v2556 = vlaneseq
    %v2557 = vshrl.u32 %v2556, 7
    %v2558 = vsub.s32 0, %v2557
    %v2559 = vrot.slane %v2554, %v2558
    %v2560 = vlaneseq
    %v2561 = vshrl.u32 %v2560, 7
    %v2562 = vsub.s32 1, %v2561
    %v2563 = vrot.slane %v2554, %v2562
    %v2566 = vsub.f32 %v2533, %v2559
    %v2567 = vsub.f32 %v2536, %v2563
    %v2568 = vmul.f32 %v2566, 1.442695
    %v2569 = vpow.pop %v2568
    %v2570 = vmul.f32 %v2567, 1.442695
    %v2571 = vpow.pop %v2570
    %2573 = vset.pattern.permute.xlu0 0
    %2574 = vperm.xlu0 %2573, %v2569
    %v2575 = vpop.permute.xlu0 %2574
    %2578 = vset.pattern.permute.xlu0 0
    %2579 = vperm.xlu0 %2578, %v2571
    %v2580 = vpop.permute.xlu0 %2579
    %v2582 = vmul.f32 %v529, %v2575
    %v2583 = vmul.f32 %v534, %v2580
    %v2584 = vsel %vm370, %v2582, 0.0
    %v2585 = vrot.slane %v2584, 4
    %v2586 = vadd.f32 %v2584, %v2585
    %v2587 = vrot.slane %v2586, 2
    %v2588 = vadd.f32 %v2586, %v2587
    %v2589 = vrot.slane %v2588, 1
    %v2590 = vadd.f32 %v2588, %v2589
    %v2591 = vsel %vm370, %v2583, 0.0
    %v2592 = vrot.slane %v2591, 4
    %v2593 = vadd.f32 %v2591, %v2592
    %v2594 = vrot.slane %v2593, 2
    %v2595 = vadd.f32 %v2593, %v2594
    %v2596 = vrot.slane %v2595, 1
    %v2597 = vadd.f32 %v2595, %v2596
    %v2598 = vlaneseq
    %v2599 = vshrl.u32 %v2598, 7
    %v2600 = vsub.s32 %v2540, %v2599
    %v2601 = vrot.slane %v2575, %v2600
    %v2602 = vlaneseq
    %v2603 = vshrl.u32 %v2602, 7
    %v2604 = vsub.s32 %v2540, %v2603
    %v2605 = vrot.slane %v2580, %v2604
    %v2606 = vsel %vm1122, %v2605, %v2601
    %v2608 = vsel %vm2551, %v2606, 0.0
    %2609 = vadd.xlane.f32.xlu0 %v2608
    %v2610 = vpop.xlane.xlu0 %2609
    %v2611 = vrcp.pop %v2610
    %v2613 = vrot.slane %v2611, 1
    %v2616 = vmul.f32 %v2590, %v2611
    %v2617 = vmul.f32 %v2597, %v2613
    %v2620 = vrot.slane %v2617, 7
    %v2621 = vsel %vm1122, %v2620, %v2616
    %v2622 = vsel %vm370, %v2621, 0
    %2624 = vmatprep.subr.mxu0 0.0
    %2625 = vmatpush1.msra.mxu0 0.0
    %2626 = vmatprep.subr.mxu0 0.0
    %2627 = vmatpush1.msra.mxu0 0.0
    %2628 = vmatprep.subr.mxu0 0.0
    %2629 = vmatpush1.msra.mxu0 0.0
    %2630 = vmatprep.subr.mxu0 0.0
    %2631 = vmatpush1.msra.mxu0 0.0
    %2632 = vmatprep.subr.mxu0 0.0
    %2633 = vmatpush1.msra.mxu0 0.0
    %2634 = vmatprep.subr.mxu0 0.0
    %2635 = vmatpush1.msra.mxu0 0.0
    %2636 = vmatprep.subr.mxu0 0.0
    %2637 = vmatpush1.msra.mxu0 0.0
    %2638 = vmatprep.subr.mxu0 0.0
    %2639 = vmatpush1.msra.mxu0 0.0
    %2640 = vmatprep.subr.mxu0 0.0
    %2641 = vmatpush1.msra.mxu0 0.0
    %2642 = vmatprep.subr.mxu0 0.0
    %2643 = vmatpush1.msra.mxu0 0.0
    %2644 = vmatprep.subr.mxu0 0.0
    %2645 = vmatpush1.msra.mxu0 0.0
    %2646 = vmatprep.subr.mxu0 0.0
    %2647 = vmatpush1.msra.mxu0 0.0
    %2648 = vmatprep.subr.mxu0 0.0
    %2649 = vmatpush1.msra.mxu0 %v301
    %2650 = vmatprep.subr.mxu0 0.0
    %2651 = vmatpush1.msra.mxu0 %v300
    %2652 = vmatprep.subr.mxu0 0.0
    %2653 = vmatpush1.msra.mxu0 %v299
    %2654 = vmatprep.subr.mxu0 0.0
    %2655 = vmatpush1.msra.mxu0 %v298
    %2656 = vmatprep.subr.mxu0 0.0
    %2657 = vmatpush2.msra.mxu0 0.0
    %2658 = vmatprep.subr.mxu0 0.0
    %2659 = vmatpush2.msra.mxu0 0.0
    %2660 = vmatprep.subr.mxu0 0.0
    %2661 = vmatpush2.msra.mxu0 0.0
    %2662 = vmatprep.subr.mxu0 0.0
    %2663 = vmatpush2.msra.mxu0 0.0
    %2664 = vmatprep.subr.mxu0 0.0
    %2665 = vmatpush2.msra.mxu0 0.0
    %2666 = vmatprep.subr.mxu0 0.0
    %2667 = vmatpush2.msra.mxu0 0.0
    %2668 = vmatprep.subr.mxu0 0.0
    %2669 = vmatpush2.msra.mxu0 0.0
    %2670 = vmatprep.subr.mxu0 0.0
    %2671 = vmatpush2.msra.mxu0 0.0
    %2672 = vmatprep.subr.mxu0 0.0
    %2673 = vmatpush2.msra.mxu0 0.0
    %2674 = vmatprep.subr.mxu0 0.0
    %2675 = vmatpush2.msra.mxu0 0.0
    %2676 = vmatprep.subr.mxu0 0.0
    %2677 = vmatpush2.msra.mxu0 0.0
    %2678 = vmatprep.subr.mxu0 0.0
    %2679 = vmatpush2.msra.mxu0 0.0
    %2680 = vmatprep.subr.mxu0 0.0
    %2681 = vmatpush2.msra.mxu0 0.0
    %2682 = vmatprep.subr.mxu0 0.0
    %2683 = vmatpush2.msra.mxu0 0.0
    %2684 = vmatprep.subr.mxu0 0.0
    %2685 = vmatpush2.msra.mxu0 0.0
    %2686 = vmatprep.subr.mxu0 0.0
    %2687 = vmatpush2.msra.mxu0 0.0
    %2688 = vmatprep.mubr.f32.mxu0 0.0
    %2689 = vmatmul.mubr.f32.gmra.mxu0 %v2622
    %v2690 = vpop.f32.mrf.mxu0
    %v2691 = vadd.f32 0.0, %v2690
    %v2692 = vpop.f32.mrf.mxu0
    %2693 = vdwg.mxu0
    %v2694 = vsel %vm370, %v2495, 0
    %2696 = vmatprep.subr.mxu0 0.0
    %2697 = vmatpush1.msra.mxu0 0.0
    %2698 = vmatprep.subr.mxu0 0.0
    %2699 = vmatpush1.msra.mxu0 0.0
    %2700 = vmatprep.subr.mxu0 0.0
    %2701 = vmatpush1.msra.mxu0 0.0
    %2702 = vmatprep.subr.mxu0 0.0
    %2703 = vmatpush1.msra.mxu0 0.0
    %2704 = vmatprep.subr.mxu0 0.0
    %2705 = vmatpush1.msra.mxu0 0.0
    %2706 = vmatprep.subr.mxu0 0.0
    %2707 = vmatpush1.msra.mxu0 0.0
    %2708 = vmatprep.subr.mxu0 0.0
    %2709 = vmatpush1.msra.mxu0 0.0
    %2710 = vmatprep.subr.mxu0 0.0
    %2711 = vmatpush1.msra.mxu0 0.0
    %2712 = vmatprep.subr.mxu0 0.0
    %2713 = vmatpush1.msra.mxu0 0.0
    %2714 = vmatprep.subr.mxu0 0.0
    %2715 = vmatpush1.msra.mxu0 0.0
    %2716 = vmatprep.subr.mxu0 0.0
    %2717 = vmatpush1.msra.mxu0 0.0
    %2718 = vmatprep.subr.mxu0 0.0
    %2719 = vmatpush1.msra.mxu0 0.0
    %2720 = vmatprep.subr.mxu0 0.0
    %2721 = vmatpush1.msra.mxu0 %v297
    %2722 = vmatprep.subr.mxu0 0.0
    %2723 = vmatpush1.msra.mxu0 %v296
    %2724 = vmatprep.subr.mxu0 0.0
    %2725 = vmatpush1.msra.mxu0 %v295
    %2726 = vmatprep.subr.mxu0 0.0
    %2727 = vmatpush1.msra.mxu0 %v294
    %2728 = vmatprep.subr.mxu0 0.0
    %2729 = vmatpush2.msra.mxu0 0.0
    %2730 = vmatprep.subr.mxu0 0.0
    %2731 = vmatpush2.msra.mxu0 0.0
    %2732 = vmatprep.subr.mxu0 0.0
    %2733 = vmatpush2.msra.mxu0 0.0
    %2734 = vmatprep.subr.mxu0 0.0
    %2735 = vmatpush2.msra.mxu0 0.0
    %2736 = vmatprep.subr.mxu0 0.0
    %2737 = vmatpush2.msra.mxu0 0.0
    %2738 = vmatprep.subr.mxu0 0.0
    %2739 = vmatpush2.msra.mxu0 0.0
    %2740 = vmatprep.subr.mxu0 0.0
    %2741 = vmatpush2.msra.mxu0 0.0
    %2742 = vmatprep.subr.mxu0 0.0
    %2743 = vmatpush2.msra.mxu0 0.0
    %2744 = vmatprep.subr.mxu0 0.0
    %2745 = vmatpush2.msra.mxu0 0.0
    %2746 = vmatprep.subr.mxu0 0.0
    %2747 = vmatpush2.msra.mxu0 0.0
    %2748 = vmatprep.subr.mxu0 0.0
    %2749 = vmatpush2.msra.mxu0 0.0
    %2750 = vmatprep.subr.mxu0 0.0
    %2751 = vmatpush2.msra.mxu0 0.0
    %2752 = vmatprep.subr.mxu0 0.0
    %2753 = vmatpush2.msra.mxu0 0.0
    %2754 = vmatprep.subr.mxu0 0.0
    %2755 = vmatpush2.msra.mxu0 0.0
    %2756 = vmatprep.subr.mxu0 0.0
    %2757 = vmatpush2.msra.mxu0 0.0
    %2758 = vmatprep.subr.mxu0 0.0
    %2759 = vmatpush2.msra.mxu0 0.0
    %2760 = vmatprep.mubr.f32.mxu0 0.0
    %2761 = vmatmul.mubr.f32.gmra.mxu0 %v2694
    %v2762 = vpop.f32.mrf.mxu0
    %v2763 = vadd.f32 %v2691, %v2762
    %v2764 = vpop.f32.mrf.mxu0
    %2765 = vdwg.mxu0
    %v2766 = vadd.f32 %v2763, %v356
    %v2769 = vunpack.c.l.s4 1966171168
    %v2770 = vunpack.c.0.s8 %v2769
    %v2771 = vlaneseq
    %v2772 = vshrl.u32 %v2771, 7
    %v2773 = vsub.s32 %v2770, %v2772
    %v2774 = vrot.slane %v2766, %v2773
    %v2775 = vcombine.high %v2774, %v2774
    %v2777 = vunpack.c.l.s4 1966171168
    %v2778 = vunpack.c.0.s8 %v2777
    %v2779 = vlaneseq
    %v2780 = vshrl.u32 %v2779, 7
    %v2781 = vsub.s32 %v2778, %v2780
    %v2782 = vrot.slane %v2774, %v2781
    %v2784 = vunpack.c.l.s4 1966171168
    %v2785 = vunpack.c.0.s8 %v2784
    %v2786 = vlaneseq
    %v2787 = vshrl.u32 %v2786, 7
    %v2788 = vsub.s32 %v2785, %v2787
    %v2789 = vrot.slane %v2775, %v2788
    %vm2792 = vcmask 90112
    %2793 = vst.msk [vmem:[%s24] sm:$0x1] %vm2792, %v2782
    %2794 = vst.msk [vmem:[%s24 + $0x8] sm:$0x1] %vm2792, %v2789
    %v2795 = vsel %vm542, %v2766, 0
    %2797 = vmatprep.subr.mxu0 0.0
    %2798 = vmatpush1.msra.mxu0 0.0
    %2799 = vmatprep.subr.mxu0 0.0
    %2800 = vmatpush1.msra.mxu0 0.0
    %2801 = vmatprep.subr.mxu0 0.0
    %2802 = vmatpush1.msra.mxu0 0.0
    %2803 = vmatprep.subr.mxu0 0.0
    %2804 = vmatpush1.msra.mxu0 0.0
    %2805 = vmatprep.subr.mxu0 0.0
    %2806 = vmatpush1.msra.mxu0 0.0
    %2807 = vmatprep.subr.mxu0 0.0
    %2808 = vmatpush1.msra.mxu0 0.0
    %2809 = vmatprep.subr.mxu0 0.0
    %2810 = vmatpush1.msra.mxu0 0.0
    %2811 = vmatprep.subr.mxu0 0.0
    %2812 = vmatpush1.msra.mxu0 0.0
    %2813 = vmatprep.subr.mxu0 0.0
    %2814 = vmatpush1.msra.mxu0 0.0
    %2815 = vmatprep.subr.mxu0 0.0
    %2816 = vmatpush1.msra.mxu0 0.0
    %2817 = vmatprep.subr.mxu0 0.0
    %2818 = vmatpush1.msra.mxu0 0.0
    %2819 = vmatprep.subr.mxu0 0.0
    %2820 = vmatpush1.msra.mxu0 0.0
    %2821 = vmatprep.subr.mxu0 0.0
    %2822 = vmatpush1.msra.mxu0 0.0
    %2823 = vmatprep.subr.mxu0 0.0
    %2824 = vmatpush1.msra.mxu0 0.0
    %2825 = vmatprep.subr.mxu0 0.0
    %2826 = vmatpush1.msra.mxu0 %v547
    %2827 = vmatprep.subr.mxu0 0.0
    %2828 = vmatpush1.msra.mxu0 %v274
    %2829 = vmatprep.subr.mxu0 0.0
    %2830 = vmatpush2.msra.mxu0 0.0
    %2831 = vmatprep.subr.mxu0 0.0
    %2832 = vmatpush2.msra.mxu0 0.0
    %2833 = vmatprep.subr.mxu0 0.0
    %2834 = vmatpush2.msra.mxu0 0.0
    %2835 = vmatprep.subr.mxu0 0.0
    %2836 = vmatpush2.msra.mxu0 0.0
    %2837 = vmatprep.subr.mxu0 0.0
    %2838 = vmatpush2.msra.mxu0 0.0
    %2839 = vmatprep.subr.mxu0 0.0
    %2840 = vmatpush2.msra.mxu0 0.0
    %2841 = vmatprep.subr.mxu0 0.0
    %2842 = vmatpush2.msra.mxu0 0.0
    %2843 = vmatprep.subr.mxu0 0.0
    %2844 = vmatpush2.msra.mxu0 0.0
    %2845 = vmatprep.subr.mxu0 0.0
    %2846 = vmatpush2.msra.mxu0 0.0
    %2847 = vmatprep.subr.mxu0 0.0
    %2848 = vmatpush2.msra.mxu0 0.0
    %2849 = vmatprep.subr.mxu0 0.0
    %2850 = vmatpush2.msra.mxu0 0.0
    %2851 = vmatprep.subr.mxu0 0.0
    %2852 = vmatpush2.msra.mxu0 0.0
    %2853 = vmatprep.subr.mxu0 0.0
    %2854 = vmatpush2.msra.mxu0 0.0
    %2855 = vmatprep.subr.mxu0 0.0
    %2856 = vmatpush2.msra.mxu0 0.0
    %2857 = vmatprep.subr.mxu0 0.0
    %2858 = vmatpush2.msra.mxu0 0.0
    %2859 = vmatprep.subr.mxu0 0.0
    %2860 = vmatpush2.msra.mxu0 0.0
    %2861 = vmatprep.mubr.f32.mxu0 0.0
    %2862 = vmatmul.mubr.f32.gmra.mxu0 %v2795
    %v2863 = vpop.f32.mrf.mxu0
    %v2864 = vadd.f32 %v307, %v2863
    %v2865 = vpop.f32.mrf.mxu0
    %2866 = vdwg.mxu0
    %v2867 = vmax.f32 %v2864, 0.0
    %v2869 = vsel %vm455, %v2867, 0
    %2871 = vmatprep.subr.mxu0 0.0
    %2872 = vmatpush1.msra.mxu0 0.0
    %2873 = vmatprep.subr.mxu0 0.0
    %2874 = vmatpush1.msra.mxu0 0.0
    %2875 = vmatprep.subr.mxu0 0.0
    %2876 = vmatpush1.msra.mxu0 0.0
    %2877 = vmatprep.subr.mxu0 0.0
    %2878 = vmatpush1.msra.mxu0 0.0
    %2879 = vmatprep.subr.mxu0 0.0
    %2880 = vmatpush1.msra.mxu0 0.0
    %2881 = vmatprep.subr.mxu0 0.0
    %2882 = vmatpush1.msra.mxu0 0.0
    %2883 = vmatprep.subr.mxu0 0.0
    %2884 = vmatpush1.msra.mxu0 0.0
    %2885 = vmatprep.subr.mxu0 0.0
    %2886 = vmatpush1.msra.mxu0 0.0
    %2887 = vmatprep.subr.mxu0 0.0
    %2888 = vmatpush1.msra.mxu0 0.0
    %2889 = vmatprep.subr.mxu0 0.0
    %2890 = vmatpush1.msra.mxu0 0.0
    %2891 = vmatprep.subr.mxu0 0.0
    %2892 = vmatpush1.msra.mxu0 0.0
    %2893 = vmatprep.subr.mxu0 0.0
    %2894 = vmatpush1.msra.mxu0 0.0
    %2895 = vmatprep.subr.mxu0 0.0
    %2896 = vmatpush1.msra.mxu0 0.0
    %2897 = vmatprep.subr.mxu0 0.0
    %2898 = vmatpush1.msra.mxu0 0.0
    %2899 = vmatprep.subr.mxu0 0.0
    %2900 = vmatpush1.msra.mxu0 %v277
    %2901 = vmatprep.subr.mxu0 0.0
    %2902 = vmatpush1.msra.mxu0 %v276
    %2903 = vmatprep.subr.mxu0 0.0
    %2904 = vmatpush2.msra.mxu0 0.0
    %2905 = vmatprep.subr.mxu0 0.0
    %2906 = vmatpush2.msra.mxu0 0.0
    %2907 = vmatprep.subr.mxu0 0.0
    %2908 = vmatpush2.msra.mxu0 0.0
    %2909 = vmatprep.subr.mxu0 0.0
    %2910 = vmatpush2.msra.mxu0 0.0
    %2911 = vmatprep.subr.mxu0 0.0
    %2912 = vmatpush2.msra.mxu0 0.0
    %2913 = vmatprep.subr.mxu0 0.0
    %2914 = vmatpush2.msra.mxu0 0.0
    %2915 = vmatprep.subr.mxu0 0.0
    %2916 = vmatpush2.msra.mxu0 0.0
    %2917 = vmatprep.subr.mxu0 0.0
    %2918 = vmatpush2.msra.mxu0 0.0
    %2919 = vmatprep.subr.mxu0 0.0
    %2920 = vmatpush2.msra.mxu0 0.0
    %2921 = vmatprep.subr.mxu0 0.0
    %2922 = vmatpush2.msra.mxu0 0.0
    %2923 = vmatprep.subr.mxu0 0.0
    %2924 = vmatpush2.msra.mxu0 0.0
    %2925 = vmatprep.subr.mxu0 0.0
    %2926 = vmatpush2.msra.mxu0 0.0
    %2927 = vmatprep.subr.mxu0 0.0
    %2928 = vmatpush2.msra.mxu0 0.0
    %2929 = vmatprep.subr.mxu0 0.0
    %2930 = vmatpush2.msra.mxu0 0.0
    %2931 = vmatprep.subr.mxu0 0.0
    %2932 = vmatpush2.msra.mxu0 0.0
    %2933 = vmatprep.subr.mxu0 0.0
    %2934 = vmatpush2.msra.mxu0 0.0
    %2935 = vmatprep.mubr.f32.mxu0 0.0
    %2936 = vmatmul.mubr.f32.gmra.mxu0 %v2869
    %v2937 = vpop.f32.mrf.mxu0
    %v2938 = vadd.f32 %v314, %v2937
    %v2939 = vpop.f32.mrf.mxu0
    %2940 = vdwg.mxu0
    %2941 = vmatprep.subr.mxu0 0.0
    %2942 = vmatpush1.msra.mxu0 0.0
    %2943 = vmatprep.subr.mxu0 0.0
    %2944 = vmatpush1.msra.mxu0 0.0
    %2945 = vmatprep.subr.mxu0 0.0
    %2946 = vmatpush1.msra.mxu0 0.0
    %2947 = vmatprep.subr.mxu0 0.0
    %2948 = vmatpush1.msra.mxu0 0.0
    %2949 = vmatprep.subr.mxu0 0.0
    %2950 = vmatpush1.msra.mxu0 0.0
    %2951 = vmatprep.subr.mxu0 0.0
    %2952 = vmatpush1.msra.mxu0 0.0
    %2953 = vmatprep.subr.mxu0 0.0
    %2954 = vmatpush1.msra.mxu0 0.0
    %2955 = vmatprep.subr.mxu0 0.0
    %2956 = vmatpush1.msra.mxu0 0.0
    %2957 = vmatprep.subr.mxu0 0.0
    %2958 = vmatpush1.msra.mxu0 0.0
    %2959 = vmatprep.subr.mxu0 0.0
    %2960 = vmatpush1.msra.mxu0 0.0
    %2961 = vmatprep.subr.mxu0 0.0
    %2962 = vmatpush1.msra.mxu0 0.0
    %2963 = vmatprep.subr.mxu0 0.0
    %2964 = vmatpush1.msra.mxu0 0.0
    %2965 = vmatprep.subr.mxu0 0.0
    %2966 = vmatpush1.msra.mxu0 0.0
    %2967 = vmatprep.subr.mxu0 0.0
    %2968 = vmatpush1.msra.mxu0 0.0
    %2969 = vmatprep.subr.mxu0 0.0
    %2970 = vmatpush1.msra.mxu0 %v279
    %2971 = vmatprep.subr.mxu0 0.0
    %2972 = vmatpush1.msra.mxu0 %v278
    %2973 = vmatprep.subr.mxu0 0.0
    %2974 = vmatpush2.msra.mxu0 0.0
    %2975 = vmatprep.subr.mxu0 0.0
    %2976 = vmatpush2.msra.mxu0 0.0
    %2977 = vmatprep.subr.mxu0 0.0
    %2978 = vmatpush2.msra.mxu0 0.0
    %2979 = vmatprep.subr.mxu0 0.0
    %2980 = vmatpush2.msra.mxu0 0.0
    %2981 = vmatprep.subr.mxu0 0.0
    %2982 = vmatpush2.msra.mxu0 0.0
    %2983 = vmatprep.subr.mxu0 0.0
    %2984 = vmatpush2.msra.mxu0 0.0
    %2985 = vmatprep.subr.mxu0 0.0
    %2986 = vmatpush2.msra.mxu0 0.0
    %2987 = vmatprep.subr.mxu0 0.0
    %2988 = vmatpush2.msra.mxu0 0.0
    %2989 = vmatprep.subr.mxu0 0.0
    %2990 = vmatpush2.msra.mxu0 0.0
    %2991 = vmatprep.subr.mxu0 0.0
    %2992 = vmatpush2.msra.mxu0 0.0
    %2993 = vmatprep.subr.mxu0 0.0
    %2994 = vmatpush2.msra.mxu0 0.0
    %2995 = vmatprep.subr.mxu0 0.0
    %2996 = vmatpush2.msra.mxu0 0.0
    %2997 = vmatprep.subr.mxu0 0.0
    %2998 = vmatpush2.msra.mxu0 0.0
    %2999 = vmatprep.subr.mxu0 0.0
    %3000 = vmatpush2.msra.mxu0 0.0
    %3001 = vmatprep.subr.mxu0 0.0
    %3002 = vmatpush2.msra.mxu0 0.0
    %3003 = vmatprep.subr.mxu0 0.0
    %3004 = vmatpush2.msra.mxu0 0.0
    %3005 = vmatprep.mubr.f32.mxu0 0.0
    %3006 = vmatmul.mubr.f32.gmra.mxu0 %v2869
    %v3007 = vpop.f32.mrf.mxu0
    %v3008 = vadd.f32 %v321, %v3007
    %v3009 = vpop.f32.mrf.mxu0
    %3010 = vdwg.mxu0
    %3011 = vmatprep.subr.mxu0 0.0
    %3012 = vmatpush1.msra.mxu0 0.0
    %3013 = vmatprep.subr.mxu0 0.0
    %3014 = vmatpush1.msra.mxu0 0.0
    %3015 = vmatprep.subr.mxu0 0.0
    %3016 = vmatpush1.msra.mxu0 0.0
    %3017 = vmatprep.subr.mxu0 0.0
    %3018 = vmatpush1.msra.mxu0 0.0
    %3019 = vmatprep.subr.mxu0 0.0
    %3020 = vmatpush1.msra.mxu0 0.0
    %3021 = vmatprep.subr.mxu0 0.0
    %3022 = vmatpush1.msra.mxu0 0.0
    %3023 = vmatprep.subr.mxu0 0.0
    %3024 = vmatpush1.msra.mxu0 0.0
    %3025 = vmatprep.subr.mxu0 0.0
    %3026 = vmatpush1.msra.mxu0 0.0
    %3027 = vmatprep.subr.mxu0 0.0
    %3028 = vmatpush1.msra.mxu0 0.0
    %3029 = vmatprep.subr.mxu0 0.0
    %3030 = vmatpush1.msra.mxu0 0.0
    %3031 = vmatprep.subr.mxu0 0.0
    %3032 = vmatpush1.msra.mxu0 0.0
    %3033 = vmatprep.subr.mxu0 0.0
    %3034 = vmatpush1.msra.mxu0 0.0
    %3035 = vmatprep.subr.mxu0 0.0
    %3036 = vmatpush1.msra.mxu0 0.0
    %3037 = vmatprep.subr.mxu0 0.0
    %3038 = vmatpush1.msra.mxu0 0.0
    %3039 = vmatprep.subr.mxu0 0.0
    %3040 = vmatpush1.msra.mxu0 %v281
    %3041 = vmatprep.subr.mxu0 0.0
    %3042 = vmatpush1.msra.mxu0 %v280
    %3043 = vmatprep.subr.mxu0 0.0
    %3044 = vmatpush2.msra.mxu0 0.0
    %3045 = vmatprep.subr.mxu0 0.0
    %3046 = vmatpush2.msra.mxu0 0.0
    %3047 = vmatprep.subr.mxu0 0.0
    %3048 = vmatpush2.msra.mxu0 0.0
    %3049 = vmatprep.subr.mxu0 0.0
    %3050 = vmatpush2.msra.mxu0 0.0
    %3051 = vmatprep.subr.mxu0 0.0
    %3052 = vmatpush2.msra.mxu0 0.0
    %3053 = vmatprep.subr.mxu0 0.0
    %3054 = vmatpush2.msra.mxu0 0.0
    %3055 = vmatprep.subr.mxu0 0.0
    %3056 = vmatpush2.msra.mxu0 0.0
    %3057 = vmatprep.subr.mxu0 0.0
    %3058 = vmatpush2.msra.mxu0 0.0
    %3059 = vmatprep.subr.mxu0 0.0
    %3060 = vmatpush2.msra.mxu0 0.0
    %3061 = vmatprep.subr.mxu0 0.0
    %3062 = vmatpush2.msra.mxu0 0.0
    %3063 = vmatprep.subr.mxu0 0.0
    %3064 = vmatpush2.msra.mxu0 0.0
    %3065 = vmatprep.subr.mxu0 0.0
    %3066 = vmatpush2.msra.mxu0 0.0
    %3067 = vmatprep.subr.mxu0 0.0
    %3068 = vmatpush2.msra.mxu0 0.0
    %3069 = vmatprep.subr.mxu0 0.0
    %3070 = vmatpush2.msra.mxu0 0.0
    %3071 = vmatprep.subr.mxu0 0.0
    %3072 = vmatpush2.msra.mxu0 0.0
    %3073 = vmatprep.subr.mxu0 0.0
    %3074 = vmatpush2.msra.mxu0 0.0
    %3075 = vmatprep.mubr.f32.mxu0 0.0
    %3076 = vmatmul.mubr.f32.gmra.mxu0 %v2869
    %v3077 = vpop.f32.mrf.mxu0
    %v3078 = vadd.f32 %v328, %v3077
    %v3079 = vpop.f32.mrf.mxu0
    %3080 = vdwg.mxu0
    %3081 = vmatprep.subr.mxu0 0.0
    %3082 = vmatpush1.msra.mxu0 0.0
    %3083 = vmatprep.subr.mxu0 0.0
    %3084 = vmatpush1.msra.mxu0 0.0
    %3085 = vmatprep.subr.mxu0 0.0
    %3086 = vmatpush1.msra.mxu0 0.0
    %3087 = vmatprep.subr.mxu0 0.0
    %3088 = vmatpush1.msra.mxu0 0.0
    %3089 = vmatprep.subr.mxu0 0.0
    %3090 = vmatpush1.msra.mxu0 0.0
    %3091 = vmatprep.subr.mxu0 0.0
    %3092 = vmatpush1.msra.mxu0 0.0
    %3093 = vmatprep.subr.mxu0 0.0
    %3094 = vmatpush1.msra.mxu0 0.0
    %3095 = vmatprep.subr.mxu0 0.0
    %3096 = vmatpush1.msra.mxu0 0.0
    %3097 = vmatprep.subr.mxu0 0.0
    %3098 = vmatpush1.msra.mxu0 0.0
    %3099 = vmatprep.subr.mxu0 0.0
    %3100 = vmatpush1.msra.mxu0 0.0
    %3101 = vmatprep.subr.mxu0 0.0
    %3102 = vmatpush1.msra.mxu0 0.0
    %3103 = vmatprep.subr.mxu0 0.0
    %3104 = vmatpush1.msra.mxu0 0.0
    %3105 = vmatprep.subr.mxu0 0.0
    %3106 = vmatpush1.msra.mxu0 %v285
    %3107 = vmatprep.subr.mxu0 0.0
    %3108 = vmatpush1.msra.mxu0 %v284
    %3109 = vmatprep.subr.mxu0 0.0
    %3110 = vmatpush1.msra.mxu0 %v283
    %3111 = vmatprep.subr.mxu0 0.0
    %3112 = vmatpush1.msra.mxu0 %v282
    %3113 = vmatprep.subr.mxu0 0.0
    %3114 = vmatpush2.msra.mxu0 0.0
    %3115 = vmatprep.subr.mxu0 0.0
    %3116 = vmatpush2.msra.mxu0 0.0
    %3117 = vmatprep.subr.mxu0 0.0
    %3118 = vmatpush2.msra.mxu0 0.0
    %3119 = vmatprep.subr.mxu0 0.0
    %3120 = vmatpush2.msra.mxu0 0.0
    %3121 = vmatprep.subr.mxu0 0.0
    %3122 = vmatpush2.msra.mxu0 0.0
    %3123 = vmatprep.subr.mxu0 0.0
    %3124 = vmatpush2.msra.mxu0 0.0
    %3125 = vmatprep.subr.mxu0 0.0
    %3126 = vmatpush2.msra.mxu0 0.0
    %3127 = vmatprep.subr.mxu0 0.0
    %3128 = vmatpush2.msra.mxu0 0.0
    %3129 = vmatprep.subr.mxu0 0.0
    %3130 = vmatpush2.msra.mxu0 0.0
    %3131 = vmatprep.subr.mxu0 0.0
    %3132 = vmatpush2.msra.mxu0 0.0
    %3133 = vmatprep.subr.mxu0 0.0
    %3134 = vmatpush2.msra.mxu0 0.0
    %3135 = vmatprep.subr.mxu0 0.0
    %3136 = vmatpush2.msra.mxu0 0.0
    %3137 = vmatprep.subr.mxu0 0.0
    %3138 = vmatpush2.msra.mxu0 0.0
    %3139 = vmatprep.subr.mxu0 0.0
    %3140 = vmatpush2.msra.mxu0 0.0
    %3141 = vmatprep.subr.mxu0 0.0
    %3142 = vmatpush2.msra.mxu0 0.0
    %3143 = vmatprep.subr.mxu0 0.0
    %3144 = vmatpush2.msra.mxu0 0.0
    %3145 = vmatprep.mubr.f32.mxu0 0.0
    %3146 = vmatmul.mubr.f32.gmra.mxu0 %v2694
    %v3147 = vpop.f32.mrf.mxu0
    %v3148 = vadd.f32 %v335, %v3147
    %v3149 = vpop.f32.mrf.mxu0
    %3150 = vdwg.mxu0
    %3151 = vmatprep.subr.mxu0 0.0
    %3152 = vmatpush1.msra.mxu0 0.0
    %3153 = vmatprep.subr.mxu0 0.0
    %3154 = vmatpush1.msra.mxu0 0.0
    %3155 = vmatprep.subr.mxu0 0.0
    %3156 = vmatpush1.msra.mxu0 0.0
    %3157 = vmatprep.subr.mxu0 0.0
    %3158 = vmatpush1.msra.mxu0 0.0
    %3159 = vmatprep.subr.mxu0 0.0
    %3160 = vmatpush1.msra.mxu0 0.0
    %3161 = vmatprep.subr.mxu0 0.0
    %3162 = vmatpush1.msra.mxu0 0.0
    %3163 = vmatprep.subr.mxu0 0.0
    %3164 = vmatpush1.msra.mxu0 0.0
    %3165 = vmatprep.subr.mxu0 0.0
    %3166 = vmatpush1.msra.mxu0 0.0
    %3167 = vmatprep.subr.mxu0 0.0
    %3168 = vmatpush1.msra.mxu0 0.0
    %3169 = vmatprep.subr.mxu0 0.0
    %3170 = vmatpush1.msra.mxu0 0.0
    %3171 = vmatprep.subr.mxu0 0.0
    %3172 = vmatpush1.msra.mxu0 0.0
    %3173 = vmatprep.subr.mxu0 0.0
    %3174 = vmatpush1.msra.mxu0 0.0
    %3175 = vmatprep.subr.mxu0 0.0
    %3176 = vmatpush1.msra.mxu0 %v289
    %3177 = vmatprep.subr.mxu0 0.0
    %3178 = vmatpush1.msra.mxu0 %v288
    %3179 = vmatprep.subr.mxu0 0.0
    %3180 = vmatpush1.msra.mxu0 %v287
    %3181 = vmatprep.subr.mxu0 0.0
    %3182 = vmatpush1.msra.mxu0 %v286
    %3183 = vmatprep.subr.mxu0 0.0
    %3184 = vmatpush2.msra.mxu0 0.0
    %3185 = vmatprep.subr.mxu0 0.0
    %3186 = vmatpush2.msra.mxu0 0.0
    %3187 = vmatprep.subr.mxu0 0.0
    %3188 = vmatpush2.msra.mxu0 0.0
    %3189 = vmatprep.subr.mxu0 0.0
    %3190 = vmatpush2.msra.mxu0 0.0
    %3191 = vmatprep.subr.mxu0 0.0
    %3192 = vmatpush2.msra.mxu0 0.0
    %3193 = vmatprep.subr.mxu0 0.0
    %3194 = vmatpush2.msra.mxu0 0.0
    %3195 = vmatprep.subr.mxu0 0.0
    %3196 = vmatpush2.msra.mxu0 0.0
    %3197 = vmatprep.subr.mxu0 0.0
    %3198 = vmatpush2.msra.mxu0 0.0
    %3199 = vmatprep.subr.mxu0 0.0
    %3200 = vmatpush2.msra.mxu0 0.0
    %3201 = vmatprep.subr.mxu0 0.0
    %3202 = vmatpush2.msra.mxu0 0.0
    %3203 = vmatprep.subr.mxu0 0.0
    %3204 = vmatpush2.msra.mxu0 0.0
    %3205 = vmatprep.subr.mxu0 0.0
    %3206 = vmatpush2.msra.mxu0 0.0
    %3207 = vmatprep.subr.mxu0 0.0
    %3208 = vmatpush2.msra.mxu0 0.0
    %3209 = vmatprep.subr.mxu0 0.0
    %3210 = vmatpush2.msra.mxu0 0.0
    %3211 = vmatprep.subr.mxu0 0.0
    %3212 = vmatpush2.msra.mxu0 0.0
    %3213 = vmatprep.subr.mxu0 0.0
    %3214 = vmatpush2.msra.mxu0 0.0
    %3215 = vmatprep.mubr.f32.mxu0 0.0
    %3216 = vmatmul.mubr.f32.gmra.mxu0 %v2694
    %v3217 = vpop.f32.mrf.mxu0
    %v3218 = vadd.f32 %v342, %v3217
    %v3219 = vpop.f32.mrf.mxu0
    %3220 = vdwg.mxu0
    %3221 = vmatprep.subr.mxu0 0.0
    %3222 = vmatpush1.msra.mxu0 0.0
    %3223 = vmatprep.subr.mxu0 0.0
    %3224 = vmatpush1.msra.mxu0 0.0
    %3225 = vmatprep.subr.mxu0 0.0
    %3226 = vmatpush1.msra.mxu0 0.0
    %3227 = vmatprep.subr.mxu0 0.0
    %3228 = vmatpush1.msra.mxu0 0.0
    %3229 = vmatprep.subr.mxu0 0.0
    %3230 = vmatpush1.msra.mxu0 0.0
    %3231 = vmatprep.subr.mxu0 0.0
    %3232 = vmatpush1.msra.mxu0 0.0
    %3233 = vmatprep.subr.mxu0 0.0
    %3234 = vmatpush1.msra.mxu0 0.0
    %3235 = vmatprep.subr.mxu0 0.0
    %3236 = vmatpush1.msra.mxu0 0.0
    %3237 = vmatprep.subr.mxu0 0.0
    %3238 = vmatpush1.msra.mxu0 0.0
    %3239 = vmatprep.subr.mxu0 0.0
    %3240 = vmatpush1.msra.mxu0 0.0
    %3241 = vmatprep.subr.mxu0 0.0
    %3242 = vmatpush1.msra.mxu0 0.0
    %3243 = vmatprep.subr.mxu0 0.0
    %3244 = vmatpush1.msra.mxu0 0.0
    %3245 = vmatprep.subr.mxu0 0.0
    %3246 = vmatpush1.msra.mxu0 %v293
    %3247 = vmatprep.subr.mxu0 0.0
    %3248 = vmatpush1.msra.mxu0 %v292
    %3249 = vmatprep.subr.mxu0 0.0
    %3250 = vmatpush1.msra.mxu0 %v291
    %3251 = vmatprep.subr.mxu0 0.0
    %3252 = vmatpush1.msra.mxu0 %v290
    %3253 = vmatprep.subr.mxu0 0.0
    %3254 = vmatpush2.msra.mxu0 0.0
    %3255 = vmatprep.subr.mxu0 0.0
    %3256 = vmatpush2.msra.mxu0 0.0
    %3257 = vmatprep.subr.mxu0 0.0
    %3258 = vmatpush2.msra.mxu0 0.0
    %3259 = vmatprep.subr.mxu0 0.0
    %3260 = vmatpush2.msra.mxu0 0.0
    %3261 = vmatprep.subr.mxu0 0.0
    %3262 = vmatpush2.msra.mxu0 0.0
    %3263 = vmatprep.subr.mxu0 0.0
    %3264 = vmatpush2.msra.mxu0 0.0
    %3265 = vmatprep.subr.mxu0 0.0
    %3266 = vmatpush2.msra.mxu0 0.0
    %3267 = vmatprep.subr.mxu0 0.0
    %3268 = vmatpush2.msra.mxu0 0.0
    %3269 = vmatprep.subr.mxu0 0.0
    %3270 = vmatpush2.msra.mxu0 0.0
    %3271 = vmatprep.subr.mxu0 0.0
    %3272 = vmatpush2.msra.mxu0 0.0
    %3273 = vmatprep.subr.mxu0 0.0
    %3274 = vmatpush2.msra.mxu0 0.0
    %3275 = vmatprep.subr.mxu0 0.0
    %3276 = vmatpush2.msra.mxu0 0.0
    %3277 = vmatprep.subr.mxu0 0.0
    %3278 = vmatpush2.msra.mxu0 0.0
    %3279 = vmatprep.subr.mxu0 0.0
    %3280 = vmatpush2.msra.mxu0 0.0
    %3281 = vmatprep.subr.mxu0 0.0
    %3282 = vmatpush2.msra.mxu0 0.0
    %3283 = vmatprep.subr.mxu0 0.0
    %3284 = vmatpush2.msra.mxu0 0.0
    %3285 = vmatprep.mubr.f32.mxu0 0.0
    %3286 = vmatmul.mubr.f32.gmra.mxu0 %v2694
    %v3287 = vpop.f32.mrf.mxu0
    %v3288 = vadd.f32 %v349, %v3287
    %v3289 = vpop.f32.mrf.mxu0
    %3290 = vdwg.mxu0
    %v3291 = vadd.f32 %v2938, %v3148
    %v3292 = vxor.u32 %v3291, 2147483648
    %v3293 = vmul.f32 %v3292, 1.442695
    %v3294 = vpow.pop %v3293
    %v3295 = vadd.f32 %v3294, 1.0
    %v3296 = vrcp.pop %v3295
    %v3297 = vmul.f32 1.0, %v3296
    %v3298 = vadd.f32 %v3008, %v3218
    %v3299 = vxor.u32 %v3298, 2147483648
    %v3300 = vmul.f32 %v3299, 1.442695
    %v3301 = vpow.pop %v3300
    %v3302 = vadd.f32 %v3301, 1.0
    %v3303 = vrcp.pop %v3302
    %v3304 = vmul.f32 1.0, %v3303
    %v3305 = vmul.f32 %v3297, %v3288
    %v3306 = vadd.f32 %v3078, %v3305
    %v3307 = vtanh.pop %v3306
    %v3308 = vsub.f32 1.0, %v3304
    %v3309 = vmul.f32 %v3308, %v3307
    %v3310 = vmul.f32 %v3304, %v2495
    %v3311 = vadd.f32 %v3309, %v3310
    %v3314 = vunpack.c.l.s4 1966171168
    %v3315 = vunpack.c.0.s8 %v3314
    %v3316 = vlaneseq
    %v3317 = vshrl.u32 %v3316, 7
    %v3318 = vsub.s32 %v3315, %v3317
    %v3319 = vrot.slane %v3311, %v3318
    %v3320 = vcombine.high %v3319, %v3319
    %v3322 = vunpack.c.l.s4 1966171168
    %v3323 = vunpack.c.0.s8 %v3322
    %v3324 = vlaneseq
    %v3325 = vshrl.u32 %v3324, 7
    %v3326 = vsub.s32 %v3323, %v3325
    %v3327 = vrot.slane %v3319, %v3326
    %v3329 = vunpack.c.l.s4 1966171168
    %v3330 = vunpack.c.0.s8 %v3329
    %v3331 = vlaneseq
    %v3332 = vshrl.u32 %v3331, 7
    %v3333 = vsub.s32 %v3330, %v3332
    %v3334 = vrot.slane %v3320, %v3333
    %v3335 = vlaneseq
    %v3336 = vshrl.u32 %v3335, 7
    %v3337 = vsub.s32 0, %v3336
    %v3338 = vrot.slane %v3327, %v3337
    %v3339 = vlaneseq
    %v3340 = vshrl.u32 %v3339, 7
    %v3341 = vsub.s32 0, %v3340
    %v3342 = vrot.slane %v3334, %v3341
    %v3345 = vmul.f32 %v529, %v3338
    %v3346 = vmul.f32 %v534, %v3342
    %v3347 = vsel %vm370, %v3345, 0.0
    %3348 = vadd.xlane.f32.xlu0 %v3347
    %v3349 = vpop.xlane.xlu0 %3348
    %v3350 = vsel %vm370, %v3346, 0.0
    %3351 = vadd.xlane.f32.xlu0 %v3350
    %v3352 = vpop.xlane.xlu0 %3351
    %v3355 = vlaneseq
    %v3356 = vshrl.u32 %v3355, 7
    %v3357 = vsub.s32 %v2540, %v3356
    %v3358 = vrot.slane %v3349, %v3357
    %v3359 = vlaneseq
    %v3360 = vshrl.u32 %v3359, 7
    %v3361 = vsub.s32 %v2540, %v3360
    %v3362 = vrot.slane %v3352, %v3361
    %v3363 = vsel %vm1122, %v3362, %v3358
    %v3365 = vsel %vm2551, %v3363, -inf
    %3366 = vmax.xlane.f32.xlu0 %v3365
    %v3367 = vpop.xlane.xlu0 %3366
    %v3369 = vlaneseq
    %v3370 = vshrl.u32 %v3369, 7
    %v3371 = vsub.s32 0, %v3370
    %v3372 = vrot.slane %v3367, %v3371
    %v3373 = vlaneseq
    %v3374 = vshrl.u32 %v3373, 7
    %v3375 = vsub.s32 1, %v3374
    %v3376 = vrot.slane %v3367, %v3375
    %v3379 = vsub.f32 %v3349, %v3372
    %v3380 = vsub.f32 %v3352, %v3376
    %v3381 = vmul.f32 %v3379, 1.442695
    %v3382 = vpow.pop %v3381
    %v3383 = vmul.f32 %v3380, 1.442695
    %v3384 = vpow.pop %v3383
    %3386 = vset.pattern.permute.xlu0 0
    %3387 = vperm.xlu0 %3386, %v3382
    %v3388 = vpop.permute.xlu0 %3387
    %3391 = vset.pattern.permute.xlu0 0
    %3392 = vperm.xlu0 %3391, %v3384
    %v3393 = vpop.permute.xlu0 %3392
    %v3395 = vmul.f32 %v529, %v3388
    %v3396 = vmul.f32 %v534, %v3393
    %v3397 = vsel %vm370, %v3395, 0.0
    %v3398 = vrot.slane %v3397, 4
    %v3399 = vadd.f32 %v3397, %v3398
    %v3400 = vrot.slane %v3399, 2
    %v3401 = vadd.f32 %v3399, %v3400
    %v3402 = vrot.slane %v3401, 1
    %v3403 = vadd.f32 %v3401, %v3402
    %v3404 = vsel %vm370, %v3396, 0.0
    %v3405 = vrot.slane %v3404, 4
    %v3406 = vadd.f32 %v3404, %v3405
    %v3407 = vrot.slane %v3406, 2
    %v3408 = vadd.f32 %v3406, %v3407
    %v3409 = vrot.slane %v3408, 1
    %v3410 = vadd.f32 %v3408, %v3409
    %v3411 = vlaneseq
    %v3412 = vshrl.u32 %v3411, 7
    %v3413 = vsub.s32 %v2540, %v3412
    %v3414 = vrot.slane %v3388, %v3413
    %v3415 = vlaneseq
    %v3416 = vshrl.u32 %v3415, 7
    %v3417 = vsub.s32 %v2540, %v3416
    %v3418 = vrot.slane %v3393, %v3417
    %v3419 = vsel %vm1122, %v3418, %v3414
    %v3421 = vsel %vm2551, %v3419, 0.0
    %3422 = vadd.xlane.f32.xlu0 %v3421
    %v3423 = vpop.xlane.xlu0 %3422
    %v3424 = vrcp.pop %v3423
    %v3426 = vrot.slane %v3424, 1
    %v3429 = vmul.f32 %v3403, %v3424
    %v3430 = vmul.f32 %v3410, %v3426
    %v3433 = vrot.slane %v3430, 7
    %v3434 = vsel %vm1122, %v3433, %v3429
    %v3435 = vsel %vm370, %v3434, 0
    %3437 = vmatprep.subr.mxu0 0.0
    %3438 = vmatpush1.msra.mxu0 0.0
    %3439 = vmatprep.subr.mxu0 0.0
    %3440 = vmatpush1.msra.mxu0 0.0
    %3441 = vmatprep.subr.mxu0 0.0
    %3442 = vmatpush1.msra.mxu0 0.0
    %3443 = vmatprep.subr.mxu0 0.0
    %3444 = vmatpush1.msra.mxu0 0.0
    %3445 = vmatprep.subr.mxu0 0.0
    %3446 = vmatpush1.msra.mxu0 0.0
    %3447 = vmatprep.subr.mxu0 0.0
    %3448 = vmatpush1.msra.mxu0 0.0
    %3449 = vmatprep.subr.mxu0 0.0
    %3450 = vmatpush1.msra.mxu0 0.0
    %3451 = vmatprep.subr.mxu0 0.0
    %3452 = vmatpush1.msra.mxu0 0.0
    %3453 = vmatprep.subr.mxu0 0.0
    %3454 = vmatpush1.msra.mxu0 0.0
    %3455 = vmatprep.subr.mxu0 0.0
    %3456 = vmatpush1.msra.mxu0 0.0
    %3457 = vmatprep.subr.mxu0 0.0
    %3458 = vmatpush1.msra.mxu0 0.0
    %3459 = vmatprep.subr.mxu0 0.0
    %3460 = vmatpush1.msra.mxu0 0.0
    %3461 = vmatprep.subr.mxu0 0.0
    %3462 = vmatpush1.msra.mxu0 %v301
    %3463 = vmatprep.subr.mxu0 0.0
    %3464 = vmatpush1.msra.mxu0 %v300
    %3465 = vmatprep.subr.mxu0 0.0
    %3466 = vmatpush1.msra.mxu0 %v299
    %3467 = vmatprep.subr.mxu0 0.0
    %3468 = vmatpush1.msra.mxu0 %v298
    %3469 = vmatprep.subr.mxu0 0.0
    %3470 = vmatpush2.msra.mxu0 0.0
    %3471 = vmatprep.subr.mxu0 0.0
    %3472 = vmatpush2.msra.mxu0 0.0
    %3473 = vmatprep.subr.mxu0 0.0
    %3474 = vmatpush2.msra.mxu0 0.0
    %3475 = vmatprep.subr.mxu0 0.0
    %3476 = vmatpush2.msra.mxu0 0.0
    %3477 = vmatprep.subr.mxu0 0.0
    %3478 = vmatpush2.msra.mxu0 0.0
    %3479 = vmatprep.subr.mxu0 0.0
    %3480 = vmatpush2.msra.mxu0 0.0
    %3481 = vmatprep.subr.mxu0 0.0
    %3482 = vmatpush2.msra.mxu0 0.0
    %3483 = vmatprep.subr.mxu0 0.0
    %3484 = vmatpush2.msra.mxu0 0.0
    %3485 = vmatprep.subr.mxu0 0.0
    %3486 = vmatpush2.msra.mxu0 0.0
    %3487 = vmatprep.subr.mxu0 0.0
    %3488 = vmatpush2.msra.mxu0 0.0
    %3489 = vmatprep.subr.mxu0 0.0
    %3490 = vmatpush2.msra.mxu0 0.0
    %3491 = vmatprep.subr.mxu0 0.0
    %3492 = vmatpush2.msra.mxu0 0.0
    %3493 = vmatprep.subr.mxu0 0.0
    %3494 = vmatpush2.msra.mxu0 0.0
    %3495 = vmatprep.subr.mxu0 0.0
    %3496 = vmatpush2.msra.mxu0 0.0
    %3497 = vmatprep.subr.mxu0 0.0
    %3498 = vmatpush2.msra.mxu0 0.0
    %3499 = vmatprep.subr.mxu0 0.0
    %3500 = vmatpush2.msra.mxu0 0.0
    %3501 = vmatprep.mubr.f32.mxu0 0.0
    %3502 = vmatmul.mubr.f32.gmra.mxu0 %v3435
    %v3503 = vpop.f32.mrf.mxu0
    %v3504 = vadd.f32 0.0, %v3503
    %v3505 = vpop.f32.mrf.mxu0
    %3506 = vdwg.mxu0
    %v3507 = vsel %vm370, %v3311, 0
    %3509 = vmatprep.subr.mxu0 0.0
    %3510 = vmatpush1.msra.mxu0 0.0
    %3511 = vmatprep.subr.mxu0 0.0
    %3512 = vmatpush1.msra.mxu0 0.0
    %3513 = vmatprep.subr.mxu0 0.0
    %3514 = vmatpush1.msra.mxu0 0.0
    %3515 = vmatprep.subr.mxu0 0.0
    %3516 = vmatpush1.msra.mxu0 0.0
    %3517 = vmatprep.subr.mxu0 0.0
    %3518 = vmatpush1.msra.mxu0 0.0
    %3519 = vmatprep.subr.mxu0 0.0
    %3520 = vmatpush1.msra.mxu0 0.0
    %3521 = vmatprep.subr.mxu0 0.0
    %3522 = vmatpush1.msra.mxu0 0.0
    %3523 = vmatprep.subr.mxu0 0.0
    %3524 = vmatpush1.msra.mxu0 0.0
    %3525 = vmatprep.subr.mxu0 0.0
    %3526 = vmatpush1.msra.mxu0 0.0
    %3527 = vmatprep.subr.mxu0 0.0
    %3528 = vmatpush1.msra.mxu0 0.0
    %3529 = vmatprep.subr.mxu0 0.0
    %3530 = vmatpush1.msra.mxu0 0.0
    %3531 = vmatprep.subr.mxu0 0.0
    %3532 = vmatpush1.msra.mxu0 0.0
    %3533 = vmatprep.subr.mxu0 0.0
    %3534 = vmatpush1.msra.mxu0 %v297
    %3535 = vmatprep.subr.mxu0 0.0
    %3536 = vmatpush1.msra.mxu0 %v296
    %3537 = vmatprep.subr.mxu0 0.0
    %3538 = vmatpush1.msra.mxu0 %v295
    %3539 = vmatprep.subr.mxu0 0.0
    %3540 = vmatpush1.msra.mxu0 %v294
    %3541 = vmatprep.subr.mxu0 0.0
    %3542 = vmatpush2.msra.mxu0 0.0
    %3543 = vmatprep.subr.mxu0 0.0
    %3544 = vmatpush2.msra.mxu0 0.0
    %3545 = vmatprep.subr.mxu0 0.0
    %3546 = vmatpush2.msra.mxu0 0.0
    %3547 = vmatprep.subr.mxu0 0.0
    %3548 = vmatpush2.msra.mxu0 0.0
    %3549 = vmatprep.subr.mxu0 0.0
    %3550 = vmatpush2.msra.mxu0 0.0
    %3551 = vmatprep.subr.mxu0 0.0
    %3552 = vmatpush2.msra.mxu0 0.0
    %3553 = vmatprep.subr.mxu0 0.0
    %3554 = vmatpush2.msra.mxu0 0.0
    %3555 = vmatprep.subr.mxu0 0.0
    %3556 = vmatpush2.msra.mxu0 0.0
    %3557 = vmatprep.subr.mxu0 0.0
    %3558 = vmatpush2.msra.mxu0 0.0
    %3559 = vmatprep.subr.mxu0 0.0
    %3560 = vmatpush2.msra.mxu0 0.0
    %3561 = vmatprep.subr.mxu0 0.0
    %3562 = vmatpush2.msra.mxu0 0.0
    %3563 = vmatprep.subr.mxu0 0.0
    %3564 = vmatpush2.msra.mxu0 0.0
    %3565 = vmatprep.subr.mxu0 0.0
    %3566 = vmatpush2.msra.mxu0 0.0
    %3567 = vmatprep.subr.mxu0 0.0
    %3568 = vmatpush2.msra.mxu0 0.0
    %3569 = vmatprep.subr.mxu0 0.0
    %3570 = vmatpush2.msra.mxu0 0.0
    %3571 = vmatprep.subr.mxu0 0.0
    %3572 = vmatpush2.msra.mxu0 0.0
    %3573 = vmatprep.mubr.f32.mxu0 0.0
    %3574 = vmatmul.mubr.f32.gmra.mxu0 %v3507
    %v3575 = vpop.f32.mrf.mxu0
    %v3576 = vadd.f32 %v3504, %v3575
    %v3577 = vpop.f32.mrf.mxu0
    %3578 = vdwg.mxu0
    %v3579 = vadd.f32 %v3576, %v356
    %v3582 = vunpack.c.l.s4 1966171168
    %v3583 = vunpack.c.0.s8 %v3582
    %v3584 = vlaneseq
    %v3585 = vshrl.u32 %v3584, 7
    %v3586 = vsub.s32 %v3583, %v3585
    %v3587 = vrot.slane %v3579, %v3586
    %v3588 = vcombine.high %v3587, %v3587
    %v3590 = vunpack.c.l.s4 1966171168
    %v3591 = vunpack.c.0.s8 %v3590
    %v3592 = vlaneseq
    %v3593 = vshrl.u32 %v3592, 7
    %v3594 = vsub.s32 %v3591, %v3593
    %v3595 = vrot.slane %v3587, %v3594
    %v3597 = vunpack.c.l.s4 1966171168
    %v3598 = vunpack.c.0.s8 %v3597
    %v3599 = vlaneseq
    %v3600 = vshrl.u32 %v3599, 7
    %v3601 = vsub.s32 %v3598, %v3600
    %v3602 = vrot.slane %v3588, %v3601
    %3605 = vst.msk [vmem:[%s24 + $0x1] sm:$0x1] %vm2792, %v3595
    %3606 = vst.msk [vmem:[%s24 + $0x9] sm:$0x1] %vm2792, %v3602
    %v3607 = vsel %vm542, %v3579, 0
    %3609 = vmatprep.subr.mxu0 0.0
    %3610 = vmatpush1.msra.mxu0 0.0
    %3611 = vmatprep.subr.mxu0 0.0
    %3612 = vmatpush1.msra.mxu0 0.0
    %3613 = vmatprep.subr.mxu0 0.0
    %3614 = vmatpush1.msra.mxu0 0.0
    %3615 = vmatprep.subr.mxu0 0.0
    %3616 = vmatpush1.msra.mxu0 0.0
    %3617 = vmatprep.subr.mxu0 0.0
    %3618 = vmatpush1.msra.mxu0 0.0
    %3619 = vmatprep.subr.mxu0 0.0
    %3620 = vmatpush1.msra.mxu0 0.0
    %3621 = vmatprep.subr.mxu0 0.0
    %3622 = vmatpush1.msra.mxu0 0.0
    %3623 = vmatprep.subr.mxu0 0.0
    %3624 = vmatpush1.msra.mxu0 0.0
    %3625 = vmatprep.subr.mxu0 0.0
    %3626 = vmatpush1.msra.mxu0 0.0
    %3627 = vmatprep.subr.mxu0 0.0
    %3628 = vmatpush1.msra.mxu0 0.0
    %3629 = vmatprep.subr.mxu0 0.0
    %3630 = vmatpush1.msra.mxu0 0.0
    %3631 = vmatprep.subr.mxu0 0.0
    %3632 = vmatpush1.msra.mxu0 0.0
    %3633 = vmatprep.subr.mxu0 0.0
    %3634 = vmatpush1.msra.mxu0 0.0
    %3635 = vmatprep.subr.mxu0 0.0
    %3636 = vmatpush1.msra.mxu0 0.0
    %3637 = vmatprep.subr.mxu0 0.0
    %3638 = vmatpush1.msra.mxu0 %v547
    %3639 = vmatprep.subr.mxu0 0.0
    %3640 = vmatpush1.msra.mxu0 %v274
    %3641 = vmatprep.subr.mxu0 0.0
    %3642 = vmatpush2.msra.mxu0 0.0
    %3643 = vmatprep.subr.mxu0 0.0
    %3644 = vmatpush2.msra.mxu0 0.0
    %3645 = vmatprep.subr.mxu0 0.0
    %3646 = vmatpush2.msra.mxu0 0.0
    %3647 = vmatprep.subr.mxu0 0.0
    %3648 = vmatpush2.msra.mxu0 0.0
    %3649 = vmatprep.subr.mxu0 0.0
    %3650 = vmatpush2.msra.mxu0 0.0
    %3651 = vmatprep.subr.mxu0 0.0
    %3652 = vmatpush2.msra.mxu0 0.0
    %3653 = vmatprep.subr.mxu0 0.0
    %3654 = vmatpush2.msra.mxu0 0.0
    %3655 = vmatprep.subr.mxu0 0.0
    %3656 = vmatpush2.msra.mxu0 0.0
    %3657 = vmatprep.subr.mxu0 0.0
    %3658 = vmatpush2.msra.mxu0 0.0
    %3659 = vmatprep.subr.mxu0 0.0
    %3660 = vmatpush2.msra.mxu0 0.0
    %3661 = vmatprep.subr.mxu0 0.0
    %3662 = vmatpush2.msra.mxu0 0.0
    %3663 = vmatprep.subr.mxu0 0.0
    %3664 = vmatpush2.msra.mxu0 0.0
    %3665 = vmatprep.subr.mxu0 0.0
    %3666 = vmatpush2.msra.mxu0 0.0
    %3667 = vmatprep.subr.mxu0 0.0
    %3668 = vmatpush2.msra.mxu0 0.0
    %3669 = vmatprep.subr.mxu0 0.0
    %3670 = vmatpush2.msra.mxu0 0.0
    %3671 = vmatprep.subr.mxu0 0.0
    %3672 = vmatpush2.msra.mxu0 0.0
    %3673 = vmatprep.mubr.f32.mxu0 0.0
    %3674 = vmatmul.mubr.f32.gmra.mxu0 %v3607
    %v3675 = vpop.f32.mrf.mxu0
    %v3676 = vadd.f32 %v307, %v3675
    %v3677 = vpop.f32.mrf.mxu0
    %3678 = vdwg.mxu0
    %v3679 = vmax.f32 %v3676, 0.0
    %v3681 = vsel %vm455, %v3679, 0
    %3683 = vmatprep.subr.mxu0 0.0
    %3684 = vmatpush1.msra.mxu0 0.0
    %3685 = vmatprep.subr.mxu0 0.0
    %3686 = vmatpush1.msra.mxu0 0.0
    %3687 = vmatprep.subr.mxu0 0.0
    %3688 = vmatpush1.msra.mxu0 0.0
    %3689 = vmatprep.subr.mxu0 0.0
    %3690 = vmatpush1.msra.mxu0 0.0
    %3691 = vmatprep.subr.mxu0 0.0
    %3692 = vmatpush1.msra.mxu0 0.0
    %3693 = vmatprep.subr.mxu0 0.0
    %3694 = vmatpush1.msra.mxu0 0.0
    %3695 = vmatprep.subr.mxu0 0.0
    %3696 = vmatpush1.msra.mxu0 0.0
    %3697 = vmatprep.subr.mxu0 0.0
    %3698 = vmatpush1.msra.mxu0 0.0
    %3699 = vmatprep.subr.mxu0 0.0
    %3700 = vmatpush1.msra.mxu0 0.0
    %3701 = vmatprep.subr.mxu0 0.0
    %3702 = vmatpush1.msra.mxu0 0.0
    %3703 = vmatprep.subr.mxu0 0.0
    %3704 = vmatpush1.msra.mxu0 0.0
    %3705 = vmatprep.subr.mxu0 0.0
    %3706 = vmatpush1.msra.mxu0 0.0
    %3707 = vmatprep.subr.mxu0 0.0
    %3708 = vmatpush1.msra.mxu0 0.0
    %3709 = vmatprep.subr.mxu0 0.0
    %3710 = vmatpush1.msra.mxu0 0.0
    %3711 = vmatprep.subr.mxu0 0.0
    %3712 = vmatpush1.msra.mxu0 %v277
    %3713 = vmatprep.subr.mxu0 0.0
    %3714 = vmatpush1.msra.mxu0 %v276
    %3715 = vmatprep.subr.mxu0 0.0
    %3716 = vmatpush2.msra.mxu0 0.0
    %3717 = vmatprep.subr.mxu0 0.0
    %3718 = vmatpush2.msra.mxu0 0.0
    %3719 = vmatprep.subr.mxu0 0.0
    %3720 = vmatpush2.msra.mxu0 0.0
    %3721 = vmatprep.subr.mxu0 0.0
    %3722 = vmatpush2.msra.mxu0 0.0
    %3723 = vmatprep.subr.mxu0 0.0
    %3724 = vmatpush2.msra.mxu0 0.0
    %3725 = vmatprep.subr.mxu0 0.0
    %3726 = vmatpush2.msra.mxu0 0.0
    %3727 = vmatprep.subr.mxu0 0.0
    %3728 = vmatpush2.msra.mxu0 0.0
    %3729 = vmatprep.subr.mxu0 0.0
    %3730 = vmatpush2.msra.mxu0 0.0
    %3731 = vmatprep.subr.mxu0 0.0
    %3732 = vmatpush2.msra.mxu0 0.0
    %3733 = vmatprep.subr.mxu0 0.0
    %3734 = vmatpush2.msra.mxu0 0.0
    %3735 = vmatprep.subr.mxu0 0.0
    %3736 = vmatpush2.msra.mxu0 0.0
    %3737 = vmatprep.subr.mxu0 0.0
    %3738 = vmatpush2.msra.mxu0 0.0
    %3739 = vmatprep.subr.mxu0 0.0
    %3740 = vmatpush2.msra.mxu0 0.0
    %3741 = vmatprep.subr.mxu0 0.0
    %3742 = vmatpush2.msra.mxu0 0.0
    %3743 = vmatprep.subr.mxu0 0.0
    %3744 = vmatpush2.msra.mxu0 0.0
    %3745 = vmatprep.subr.mxu0 0.0
    %3746 = vmatpush2.msra.mxu0 0.0
    %3747 = vmatprep.mubr.f32.mxu0 0.0
    %3748 = vmatmul.mubr.f32.gmra.mxu0 %v3681
    %v3749 = vpop.f32.mrf.mxu0
    %v3750 = vadd.f32 %v314, %v3749
    %v3751 = vpop.f32.mrf.mxu0
    %3752 = vdwg.mxu0
    %3753 = vmatprep.subr.mxu0 0.0
    %3754 = vmatpush1.msra.mxu0 0.0
    %3755 = vmatprep.subr.mxu0 0.0
    %3756 = vmatpush1.msra.mxu0 0.0
    %3757 = vmatprep.subr.mxu0 0.0
    %3758 = vmatpush1.msra.mxu0 0.0
    %3759 = vmatprep.subr.mxu0 0.0
    %3760 = vmatpush1.msra.mxu0 0.0
    %3761 = vmatprep.subr.mxu0 0.0
    %3762 = vmatpush1.msra.mxu0 0.0
    %3763 = vmatprep.subr.mxu0 0.0
    %3764 = vmatpush1.msra.mxu0 0.0
    %3765 = vmatprep.subr.mxu0 0.0
    %3766 = vmatpush1.msra.mxu0 0.0
    %3767 = vmatprep.subr.mxu0 0.0
    %3768 = vmatpush1.msra.mxu0 0.0
    %3769 = vmatprep.subr.mxu0 0.0
    %3770 = vmatpush1.msra.mxu0 0.0
    %3771 = vmatprep.subr.mxu0 0.0
    %3772 = vmatpush1.msra.mxu0 0.0
    %3773 = vmatprep.subr.mxu0 0.0
    %3774 = vmatpush1.msra.mxu0 0.0
    %3775 = vmatprep.subr.mxu0 0.0
    %3776 = vmatpush1.msra.mxu0 0.0
    %3777 = vmatprep.subr.mxu0 0.0
    %3778 = vmatpush1.msra.mxu0 0.0
    %3779 = vmatprep.subr.mxu0 0.0
    %3780 = vmatpush1.msra.mxu0 0.0
    %3781 = vmatprep.subr.mxu0 0.0
    %3782 = vmatpush1.msra.mxu0 %v279
    %3783 = vmatprep.subr.mxu0 0.0
    %3784 = vmatpush1.msra.mxu0 %v278
    %3785 = vmatprep.subr.mxu0 0.0
    %3786 = vmatpush2.msra.mxu0 0.0
    %3787 = vmatprep.subr.mxu0 0.0
    %3788 = vmatpush2.msra.mxu0 0.0
    %3789 = vmatprep.subr.mxu0 0.0
    %3790 = vmatpush2.msra.mxu0 0.0
    %3791 = vmatprep.subr.mxu0 0.0
    %3792 = vmatpush2.msra.mxu0 0.0
    %3793 = vmatprep.subr.mxu0 0.0
    %3794 = vmatpush2.msra.mxu0 0.0
    %3795 = vmatprep.subr.mxu0 0.0
    %3796 = vmatpush2.msra.mxu0 0.0
    %3797 = vmatprep.subr.mxu0 0.0
    %3798 = vmatpush2.msra.mxu0 0.0
    %3799 = vmatprep.subr.mxu0 0.0
    %3800 = vmatpush2.msra.mxu0 0.0
    %3801 = vmatprep.subr.mxu0 0.0
    %3802 = vmatpush2.msra.mxu0 0.0
    %3803 = vmatprep.subr.mxu0 0.0
    %3804 = vmatpush2.msra.mxu0 0.0
    %3805 = vmatprep.subr.mxu0 0.0
    %3806 = vmatpush2.msra.mxu0 0.0
    %3807 = vmatprep.subr.mxu0 0.0
    %3808 = vmatpush2.msra.mxu0 0.0
    %3809 = vmatprep.subr.mxu0 0.0
    %3810 = vmatpush2.msra.mxu0 0.0
    %3811 = vmatprep.subr.mxu0 0.0
    %3812 = vmatpush2.msra.mxu0 0.0
    %3813 = vmatprep.subr.mxu0 0.0
    %3814 = vmatpush2.msra.mxu0 0.0
    %3815 = vmatprep.subr.mxu0 0.0
    %3816 = vmatpush2.msra.mxu0 0.0
    %3817 = vmatprep.mubr.f32.mxu0 0.0
    %3818 = vmatmul.mubr.f32.gmra.mxu0 %v3681
    %v3819 = vpop.f32.mrf.mxu0
    %v3820 = vadd.f32 %v321, %v3819
    %v3821 = vpop.f32.mrf.mxu0
    %3822 = vdwg.mxu0
    %3823 = vmatprep.subr.mxu0 0.0
    %3824 = vmatpush1.msra.mxu0 0.0
    %3825 = vmatprep.subr.mxu0 0.0
    %3826 = vmatpush1.msra.mxu0 0.0
    %3827 = vmatprep.subr.mxu0 0.0
    %3828 = vmatpush1.msra.mxu0 0.0
    %3829 = vmatprep.subr.mxu0 0.0
    %3830 = vmatpush1.msra.mxu0 0.0
    %3831 = vmatprep.subr.mxu0 0.0
    %3832 = vmatpush1.msra.mxu0 0.0
    %3833 = vmatprep.subr.mxu0 0.0
    %3834 = vmatpush1.msra.mxu0 0.0
    %3835 = vmatprep.subr.mxu0 0.0
    %3836 = vmatpush1.msra.mxu0 0.0
    %3837 = vmatprep.subr.mxu0 0.0
    %3838 = vmatpush1.msra.mxu0 0.0
    %3839 = vmatprep.subr.mxu0 0.0
    %3840 = vmatpush1.msra.mxu0 0.0
    %3841 = vmatprep.subr.mxu0 0.0
    %3842 = vmatpush1.msra.mxu0 0.0
    %3843 = vmatprep.subr.mxu0 0.0
    %3844 = vmatpush1.msra.mxu0 0.0
    %3845 = vmatprep.subr.mxu0 0.0
    %3846 = vmatpush1.msra.mxu0 0.0
    %3847 = vmatprep.subr.mxu0 0.0
    %3848 = vmatpush1.msra.mxu0 0.0
    %3849 = vmatprep.subr.mxu0 0.0
    %3850 = vmatpush1.msra.mxu0 0.0
    %3851 = vmatprep.subr.mxu0 0.0
    %3852 = vmatpush1.msra.mxu0 %v281
    %3853 = vmatprep.subr.mxu0 0.0
    %3854 = vmatpush1.msra.mxu0 %v280
    %3855 = vmatprep.subr.mxu0 0.0
    %3856 = vmatpush2.msra.mxu0 0.0
    %3857 = vmatprep.subr.mxu0 0.0
    %3858 = vmatpush2.msra.mxu0 0.0
    %3859 = vmatprep.subr.mxu0 0.0
    %3860 = vmatpush2.msra.mxu0 0.0
    %3861 = vmatprep.subr.mxu0 0.0
    %3862 = vmatpush2.msra.mxu0 0.0
    %3863 = vmatprep.subr.mxu0 0.0
    %3864 = vmatpush2.msra.mxu0 0.0
    %3865 = vmatprep.subr.mxu0 0.0
    %3866 = vmatpush2.msra.mxu0 0.0
    %3867 = vmatprep.subr.mxu0 0.0
    %3868 = vmatpush2.msra.mxu0 0.0
    %3869 = vmatprep.subr.mxu0 0.0
    %3870 = vmatpush2.msra.mxu0 0.0
    %3871 = vmatprep.subr.mxu0 0.0
    %3872 = vmatpush2.msra.mxu0 0.0
    %3873 = vmatprep.subr.mxu0 0.0
    %3874 = vmatpush2.msra.mxu0 0.0
    %3875 = vmatprep.subr.mxu0 0.0
    %3876 = vmatpush2.msra.mxu0 0.0
    %3877 = vmatprep.subr.mxu0 0.0
    %3878 = vmatpush2.msra.mxu0 0.0
    %3879 = vmatprep.subr.mxu0 0.0
    %3880 = vmatpush2.msra.mxu0 0.0
    %3881 = vmatprep.subr.mxu0 0.0
    %3882 = vmatpush2.msra.mxu0 0.0
    %3883 = vmatprep.subr.mxu0 0.0
    %3884 = vmatpush2.msra.mxu0 0.0
    %3885 = vmatprep.subr.mxu0 0.0
    %3886 = vmatpush2.msra.mxu0 0.0
    %3887 = vmatprep.mubr.f32.mxu0 0.0
    %3888 = vmatmul.mubr.f32.gmra.mxu0 %v3681
    %v3889 = vpop.f32.mrf.mxu0
    %v3890 = vadd.f32 %v328, %v3889
    %v3891 = vpop.f32.mrf.mxu0
    %3892 = vdwg.mxu0
    %3893 = vmatprep.subr.mxu0 0.0
    %3894 = vmatpush1.msra.mxu0 0.0
    %3895 = vmatprep.subr.mxu0 0.0
    %3896 = vmatpush1.msra.mxu0 0.0
    %3897 = vmatprep.subr.mxu0 0.0
    %3898 = vmatpush1.msra.mxu0 0.0
    %3899 = vmatprep.subr.mxu0 0.0
    %3900 = vmatpush1.msra.mxu0 0.0
    %3901 = vmatprep.subr.mxu0 0.0
    %3902 = vmatpush1.msra.mxu0 0.0
    %3903 = vmatprep.subr.mxu0 0.0
    %3904 = vmatpush1.msra.mxu0 0.0
    %3905 = vmatprep.subr.mxu0 0.0
    %3906 = vmatpush1.msra.mxu0 0.0
    %3907 = vmatprep.subr.mxu0 0.0
    %3908 = vmatpush1.msra.mxu0 0.0
    %3909 = vmatprep.subr.mxu0 0.0
    %3910 = vmatpush1.msra.mxu0 0.0
    %3911 = vmatprep.subr.mxu0 0.0
    %3912 = vmatpush1.msra.mxu0 0.0
    %3913 = vmatprep.subr.mxu0 0.0
    %3914 = vmatpush1.msra.mxu0 0.0
    %3915 = vmatprep.subr.mxu0 0.0
    %3916 = vmatpush1.msra.mxu0 0.0
    %3917 = vmatprep.subr.mxu0 0.0
    %3918 = vmatpush1.msra.mxu0 %v285
    %3919 = vmatprep.subr.mxu0 0.0
    %3920 = vmatpush1.msra.mxu0 %v284
    %3921 = vmatprep.subr.mxu0 0.0
    %3922 = vmatpush1.msra.mxu0 %v283
    %3923 = vmatprep.subr.mxu0 0.0
    %3924 = vmatpush1.msra.mxu0 %v282
    %3925 = vmatprep.subr.mxu0 0.0
    %3926 = vmatpush2.msra.mxu0 0.0
    %3927 = vmatprep.subr.mxu0 0.0
    %3928 = vmatpush2.msra.mxu0 0.0
    %3929 = vmatprep.subr.mxu0 0.0
    %3930 = vmatpush2.msra.mxu0 0.0
    %3931 = vmatprep.subr.mxu0 0.0
    %3932 = vmatpush2.msra.mxu0 0.0
    %3933 = vmatprep.subr.mxu0 0.0
    %3934 = vmatpush2.msra.mxu0 0.0
    %3935 = vmatprep.subr.mxu0 0.0
    %3936 = vmatpush2.msra.mxu0 0.0
    %3937 = vmatprep.subr.mxu0 0.0
    %3938 = vmatpush2.msra.mxu0 0.0
    %3939 = vmatprep.subr.mxu0 0.0
    %3940 = vmatpush2.msra.mxu0 0.0
    %3941 = vmatprep.subr.mxu0 0.0
    %3942 = vmatpush2.msra.mxu0 0.0
    %3943 = vmatprep.subr.mxu0 0.0
    %3944 = vmatpush2.msra.mxu0 0.0
    %3945 = vmatprep.subr.mxu0 0.0
    %3946 = vmatpush2.msra.mxu0 0.0
    %3947 = vmatprep.subr.mxu0 0.0
    %3948 = vmatpush2.msra.mxu0 0.0
    %3949 = vmatprep.subr.mxu0 0.0
    %3950 = vmatpush2.msra.mxu0 0.0
    %3951 = vmatprep.subr.mxu0 0.0
    %3952 = vmatpush2.msra.mxu0 0.0
    %3953 = vmatprep.subr.mxu0 0.0
    %3954 = vmatpush2.msra.mxu0 0.0
    %3955 = vmatprep.subr.mxu0 0.0
    %3956 = vmatpush2.msra.mxu0 0.0
    %3957 = vmatprep.mubr.f32.mxu0 0.0
    %3958 = vmatmul.mubr.f32.gmra.mxu0 %v3507
    %v3959 = vpop.f32.mrf.mxu0
    %v3960 = vadd.f32 %v335, %v3959
    %v3961 = vpop.f32.mrf.mxu0
    %3962 = vdwg.mxu0
    %3963 = vmatprep.subr.mxu0 0.0
    %3964 = vmatpush1.msra.mxu0 0.0
    %3965 = vmatprep.subr.mxu0 0.0
    %3966 = vmatpush1.msra.mxu0 0.0
    %3967 = vmatprep.subr.mxu0 0.0
    %3968 = vmatpush1.msra.mxu0 0.0
    %3969 = vmatprep.subr.mxu0 0.0
    %3970 = vmatpush1.msra.mxu0 0.0
    %3971 = vmatprep.subr.mxu0 0.0
    %3972 = vmatpush1.msra.mxu0 0.0
    %3973 = vmatprep.subr.mxu0 0.0
    %3974 = vmatpush1.msra.mxu0 0.0
    %3975 = vmatprep.subr.mxu0 0.0
    %3976 = vmatpush1.msra.mxu0 0.0
    %3977 = vmatprep.subr.mxu0 0.0
    %3978 = vmatpush1.msra.mxu0 0.0
    %3979 = vmatprep.subr.mxu0 0.0
    %3980 = vmatpush1.msra.mxu0 0.0
    %3981 = vmatprep.subr.mxu0 0.0
    %3982 = vmatpush1.msra.mxu0 0.0
    %3983 = vmatprep.subr.mxu0 0.0
    %3984 = vmatpush1.msra.mxu0 0.0
    %3985 = vmatprep.subr.mxu0 0.0
    %3986 = vmatpush1.msra.mxu0 0.0
    %3987 = vmatprep.subr.mxu0 0.0
    %3988 = vmatpush1.msra.mxu0 %v289
    %3989 = vmatprep.subr.mxu0 0.0
    %3990 = vmatpush1.msra.mxu0 %v288
    %3991 = vmatprep.subr.mxu0 0.0
    %3992 = vmatpush1.msra.mxu0 %v287
    %3993 = vmatprep.subr.mxu0 0.0
    %3994 = vmatpush1.msra.mxu0 %v286
    %3995 = vmatprep.subr.mxu0 0.0
    %3996 = vmatpush2.msra.mxu0 0.0
    %3997 = vmatprep.subr.mxu0 0.0
    %3998 = vmatpush2.msra.mxu0 0.0
    %3999 = vmatprep.subr.mxu0 0.0
    %4000 = vmatpush2.msra.mxu0 0.0
    %4001 = vmatprep.subr.mxu0 0.0
    %4002 = vmatpush2.msra.mxu0 0.0
    %4003 = vmatprep.subr.mxu0 0.0
    %4004 = vmatpush2.msra.mxu0 0.0
    %4005 = vmatprep.subr.mxu0 0.0
    %4006 = vmatpush2.msra.mxu0 0.0
    %4007 = vmatprep.subr.mxu0 0.0
    %4008 = vmatpush2.msra.mxu0 0.0
    %4009 = vmatprep.subr.mxu0 0.0
    %4010 = vmatpush2.msra.mxu0 0.0
    %4011 = vmatprep.subr.mxu0 0.0
    %4012 = vmatpush2.msra.mxu0 0.0
    %4013 = vmatprep.subr.mxu0 0.0
    %4014 = vmatpush2.msra.mxu0 0.0
    %4015 = vmatprep.subr.mxu0 0.0
    %4016 = vmatpush2.msra.mxu0 0.0
    %4017 = vmatprep.subr.mxu0 0.0
    %4018 = vmatpush2.msra.mxu0 0.0
    %4019 = vmatprep.subr.mxu0 0.0
    %4020 = vmatpush2.msra.mxu0 0.0
    %4021 = vmatprep.subr.mxu0 0.0
    %4022 = vmatpush2.msra.mxu0 0.0
    %4023 = vmatprep.subr.mxu0 0.0
    %4024 = vmatpush2.msra.mxu0 0.0
    %4025 = vmatprep.subr.mxu0 0.0
    %4026 = vmatpush2.msra.mxu0 0.0
    %4027 = vmatprep.mubr.f32.mxu0 0.0
    %4028 = vmatmul.mubr.f32.gmra.mxu0 %v3507
    %v4029 = vpop.f32.mrf.mxu0
    %v4030 = vadd.f32 %v342, %v4029
    %v4031 = vpop.f32.mrf.mxu0
    %4032 = vdwg.mxu0
    %4033 = vmatprep.subr.mxu0 0.0
    %4034 = vmatpush1.msra.mxu0 0.0
    %4035 = vmatprep.subr.mxu0 0.0
    %4036 = vmatpush1.msra.mxu0 0.0
    %4037 = vmatprep.subr.mxu0 0.0
    %4038 = vmatpush1.msra.mxu0 0.0
    %4039 = vmatprep.subr.mxu0 0.0
    %4040 = vmatpush1.msra.mxu0 0.0
    %4041 = vmatprep.subr.mxu0 0.0
    %4042 = vmatpush1.msra.mxu0 0.0
    %4043 = vmatprep.subr.mxu0 0.0
    %4044 = vmatpush1.msra.mxu0 0.0
    %4045 = vmatprep.subr.mxu0 0.0
    %4046 = vmatpush1.msra.mxu0 0.0
    %4047 = vmatprep.subr.mxu0 0.0
    %4048 = vmatpush1.msra.mxu0 0.0
    %4049 = vmatprep.subr.mxu0 0.0
    %4050 = vmatpush1.msra.mxu0 0.0
    %4051 = vmatprep.subr.mxu0 0.0
    %4052 = vmatpush1.msra.mxu0 0.0
    %4053 = vmatprep.subr.mxu0 0.0
    %4054 = vmatpush1.msra.mxu0 0.0
    %4055 = vmatprep.subr.mxu0 0.0
    %4056 = vmatpush1.msra.mxu0 0.0
    %4057 = vmatprep.subr.mxu0 0.0
    %4058 = vmatpush1.msra.mxu0 %v293
    %4059 = vmatprep.subr.mxu0 0.0
    %4060 = vmatpush1.msra.mxu0 %v292
    %4061 = vmatprep.subr.mxu0 0.0
    %4062 = vmatpush1.msra.mxu0 %v291
    %4063 = vmatprep.subr.mxu0 0.0
    %4064 = vmatpush1.msra.mxu0 %v290
    %4065 = vmatprep.subr.mxu0 0.0
    %4066 = vmatpush2.msra.mxu0 0.0
    %4067 = vmatprep.subr.mxu0 0.0
    %4068 = vmatpush2.msra.mxu0 0.0
    %4069 = vmatprep.subr.mxu0 0.0
    %4070 = vmatpush2.msra.mxu0 0.0
    %4071 = vmatprep.subr.mxu0 0.0
    %4072 = vmatpush2.msra.mxu0 0.0
    %4073 = vmatprep.subr.mxu0 0.0
    %4074 = vmatpush2.msra.mxu0 0.0
    %4075 = vmatprep.subr.mxu0 0.0
    %4076 = vmatpush2.msra.mxu0 0.0
    %4077 = vmatprep.subr.mxu0 0.0
    %4078 = vmatpush2.msra.mxu0 0.0
    %4079 = vmatprep.subr.mxu0 0.0
    %4080 = vmatpush2.msra.mxu0 0.0
    %4081 = vmatprep.subr.mxu0 0.0
    %4082 = vmatpush2.msra.mxu0 0.0
    %4083 = vmatprep.subr.mxu0 0.0
    %4084 = vmatpush2.msra.mxu0 0.0
    %4085 = vmatprep.subr.mxu0 0.0
    %4086 = vmatpush2.msra.mxu0 0.0
    %4087 = vmatprep.subr.mxu0 0.0
    %4088 = vmatpush2.msra.mxu0 0.0
    %4089 = vmatprep.subr.mxu0 0.0
    %4090 = vmatpush2.msra.mxu0 0.0
    %4091 = vmatprep.subr.mxu0 0.0
    %4092 = vmatpush2.msra.mxu0 0.0
    %4093 = vmatprep.subr.mxu0 0.0
    %4094 = vmatpush2.msra.mxu0 0.0
    %4095 = vmatprep.subr.mxu0 0.0
    %4096 = vmatpush2.msra.mxu0 0.0
    %4097 = vmatprep.mubr.f32.mxu0 0.0
    %4098 = vmatmul.mubr.f32.gmra.mxu0 %v3507
    %v4099 = vpop.f32.mrf.mxu0
    %v4100 = vadd.f32 %v349, %v4099
    %v4101 = vpop.f32.mrf.mxu0
    %4102 = vdwg.mxu0
    %v4103 = vadd.f32 %v3750, %v3960
    %v4104 = vxor.u32 %v4103, 2147483648
    %v4105 = vmul.f32 %v4104, 1.442695
    %v4106 = vpow.pop %v4105
    %v4107 = vadd.f32 %v4106, 1.0
    %v4108 = vrcp.pop %v4107
    %v4109 = vmul.f32 1.0, %v4108
    %v4110 = vadd.f32 %v3820, %v4030
    %v4111 = vxor.u32 %v4110, 2147483648
    %v4112 = vmul.f32 %v4111, 1.442695
    %v4113 = vpow.pop %v4112
    %v4114 = vadd.f32 %v4113, 1.0
    %v4115 = vrcp.pop %v4114
    %v4116 = vmul.f32 1.0, %v4115
    %v4117 = vmul.f32 %v4109, %v4100
    %v4118 = vadd.f32 %v3890, %v4117
    %v4119 = vtanh.pop %v4118
    %v4120 = vsub.f32 1.0, %v4116
    %v4121 = vmul.f32 %v4120, %v4119
    %v4122 = vmul.f32 %v4116, %v3311
    %v4123 = vadd.f32 %v4121, %v4122
    %v4126 = vunpack.c.l.s4 1966171168
    %v4127 = vunpack.c.0.s8 %v4126
    %v4128 = vlaneseq
    %v4129 = vshrl.u32 %v4128, 7
    %v4130 = vsub.s32 %v4127, %v4129
    %v4131 = vrot.slane %v4123, %v4130
    %v4132 = vcombine.high %v4131, %v4131
    %v4134 = vunpack.c.l.s4 1966171168
    %v4135 = vunpack.c.0.s8 %v4134
    %v4136 = vlaneseq
    %v4137 = vshrl.u32 %v4136, 7
    %v4138 = vsub.s32 %v4135, %v4137
    %v4139 = vrot.slane %v4131, %v4138
    %v4141 = vunpack.c.l.s4 1966171168
    %v4142 = vunpack.c.0.s8 %v4141
    %v4143 = vlaneseq
    %v4144 = vshrl.u32 %v4143, 7
    %v4145 = vsub.s32 %v4142, %v4144
    %v4146 = vrot.slane %v4132, %v4145
    %v4147 = vlaneseq
    %v4148 = vshrl.u32 %v4147, 7
    %v4149 = vsub.s32 0, %v4148
    %v4150 = vrot.slane %v4139, %v4149
    %v4151 = vlaneseq
    %v4152 = vshrl.u32 %v4151, 7
    %v4153 = vsub.s32 0, %v4152
    %v4154 = vrot.slane %v4146, %v4153
    %v4157 = vmul.f32 %v529, %v4150
    %v4158 = vmul.f32 %v534, %v4154
    %v4159 = vsel %vm370, %v4157, 0.0
    %4160 = vadd.xlane.f32.xlu0 %v4159
    %v4161 = vpop.xlane.xlu0 %4160
    %v4162 = vsel %vm370, %v4158, 0.0
    %4163 = vadd.xlane.f32.xlu0 %v4162
    %v4164 = vpop.xlane.xlu0 %4163
    %v4167 = vlaneseq
    %v4168 = vshrl.u32 %v4167, 7
    %v4169 = vsub.s32 %v2540, %v4168
    %v4170 = vrot.slane %v4161, %v4169
    %v4171 = vlaneseq
    %v4172 = vshrl.u32 %v4171, 7
    %v4173 = vsub.s32 %v2540, %v4172
    %v4174 = vrot.slane %v4164, %v4173
    %v4175 = vsel %vm1122, %v4174, %v4170
    %v4177 = vsel %vm2551, %v4175, -inf
    %4178 = vmax.xlane.f32.xlu0 %v4177
    %v4179 = vpop.xlane.xlu0 %4178
    %v4181 = vlaneseq
    %v4182 = vshrl.u32 %v4181, 7
    %v4183 = vsub.s32 0, %v4182
    %v4184 = vrot.slane %v4179, %v4183
    %v4185 = vlaneseq
    %v4186 = vshrl.u32 %v4185, 7
    %v4187 = vsub.s32 1, %v4186
    %v4188 = vrot.slane %v4179, %v4187
    %v4191 = vsub.f32 %v4161, %v4184
    %v4192 = vsub.f32 %v4164, %v4188
    %v4193 = vmul.f32 %v4191, 1.442695
    %v4194 = vpow.pop %v4193
    %v4195 = vmul.f32 %v4192, 1.442695
    %v4196 = vpow.pop %v4195
    %4198 = vset.pattern.permute.xlu0 0
    %4199 = vperm.xlu0 %4198, %v4194
    %v4200 = vpop.permute.xlu0 %4199
    %4203 = vset.pattern.permute.xlu0 0
    %4204 = vperm.xlu0 %4203, %v4196
    %v4205 = vpop.permute.xlu0 %4204
    %v4207 = vmul.f32 %v529, %v4200
    %v4208 = vmul.f32 %v534, %v4205
    %v4209 = vsel %vm370, %v4207, 0.0
    %v4210 = vrot.slane %v4209, 4
    %v4211 = vadd.f32 %v4209, %v4210
    %v4212 = vrot.slane %v4211, 2
    %v4213 = vadd.f32 %v4211, %v4212
    %v4214 = vrot.slane %v4213, 1
    %v4215 = vadd.f32 %v4213, %v4214
    %v4216 = vsel %vm370, %v4208, 0.0
    %v4217 = vrot.slane %v4216, 4
    %v4218 = vadd.f32 %v4216, %v4217
    %v4219 = vrot.slane %v4218, 2
    %v4220 = vadd.f32 %v4218, %v4219
    %v4221 = vrot.slane %v4220, 1
    %v4222 = vadd.f32 %v4220, %v4221
    %v4223 = vlaneseq
    %v4224 = vshrl.u32 %v4223, 7
    %v4225 = vsub.s32 %v2540, %v4224
    %v4226 = vrot.slane %v4200, %v4225
    %v4227 = vlaneseq
    %v4228 = vshrl.u32 %v4227, 7
    %v4229 = vsub.s32 %v2540, %v4228
    %v4230 = vrot.slane %v4205, %v4229
    %v4231 = vsel %vm1122, %v4230, %v4226
    %v4233 = vsel %vm2551, %v4231, 0.0
    %4234 = vadd.xlane.f32.xlu0 %v4233
    %v4235 = vpop.xlane.xlu0 %4234
    %v4236 = vrcp.pop %v4235
    %v4238 = vrot.slane %v4236, 1
    %v4241 = vmul.f32 %v4215, %v4236
    %v4242 = vmul.f32 %v4222, %v4238
    %v4245 = vrot.slane %v4242, 7
    %v4246 = vsel %vm1122, %v4245, %v4241
    %v4247 = vsel %vm370, %v4246, 0
    %4249 = vmatprep.subr.mxu0 0.0
    %4250 = vmatpush1.msra.mxu0 0.0
    %4251 = vmatprep.subr.mxu0 0.0
    %4252 = vmatpush1.msra.mxu0 0.0
    %4253 = vmatprep.subr.mxu0 0.0
    %4254 = vmatpush1.msra.mxu0 0.0
    %4255 = vmatprep.subr.mxu0 0.0
    %4256 = vmatpush1.msra.mxu0 0.0
    %4257 = vmatprep.subr.mxu0 0.0
    %4258 = vmatpush1.msra.mxu0 0.0
    %4259 = vmatprep.subr.mxu0 0.0
    %4260 = vmatpush1.msra.mxu0 0.0
    %4261 = vmatprep.subr.mxu0 0.0
    %4262 = vmatpush1.msra.mxu0 0.0
    %4263 = vmatprep.subr.mxu0 0.0
    %4264 = vmatpush1.msra.mxu0 0.0
    %4265 = vmatprep.subr.mxu0 0.0
    %4266 = vmatpush1.msra.mxu0 0.0
    %4267 = vmatprep.subr.mxu0 0.0
    %4268 = vmatpush1.msra.mxu0 0.0
    %4269 = vmatprep.subr.mxu0 0.0
    %4270 = vmatpush1.msra.mxu0 0.0
    %4271 = vmatprep.subr.mxu0 0.0
    %4272 = vmatpush1.msra.mxu0 0.0
    %4273 = vmatprep.subr.mxu0 0.0
    %4274 = vmatpush1.msra.mxu0 %v301
    %4275 = vmatprep.subr.mxu0 0.0
    %4276 = vmatpush1.msra.mxu0 %v300
    %4277 = vmatprep.subr.mxu0 0.0
    %4278 = vmatpush1.msra.mxu0 %v299
    %4279 = vmatprep.subr.mxu0 0.0
    %4280 = vmatpush1.msra.mxu0 %v298
    %4281 = vmatprep.subr.mxu0 0.0
    %4282 = vmatpush2.msra.mxu0 0.0
    %4283 = vmatprep.subr.mxu0 0.0
    %4284 = vmatpush2.msra.mxu0 0.0
    %4285 = vmatprep.subr.mxu0 0.0
    %4286 = vmatpush2.msra.mxu0 0.0
    %4287 = vmatprep.subr.mxu0 0.0
    %4288 = vmatpush2.msra.mxu0 0.0
    %4289 = vmatprep.subr.mxu0 0.0
    %4290 = vmatpush2.msra.mxu0 0.0
    %4291 = vmatprep.subr.mxu0 0.0
    %4292 = vmatpush2.msra.mxu0 0.0
    %4293 = vmatprep.subr.mxu0 0.0
    %4294 = vmatpush2.msra.mxu0 0.0
    %4295 = vmatprep.subr.mxu0 0.0
    %4296 = vmatpush2.msra.mxu0 0.0
    %4297 = vmatprep.subr.mxu0 0.0
    %4298 = vmatpush2.msra.mxu0 0.0
    %4299 = vmatprep.subr.mxu0 0.0
    %4300 = vmatpush2.msra.mxu0 0.0
    %4301 = vmatprep.subr.mxu0 0.0
    %4302 = vmatpush2.msra.mxu0 0.0
    %4303 = vmatprep.subr.mxu0 0.0
    %4304 = vmatpush2.msra.mxu0 0.0
    %4305 = vmatprep.subr.mxu0 0.0
    %4306 = vmatpush2.msra.mxu0 0.0
    %4307 = vmatprep.subr.mxu0 0.0
    %4308 = vmatpush2.msra.mxu0 0.0
    %4309 = vmatprep.subr.mxu0 0.0
    %4310 = vmatpush2.msra.mxu0 0.0
    %4311 = vmatprep.subr.mxu0 0.0
    %4312 = vmatpush2.msra.mxu0 0.0
    %4313 = vmatprep.mubr.f32.mxu0 0.0
    %4314 = vmatmul.mubr.f32.gmra.mxu0 %v4247
    %v4315 = vpop.f32.mrf.mxu0
    %v4316 = vadd.f32 0.0, %v4315
    %v4317 = vpop.f32.mrf.mxu0
    %4318 = vdwg.mxu0
    %v4319 = vsel %vm370, %v4123, 0
    %4321 = vmatprep.subr.mxu0 0.0
    %4322 = vmatpush1.msra.mxu0 0.0
    %4323 = vmatprep.subr.mxu0 0.0
    %4324 = vmatpush1.msra.mxu0 0.0
    %4325 = vmatprep.subr.mxu0 0.0
    %4326 = vmatpush1.msra.mxu0 0.0
    %4327 = vmatprep.subr.mxu0 0.0
    %4328 = vmatpush1.msra.mxu0 0.0
    %4329 = vmatprep.subr.mxu0 0.0
    %4330 = vmatpush1.msra.mxu0 0.0
    %4331 = vmatprep.subr.mxu0 0.0
    %4332 = vmatpush1.msra.mxu0 0.0
    %4333 = vmatprep.subr.mxu0 0.0
    %4334 = vmatpush1.msra.mxu0 0.0
    %4335 = vmatprep.subr.mxu0 0.0
    %4336 = vmatpush1.msra.mxu0 0.0
    %4337 = vmatprep.subr.mxu0 0.0
    %4338 = vmatpush1.msra.mxu0 0.0
    %4339 = vmatprep.subr.mxu0 0.0
    %4340 = vmatpush1.msra.mxu0 0.0
    %4341 = vmatprep.subr.mxu0 0.0
    %4342 = vmatpush1.msra.mxu0 0.0
    %4343 = vmatprep.subr.mxu0 0.0
    %4344 = vmatpush1.msra.mxu0 0.0
    %4345 = vmatprep.subr.mxu0 0.0
    %4346 = vmatpush1.msra.mxu0 %v297
    %4347 = vmatprep.subr.mxu0 0.0
    %4348 = vmatpush1.msra.mxu0 %v296
    %4349 = vmatprep.subr.mxu0 0.0
    %4350 = vmatpush1.msra.mxu0 %v295
    %4351 = vmatprep.subr.mxu0 0.0
    %4352 = vmatpush1.msra.mxu0 %v294
    %4353 = vmatprep.subr.mxu0 0.0
    %4354 = vmatpush2.msra.mxu0 0.0
    %4355 = vmatprep.subr.mxu0 0.0
    %4356 = vmatpush2.msra.mxu0 0.0
    %4357 = vmatprep.subr.mxu0 0.0
    %4358 = vmatpush2.msra.mxu0 0.0
    %4359 = vmatprep.subr.mxu0 0.0
    %4360 = vmatpush2.msra.mxu0 0.0
    %4361 = vmatprep.subr.mxu0 0.0
    %4362 = vmatpush2.msra.mxu0 0.0
    %4363 = vmatprep.subr.mxu0 0.0
    %4364 = vmatpush2.msra.mxu0 0.0
    %4365 = vmatprep.subr.mxu0 0.0
    %4366 = vmatpush2.msra.mxu0 0.0
    %4367 = vmatprep.subr.mxu0 0.0
    %4368 = vmatpush2.msra.mxu0 0.0
    %4369 = vmatprep.subr.mxu0 0.0
    %4370 = vmatpush2.msra.mxu0 0.0
    %4371 = vmatprep.subr.mxu0 0.0
    %4372 = vmatpush2.msra.mxu0 0.0
    %4373 = vmatprep.subr.mxu0 0.0
    %4374 = vmatpush2.msra.mxu0 0.0
    %4375 = vmatprep.subr.mxu0 0.0
    %4376 = vmatpush2.msra.mxu0 0.0
    %4377 = vmatprep.subr.mxu0 0.0
    %4378 = vmatpush2.msra.mxu0 0.0
    %4379 = vmatprep.subr.mxu0 0.0
    %4380 = vmatpush2.msra.mxu0 0.0
    %4381 = vmatprep.subr.mxu0 0.0
    %4382 = vmatpush2.msra.mxu0 0.0
    %4383 = vmatprep.subr.mxu0 0.0
    %4384 = vmatpush2.msra.mxu0 0.0
    %4385 = vmatprep.mubr.f32.mxu0 0.0
    %4386 = vmatmul.mubr.f32.gmra.mxu0 %v4319
    %v4387 = vpop.f32.mrf.mxu0
    %v4388 = vadd.f32 %v4316, %v4387
    %v4389 = vpop.f32.mrf.mxu0
    %4390 = vdwg.mxu0
    %v4391 = vadd.f32 %v4388, %v356
    %v4394 = vunpack.c.l.s4 1966171168
    %v4395 = vunpack.c.0.s8 %v4394
    %v4396 = vlaneseq
    %v4397 = vshrl.u32 %v4396, 7
    %v4398 = vsub.s32 %v4395, %v4397
    %v4399 = vrot.slane %v4391, %v4398
    %v4400 = vcombine.high %v4399, %v4399
    %v4402 = vunpack.c.l.s4 1966171168
    %v4403 = vunpack.c.0.s8 %v4402
    %v4404 = vlaneseq
    %v4405 = vshrl.u32 %v4404, 7
    %v4406 = vsub.s32 %v4403, %v4405
    %v4407 = vrot.slane %v4399, %v4406
    %v4409 = vunpack.c.l.s4 1966171168
    %v4410 = vunpack.c.0.s8 %v4409
    %v4411 = vlaneseq
    %v4412 = vshrl.u32 %v4411, 7
    %v4413 = vsub.s32 %v4410, %v4412
    %v4414 = vrot.slane %v4400, %v4413
    %4417 = vst.msk [vmem:[%s24 + $0x2] sm:$0x1] %vm2792, %v4407
    %4418 = vst.msk [vmem:[%s24 + $0xa] sm:$0x1] %vm2792, %v4414
    %v4419 = vsel %vm542, %v4391, 0
    %4421 = vmatprep.subr.mxu0 0.0
    %4422 = vmatpush1.msra.mxu0 0.0
    %4423 = vmatprep.subr.mxu0 0.0
    %4424 = vmatpush1.msra.mxu0 0.0
    %4425 = vmatprep.subr.mxu0 0.0
    %4426 = vmatpush1.msra.mxu0 0.0
    %4427 = vmatprep.subr.mxu0 0.0
    %4428 = vmatpush1.msra.mxu0 0.0
    %4429 = vmatprep.subr.mxu0 0.0
    %4430 = vmatpush1.msra.mxu0 0.0
    %4431 = vmatprep.subr.mxu0 0.0
    %4432 = vmatpush1.msra.mxu0 0.0
    %4433 = vmatprep.subr.mxu0 0.0
    %4434 = vmatpush1.msra.mxu0 0.0
    %4435 = vmatprep.subr.mxu0 0.0
    %4436 = vmatpush1.msra.mxu0 0.0
    %4437 = vmatprep.subr.mxu0 0.0
    %4438 = vmatpush1.msra.mxu0 0.0
    %4439 = vmatprep.subr.mxu0 0.0
    %4440 = vmatpush1.msra.mxu0 0.0
    %4441 = vmatprep.subr.mxu0 0.0
    %4442 = vmatpush1.msra.mxu0 0.0
    %4443 = vmatprep.subr.mxu0 0.0
    %4444 = vmatpush1.msra.mxu0 0.0
    %4445 = vmatprep.subr.mxu0 0.0
    %4446 = vmatpush1.msra.mxu0 0.0
    %4447 = vmatprep.subr.mxu0 0.0
    %4448 = vmatpush1.msra.mxu0 0.0
    %4449 = vmatprep.subr.mxu0 0.0
    %4450 = vmatpush1.msra.mxu0 %v547
    %4451 = vmatprep.subr.mxu0 0.0
    %4452 = vmatpush1.msra.mxu0 %v274
    %4453 = vmatprep.subr.mxu0 0.0
    %4454 = vmatpush2.msra.mxu0 0.0
    %4455 = vmatprep.subr.mxu0 0.0
    %4456 = vmatpush2.msra.mxu0 0.0
    %4457 = vmatprep.subr.mxu0 0.0
    %4458 = vmatpush2.msra.mxu0 0.0
    %4459 = vmatprep.subr.mxu0 0.0
    %4460 = vmatpush2.msra.mxu0 0.0
    %4461 = vmatprep.subr.mxu0 0.0
    %4462 = vmatpush2.msra.mxu0 0.0
    %4463 = vmatprep.subr.mxu0 0.0
    %4464 = vmatpush2.msra.mxu0 0.0
    %4465 = vmatprep.subr.mxu0 0.0
    %4466 = vmatpush2.msra.mxu0 0.0
    %4467 = vmatprep.subr.mxu0 0.0
    %4468 = vmatpush2.msra.mxu0 0.0
    %4469 = vmatprep.subr.mxu0 0.0
    %4470 = vmatpush2.msra.mxu0 0.0
    %4471 = vmatprep.subr.mxu0 0.0
    %4472 = vmatpush2.msra.mxu0 0.0
    %4473 = vmatprep.subr.mxu0 0.0
    %4474 = vmatpush2.msra.mxu0 0.0
    %4475 = vmatprep.subr.mxu0 0.0
    %4476 = vmatpush2.msra.mxu0 0.0
    %4477 = vmatprep.subr.mxu0 0.0
    %4478 = vmatpush2.msra.mxu0 0.0
    %4479 = vmatprep.subr.mxu0 0.0
    %4480 = vmatpush2.msra.mxu0 0.0
    %4481 = vmatprep.subr.mxu0 0.0
    %4482 = vmatpush2.msra.mxu0 0.0
    %4483 = vmatprep.subr.mxu0 0.0
    %4484 = vmatpush2.msra.mxu0 0.0
    %4485 = vmatprep.mubr.f32.mxu0 0.0
    %4486 = vmatmul.mubr.f32.gmra.mxu0 %v4419
    %v4487 = vpop.f32.mrf.mxu0
    %v4488 = vadd.f32 %v307, %v4487
    %v4489 = vpop.f32.mrf.mxu0
    %4490 = vdwg.mxu0
    %v4491 = vmax.f32 %v4488, 0.0
    %v4493 = vsel %vm455, %v4491, 0
    %4495 = vmatprep.subr.mxu0 0.0
    %4496 = vmatpush1.msra.mxu0 0.0
    %4497 = vmatprep.subr.mxu0 0.0
    %4498 = vmatpush1.msra.mxu0 0.0
    %4499 = vmatprep.subr.mxu0 0.0
    %4500 = vmatpush1.msra.mxu0 0.0
    %4501 = vmatprep.subr.mxu0 0.0
    %4502 = vmatpush1.msra.mxu0 0.0
    %4503 = vmatprep.subr.mxu0 0.0
    %4504 = vmatpush1.msra.mxu0 0.0
    %4505 = vmatprep.subr.mxu0 0.0
    %4506 = vmatpush1.msra.mxu0 0.0
    %4507 = vmatprep.subr.mxu0 0.0
    %4508 = vmatpush1.msra.mxu0 0.0
    %4509 = vmatprep.subr.mxu0 0.0
    %4510 = vmatpush1.msra.mxu0 0.0
    %4511 = vmatprep.subr.mxu0 0.0
    %4512 = vmatpush1.msra.mxu0 0.0
    %4513 = vmatprep.subr.mxu0 0.0
    %4514 = vmatpush1.msra.mxu0 0.0
    %4515 = vmatprep.subr.mxu0 0.0
    %4516 = vmatpush1.msra.mxu0 0.0
    %4517 = vmatprep.subr.mxu0 0.0
    %4518 = vmatpush1.msra.mxu0 0.0
    %4519 = vmatprep.subr.mxu0 0.0
    %4520 = vmatpush1.msra.mxu0 0.0
    %4521 = vmatprep.subr.mxu0 0.0
    %4522 = vmatpush1.msra.mxu0 0.0
    %4523 = vmatprep.subr.mxu0 0.0
    %4524 = vmatpush1.msra.mxu0 %v277
    %4525 = vmatprep.subr.mxu0 0.0
    %4526 = vmatpush1.msra.mxu0 %v276
    %4527 = vmatprep.subr.mxu0 0.0
    %4528 = vmatpush2.msra.mxu0 0.0
    %4529 = vmatprep.subr.mxu0 0.0
    %4530 = vmatpush2.msra.mxu0 0.0
    %4531 = vmatprep.subr.mxu0 0.0
    %4532 = vmatpush2.msra.mxu0 0.0
    %4533 = vmatprep.subr.mxu0 0.0
    %4534 = vmatpush2.msra.mxu0 0.0
    %4535 = vmatprep.subr.mxu0 0.0
    %4536 = vmatpush2.msra.mxu0 0.0
    %4537 = vmatprep.subr.mxu0 0.0
    %4538 = vmatpush2.msra.mxu0 0.0
    %4539 = vmatprep.subr.mxu0 0.0
    %4540 = vmatpush2.msra.mxu0 0.0
    %4541 = vmatprep.subr.mxu0 0.0
    %4542 = vmatpush2.msra.mxu0 0.0
    %4543 = vmatprep.subr.mxu0 0.0
    %4544 = vmatpush2.msra.mxu0 0.0
    %4545 = vmatprep.subr.mxu0 0.0
    %4546 = vmatpush2.msra.mxu0 0.0
    %4547 = vmatprep.subr.mxu0 0.0
    %4548 = vmatpush2.msra.mxu0 0.0
    %4549 = vmatprep.subr.mxu0 0.0
    %4550 = vmatpush2.msra.mxu0 0.0
    %4551 = vmatprep.subr.mxu0 0.0
    %4552 = vmatpush2.msra.mxu0 0.0
    %4553 = vmatprep.subr.mxu0 0.0
    %4554 = vmatpush2.msra.mxu0 0.0
    %4555 = vmatprep.subr.mxu0 0.0
    %4556 = vmatpush2.msra.mxu0 0.0
    %4557 = vmatprep.subr.mxu0 0.0
    %4558 = vmatpush2.msra.mxu0 0.0
    %4559 = vmatprep.mubr.f32.mxu0 0.0
    %4560 = vmatmul.mubr.f32.gmra.mxu0 %v4493
    %v4561 = vpop.f32.mrf.mxu0
    %v4562 = vadd.f32 %v314, %v4561
    %v4563 = vpop.f32.mrf.mxu0
    %4564 = vdwg.mxu0
    %4565 = vmatprep.subr.mxu0 0.0
    %4566 = vmatpush1.msra.mxu0 0.0
    %4567 = vmatprep.subr.mxu0 0.0
    %4568 = vmatpush1.msra.mxu0 0.0
    %4569 = vmatprep.subr.mxu0 0.0
    %4570 = vmatpush1.msra.mxu0 0.0
    %4571 = vmatprep.subr.mxu0 0.0
    %4572 = vmatpush1.msra.mxu0 0.0
    %4573 = vmatprep.subr.mxu0 0.0
    %4574 = vmatpush1.msra.mxu0 0.0
    %4575 = vmatprep.subr.mxu0 0.0
    %4576 = vmatpush1.msra.mxu0 0.0
    %4577 = vmatprep.subr.mxu0 0.0
    %4578 = vmatpush1.msra.mxu0 0.0
    %4579 = vmatprep.subr.mxu0 0.0
    %4580 = vmatpush1.msra.mxu0 0.0
    %4581 = vmatprep.subr.mxu0 0.0
    %4582 = vmatpush1.msra.mxu0 0.0
    %4583 = vmatprep.subr.mxu0 0.0
    %4584 = vmatpush1.msra.mxu0 0.0
    %4585 = vmatprep.subr.mxu0 0.0
    %4586 = vmatpush1.msra.mxu0 0.0
    %4587 = vmatprep.subr.mxu0 0.0
    %4588 = vmatpush1.msra.mxu0 0.0
    %4589 = vmatprep.subr.mxu0 0.0
    %4590 = vmatpush1.msra.mxu0 0.0
    %4591 = vmatprep.subr.mxu0 0.0
    %4592 = vmatpush1.msra.mxu0 0.0
    %4593 = vmatprep.subr.mxu0 0.0
    %4594 = vmatpush1.msra.mxu0 %v279
    %4595 = vmatprep.subr.mxu0 0.0
    %4596 = vmatpush1.msra.mxu0 %v278
    %4597 = vmatprep.subr.mxu0 0.0
    %4598 = vmatpush2.msra.mxu0 0.0
    %4599 = vmatprep.subr.mxu0 0.0
    %4600 = vmatpush2.msra.mxu0 0.0
    %4601 = vmatprep.subr.mxu0 0.0
    %4602 = vmatpush2.msra.mxu0 0.0
    %4603 = vmatprep.subr.mxu0 0.0
    %4604 = vmatpush2.msra.mxu0 0.0
    %4605 = vmatprep.subr.mxu0 0.0
    %4606 = vmatpush2.msra.mxu0 0.0
    %4607 = vmatprep.subr.mxu0 0.0
    %4608 = vmatpush2.msra.mxu0 0.0
    %4609 = vmatprep.subr.mxu0 0.0
    %4610 = vmatpush2.msra.mxu0 0.0
    %4611 = vmatprep.subr.mxu0 0.0
    %4612 = vmatpush2.msra.mxu0 0.0
    %4613 = vmatprep.subr.mxu0 0.0
    %4614 = vmatpush2.msra.mxu0 0.0
    %4615 = vmatprep.subr.mxu0 0.0
    %4616 = vmatpush2.msra.mxu0 0.0
    %4617 = vmatprep.subr.mxu0 0.0
    %4618 = vmatpush2.msra.mxu0 0.0
    %4619 = vmatprep.subr.mxu0 0.0
    %4620 = vmatpush2.msra.mxu0 0.0
    %4621 = vmatprep.subr.mxu0 0.0
    %4622 = vmatpush2.msra.mxu0 0.0
    %4623 = vmatprep.subr.mxu0 0.0
    %4624 = vmatpush2.msra.mxu0 0.0
    %4625 = vmatprep.subr.mxu0 0.0
    %4626 = vmatpush2.msra.mxu0 0.0
    %4627 = vmatprep.subr.mxu0 0.0
    %4628 = vmatpush2.msra.mxu0 0.0
    %4629 = vmatprep.mubr.f32.mxu0 0.0
    %4630 = vmatmul.mubr.f32.gmra.mxu0 %v4493
    %v4631 = vpop.f32.mrf.mxu0
    %v4632 = vadd.f32 %v321, %v4631
    %v4633 = vpop.f32.mrf.mxu0
    %4634 = vdwg.mxu0
    %4635 = vmatprep.subr.mxu0 0.0
    %4636 = vmatpush1.msra.mxu0 0.0
    %4637 = vmatprep.subr.mxu0 0.0
    %4638 = vmatpush1.msra.mxu0 0.0
    %4639 = vmatprep.subr.mxu0 0.0
    %4640 = vmatpush1.msra.mxu0 0.0
    %4641 = vmatprep.subr.mxu0 0.0
    %4642 = vmatpush1.msra.mxu0 0.0
    %4643 = vmatprep.subr.mxu0 0.0
    %4644 = vmatpush1.msra.mxu0 0.0
    %4645 = vmatprep.subr.mxu0 0.0
    %4646 = vmatpush1.msra.mxu0 0.0
    %4647 = vmatprep.subr.mxu0 0.0
    %4648 = vmatpush1.msra.mxu0 0.0
    %4649 = vmatprep.subr.mxu0 0.0
    %4650 = vmatpush1.msra.mxu0 0.0
    %4651 = vmatprep.subr.mxu0 0.0
    %4652 = vmatpush1.msra.mxu0 0.0
    %4653 = vmatprep.subr.mxu0 0.0
    %4654 = vmatpush1.msra.mxu0 0.0
    %4655 = vmatprep.subr.mxu0 0.0
    %4656 = vmatpush1.msra.mxu0 0.0
    %4657 = vmatprep.subr.mxu0 0.0
    %4658 = vmatpush1.msra.mxu0 0.0
    %4659 = vmatprep.subr.mxu0 0.0
    %4660 = vmatpush1.msra.mxu0 0.0
    %4661 = vmatprep.subr.mxu0 0.0
    %4662 = vmatpush1.msra.mxu0 0.0
    %4663 = vmatprep.subr.mxu0 0.0
    %4664 = vmatpush1.msra.mxu0 %v281
    %4665 = vmatprep.subr.mxu0 0.0
    %4666 = vmatpush1.msra.mxu0 %v280
    %4667 = vmatprep.subr.mxu0 0.0
    %4668 = vmatpush2.msra.mxu0 0.0
    %4669 = vmatprep.subr.mxu0 0.0
    %4670 = vmatpush2.msra.mxu0 0.0
    %4671 = vmatprep.subr.mxu0 0.0
    %4672 = vmatpush2.msra.mxu0 0.0
    %4673 = vmatprep.subr.mxu0 0.0
    %4674 = vmatpush2.msra.mxu0 0.0
    %4675 = vmatprep.subr.mxu0 0.0
    %4676 = vmatpush2.msra.mxu0 0.0
    %4677 = vmatprep.subr.mxu0 0.0
    %4678 = vmatpush2.msra.mxu0 0.0
    %4679 = vmatprep.subr.mxu0 0.0
    %4680 = vmatpush2.msra.mxu0 0.0
    %4681 = vmatprep.subr.mxu0 0.0
    %4682 = vmatpush2.msra.mxu0 0.0
    %4683 = vmatprep.subr.mxu0 0.0
    %4684 = vmatpush2.msra.mxu0 0.0
    %4685 = vmatprep.subr.mxu0 0.0
    %4686 = vmatpush2.msra.mxu0 0.0
    %4687 = vmatprep.subr.mxu0 0.0
    %4688 = vmatpush2.msra.mxu0 0.0
    %4689 = vmatprep.subr.mxu0 0.0
    %4690 = vmatpush2.msra.mxu0 0.0
    %4691 = vmatprep.subr.mxu0 0.0
    %4692 = vmatpush2.msra.mxu0 0.0
    %4693 = vmatprep.subr.mxu0 0.0
    %4694 = vmatpush2.msra.mxu0 0.0
    %4695 = vmatprep.subr.mxu0 0.0
    %4696 = vmatpush2.msra.mxu0 0.0
    %4697 = vmatprep.subr.mxu0 0.0
    %4698 = vmatpush2.msra.mxu0 0.0
    %4699 = vmatprep.mubr.f32.mxu0 0.0
    %4700 = vmatmul.mubr.f32.gmra.mxu0 %v4493
    %v4701 = vpop.f32.mrf.mxu0
    %v4702 = vadd.f32 %v328, %v4701
    %v4703 = vpop.f32.mrf.mxu0
    %4704 = vdwg.mxu0
    %4705 = vmatprep.subr.mxu0 0.0
    %4706 = vmatpush1.msra.mxu0 0.0
    %4707 = vmatprep.subr.mxu0 0.0
    %4708 = vmatpush1.msra.mxu0 0.0
    %4709 = vmatprep.subr.mxu0 0.0
    %4710 = vmatpush1.msra.mxu0 0.0
    %4711 = vmatprep.subr.mxu0 0.0
    %4712 = vmatpush1.msra.mxu0 0.0
    %4713 = vmatprep.subr.mxu0 0.0
    %4714 = vmatpush1.msra.mxu0 0.0
    %4715 = vmatprep.subr.mxu0 0.0
    %4716 = vmatpush1.msra.mxu0 0.0
    %4717 = vmatprep.subr.mxu0 0.0
    %4718 = vmatpush1.msra.mxu0 0.0
    %4719 = vmatprep.subr.mxu0 0.0
    %4720 = vmatpush1.msra.mxu0 0.0
    %4721 = vmatprep.subr.mxu0 0.0
    %4722 = vmatpush1.msra.mxu0 0.0
    %4723 = vmatprep.subr.mxu0 0.0
    %4724 = vmatpush1.msra.mxu0 0.0
    %4725 = vmatprep.subr.mxu0 0.0
    %4726 = vmatpush1.msra.mxu0 0.0
    %4727 = vmatprep.subr.mxu0 0.0
    %4728 = vmatpush1.msra.mxu0 0.0
    %4729 = vmatprep.subr.mxu0 0.0
    %4730 = vmatpush1.msra.mxu0 %v285
    %4731 = vmatprep.subr.mxu0 0.0
    %4732 = vmatpush1.msra.mxu0 %v284
    %4733 = vmatprep.subr.mxu0 0.0
    %4734 = vmatpush1.msra.mxu0 %v283
    %4735 = vmatprep.subr.mxu0 0.0
    %4736 = vmatpush1.msra.mxu0 %v282
    %4737 = vmatprep.subr.mxu0 0.0
    %4738 = vmatpush2.msra.mxu0 0.0
    %4739 = vmatprep.subr.mxu0 0.0
    %4740 = vmatpush2.msra.mxu0 0.0
    %4741 = vmatprep.subr.mxu0 0.0
    %4742 = vmatpush2.msra.mxu0 0.0
    %4743 = vmatprep.subr.mxu0 0.0
    %4744 = vmatpush2.msra.mxu0 0.0
    %4745 = vmatprep.subr.mxu0 0.0
    %4746 = vmatpush2.msra.mxu0 0.0
    %4747 = vmatprep.subr.mxu0 0.0
    %4748 = vmatpush2.msra.mxu0 0.0
    %4749 = vmatprep.subr.mxu0 0.0
    %4750 = vmatpush2.msra.mxu0 0.0
    %4751 = vmatprep.subr.mxu0 0.0
    %4752 = vmatpush2.msra.mxu0 0.0
    %4753 = vmatprep.subr.mxu0 0.0
    %4754 = vmatpush2.msra.mxu0 0.0
    %4755 = vmatprep.subr.mxu0 0.0
    %4756 = vmatpush2.msra.mxu0 0.0
    %4757 = vmatprep.subr.mxu0 0.0
    %4758 = vmatpush2.msra.mxu0 0.0
    %4759 = vmatprep.subr.mxu0 0.0
    %4760 = vmatpush2.msra.mxu0 0.0
    %4761 = vmatprep.subr.mxu0 0.0
    %4762 = vmatpush2.msra.mxu0 0.0
    %4763 = vmatprep.subr.mxu0 0.0
    %4764 = vmatpush2.msra.mxu0 0.0
    %4765 = vmatprep.subr.mxu0 0.0
    %4766 = vmatpush2.msra.mxu0 0.0
    %4767 = vmatprep.subr.mxu0 0.0
    %4768 = vmatpush2.msra.mxu0 0.0
    %4769 = vmatprep.mubr.f32.mxu0 0.0
    %4770 = vmatmul.mubr.f32.gmra.mxu0 %v4319
    %v4771 = vpop.f32.mrf.mxu0
    %v4772 = vadd.f32 %v335, %v4771
    %v4773 = vpop.f32.mrf.mxu0
    %4774 = vdwg.mxu0
    %4775 = vmatprep.subr.mxu0 0.0
    %4776 = vmatpush1.msra.mxu0 0.0
    %4777 = vmatprep.subr.mxu0 0.0
    %4778 = vmatpush1.msra.mxu0 0.0
    %4779 = vmatprep.subr.mxu0 0.0
    %4780 = vmatpush1.msra.mxu0 0.0
    %4781 = vmatprep.subr.mxu0 0.0
    %4782 = vmatpush1.msra.mxu0 0.0
    %4783 = vmatprep.subr.mxu0 0.0
    %4784 = vmatpush1.msra.mxu0 0.0
    %4785 = vmatprep.subr.mxu0 0.0
    %4786 = vmatpush1.msra.mxu0 0.0
    %4787 = vmatprep.subr.mxu0 0.0
    %4788 = vmatpush1.msra.mxu0 0.0
    %4789 = vmatprep.subr.mxu0 0.0
    %4790 = vmatpush1.msra.mxu0 0.0
    %4791 = vmatprep.subr.mxu0 0.0
    %4792 = vmatpush1.msra.mxu0 0.0
    %4793 = vmatprep.subr.mxu0 0.0
    %4794 = vmatpush1.msra.mxu0 0.0
    %4795 = vmatprep.subr.mxu0 0.0
    %4796 = vmatpush1.msra.mxu0 0.0
    %4797 = vmatprep.subr.mxu0 0.0
    %4798 = vmatpush1.msra.mxu0 0.0
    %4799 = vmatprep.subr.mxu0 0.0
    %4800 = vmatpush1.msra.mxu0 %v289
    %4801 = vmatprep.subr.mxu0 0.0
    %4802 = vmatpush1.msra.mxu0 %v288
    %4803 = vmatprep.subr.mxu0 0.0
    %4804 = vmatpush1.msra.mxu0 %v287
    %4805 = vmatprep.subr.mxu0 0.0
    %4806 = vmatpush1.msra.mxu0 %v286
    %4807 = vmatprep.subr.mxu0 0.0
    %4808 = vmatpush2.msra.mxu0 0.0
    %4809 = vmatprep.subr.mxu0 0.0
    %4810 = vmatpush2.msra.mxu0 0.0
    %4811 = vmatprep.subr.mxu0 0.0
    %4812 = vmatpush2.msra.mxu0 0.0
    %4813 = vmatprep.subr.mxu0 0.0
    %4814 = vmatpush2.msra.mxu0 0.0
    %4815 = vmatprep.subr.mxu0 0.0
    %4816 = vmatpush2.msra.mxu0 0.0
    %4817 = vmatprep.subr.mxu0 0.0
    %4818 = vmatpush2.msra.mxu0 0.0
    %4819 = vmatprep.subr.mxu0 0.0
    %4820 = vmatpush2.msra.mxu0 0.0
    %4821 = vmatprep.subr.mxu0 0.0
    %4822 = vmatpush2.msra.mxu0 0.0
    %4823 = vmatprep.subr.mxu0 0.0
    %4824 = vmatpush2.msra.mxu0 0.0
    %4825 = vmatprep.subr.mxu0 0.0
    %4826 = vmatpush2.msra.mxu0 0.0
    %4827 = vmatprep.subr.mxu0 0.0
    %4828 = vmatpush2.msra.mxu0 0.0
    %4829 = vmatprep.subr.mxu0 0.0
    %4830 = vmatpush2.msra.mxu0 0.0
    %4831 = vmatprep.subr.mxu0 0.0
    %4832 = vmatpush2.msra.mxu0 0.0
    %4833 = vmatprep.subr.mxu0 0.0
    %4834 = vmatpush2.msra.mxu0 0.0
    %4835 = vmatprep.subr.mxu0 0.0
    %4836 = vmatpush2.msra.mxu0 0.0
    %4837 = vmatprep.subr.mxu0 0.0
    %4838 = vmatpush2.msra.mxu0 0.0
    %4839 = vmatprep.mubr.f32.mxu0 0.0
    %4840 = vmatmul.mubr.f32.gmra.mxu0 %v4319
    %v4841 = vpop.f32.mrf.mxu0
    %v4842 = vadd.f32 %v342, %v4841
    %v4843 = vpop.f32.mrf.mxu0
    %4844 = vdwg.mxu0
    %4845 = vmatprep.subr.mxu0 0.0
    %4846 = vmatpush1.msra.mxu0 0.0
    %4847 = vmatprep.subr.mxu0 0.0
    %4848 = vmatpush1.msra.mxu0 0.0
    %4849 = vmatprep.subr.mxu0 0.0
    %4850 = vmatpush1.msra.mxu0 0.0
    %4851 = vmatprep.subr.mxu0 0.0
    %4852 = vmatpush1.msra.mxu0 0.0
    %4853 = vmatprep.subr.mxu0 0.0
    %4854 = vmatpush1.msra.mxu0 0.0
    %4855 = vmatprep.subr.mxu0 0.0
    %4856 = vmatpush1.msra.mxu0 0.0
    %4857 = vmatprep.subr.mxu0 0.0
    %4858 = vmatpush1.msra.mxu0 0.0
    %4859 = vmatprep.subr.mxu0 0.0
    %4860 = vmatpush1.msra.mxu0 0.0
    %4861 = vmatprep.subr.mxu0 0.0
    %4862 = vmatpush1.msra.mxu0 0.0
    %4863 = vmatprep.subr.mxu0 0.0
    %4864 = vmatpush1.msra.mxu0 0.0
    %4865 = vmatprep.subr.mxu0 0.0
    %4866 = vmatpush1.msra.mxu0 0.0
    %4867 = vmatprep.subr.mxu0 0.0
    %4868 = vmatpush1.msra.mxu0 0.0
    %4869 = vmatprep.subr.mxu0 0.0
    %4870 = vmatpush1.msra.mxu0 %v293
    %4871 = vmatprep.subr.mxu0 0.0
    %4872 = vmatpush1.msra.mxu0 %v292
    %4873 = vmatprep.subr.mxu0 0.0
    %4874 = vmatpush1.msra.mxu0 %v291
    %4875 = vmatprep.subr.mxu0 0.0
    %4876 = vmatpush1.msra.mxu0 %v290
    %4877 = vmatprep.subr.mxu0 0.0
    %4878 = vmatpush2.msra.mxu0 0.0
    %4879 = vmatprep.subr.mxu0 0.0
    %4880 = vmatpush2.msra.mxu0 0.0
    %4881 = vmatprep.subr.mxu0 0.0
    %4882 = vmatpush2.msra.mxu0 0.0
    %4883 = vmatprep.subr.mxu0 0.0
    %4884 = vmatpush2.msra.mxu0 0.0
    %4885 = vmatprep.subr.mxu0 0.0
    %4886 = vmatpush2.msra.mxu0 0.0
    %4887 = vmatprep.subr.mxu0 0.0
    %4888 = vmatpush2.msra.mxu0 0.0
    %4889 = vmatprep.subr.mxu0 0.0
    %4890 = vmatpush2.msra.mxu0 0.0
    %4891 = vmatprep.subr.mxu0 0.0
    %4892 = vmatpush2.msra.mxu0 0.0
    %4893 = vmatprep.subr.mxu0 0.0
    %4894 = vmatpush2.msra.mxu0 0.0
    %4895 = vmatprep.subr.mxu0 0.0
    %4896 = vmatpush2.msra.mxu0 0.0
    %4897 = vmatprep.subr.mxu0 0.0
    %4898 = vmatpush2.msra.mxu0 0.0
    %4899 = vmatprep.subr.mxu0 0.0
    %4900 = vmatpush2.msra.mxu0 0.0
    %4901 = vmatprep.subr.mxu0 0.0
    %4902 = vmatpush2.msra.mxu0 0.0
    %4903 = vmatprep.subr.mxu0 0.0
    %4904 = vmatpush2.msra.mxu0 0.0
    %4905 = vmatprep.subr.mxu0 0.0
    %4906 = vmatpush2.msra.mxu0 0.0
    %4907 = vmatprep.subr.mxu0 0.0
    %4908 = vmatpush2.msra.mxu0 0.0
    %4909 = vmatprep.mubr.f32.mxu0 0.0
    %4910 = vmatmul.mubr.f32.gmra.mxu0 %v4319
    %v4911 = vpop.f32.mrf.mxu0
    %v4912 = vadd.f32 %v349, %v4911
    %v4913 = vpop.f32.mrf.mxu0
    %4914 = vdwg.mxu0
    %v4915 = vadd.f32 %v4562, %v4772
    %v4916 = vxor.u32 %v4915, 2147483648
    %v4917 = vmul.f32 %v4916, 1.442695
    %v4918 = vpow.pop %v4917
    %v4919 = vadd.f32 %v4918, 1.0
    %v4920 = vrcp.pop %v4919
    %v4921 = vmul.f32 1.0, %v4920
    %v4922 = vadd.f32 %v4632, %v4842
    %v4923 = vxor.u32 %v4922, 2147483648
    %v4924 = vmul.f32 %v4923, 1.442695
    %v4925 = vpow.pop %v4924
    %v4926 = vadd.f32 %v4925, 1.0
    %v4927 = vrcp.pop %v4926
    %v4928 = vmul.f32 1.0, %v4927
    %v4929 = vmul.f32 %v4921, %v4912
    %v4930 = vadd.f32 %v4702, %v4929
    %v4931 = vtanh.pop %v4930
    %v4932 = vsub.f32 1.0, %v4928
    %v4933 = vmul.f32 %v4932, %v4931
    %v4934 = vmul.f32 %v4928, %v4123
    %v4935 = vadd.f32 %v4933, %v4934
    %v4938 = vunpack.c.l.s4 1966171168
    %v4939 = vunpack.c.0.s8 %v4938
    %v4940 = vlaneseq
    %v4941 = vshrl.u32 %v4940, 7
    %v4942 = vsub.s32 %v4939, %v4941
    %v4943 = vrot.slane %v4935, %v4942
    %v4944 = vcombine.high %v4943, %v4943
    %v4946 = vunpack.c.l.s4 1966171168
    %v4947 = vunpack.c.0.s8 %v4946
    %v4948 = vlaneseq
    %v4949 = vshrl.u32 %v4948, 7
    %v4950 = vsub.s32 %v4947, %v4949
    %v4951 = vrot.slane %v4943, %v4950
    %v4953 = vunpack.c.l.s4 1966171168
    %v4954 = vunpack.c.0.s8 %v4953
    %v4955 = vlaneseq
    %v4956 = vshrl.u32 %v4955, 7
    %v4957 = vsub.s32 %v4954, %v4956
    %v4958 = vrot.slane %v4944, %v4957
    %v4959 = vlaneseq
    %v4960 = vshrl.u32 %v4959, 7
    %v4961 = vsub.s32 0, %v4960
    %v4962 = vrot.slane %v4951, %v4961
    %v4963 = vlaneseq
    %v4964 = vshrl.u32 %v4963, 7
    %v4965 = vsub.s32 0, %v4964
    %v4966 = vrot.slane %v4958, %v4965
    %v4969 = vmul.f32 %v529, %v4962
    %v4970 = vmul.f32 %v534, %v4966
    %v4971 = vsel %vm370, %v4969, 0.0
    %4972 = vadd.xlane.f32.xlu0 %v4971
    %v4973 = vpop.xlane.xlu0 %4972
    %v4974 = vsel %vm370, %v4970, 0.0
    %4975 = vadd.xlane.f32.xlu0 %v4974
    %v4976 = vpop.xlane.xlu0 %4975
    %v4979 = vlaneseq
    %v4980 = vshrl.u32 %v4979, 7
    %v4981 = vsub.s32 %v2540, %v4980
    %v4982 = vrot.slane %v4973, %v4981
    %v4983 = vlaneseq
    %v4984 = vshrl.u32 %v4983, 7
    %v4985 = vsub.s32 %v2540, %v4984
    %v4986 = vrot.slane %v4976, %v4985
    %v4987 = vsel %vm1122, %v4986, %v4982
    %v4989 = vsel %vm2551, %v4987, -inf
    %4990 = vmax.xlane.f32.xlu0 %v4989
    %v4991 = vpop.xlane.xlu0 %4990
    %v4993 = vlaneseq
    %v4994 = vshrl.u32 %v4993, 7
    %v4995 = vsub.s32 0, %v4994
    %v4996 = vrot.slane %v4991, %v4995
    %v4997 = vlaneseq
    %v4998 = vshrl.u32 %v4997, 7
    %v4999 = vsub.s32 1, %v4998
    %v5000 = vrot.slane %v4991, %v4999
    %v5003 = vsub.f32 %v4973, %v4996
    %v5004 = vsub.f32 %v4976, %v5000
    %v5005 = vmul.f32 %v5003, 1.442695
    %v5006 = vpow.pop %v5005
    %v5007 = vmul.f32 %v5004, 1.442695
    %v5008 = vpow.pop %v5007
    %5010 = vset.pattern.permute.xlu0 0
    %5011 = vperm.xlu0 %5010, %v5006
    %v5012 = vpop.permute.xlu0 %5011
    %5015 = vset.pattern.permute.xlu0 0
    %5016 = vperm.xlu0 %5015, %v5008
    %v5017 = vpop.permute.xlu0 %5016
    %v5019 = vmul.f32 %v529, %v5012
    %v5020 = vmul.f32 %v534, %v5017
    %v5021 = vsel %vm370, %v5019, 0.0
    %v5022 = vrot.slane %v5021, 4
    %v5023 = vadd.f32 %v5021, %v5022
    %v5024 = vrot.slane %v5023, 2
    %v5025 = vadd.f32 %v5023, %v5024
    %v5026 = vrot.slane %v5025, 1
    %v5027 = vadd.f32 %v5025, %v5026
    %v5028 = vsel %vm370, %v5020, 0.0
    %v5029 = vrot.slane %v5028, 4
    %v5030 = vadd.f32 %v5028, %v5029
    %v5031 = vrot.slane %v5030, 2
    %v5032 = vadd.f32 %v5030, %v5031
    %v5033 = vrot.slane %v5032, 1
    %v5034 = vadd.f32 %v5032, %v5033
    %v5035 = vlaneseq
    %v5036 = vshrl.u32 %v5035, 7
    %v5037 = vsub.s32 %v2540, %v5036
    %v5038 = vrot.slane %v5012, %v5037
    %v5039 = vlaneseq
    %v5040 = vshrl.u32 %v5039, 7
    %v5041 = vsub.s32 %v2540, %v5040
    %v5042 = vrot.slane %v5017, %v5041
    %v5043 = vsel %vm1122, %v5042, %v5038
    %v5045 = vsel %vm2551, %v5043, 0.0
    %5046 = vadd.xlane.f32.xlu0 %v5045
    %v5047 = vpop.xlane.xlu0 %5046
    %v5048 = vrcp.pop %v5047
    %v5050 = vrot.slane %v5048, 1
    %v5053 = vmul.f32 %v5027, %v5048
    %v5054 = vmul.f32 %v5034, %v5050
    %v5057 = vrot.slane %v5054, 7
    %v5058 = vsel %vm1122, %v5057, %v5053
    %v5059 = vsel %vm370, %v5058, 0
    %5061 = vmatprep.subr.mxu0 0.0
    %5062 = vmatpush1.msra.mxu0 0.0
    %5063 = vmatprep.subr.mxu0 0.0
    %5064 = vmatpush1.msra.mxu0 0.0
    %5065 = vmatprep.subr.mxu0 0.0
    %5066 = vmatpush1.msra.mxu0 0.0
    %5067 = vmatprep.subr.mxu0 0.0
    %5068 = vmatpush1.msra.mxu0 0.0
    %5069 = vmatprep.subr.mxu0 0.0
    %5070 = vmatpush1.msra.mxu0 0.0
    %5071 = vmatprep.subr.mxu0 0.0
    %5072 = vmatpush1.msra.mxu0 0.0
    %5073 = vmatprep.subr.mxu0 0.0
    %5074 = vmatpush1.msra.mxu0 0.0
    %5075 = vmatprep.subr.mxu0 0.0
    %5076 = vmatpush1.msra.mxu0 0.0
    %5077 = vmatprep.subr.mxu0 0.0
    %5078 = vmatpush1.msra.mxu0 0.0
    %5079 = vmatprep.subr.mxu0 0.0
    %5080 = vmatpush1.msra.mxu0 0.0
    %5081 = vmatprep.subr.mxu0 0.0
    %5082 = vmatpush1.msra.mxu0 0.0
    %5083 = vmatprep.subr.mxu0 0.0
    %5084 = vmatpush1.msra.mxu0 0.0
    %5085 = vmatprep.subr.mxu0 0.0
    %5086 = vmatpush1.msra.mxu0 %v301
    %5087 = vmatprep.subr.mxu0 0.0
    %5088 = vmatpush1.msra.mxu0 %v300
    %5089 = vmatprep.subr.mxu0 0.0
    %5090 = vmatpush1.msra.mxu0 %v299
    %5091 = vmatprep.subr.mxu0 0.0
    %5092 = vmatpush1.msra.mxu0 %v298
    %5093 = vmatprep.subr.mxu0 0.0
    %5094 = vmatpush2.msra.mxu0 0.0
    %5095 = vmatprep.subr.mxu0 0.0
    %5096 = vmatpush2.msra.mxu0 0.0
    %5097 = vmatprep.subr.mxu0 0.0
    %5098 = vmatpush2.msra.mxu0 0.0
    %5099 = vmatprep.subr.mxu0 0.0
    %5100 = vmatpush2.msra.mxu0 0.0
    %5101 = vmatprep.subr.mxu0 0.0
    %5102 = vmatpush2.msra.mxu0 0.0
    %5103 = vmatprep.subr.mxu0 0.0
    %5104 = vmatpush2.msra.mxu0 0.0
    %5105 = vmatprep.subr.mxu0 0.0
    %5106 = vmatpush2.msra.mxu0 0.0
    %5107 = vmatprep.subr.mxu0 0.0
    %5108 = vmatpush2.msra.mxu0 0.0
    %5109 = vmatprep.subr.mxu0 0.0
    %5110 = vmatpush2.msra.mxu0 0.0
    %5111 = vmatprep.subr.mxu0 0.0
    %5112 = vmatpush2.msra.mxu0 0.0
    %5113 = vmatprep.subr.mxu0 0.0
    %5114 = vmatpush2.msra.mxu0 0.0
    %5115 = vmatprep.subr.mxu0 0.0
    %5116 = vmatpush2.msra.mxu0 0.0
    %5117 = vmatprep.subr.mxu0 0.0
    %5118 = vmatpush2.msra.mxu0 0.0
    %5119 = vmatprep.subr.mxu0 0.0
    %5120 = vmatpush2.msra.mxu0 0.0
    %5121 = vmatprep.subr.mxu0 0.0
    %5122 = vmatpush2.msra.mxu0 0.0
    %5123 = vmatprep.subr.mxu0 0.0
    %5124 = vmatpush2.msra.mxu0 0.0
    %5125 = vmatprep.mubr.f32.mxu0 0.0
    %5126 = vmatmul.mubr.f32.gmra.mxu0 %v5059
    %v5127 = vpop.f32.mrf.mxu0
    %v5128 = vadd.f32 0.0, %v5127
    %v5129 = vpop.f32.mrf.mxu0
    %5130 = vdwg.mxu0
    %v5131 = vsel %vm370, %v4935, 0
    %5133 = vmatprep.subr.mxu0 0.0
    %5134 = vmatpush1.msra.mxu0 0.0
    %5135 = vmatprep.subr.mxu0 0.0
    %5136 = vmatpush1.msra.mxu0 0.0
    %5137 = vmatprep.subr.mxu0 0.0
    %5138 = vmatpush1.msra.mxu0 0.0
    %5139 = vmatprep.subr.mxu0 0.0
    %5140 = vmatpush1.msra.mxu0 0.0
    %5141 = vmatprep.subr.mxu0 0.0
    %5142 = vmatpush1.msra.mxu0 0.0
    %5143 = vmatprep.subr.mxu0 0.0
    %5144 = vmatpush1.msra.mxu0 0.0
    %5145 = vmatprep.subr.mxu0 0.0
    %5146 = vmatpush1.msra.mxu0 0.0
    %5147 = vmatprep.subr.mxu0 0.0
    %5148 = vmatpush1.msra.mxu0 0.0
    %5149 = vmatprep.subr.mxu0 0.0
    %5150 = vmatpush1.msra.mxu0 0.0
    %5151 = vmatprep.subr.mxu0 0.0
    %5152 = vmatpush1.msra.mxu0 0.0
    %5153 = vmatprep.subr.mxu0 0.0
    %5154 = vmatpush1.msra.mxu0 0.0
    %5155 = vmatprep.subr.mxu0 0.0
    %5156 = vmatpush1.msra.mxu0 0.0
    %5157 = vmatprep.subr.mxu0 0.0
    %5158 = vmatpush1.msra.mxu0 %v297
    %5159 = vmatprep.subr.mxu0 0.0
    %5160 = vmatpush1.msra.mxu0 %v296
    %5161 = vmatprep.subr.mxu0 0.0
    %5162 = vmatpush1.msra.mxu0 %v295
    %5163 = vmatprep.subr.mxu0 0.0
    %5164 = vmatpush1.msra.mxu0 %v294
    %5165 = vmatprep.subr.mxu0 0.0
    %5166 = vmatpush2.msra.mxu0 0.0
    %5167 = vmatprep.subr.mxu0 0.0
    %5168 = vmatpush2.msra.mxu0 0.0
    %5169 = vmatprep.subr.mxu0 0.0
    %5170 = vmatpush2.msra.mxu0 0.0
    %5171 = vmatprep.subr.mxu0 0.0
    %5172 = vmatpush2.msra.mxu0 0.0
    %5173 = vmatprep.subr.mxu0 0.0
    %5174 = vmatpush2.msra.mxu0 0.0
    %5175 = vmatprep.subr.mxu0 0.0
    %5176 = vmatpush2.msra.mxu0 0.0
    %5177 = vmatprep.subr.mxu0 0.0
    %5178 = vmatpush2.msra.mxu0 0.0
    %5179 = vmatprep.subr.mxu0 0.0
    %5180 = vmatpush2.msra.mxu0 0.0
    %5181 = vmatprep.subr.mxu0 0.0
    %5182 = vmatpush2.msra.mxu0 0.0
    %5183 = vmatprep.subr.mxu0 0.0
    %5184 = vmatpush2.msra.mxu0 0.0
    %5185 = vmatprep.subr.mxu0 0.0
    %5186 = vmatpush2.msra.mxu0 0.0
    %5187 = vmatprep.subr.mxu0 0.0
    %5188 = vmatpush2.msra.mxu0 0.0
    %5189 = vmatprep.subr.mxu0 0.0
    %5190 = vmatpush2.msra.mxu0 0.0
    %5191 = vmatprep.subr.mxu0 0.0
    %5192 = vmatpush2.msra.mxu0 0.0
    %5193 = vmatprep.subr.mxu0 0.0
    %5194 = vmatpush2.msra.mxu0 0.0
    %5195 = vmatprep.subr.mxu0 0.0
    %5196 = vmatpush2.msra.mxu0 0.0
    %5197 = vmatprep.mubr.f32.mxu0 0.0
    %5198 = vmatmul.mubr.f32.gmra.mxu0 %v5131
    %v5199 = vpop.f32.mrf.mxu0
    %v5200 = vadd.f32 %v5128, %v5199
    %v5201 = vpop.f32.mrf.mxu0
    %5202 = vdwg.mxu0
    %v5203 = vadd.f32 %v5200, %v356
    %v5206 = vunpack.c.l.s4 1966171168
    %v5207 = vunpack.c.0.s8 %v5206
    %v5208 = vlaneseq
    %v5209 = vshrl.u32 %v5208, 7
    %v5210 = vsub.s32 %v5207, %v5209
    %v5211 = vrot.slane %v5203, %v5210
    %v5212 = vcombine.high %v5211, %v5211
    %v5214 = vunpack.c.l.s4 1966171168
    %v5215 = vunpack.c.0.s8 %v5214
    %v5216 = vlaneseq
    %v5217 = vshrl.u32 %v5216, 7
    %v5218 = vsub.s32 %v5215, %v5217
    %v5219 = vrot.slane %v5211, %v5218
    %v5221 = vunpack.c.l.s4 1966171168
    %v5222 = vunpack.c.0.s8 %v5221
    %v5223 = vlaneseq
    %v5224 = vshrl.u32 %v5223, 7
    %v5225 = vsub.s32 %v5222, %v5224
    %v5226 = vrot.slane %v5212, %v5225
    %5229 = vst.msk [vmem:[%s24 + $0x3] sm:$0x1] %vm2792, %v5219
    %5230 = vst.msk [vmem:[%s24 + $0xb] sm:$0x1] %vm2792, %v5226
    %v5231 = vsel %vm542, %v5203, 0
    %5233 = vmatprep.subr.mxu0 0.0
    %5234 = vmatpush1.msra.mxu0 0.0
    %5235 = vmatprep.subr.mxu0 0.0
    %5236 = vmatpush1.msra.mxu0 0.0
    %5237 = vmatprep.subr.mxu0 0.0
    %5238 = vmatpush1.msra.mxu0 0.0
    %5239 = vmatprep.subr.mxu0 0.0
    %5240 = vmatpush1.msra.mxu0 0.0
    %5241 = vmatprep.subr.mxu0 0.0
    %5242 = vmatpush1.msra.mxu0 0.0
    %5243 = vmatprep.subr.mxu0 0.0
    %5244 = vmatpush1.msra.mxu0 0.0
    %5245 = vmatprep.subr.mxu0 0.0
    %5246 = vmatpush1.msra.mxu0 0.0
    %5247 = vmatprep.subr.mxu0 0.0
    %5248 = vmatpush1.msra.mxu0 0.0
    %5249 = vmatprep.subr.mxu0 0.0
    %5250 = vmatpush1.msra.mxu0 0.0
    %5251 = vmatprep.subr.mxu0 0.0
    %5252 = vmatpush1.msra.mxu0 0.0
    %5253 = vmatprep.subr.mxu0 0.0
    %5254 = vmatpush1.msra.mxu0 0.0
    %5255 = vmatprep.subr.mxu0 0.0
    %5256 = vmatpush1.msra.mxu0 0.0
    %5257 = vmatprep.subr.mxu0 0.0
    %5258 = vmatpush1.msra.mxu0 0.0
    %5259 = vmatprep.subr.mxu0 0.0
    %5260 = vmatpush1.msra.mxu0 0.0
    %5261 = vmatprep.subr.mxu0 0.0
    %5262 = vmatpush1.msra.mxu0 %v547
    %5263 = vmatprep.subr.mxu0 0.0
    %5264 = vmatpush1.msra.mxu0 %v274
    %5265 = vmatprep.subr.mxu0 0.0
    %5266 = vmatpush2.msra.mxu0 0.0
    %5267 = vmatprep.subr.mxu0 0.0
    %5268 = vmatpush2.msra.mxu0 0.0
    %5269 = vmatprep.subr.mxu0 0.0
    %5270 = vmatpush2.msra.mxu0 0.0
    %5271 = vmatprep.subr.mxu0 0.0
    %5272 = vmatpush2.msra.mxu0 0.0
    %5273 = vmatprep.subr.mxu0 0.0
    %5274 = vmatpush2.msra.mxu0 0.0
    %5275 = vmatprep.subr.mxu0 0.0
    %5276 = vmatpush2.msra.mxu0 0.0
    %5277 = vmatprep.subr.mxu0 0.0
    %5278 = vmatpush2.msra.mxu0 0.0
    %5279 = vmatprep.subr.mxu0 0.0
    %5280 = vmatpush2.msra.mxu0 0.0
    %5281 = vmatprep.subr.mxu0 0.0
    %5282 = vmatpush2.msra.mxu0 0.0
    %5283 = vmatprep.subr.mxu0 0.0
    %5284 = vmatpush2.msra.mxu0 0.0
    %5285 = vmatprep.subr.mxu0 0.0
    %5286 = vmatpush2.msra.mxu0 0.0
    %5287 = vmatprep.subr.mxu0 0.0
    %5288 = vmatpush2.msra.mxu0 0.0
    %5289 = vmatprep.subr.mxu0 0.0
    %5290 = vmatpush2.msra.mxu0 0.0
    %5291 = vmatprep.subr.mxu0 0.0
    %5292 = vmatpush2.msra.mxu0 0.0
    %5293 = vmatprep.subr.mxu0 0.0
    %5294 = vmatpush2.msra.mxu0 0.0
    %5295 = vmatprep.subr.mxu0 0.0
    %5296 = vmatpush2.msra.mxu0 0.0
    %5297 = vmatprep.mubr.f32.mxu0 0.0
    %5298 = vmatmul.mubr.f32.gmra.mxu0 %v5231
    %v5299 = vpop.f32.mrf.mxu0
    %v5300 = vadd.f32 %v307, %v5299
    %v5301 = vpop.f32.mrf.mxu0
    %5302 = vdwg.mxu0
    %v5303 = vmax.f32 %v5300, 0.0
    %v5305 = vsel %vm455, %v5303, 0
    %5307 = vmatprep.subr.mxu0 0.0
    %5308 = vmatpush1.msra.mxu0 0.0
    %5309 = vmatprep.subr.mxu0 0.0
    %5310 = vmatpush1.msra.mxu0 0.0
    %5311 = vmatprep.subr.mxu0 0.0
    %5312 = vmatpush1.msra.mxu0 0.0
    %5313 = vmatprep.subr.mxu0 0.0
    %5314 = vmatpush1.msra.mxu0 0.0
    %5315 = vmatprep.subr.mxu0 0.0
    %5316 = vmatpush1.msra.mxu0 0.0
    %5317 = vmatprep.subr.mxu0 0.0
    %5318 = vmatpush1.msra.mxu0 0.0
    %5319 = vmatprep.subr.mxu0 0.0
    %5320 = vmatpush1.msra.mxu0 0.0
    %5321 = vmatprep.subr.mxu0 0.0
    %5322 = vmatpush1.msra.mxu0 0.0
    %5323 = vmatprep.subr.mxu0 0.0
    %5324 = vmatpush1.msra.mxu0 0.0
    %5325 = vmatprep.subr.mxu0 0.0
    %5326 = vmatpush1.msra.mxu0 0.0
    %5327 = vmatprep.subr.mxu0 0.0
    %5328 = vmatpush1.msra.mxu0 0.0
    %5329 = vmatprep.subr.mxu0 0.0
    %5330 = vmatpush1.msra.mxu0 0.0
    %5331 = vmatprep.subr.mxu0 0.0
    %5332 = vmatpush1.msra.mxu0 0.0
    %5333 = vmatprep.subr.mxu0 0.0
    %5334 = vmatpush1.msra.mxu0 0.0
    %5335 = vmatprep.subr.mxu0 0.0
    %5336 = vmatpush1.msra.mxu0 %v277
    %5337 = vmatprep.subr.mxu0 0.0
    %5338 = vmatpush1.msra.mxu0 %v276
    %5339 = vmatprep.subr.mxu0 0.0
    %5340 = vmatpush2.msra.mxu0 0.0
    %5341 = vmatprep.subr.mxu0 0.0
    %5342 = vmatpush2.msra.mxu0 0.0
    %5343 = vmatprep.subr.mxu0 0.0
    %5344 = vmatpush2.msra.mxu0 0.0
    %5345 = vmatprep.subr.mxu0 0.0
    %5346 = vmatpush2.msra.mxu0 0.0
    %5347 = vmatprep.subr.mxu0 0.0
    %5348 = vmatpush2.msra.mxu0 0.0
    %5349 = vmatprep.subr.mxu0 0.0
    %5350 = vmatpush2.msra.mxu0 0.0
    %5351 = vmatprep.subr.mxu0 0.0
    %5352 = vmatpush2.msra.mxu0 0.0
    %5353 = vmatprep.subr.mxu0 0.0
    %5354 = vmatpush2.msra.mxu0 0.0
    %5355 = vmatprep.subr.mxu0 0.0
    %5356 = vmatpush2.msra.mxu0 0.0
    %5357 = vmatprep.subr.mxu0 0.0
    %5358 = vmatpush2.msra.mxu0 0.0
    %5359 = vmatprep.subr.mxu0 0.0
    %5360 = vmatpush2.msra.mxu0 0.0
    %5361 = vmatprep.subr.mxu0 0.0
    %5362 = vmatpush2.msra.mxu0 0.0
    %5363 = vmatprep.subr.mxu0 0.0
    %5364 = vmatpush2.msra.mxu0 0.0
    %5365 = vmatprep.subr.mxu0 0.0
    %5366 = vmatpush2.msra.mxu0 0.0
    %5367 = vmatprep.subr.mxu0 0.0
    %5368 = vmatpush2.msra.mxu0 0.0
    %5369 = vmatprep.subr.mxu0 0.0
    %5370 = vmatpush2.msra.mxu0 0.0
    %5371 = vmatprep.mubr.f32.mxu0 0.0
    %5372 = vmatmul.mubr.f32.gmra.mxu0 %v5305
    %v5373 = vpop.f32.mrf.mxu0
    %v5374 = vadd.f32 %v314, %v5373
    %v5375 = vpop.f32.mrf.mxu0
    %5376 = vdwg.mxu0
    %5377 = vmatprep.subr.mxu0 0.0
    %5378 = vmatpush1.msra.mxu0 0.0
    %5379 = vmatprep.subr.mxu0 0.0
    %5380 = vmatpush1.msra.mxu0 0.0
    %5381 = vmatprep.subr.mxu0 0.0
    %5382 = vmatpush1.msra.mxu0 0.0
    %5383 = vmatprep.subr.mxu0 0.0
    %5384 = vmatpush1.msra.mxu0 0.0
    %5385 = vmatprep.subr.mxu0 0.0
    %5386 = vmatpush1.msra.mxu0 0.0
    %5387 = vmatprep.subr.mxu0 0.0
    %5388 = vmatpush1.msra.mxu0 0.0
    %5389 = vmatprep.subr.mxu0 0.0
    %5390 = vmatpush1.msra.mxu0 0.0
    %5391 = vmatprep.subr.mxu0 0.0
    %5392 = vmatpush1.msra.mxu0 0.0
    %5393 = vmatprep.subr.mxu0 0.0
    %5394 = vmatpush1.msra.mxu0 0.0
    %5395 = vmatprep.subr.mxu0 0.0
    %5396 = vmatpush1.msra.mxu0 0.0
    %5397 = vmatprep.subr.mxu0 0.0
    %5398 = vmatpush1.msra.mxu0 0.0
    %5399 = vmatprep.subr.mxu0 0.0
    %5400 = vmatpush1.msra.mxu0 0.0
    %5401 = vmatprep.subr.mxu0 0.0
    %5402 = vmatpush1.msra.mxu0 0.0
    %5403 = vmatprep.subr.mxu0 0.0
    %5404 = vmatpush1.msra.mxu0 0.0
    %5405 = vmatprep.subr.mxu0 0.0
    %5406 = vmatpush1.msra.mxu0 %v279
    %5407 = vmatprep.subr.mxu0 0.0
    %5408 = vmatpush1.msra.mxu0 %v278
    %5409 = vmatprep.subr.mxu0 0.0
    %5410 = vmatpush2.msra.mxu0 0.0
    %5411 = vmatprep.subr.mxu0 0.0
    %5412 = vmatpush2.msra.mxu0 0.0
    %5413 = vmatprep.subr.mxu0 0.0
    %5414 = vmatpush2.msra.mxu0 0.0
    %5415 = vmatprep.subr.mxu0 0.0
    %5416 = vmatpush2.msra.mxu0 0.0
    %5417 = vmatprep.subr.mxu0 0.0
    %5418 = vmatpush2.msra.mxu0 0.0
    %5419 = vmatprep.subr.mxu0 0.0
    %5420 = vmatpush2.msra.mxu0 0.0
    %5421 = vmatprep.subr.mxu0 0.0
    %5422 = vmatpush2.msra.mxu0 0.0
    %5423 = vmatprep.subr.mxu0 0.0
    %5424 = vmatpush2.msra.mxu0 0.0
    %5425 = vmatprep.subr.mxu0 0.0
    %5426 = vmatpush2.msra.mxu0 0.0
    %5427 = vmatprep.subr.mxu0 0.0
    %5428 = vmatpush2.msra.mxu0 0.0
    %5429 = vmatprep.subr.mxu0 0.0
    %5430 = vmatpush2.msra.mxu0 0.0
    %5431 = vmatprep.subr.mxu0 0.0
    %5432 = vmatpush2.msra.mxu0 0.0
    %5433 = vmatprep.subr.mxu0 0.0
    %5434 = vmatpush2.msra.mxu0 0.0
    %5435 = vmatprep.subr.mxu0 0.0
    %5436 = vmatpush2.msra.mxu0 0.0
    %5437 = vmatprep.subr.mxu0 0.0
    %5438 = vmatpush2.msra.mxu0 0.0
    %5439 = vmatprep.subr.mxu0 0.0
    %5440 = vmatpush2.msra.mxu0 0.0
    %5441 = vmatprep.mubr.f32.mxu0 0.0
    %5442 = vmatmul.mubr.f32.gmra.mxu0 %v5305
    %v5443 = vpop.f32.mrf.mxu0
    %v5444 = vadd.f32 %v321, %v5443
    %v5445 = vpop.f32.mrf.mxu0
    %5446 = vdwg.mxu0
    %5447 = vmatprep.subr.mxu0 0.0
    %5448 = vmatpush1.msra.mxu0 0.0
    %5449 = vmatprep.subr.mxu0 0.0
    %5450 = vmatpush1.msra.mxu0 0.0
    %5451 = vmatprep.subr.mxu0 0.0
    %5452 = vmatpush1.msra.mxu0 0.0
    %5453 = vmatprep.subr.mxu0 0.0
    %5454 = vmatpush1.msra.mxu0 0.0
    %5455 = vmatprep.subr.mxu0 0.0
    %5456 = vmatpush1.msra.mxu0 0.0
    %5457 = vmatprep.subr.mxu0 0.0
    %5458 = vmatpush1.msra.mxu0 0.0
    %5459 = vmatprep.subr.mxu0 0.0
    %5460 = vmatpush1.msra.mxu0 0.0
    %5461 = vmatprep.subr.mxu0 0.0
    %5462 = vmatpush1.msra.mxu0 0.0
    %5463 = vmatprep.subr.mxu0 0.0
    %5464 = vmatpush1.msra.mxu0 0.0
    %5465 = vmatprep.subr.mxu0 0.0
    %5466 = vmatpush1.msra.mxu0 0.0
    %5467 = vmatprep.subr.mxu0 0.0
    %5468 = vmatpush1.msra.mxu0 0.0
    %5469 = vmatprep.subr.mxu0 0.0
    %5470 = vmatpush1.msra.mxu0 0.0
    %5471 = vmatprep.subr.mxu0 0.0
    %5472 = vmatpush1.msra.mxu0 0.0
    %5473 = vmatprep.subr.mxu0 0.0
    %5474 = vmatpush1.msra.mxu0 0.0
    %5475 = vmatprep.subr.mxu0 0.0
    %5476 = vmatpush1.msra.mxu0 %v281
    %5477 = vmatprep.subr.mxu0 0.0
    %5478 = vmatpush1.msra.mxu0 %v280
    %5479 = vmatprep.subr.mxu0 0.0
    %5480 = vmatpush2.msra.mxu0 0.0
    %5481 = vmatprep.subr.mxu0 0.0
    %5482 = vmatpush2.msra.mxu0 0.0
    %5483 = vmatprep.subr.mxu0 0.0
    %5484 = vmatpush2.msra.mxu0 0.0
    %5485 = vmatprep.subr.mxu0 0.0
    %5486 = vmatpush2.msra.mxu0 0.0
    %5487 = vmatprep.subr.mxu0 0.0
    %5488 = vmatpush2.msra.mxu0 0.0
    %5489 = vmatprep.subr.mxu0 0.0
    %5490 = vmatpush2.msra.mxu0 0.0
    %5491 = vmatprep.subr.mxu0 0.0
    %5492 = vmatpush2.msra.mxu0 0.0
    %5493 = vmatprep.subr.mxu0 0.0
    %5494 = vmatpush2.msra.mxu0 0.0
    %5495 = vmatprep.subr.mxu0 0.0
    %5496 = vmatpush2.msra.mxu0 0.0
    %5497 = vmatprep.subr.mxu0 0.0
    %5498 = vmatpush2.msra.mxu0 0.0
    %5499 = vmatprep.subr.mxu0 0.0
    %5500 = vmatpush2.msra.mxu0 0.0
    %5501 = vmatprep.subr.mxu0 0.0
    %5502 = vmatpush2.msra.mxu0 0.0
    %5503 = vmatprep.subr.mxu0 0.0
    %5504 = vmatpush2.msra.mxu0 0.0
    %5505 = vmatprep.subr.mxu0 0.0
    %5506 = vmatpush2.msra.mxu0 0.0
    %5507 = vmatprep.subr.mxu0 0.0
    %5508 = vmatpush2.msra.mxu0 0.0
    %5509 = vmatprep.subr.mxu0 0.0
    %5510 = vmatpush2.msra.mxu0 0.0
    %5511 = vmatprep.mubr.f32.mxu0 0.0
    %5512 = vmatmul.mubr.f32.gmra.mxu0 %v5305
    %v5513 = vpop.f32.mrf.mxu0
    %v5514 = vadd.f32 %v328, %v5513
    %v5515 = vpop.f32.mrf.mxu0
    %5516 = vdwg.mxu0
    %5517 = vmatprep.subr.mxu0 0.0
    %5518 = vmatpush1.msra.mxu0 0.0
    %5519 = vmatprep.subr.mxu0 0.0
    %5520 = vmatpush1.msra.mxu0 0.0
    %5521 = vmatprep.subr.mxu0 0.0
    %5522 = vmatpush1.msra.mxu0 0.0
    %5523 = vmatprep.subr.mxu0 0.0
    %5524 = vmatpush1.msra.mxu0 0.0
    %5525 = vmatprep.subr.mxu0 0.0
    %5526 = vmatpush1.msra.mxu0 0.0
    %5527 = vmatprep.subr.mxu0 0.0
    %5528 = vmatpush1.msra.mxu0 0.0
    %5529 = vmatprep.subr.mxu0 0.0
    %5530 = vmatpush1.msra.mxu0 0.0
    %5531 = vmatprep.subr.mxu0 0.0
    %5532 = vmatpush1.msra.mxu0 0.0
    %5533 = vmatprep.subr.mxu0 0.0
    %5534 = vmatpush1.msra.mxu0 0.0
    %5535 = vmatprep.subr.mxu0 0.0
    %5536 = vmatpush1.msra.mxu0 0.0
    %5537 = vmatprep.subr.mxu0 0.0
    %5538 = vmatpush1.msra.mxu0 0.0
    %5539 = vmatprep.subr.mxu0 0.0
    %5540 = vmatpush1.msra.mxu0 0.0
    %5541 = vmatprep.subr.mxu0 0.0
    %5542 = vmatpush1.msra.mxu0 %v285
    %5543 = vmatprep.subr.mxu0 0.0
    %5544 = vmatpush1.msra.mxu0 %v284
    %5545 = vmatprep.subr.mxu0 0.0
    %5546 = vmatpush1.msra.mxu0 %v283
    %5547 = vmatprep.subr.mxu0 0.0
    %5548 = vmatpush1.msra.mxu0 %v282
    %5549 = vmatprep.subr.mxu0 0.0
    %5550 = vmatpush2.msra.mxu0 0.0
    %5551 = vmatprep.subr.mxu0 0.0
    %5552 = vmatpush2.msra.mxu0 0.0
    %5553 = vmatprep.subr.mxu0 0.0
    %5554 = vmatpush2.msra.mxu0 0.0
    %5555 = vmatprep.subr.mxu0 0.0
    %5556 = vmatpush2.msra.mxu0 0.0
    %5557 = vmatprep.subr.mxu0 0.0
    %5558 = vmatpush2.msra.mxu0 0.0
    %5559 = vmatprep.subr.mxu0 0.0
    %5560 = vmatpush2.msra.mxu0 0.0
    %5561 = vmatprep.subr.mxu0 0.0
    %5562 = vmatpush2.msra.mxu0 0.0
    %5563 = vmatprep.subr.mxu0 0.0
    %5564 = vmatpush2.msra.mxu0 0.0
    %5565 = vmatprep.subr.mxu0 0.0
    %5566 = vmatpush2.msra.mxu0 0.0
    %5567 = vmatprep.subr.mxu0 0.0
    %5568 = vmatpush2.msra.mxu0 0.0
    %5569 = vmatprep.subr.mxu0 0.0
    %5570 = vmatpush2.msra.mxu0 0.0
    %5571 = vmatprep.subr.mxu0 0.0
    %5572 = vmatpush2.msra.mxu0 0.0
    %5573 = vmatprep.subr.mxu0 0.0
    %5574 = vmatpush2.msra.mxu0 0.0
    %5575 = vmatprep.subr.mxu0 0.0
    %5576 = vmatpush2.msra.mxu0 0.0
    %5577 = vmatprep.subr.mxu0 0.0
    %5578 = vmatpush2.msra.mxu0 0.0
    %5579 = vmatprep.subr.mxu0 0.0
    %5580 = vmatpush2.msra.mxu0 0.0
    %5581 = vmatprep.mubr.f32.mxu0 0.0
    %5582 = vmatmul.mubr.f32.gmra.mxu0 %v5131
    %v5583 = vpop.f32.mrf.mxu0
    %v5584 = vadd.f32 %v335, %v5583
    %v5585 = vpop.f32.mrf.mxu0
    %5586 = vdwg.mxu0
    %5587 = vmatprep.subr.mxu0 0.0
    %5588 = vmatpush1.msra.mxu0 0.0
    %5589 = vmatprep.subr.mxu0 0.0
    %5590 = vmatpush1.msra.mxu0 0.0
    %5591 = vmatprep.subr.mxu0 0.0
    %5592 = vmatpush1.msra.mxu0 0.0
    %5593 = vmatprep.subr.mxu0 0.0
    %5594 = vmatpush1.msra.mxu0 0.0
    %5595 = vmatprep.subr.mxu0 0.0
    %5596 = vmatpush1.msra.mxu0 0.0
    %5597 = vmatprep.subr.mxu0 0.0
    %5598 = vmatpush1.msra.mxu0 0.0
    %5599 = vmatprep.subr.mxu0 0.0
    %5600 = vmatpush1.msra.mxu0 0.0
    %5601 = vmatprep.subr.mxu0 0.0
    %5602 = vmatpush1.msra.mxu0 0.0
    %5603 = vmatprep.subr.mxu0 0.0
    %5604 = vmatpush1.msra.mxu0 0.0
    %5605 = vmatprep.subr.mxu0 0.0
    %5606 = vmatpush1.msra.mxu0 0.0
    %5607 = vmatprep.subr.mxu0 0.0
    %5608 = vmatpush1.msra.mxu0 0.0
    %5609 = vmatprep.subr.mxu0 0.0
    %5610 = vmatpush1.msra.mxu0 0.0
    %5611 = vmatprep.subr.mxu0 0.0
    %5612 = vmatpush1.msra.mxu0 %v289
    %5613 = vmatprep.subr.mxu0 0.0
    %5614 = vmatpush1.msra.mxu0 %v288
    %5615 = vmatprep.subr.mxu0 0.0
    %5616 = vmatpush1.msra.mxu0 %v287
    %5617 = vmatprep.subr.mxu0 0.0
    %5618 = vmatpush1.msra.mxu0 %v286
    %5619 = vmatprep.subr.mxu0 0.0
    %5620 = vmatpush2.msra.mxu0 0.0
    %5621 = vmatprep.subr.mxu0 0.0
    %5622 = vmatpush2.msra.mxu0 0.0
    %5623 = vmatprep.subr.mxu0 0.0
    %5624 = vmatpush2.msra.mxu0 0.0
    %5625 = vmatprep.subr.mxu0 0.0
    %5626 = vmatpush2.msra.mxu0 0.0
    %5627 = vmatprep.subr.mxu0 0.0
    %5628 = vmatpush2.msra.mxu0 0.0
    %5629 = vmatprep.subr.mxu0 0.0
    %5630 = vmatpush2.msra.mxu0 0.0
    %5631 = vmatprep.subr.mxu0 0.0
    %5632 = vmatpush2.msra.mxu0 0.0
    %5633 = vmatprep.subr.mxu0 0.0
    %5634 = vmatpush2.msra.mxu0 0.0
    %5635 = vmatprep.subr.mxu0 0.0
    %5636 = vmatpush2.msra.mxu0 0.0
    %5637 = vmatprep.subr.mxu0 0.0
    %5638 = vmatpush2.msra.mxu0 0.0
    %5639 = vmatprep.subr.mxu0 0.0
    %5640 = vmatpush2.msra.mxu0 0.0
    %5641 = vmatprep.subr.mxu0 0.0
    %5642 = vmatpush2.msra.mxu0 0.0
    %5643 = vmatprep.subr.mxu0 0.0
    %5644 = vmatpush2.msra.mxu0 0.0
    %5645 = vmatprep.subr.mxu0 0.0
    %5646 = vmatpush2.msra.mxu0 0.0
    %5647 = vmatprep.subr.mxu0 0.0
    %5648 = vmatpush2.msra.mxu0 0.0
    %5649 = vmatprep.subr.mxu0 0.0
    %5650 = vmatpush2.msra.mxu0 0.0
    %5651 = vmatprep.mubr.f32.mxu0 0.0
    %5652 = vmatmul.mubr.f32.gmra.mxu0 %v5131
    %v5653 = vpop.f32.mrf.mxu0
    %v5654 = vadd.f32 %v342, %v5653
    %v5655 = vpop.f32.mrf.mxu0
    %5656 = vdwg.mxu0
    %5657 = vmatprep.subr.mxu0 0.0
    %5658 = vmatpush1.msra.mxu0 0.0
    %5659 = vmatprep.subr.mxu0 0.0
    %5660 = vmatpush1.msra.mxu0 0.0
    %5661 = vmatprep.subr.mxu0 0.0
    %5662 = vmatpush1.msra.mxu0 0.0
    %5663 = vmatprep.subr.mxu0 0.0
    %5664 = vmatpush1.msra.mxu0 0.0
    %5665 = vmatprep.subr.mxu0 0.0
    %5666 = vmatpush1.msra.mxu0 0.0
    %5667 = vmatprep.subr.mxu0 0.0
    %5668 = vmatpush1.msra.mxu0 0.0
    %5669 = vmatprep.subr.mxu0 0.0
    %5670 = vmatpush1.msra.mxu0 0.0
    %5671 = vmatprep.subr.mxu0 0.0
    %5672 = vmatpush1.msra.mxu0 0.0
    %5673 = vmatprep.subr.mxu0 0.0
    %5674 = vmatpush1.msra.mxu0 0.0
    %5675 = vmatprep.subr.mxu0 0.0
    %5676 = vmatpush1.msra.mxu0 0.0
    %5677 = vmatprep.subr.mxu0 0.0
    %5678 = vmatpush1.msra.mxu0 0.0
    %5679 = vmatprep.subr.mxu0 0.0
    %5680 = vmatpush1.msra.mxu0 0.0
    %5681 = vmatprep.subr.mxu0 0.0
    %5682 = vmatpush1.msra.mxu0 %v293
    %5683 = vmatprep.subr.mxu0 0.0
    %5684 = vmatpush1.msra.mxu0 %v292
    %5685 = vmatprep.subr.mxu0 0.0
    %5686 = vmatpush1.msra.mxu0 %v291
    %5687 = vmatprep.subr.mxu0 0.0
    %5688 = vmatpush1.msra.mxu0 %v290
    %5689 = vmatprep.subr.mxu0 0.0
    %5690 = vmatpush2.msra.mxu0 0.0
    %5691 = vmatprep.subr.mxu0 0.0
    %5692 = vmatpush2.msra.mxu0 0.0
    %5693 = vmatprep.subr.mxu0 0.0
    %5694 = vmatpush2.msra.mxu0 0.0
    %5695 = vmatprep.subr.mxu0 0.0
    %5696 = vmatpush2.msra.mxu0 0.0
    %5697 = vmatprep.subr.mxu0 0.0
    %5698 = vmatpush2.msra.mxu0 0.0
    %5699 = vmatprep.subr.mxu0 0.0
    %5700 = vmatpush2.msra.mxu0 0.0
    %5701 = vmatprep.subr.mxu0 0.0
    %5702 = vmatpush2.msra.mxu0 0.0
    %5703 = vmatprep.subr.mxu0 0.0
    %5704 = vmatpush2.msra.mxu0 0.0
    %5705 = vmatprep.subr.mxu0 0.0
    %5706 = vmatpush2.msra.mxu0 0.0
    %5707 = vmatprep.subr.mxu0 0.0
    %5708 = vmatpush2.msra.mxu0 0.0
    %5709 = vmatprep.subr.mxu0 0.0
    %5710 = vmatpush2.msra.mxu0 0.0
    %5711 = vmatprep.subr.mxu0 0.0
    %5712 = vmatpush2.msra.mxu0 0.0
    %5713 = vmatprep.subr.mxu0 0.0
    %5714 = vmatpush2.msra.mxu0 0.0
    %5715 = vmatprep.subr.mxu0 0.0
    %5716 = vmatpush2.msra.mxu0 0.0
    %5717 = vmatprep.subr.mxu0 0.0
    %5718 = vmatpush2.msra.mxu0 0.0
    %5719 = vmatprep.subr.mxu0 0.0
    %5720 = vmatpush2.msra.mxu0 0.0
    %5721 = vmatprep.mubr.f32.mxu0 0.0
    %5722 = vmatmul.mubr.f32.gmra.mxu0 %v5131
    %v5723 = vpop.f32.mrf.mxu0
    %v5724 = vadd.f32 %v349, %v5723
    %v5725 = vpop.f32.mrf.mxu0
    %5726 = vdwg.mxu0
    %v5727 = vadd.f32 %v5374, %v5584
    %v5728 = vxor.u32 %v5727, 2147483648
    %v5729 = vmul.f32 %v5728, 1.442695
    %v5730 = vpow.pop %v5729
    %v5731 = vadd.f32 %v5730, 1.0
    %v5732 = vrcp.pop %v5731
    %v5733 = vmul.f32 1.0, %v5732
    %v5734 = vadd.f32 %v5444, %v5654
    %v5735 = vxor.u32 %v5734, 2147483648
    %v5736 = vmul.f32 %v5735, 1.442695
    %v5737 = vpow.pop %v5736
    %v5738 = vadd.f32 %v5737, 1.0
    %v5739 = vrcp.pop %v5738
    %v5740 = vmul.f32 1.0, %v5739
    %v5741 = vmul.f32 %v5733, %v5724
    %v5742 = vadd.f32 %v5514, %v5741
    %v5743 = vtanh.pop %v5742
    %v5744 = vsub.f32 1.0, %v5740
    %v5745 = vmul.f32 %v5744, %v5743
    %v5746 = vmul.f32 %v5740, %v4935
    %v5747 = vadd.f32 %v5745, %v5746
    %v5750 = vunpack.c.l.s4 1966171168
    %v5751 = vunpack.c.0.s8 %v5750
    %v5752 = vlaneseq
    %v5753 = vshrl.u32 %v5752, 7
    %v5754 = vsub.s32 %v5751, %v5753
    %v5755 = vrot.slane %v5747, %v5754
    %v5756 = vcombine.high %v5755, %v5755
    %v5758 = vunpack.c.l.s4 1966171168
    %v5759 = vunpack.c.0.s8 %v5758
    %v5760 = vlaneseq
    %v5761 = vshrl.u32 %v5760, 7
    %v5762 = vsub.s32 %v5759, %v5761
    %v5763 = vrot.slane %v5755, %v5762
    %v5765 = vunpack.c.l.s4 1966171168
    %v5766 = vunpack.c.0.s8 %v5765
    %v5767 = vlaneseq
    %v5768 = vshrl.u32 %v5767, 7
    %v5769 = vsub.s32 %v5766, %v5768
    %v5770 = vrot.slane %v5756, %v5769
    %v5771 = vlaneseq
    %v5772 = vshrl.u32 %v5771, 7
    %v5773 = vsub.s32 0, %v5772
    %v5774 = vrot.slane %v5763, %v5773
    %v5775 = vlaneseq
    %v5776 = vshrl.u32 %v5775, 7
    %v5777 = vsub.s32 0, %v5776
    %v5778 = vrot.slane %v5770, %v5777
    %v5781 = vmul.f32 %v529, %v5774
    %v5782 = vmul.f32 %v534, %v5778
    %v5783 = vsel %vm370, %v5781, 0.0
    %5784 = vadd.xlane.f32.xlu0 %v5783
    %v5785 = vpop.xlane.xlu0 %5784
    %v5786 = vsel %vm370, %v5782, 0.0
    %5787 = vadd.xlane.f32.xlu0 %v5786
    %v5788 = vpop.xlane.xlu0 %5787
    %v5791 = vlaneseq
    %v5792 = vshrl.u32 %v5791, 7
    %v5793 = vsub.s32 %v2540, %v5792
    %v5794 = vrot.slane %v5785, %v5793
    %v5795 = vlaneseq
    %v5796 = vshrl.u32 %v5795, 7
    %v5797 = vsub.s32 %v2540, %v5796
    %v5798 = vrot.slane %v5788, %v5797
    %v5799 = vsel %vm1122, %v5798, %v5794
    %v5801 = vsel %vm2551, %v5799, -inf
    %5802 = vmax.xlane.f32.xlu0 %v5801
    %v5803 = vpop.xlane.xlu0 %5802
    %v5805 = vlaneseq
    %v5806 = vshrl.u32 %v5805, 7
    %v5807 = vsub.s32 0, %v5806
    %v5808 = vrot.slane %v5803, %v5807
    %v5809 = vlaneseq
    %v5810 = vshrl.u32 %v5809, 7
    %v5811 = vsub.s32 1, %v5810
    %v5812 = vrot.slane %v5803, %v5811
    %v5815 = vsub.f32 %v5785, %v5808
    %v5816 = vsub.f32 %v5788, %v5812
    %v5817 = vmul.f32 %v5815, 1.442695
    %v5818 = vpow.pop %v5817
    %v5819 = vmul.f32 %v5816, 1.442695
    %v5820 = vpow.pop %v5819
    %5822 = vset.pattern.permute.xlu0 0
    %5823 = vperm.xlu0 %5822, %v5818
    %v5824 = vpop.permute.xlu0 %5823
    %5827 = vset.pattern.permute.xlu0 0
    %5828 = vperm.xlu0 %5827, %v5820
    %v5829 = vpop.permute.xlu0 %5828
    %v5831 = vmul.f32 %v529, %v5824
    %v5832 = vmul.f32 %v534, %v5829
    %v5833 = vsel %vm370, %v5831, 0.0
    %v5834 = vrot.slane %v5833, 4
    %v5835 = vadd.f32 %v5833, %v5834
    %v5836 = vrot.slane %v5835, 2
    %v5837 = vadd.f32 %v5835, %v5836
    %v5838 = vrot.slane %v5837, 1
    %v5839 = vadd.f32 %v5837, %v5838
    %v5840 = vsel %vm370, %v5832, 0.0
    %v5841 = vrot.slane %v5840, 4
    %v5842 = vadd.f32 %v5840, %v5841
    %v5843 = vrot.slane %v5842, 2
    %v5844 = vadd.f32 %v5842, %v5843
    %v5845 = vrot.slane %v5844, 1
    %v5846 = vadd.f32 %v5844, %v5845
    %v5847 = vlaneseq
    %v5848 = vshrl.u32 %v5847, 7
    %v5849 = vsub.s32 %v2540, %v5848
    %v5850 = vrot.slane %v5824, %v5849
    %v5851 = vlaneseq
    %v5852 = vshrl.u32 %v5851, 7
    %v5853 = vsub.s32 %v2540, %v5852
    %v5854 = vrot.slane %v5829, %v5853
    %v5855 = vsel %vm1122, %v5854, %v5850
    %v5857 = vsel %vm2551, %v5855, 0.0
    %5858 = vadd.xlane.f32.xlu0 %v5857
    %v5859 = vpop.xlane.xlu0 %5858
    %v5860 = vrcp.pop %v5859
    %v5862 = vrot.slane %v5860, 1
    %v5865 = vmul.f32 %v5839, %v5860
    %v5866 = vmul.f32 %v5846, %v5862
    %v5869 = vrot.slane %v5866, 7
    %v5870 = vsel %vm1122, %v5869, %v5865
    %v5871 = vsel %vm370, %v5870, 0
    %5873 = vmatprep.subr.mxu0 0.0
    %5874 = vmatpush1.msra.mxu0 0.0
    %5875 = vmatprep.subr.mxu0 0.0
    %5876 = vmatpush1.msra.mxu0 0.0
    %5877 = vmatprep.subr.mxu0 0.0
    %5878 = vmatpush1.msra.mxu0 0.0
    %5879 = vmatprep.subr.mxu0 0.0
    %5880 = vmatpush1.msra.mxu0 0.0
    %5881 = vmatprep.subr.mxu0 0.0
    %5882 = vmatpush1.msra.mxu0 0.0
    %5883 = vmatprep.subr.mxu0 0.0
    %5884 = vmatpush1.msra.mxu0 0.0
    %5885 = vmatprep.subr.mxu0 0.0
    %5886 = vmatpush1.msra.mxu0 0.0
    %5887 = vmatprep.subr.mxu0 0.0
    %5888 = vmatpush1.msra.mxu0 0.0
    %5889 = vmatprep.subr.mxu0 0.0
    %5890 = vmatpush1.msra.mxu0 0.0
    %5891 = vmatprep.subr.mxu0 0.0
    %5892 = vmatpush1.msra.mxu0 0.0
    %5893 = vmatprep.subr.mxu0 0.0
    %5894 = vmatpush1.msra.mxu0 0.0
    %5895 = vmatprep.subr.mxu0 0.0
    %5896 = vmatpush1.msra.mxu0 0.0
    %5897 = vmatprep.subr.mxu0 0.0
    %5898 = vmatpush1.msra.mxu0 %v301
    %5899 = vmatprep.subr.mxu0 0.0
    %5900 = vmatpush1.msra.mxu0 %v300
    %5901 = vmatprep.subr.mxu0 0.0
    %5902 = vmatpush1.msra.mxu0 %v299
    %5903 = vmatprep.subr.mxu0 0.0
    %5904 = vmatpush1.msra.mxu0 %v298
    %5905 = vmatprep.subr.mxu0 0.0
    %5906 = vmatpush2.msra.mxu0 0.0
    %5907 = vmatprep.subr.mxu0 0.0
    %5908 = vmatpush2.msra.mxu0 0.0
    %5909 = vmatprep.subr.mxu0 0.0
    %5910 = vmatpush2.msra.mxu0 0.0
    %5911 = vmatprep.subr.mxu0 0.0
    %5912 = vmatpush2.msra.mxu0 0.0
    %5913 = vmatprep.subr.mxu0 0.0
    %5914 = vmatpush2.msra.mxu0 0.0
    %5915 = vmatprep.subr.mxu0 0.0
    %5916 = vmatpush2.msra.mxu0 0.0
    %5917 = vmatprep.subr.mxu0 0.0
    %5918 = vmatpush2.msra.mxu0 0.0
    %5919 = vmatprep.subr.mxu0 0.0
    %5920 = vmatpush2.msra.mxu0 0.0
    %5921 = vmatprep.subr.mxu0 0.0
    %5922 = vmatpush2.msra.mxu0 0.0
    %5923 = vmatprep.subr.mxu0 0.0
    %5924 = vmatpush2.msra.mxu0 0.0
    %5925 = vmatprep.subr.mxu0 0.0
    %5926 = vmatpush2.msra.mxu0 0.0
    %5927 = vmatprep.subr.mxu0 0.0
    %5928 = vmatpush2.msra.mxu0 0.0
    %5929 = vmatprep.subr.mxu0 0.0
    %5930 = vmatpush2.msra.mxu0 0.0
    %5931 = vmatprep.subr.mxu0 0.0
    %5932 = vmatpush2.msra.mxu0 0.0
    %5933 = vmatprep.subr.mxu0 0.0
    %5934 = vmatpush2.msra.mxu0 0.0
    %5935 = vmatprep.subr.mxu0 0.0
    %5936 = vmatpush2.msra.mxu0 0.0
    %5937 = vmatprep.mubr.f32.mxu0 0.0
    %5938 = vmatmul.mubr.f32.gmra.mxu0 %v5871
    %v5939 = vpop.f32.mrf.mxu0
    %v5940 = vadd.f32 0.0, %v5939
    %v5941 = vpop.f32.mrf.mxu0
    %5942 = vdwg.mxu0
    %v5943 = vsel %vm370, %v5747, 0
    %5945 = vmatprep.subr.mxu0 0.0
    %5946 = vmatpush1.msra.mxu0 0.0
    %5947 = vmatprep.subr.mxu0 0.0
    %5948 = vmatpush1.msra.mxu0 0.0
    %5949 = vmatprep.subr.mxu0 0.0
    %5950 = vmatpush1.msra.mxu0 0.0
    %5951 = vmatprep.subr.mxu0 0.0
    %5952 = vmatpush1.msra.mxu0 0.0
    %5953 = vmatprep.subr.mxu0 0.0
    %5954 = vmatpush1.msra.mxu0 0.0
    %5955 = vmatprep.subr.mxu0 0.0
    %5956 = vmatpush1.msra.mxu0 0.0
    %5957 = vmatprep.subr.mxu0 0.0
    %5958 = vmatpush1.msra.mxu0 0.0
    %5959 = vmatprep.subr.mxu0 0.0
    %5960 = vmatpush1.msra.mxu0 0.0
    %5961 = vmatprep.subr.mxu0 0.0
    %5962 = vmatpush1.msra.mxu0 0.0
    %5963 = vmatprep.subr.mxu0 0.0
    %5964 = vmatpush1.msra.mxu0 0.0
    %5965 = vmatprep.subr.mxu0 0.0
    %5966 = vmatpush1.msra.mxu0 0.0
    %5967 = vmatprep.subr.mxu0 0.0
    %5968 = vmatpush1.msra.mxu0 0.0
    %5969 = vmatprep.subr.mxu0 0.0
    %5970 = vmatpush1.msra.mxu0 %v297
    %5971 = vmatprep.subr.mxu0 0.0
    %5972 = vmatpush1.msra.mxu0 %v296
    %5973 = vmatprep.subr.mxu0 0.0
    %5974 = vmatpush1.msra.mxu0 %v295
    %5975 = vmatprep.subr.mxu0 0.0
    %5976 = vmatpush1.msra.mxu0 %v294
    %5977 = vmatprep.subr.mxu0 0.0
    %5978 = vmatpush2.msra.mxu0 0.0
    %5979 = vmatprep.subr.mxu0 0.0
    %5980 = vmatpush2.msra.mxu0 0.0
    %5981 = vmatprep.subr.mxu0 0.0
    %5982 = vmatpush2.msra.mxu0 0.0
    %5983 = vmatprep.subr.mxu0 0.0
    %5984 = vmatpush2.msra.mxu0 0.0
    %5985 = vmatprep.subr.mxu0 0.0
    %5986 = vmatpush2.msra.mxu0 0.0
    %5987 = vmatprep.subr.mxu0 0.0
    %5988 = vmatpush2.msra.mxu0 0.0
    %5989 = vmatprep.subr.mxu0 0.0
    %5990 = vmatpush2.msra.mxu0 0.0
    %5991 = vmatprep.subr.mxu0 0.0
    %5992 = vmatpush2.msra.mxu0 0.0
    %5993 = vmatprep.subr.mxu0 0.0
    %5994 = vmatpush2.msra.mxu0 0.0
    %5995 = vmatprep.subr.mxu0 0.0
    %5996 = vmatpush2.msra.mxu0 0.0
    %5997 = vmatprep.subr.mxu0 0.0
    %5998 = vmatpush2.msra.mxu0 0.0
    %5999 = vmatprep.subr.mxu0 0.0
    %6000 = vmatpush2.msra.mxu0 0.0
    %6001 = vmatprep.subr.mxu0 0.0
    %6002 = vmatpush2.msra.mxu0 0.0
    %6003 = vmatprep.subr.mxu0 0.0
    %6004 = vmatpush2.msra.mxu0 0.0
    %6005 = vmatprep.subr.mxu0 0.0
    %6006 = vmatpush2.msra.mxu0 0.0
    %6007 = vmatprep.subr.mxu0 0.0
    %6008 = vmatpush2.msra.mxu0 0.0
    %6009 = vmatprep.mubr.f32.mxu0 0.0
    %6010 = vmatmul.mubr.f32.gmra.mxu0 %v5943
    %v6011 = vpop.f32.mrf.mxu0
    %v6012 = vadd.f32 %v5940, %v6011
    %v6013 = vpop.f32.mrf.mxu0
    %6014 = vdwg.mxu0
    %v6015 = vadd.f32 %v6012, %v356
    %v6018 = vunpack.c.l.s4 1966171168
    %v6019 = vunpack.c.0.s8 %v6018
    %v6020 = vlaneseq
    %v6021 = vshrl.u32 %v6020, 7
    %v6022 = vsub.s32 %v6019, %v6021
    %v6023 = vrot.slane %v6015, %v6022
    %v6024 = vcombine.high %v6023, %v6023
    %v6026 = vunpack.c.l.s4 1966171168
    %v6027 = vunpack.c.0.s8 %v6026
    %v6028 = vlaneseq
    %v6029 = vshrl.u32 %v6028, 7
    %v6030 = vsub.s32 %v6027, %v6029
    %v6031 = vrot.slane %v6023, %v6030
    %v6033 = vunpack.c.l.s4 1966171168
    %v6034 = vunpack.c.0.s8 %v6033
    %v6035 = vlaneseq
    %v6036 = vshrl.u32 %v6035, 7
    %v6037 = vsub.s32 %v6034, %v6036
    %v6038 = vrot.slane %v6024, %v6037
    %6041 = vst.msk [vmem:[%s24 + $0x4] sm:$0x1] %vm2792, %v6031
    %6042 = vst.msk [vmem:[%s24 + $0xc] sm:$0x1] %vm2792, %v6038
    %v6043 = vsel %vm542, %v6015, 0
    %6045 = vmatprep.subr.mxu0 0.0
    %6046 = vmatpush1.msra.mxu0 0.0
    %6047 = vmatprep.subr.mxu0 0.0
    %6048 = vmatpush1.msra.mxu0 0.0
    %6049 = vmatprep.subr.mxu0 0.0
    %6050 = vmatpush1.msra.mxu0 0.0
    %6051 = vmatprep.subr.mxu0 0.0
    %6052 = vmatpush1.msra.mxu0 0.0
    %6053 = vmatprep.subr.mxu0 0.0
    %6054 = vmatpush1.msra.mxu0 0.0
    %6055 = vmatprep.subr.mxu0 0.0
    %6056 = vmatpush1.msra.mxu0 0.0
    %6057 = vmatprep.subr.mxu0 0.0
    %6058 = vmatpush1.msra.mxu0 0.0
    %6059 = vmatprep.subr.mxu0 0.0
    %6060 = vmatpush1.msra.mxu0 0.0
    %6061 = vmatprep.subr.mxu0 0.0
    %6062 = vmatpush1.msra.mxu0 0.0
    %6063 = vmatprep.subr.mxu0 0.0
    %6064 = vmatpush1.msra.mxu0 0.0
    %6065 = vmatprep.subr.mxu0 0.0
    %6066 = vmatpush1.msra.mxu0 0.0
    %6067 = vmatprep.subr.mxu0 0.0
    %6068 = vmatpush1.msra.mxu0 0.0
    %6069 = vmatprep.subr.mxu0 0.0
    %6070 = vmatpush1.msra.mxu0 0.0
    %6071 = vmatprep.subr.mxu0 0.0
    %6072 = vmatpush1.msra.mxu0 0.0
    %6073 = vmatprep.subr.mxu0 0.0
    %6074 = vmatpush1.msra.mxu0 %v547
    %6075 = vmatprep.subr.mxu0 0.0
    %6076 = vmatpush1.msra.mxu0 %v274
    %6077 = vmatprep.subr.mxu0 0.0
    %6078 = vmatpush2.msra.mxu0 0.0
    %6079 = vmatprep.subr.mxu0 0.0
    %6080 = vmatpush2.msra.mxu0 0.0
    %6081 = vmatprep.subr.mxu0 0.0
    %6082 = vmatpush2.msra.mxu0 0.0
    %6083 = vmatprep.subr.mxu0 0.0
    %6084 = vmatpush2.msra.mxu0 0.0
    %6085 = vmatprep.subr.mxu0 0.0
    %6086 = vmatpush2.msra.mxu0 0.0
    %6087 = vmatprep.subr.mxu0 0.0
    %6088 = vmatpush2.msra.mxu0 0.0
    %6089 = vmatprep.subr.mxu0 0.0
    %6090 = vmatpush2.msra.mxu0 0.0
    %6091 = vmatprep.subr.mxu0 0.0
    %6092 = vmatpush2.msra.mxu0 0.0
    %6093 = vmatprep.subr.mxu0 0.0
    %6094 = vmatpush2.msra.mxu0 0.0
    %6095 = vmatprep.subr.mxu0 0.0
    %6096 = vmatpush2.msra.mxu0 0.0
    %6097 = vmatprep.subr.mxu0 0.0
    %6098 = vmatpush2.msra.mxu0 0.0
    %6099 = vmatprep.subr.mxu0 0.0
    %6100 = vmatpush2.msra.mxu0 0.0
    %6101 = vmatprep.subr.mxu0 0.0
    %6102 = vmatpush2.msra.mxu0 0.0
    %6103 = vmatprep.subr.mxu0 0.0
    %6104 = vmatpush2.msra.mxu0 0.0
    %6105 = vmatprep.subr.mxu0 0.0
    %6106 = vmatpush2.msra.mxu0 0.0
    %6107 = vmatprep.subr.mxu0 0.0
    %6108 = vmatpush2.msra.mxu0 0.0
    %6109 = vmatprep.mubr.f32.mxu0 0.0
    %6110 = vmatmul.mubr.f32.gmra.mxu0 %v6043
    %v6111 = vpop.f32.mrf.mxu0
    %v6112 = vadd.f32 %v307, %v6111
    %v6113 = vpop.f32.mrf.mxu0
    %6114 = vdwg.mxu0
    %v6115 = vmax.f32 %v6112, 0.0
    %v6117 = vsel %vm455, %v6115, 0
    %6119 = vmatprep.subr.mxu0 0.0
    %6120 = vmatpush1.msra.mxu0 0.0
    %6121 = vmatprep.subr.mxu0 0.0
    %6122 = vmatpush1.msra.mxu0 0.0
    %6123 = vmatprep.subr.mxu0 0.0
    %6124 = vmatpush1.msra.mxu0 0.0
    %6125 = vmatprep.subr.mxu0 0.0
    %6126 = vmatpush1.msra.mxu0 0.0
    %6127 = vmatprep.subr.mxu0 0.0
    %6128 = vmatpush1.msra.mxu0 0.0
    %6129 = vmatprep.subr.mxu0 0.0
    %6130 = vmatpush1.msra.mxu0 0.0
    %6131 = vmatprep.subr.mxu0 0.0
    %6132 = vmatpush1.msra.mxu0 0.0
    %6133 = vmatprep.subr.mxu0 0.0
    %6134 = vmatpush1.msra.mxu0 0.0
    %6135 = vmatprep.subr.mxu0 0.0
    %6136 = vmatpush1.msra.mxu0 0.0
    %6137 = vmatprep.subr.mxu0 0.0
    %6138 = vmatpush1.msra.mxu0 0.0
    %6139 = vmatprep.subr.mxu0 0.0
    %6140 = vmatpush1.msra.mxu0 0.0
    %6141 = vmatprep.subr.mxu0 0.0
    %6142 = vmatpush1.msra.mxu0 0.0
    %6143 = vmatprep.subr.mxu0 0.0
    %6144 = vmatpush1.msra.mxu0 0.0
    %6145 = vmatprep.subr.mxu0 0.0
    %6146 = vmatpush1.msra.mxu0 0.0
    %6147 = vmatprep.subr.mxu0 0.0
    %6148 = vmatpush1.msra.mxu0 %v277
    %6149 = vmatprep.subr.mxu0 0.0
    %6150 = vmatpush1.msra.mxu0 %v276
    %6151 = vmatprep.subr.mxu0 0.0
    %6152 = vmatpush2.msra.mxu0 0.0
    %6153 = vmatprep.subr.mxu0 0.0
    %6154 = vmatpush2.msra.mxu0 0.0
    %6155 = vmatprep.subr.mxu0 0.0
    %6156 = vmatpush2.msra.mxu0 0.0
    %6157 = vmatprep.subr.mxu0 0.0
    %6158 = vmatpush2.msra.mxu0 0.0
    %6159 = vmatprep.subr.mxu0 0.0
    %6160 = vmatpush2.msra.mxu0 0.0
    %6161 = vmatprep.subr.mxu0 0.0
    %6162 = vmatpush2.msra.mxu0 0.0
    %6163 = vmatprep.subr.mxu0 0.0
    %6164 = vmatpush2.msra.mxu0 0.0
    %6165 = vmatprep.subr.mxu0 0.0
    %6166 = vmatpush2.msra.mxu0 0.0
    %6167 = vmatprep.subr.mxu0 0.0
    %6168 = vmatpush2.msra.mxu0 0.0
    %6169 = vmatprep.subr.mxu0 0.0
    %6170 = vmatpush2.msra.mxu0 0.0
    %6171 = vmatprep.subr.mxu0 0.0
    %6172 = vmatpush2.msra.mxu0 0.0
    %6173 = vmatprep.subr.mxu0 0.0
    %6174 = vmatpush2.msra.mxu0 0.0
    %6175 = vmatprep.subr.mxu0 0.0
    %6176 = vmatpush2.msra.mxu0 0.0
    %6177 = vmatprep.subr.mxu0 0.0
    %6178 = vmatpush2.msra.mxu0 0.0
    %6179 = vmatprep.subr.mxu0 0.0
    %6180 = vmatpush2.msra.mxu0 0.0
    %6181 = vmatprep.subr.mxu0 0.0
    %6182 = vmatpush2.msra.mxu0 0.0
    %6183 = vmatprep.mubr.f32.mxu0 0.0
    %6184 = vmatmul.mubr.f32.gmra.mxu0 %v6117
    %v6185 = vpop.f32.mrf.mxu0
    %v6186 = vadd.f32 %v314, %v6185
    %v6187 = vpop.f32.mrf.mxu0
    %6188 = vdwg.mxu0
    %6189 = vmatprep.subr.mxu0 0.0
    %6190 = vmatpush1.msra.mxu0 0.0
    %6191 = vmatprep.subr.mxu0 0.0
    %6192 = vmatpush1.msra.mxu0 0.0
    %6193 = vmatprep.subr.mxu0 0.0
    %6194 = vmatpush1.msra.mxu0 0.0
    %6195 = vmatprep.subr.mxu0 0.0
    %6196 = vmatpush1.msra.mxu0 0.0
    %6197 = vmatprep.subr.mxu0 0.0
    %6198 = vmatpush1.msra.mxu0 0.0
    %6199 = vmatprep.subr.mxu0 0.0
    %6200 = vmatpush1.msra.mxu0 0.0
    %6201 = vmatprep.subr.mxu0 0.0
    %6202 = vmatpush1.msra.mxu0 0.0
    %6203 = vmatprep.subr.mxu0 0.0
    %6204 = vmatpush1.msra.mxu0 0.0
    %6205 = vmatprep.subr.mxu0 0.0
    %6206 = vmatpush1.msra.mxu0 0.0
    %6207 = vmatprep.subr.mxu0 0.0
    %6208 = vmatpush1.msra.mxu0 0.0
    %6209 = vmatprep.subr.mxu0 0.0
    %6210 = vmatpush1.msra.mxu0 0.0
    %6211 = vmatprep.subr.mxu0 0.0
    %6212 = vmatpush1.msra.mxu0 0.0
    %6213 = vmatprep.subr.mxu0 0.0
    %6214 = vmatpush1.msra.mxu0 0.0
    %6215 = vmatprep.subr.mxu0 0.0
    %6216 = vmatpush1.msra.mxu0 0.0
    %6217 = vmatprep.subr.mxu0 0.0
    %6218 = vmatpush1.msra.mxu0 %v279
    %6219 = vmatprep.subr.mxu0 0.0
    %6220 = vmatpush1.msra.mxu0 %v278
    %6221 = vmatprep.subr.mxu0 0.0
    %6222 = vmatpush2.msra.mxu0 0.0
    %6223 = vmatprep.subr.mxu0 0.0
    %6224 = vmatpush2.msra.mxu0 0.0
    %6225 = vmatprep.subr.mxu0 0.0
    %6226 = vmatpush2.msra.mxu0 0.0
    %6227 = vmatprep.subr.mxu0 0.0
    %6228 = vmatpush2.msra.mxu0 0.0
    %6229 = vmatprep.subr.mxu0 0.0
    %6230 = vmatpush2.msra.mxu0 0.0
    %6231 = vmatprep.subr.mxu0 0.0
    %6232 = vmatpush2.msra.mxu0 0.0
    %6233 = vmatprep.subr.mxu0 0.0
    %6234 = vmatpush2.msra.mxu0 0.0
    %6235 = vmatprep.subr.mxu0 0.0
    %6236 = vmatpush2.msra.mxu0 0.0
    %6237 = vmatprep.subr.mxu0 0.0
    %6238 = vmatpush2.msra.mxu0 0.0
    %6239 = vmatprep.subr.mxu0 0.0
    %6240 = vmatpush2.msra.mxu0 0.0
    %6241 = vmatprep.subr.mxu0 0.0
    %6242 = vmatpush2.msra.mxu0 0.0
    %6243 = vmatprep.subr.mxu0 0.0
    %6244 = vmatpush2.msra.mxu0 0.0
    %6245 = vmatprep.subr.mxu0 0.0
    %6246 = vmatpush2.msra.mxu0 0.0
    %6247 = vmatprep.subr.mxu0 0.0
    %6248 = vmatpush2.msra.mxu0 0.0
    %6249 = vmatprep.subr.mxu0 0.0
    %6250 = vmatpush2.msra.mxu0 0.0
    %6251 = vmatprep.subr.mxu0 0.0
    %6252 = vmatpush2.msra.mxu0 0.0
    %6253 = vmatprep.mubr.f32.mxu0 0.0
    %6254 = vmatmul.mubr.f32.gmra.mxu0 %v6117
    %v6255 = vpop.f32.mrf.mxu0
    %v6256 = vadd.f32 %v321, %v6255
    %v6257 = vpop.f32.mrf.mxu0
    %6258 = vdwg.mxu0
    %6259 = vmatprep.subr.mxu0 0.0
    %6260 = vmatpush1.msra.mxu0 0.0
    %6261 = vmatprep.subr.mxu0 0.0
    %6262 = vmatpush1.msra.mxu0 0.0
    %6263 = vmatprep.subr.mxu0 0.0
    %6264 = vmatpush1.msra.mxu0 0.0
    %6265 = vmatprep.subr.mxu0 0.0
    %6266 = vmatpush1.msra.mxu0 0.0
    %6267 = vmatprep.subr.mxu0 0.0
    %6268 = vmatpush1.msra.mxu0 0.0
    %6269 = vmatprep.subr.mxu0 0.0
    %6270 = vmatpush1.msra.mxu0 0.0
    %6271 = vmatprep.subr.mxu0 0.0
    %6272 = vmatpush1.msra.mxu0 0.0
    %6273 = vmatprep.subr.mxu0 0.0
    %6274 = vmatpush1.msra.mxu0 0.0
    %6275 = vmatprep.subr.mxu0 0.0
    %6276 = vmatpush1.msra.mxu0 0.0
    %6277 = vmatprep.subr.mxu0 0.0
    %6278 = vmatpush1.msra.mxu0 0.0
    %6279 = vmatprep.subr.mxu0 0.0
    %6280 = vmatpush1.msra.mxu0 0.0
    %6281 = vmatprep.subr.mxu0 0.0
    %6282 = vmatpush1.msra.mxu0 0.0
    %6283 = vmatprep.subr.mxu0 0.0
    %6284 = vmatpush1.msra.mxu0 0.0
    %6285 = vmatprep.subr.mxu0 0.0
    %6286 = vmatpush1.msra.mxu0 0.0
    %6287 = vmatprep.subr.mxu0 0.0
    %6288 = vmatpush1.msra.mxu0 %v281
    %6289 = vmatprep.subr.mxu0 0.0
    %6290 = vmatpush1.msra.mxu0 %v280
    %6291 = vmatprep.subr.mxu0 0.0
    %6292 = vmatpush2.msra.mxu0 0.0
    %6293 = vmatprep.subr.mxu0 0.0
    %6294 = vmatpush2.msra.mxu0 0.0
    %6295 = vmatprep.subr.mxu0 0.0
    %6296 = vmatpush2.msra.mxu0 0.0
    %6297 = vmatprep.subr.mxu0 0.0
    %6298 = vmatpush2.msra.mxu0 0.0
    %6299 = vmatprep.subr.mxu0 0.0
    %6300 = vmatpush2.msra.mxu0 0.0
    %6301 = vmatprep.subr.mxu0 0.0
    %6302 = vmatpush2.msra.mxu0 0.0
    %6303 = vmatprep.subr.mxu0 0.0
    %6304 = vmatpush2.msra.mxu0 0.0
    %6305 = vmatprep.subr.mxu0 0.0
    %6306 = vmatpush2.msra.mxu0 0.0
    %6307 = vmatprep.subr.mxu0 0.0
    %6308 = vmatpush2.msra.mxu0 0.0
    %6309 = vmatprep.subr.mxu0 0.0
    %6310 = vmatpush2.msra.mxu0 0.0
    %6311 = vmatprep.subr.mxu0 0.0
    %6312 = vmatpush2.msra.mxu0 0.0
    %6313 = vmatprep.subr.mxu0 0.0
    %6314 = vmatpush2.msra.mxu0 0.0
    %6315 = vmatprep.subr.mxu0 0.0
    %6316 = vmatpush2.msra.mxu0 0.0
    %6317 = vmatprep.subr.mxu0 0.0
    %6318 = vmatpush2.msra.mxu0 0.0
    %6319 = vmatprep.subr.mxu0 0.0
    %6320 = vmatpush2.msra.mxu0 0.0
    %6321 = vmatprep.subr.mxu0 0.0
    %6322 = vmatpush2.msra.mxu0 0.0
    %6323 = vmatprep.mubr.f32.mxu0 0.0
    %6324 = vmatmul.mubr.f32.gmra.mxu0 %v6117
    %v6325 = vpop.f32.mrf.mxu0
    %v6326 = vadd.f32 %v328, %v6325
    %v6327 = vpop.f32.mrf.mxu0
    %6328 = vdwg.mxu0
    %6329 = vmatprep.subr.mxu0 0.0
    %6330 = vmatpush1.msra.mxu0 0.0
    %6331 = vmatprep.subr.mxu0 0.0
    %6332 = vmatpush1.msra.mxu0 0.0
    %6333 = vmatprep.subr.mxu0 0.0
    %6334 = vmatpush1.msra.mxu0 0.0
    %6335 = vmatprep.subr.mxu0 0.0
    %6336 = vmatpush1.msra.mxu0 0.0
    %6337 = vmatprep.subr.mxu0 0.0
    %6338 = vmatpush1.msra.mxu0 0.0
    %6339 = vmatprep.subr.mxu0 0.0
    %6340 = vmatpush1.msra.mxu0 0.0
    %6341 = vmatprep.subr.mxu0 0.0
    %6342 = vmatpush1.msra.mxu0 0.0
    %6343 = vmatprep.subr.mxu0 0.0
    %6344 = vmatpush1.msra.mxu0 0.0
    %6345 = vmatprep.subr.mxu0 0.0
    %6346 = vmatpush1.msra.mxu0 0.0
    %6347 = vmatprep.subr.mxu0 0.0
    %6348 = vmatpush1.msra.mxu0 0.0
    %6349 = vmatprep.subr.mxu0 0.0
    %6350 = vmatpush1.msra.mxu0 0.0
    %6351 = vmatprep.subr.mxu0 0.0
    %6352 = vmatpush1.msra.mxu0 0.0
    %6353 = vmatprep.subr.mxu0 0.0
    %6354 = vmatpush1.msra.mxu0 %v285
    %6355 = vmatprep.subr.mxu0 0.0
    %6356 = vmatpush1.msra.mxu0 %v284
    %6357 = vmatprep.subr.mxu0 0.0
    %6358 = vmatpush1.msra.mxu0 %v283
    %6359 = vmatprep.subr.mxu0 0.0
    %6360 = vmatpush1.msra.mxu0 %v282
    %6361 = vmatprep.subr.mxu0 0.0
    %6362 = vmatpush2.msra.mxu0 0.0
    %6363 = vmatprep.subr.mxu0 0.0
    %6364 = vmatpush2.msra.mxu0 0.0
    %6365 = vmatprep.subr.mxu0 0.0
    %6366 = vmatpush2.msra.mxu0 0.0
    %6367 = vmatprep.subr.mxu0 0.0
    %6368 = vmatpush2.msra.mxu0 0.0
    %6369 = vmatprep.subr.mxu0 0.0
    %6370 = vmatpush2.msra.mxu0 0.0
    %6371 = vmatprep.subr.mxu0 0.0
    %6372 = vmatpush2.msra.mxu0 0.0
    %6373 = vmatprep.subr.mxu0 0.0
    %6374 = vmatpush2.msra.mxu0 0.0
    %6375 = vmatprep.subr.mxu0 0.0
    %6376 = vmatpush2.msra.mxu0 0.0
    %6377 = vmatprep.subr.mxu0 0.0
    %6378 = vmatpush2.msra.mxu0 0.0
    %6379 = vmatprep.subr.mxu0 0.0
    %6380 = vmatpush2.msra.mxu0 0.0
    %6381 = vmatprep.subr.mxu0 0.0
    %6382 = vmatpush2.msra.mxu0 0.0
    %6383 = vmatprep.subr.mxu0 0.0
    %6384 = vmatpush2.msra.mxu0 0.0
    %6385 = vmatprep.subr.mxu0 0.0
    %6386 = vmatpush2.msra.mxu0 0.0
    %6387 = vmatprep.subr.mxu0 0.0
    %6388 = vmatpush2.msra.mxu0 0.0
    %6389 = vmatprep.subr.mxu0 0.0
    %6390 = vmatpush2.msra.mxu0 0.0
    %6391 = vmatprep.subr.mxu0 0.0
    %6392 = vmatpush2.msra.mxu0 0.0
    %6393 = vmatprep.mubr.f32.mxu0 0.0
    %6394 = vmatmul.mubr.f32.gmra.mxu0 %v5943
    %v6395 = vpop.f32.mrf.mxu0
    %v6396 = vadd.f32 %v335, %v6395
    %v6397 = vpop.f32.mrf.mxu0
    %6398 = vdwg.mxu0
    %6399 = vmatprep.subr.mxu0 0.0
    %6400 = vmatpush1.msra.mxu0 0.0
    %6401 = vmatprep.subr.mxu0 0.0
    %6402 = vmatpush1.msra.mxu0 0.0
    %6403 = vmatprep.subr.mxu0 0.0
    %6404 = vmatpush1.msra.mxu0 0.0
    %6405 = vmatprep.subr.mxu0 0.0
    %6406 = vmatpush1.msra.mxu0 0.0
    %6407 = vmatprep.subr.mxu0 0.0
    %6408 = vmatpush1.msra.mxu0 0.0
    %6409 = vmatprep.subr.mxu0 0.0
    %6410 = vmatpush1.msra.mxu0 0.0
    %6411 = vmatprep.subr.mxu0 0.0
    %6412 = vmatpush1.msra.mxu0 0.0
    %6413 = vmatprep.subr.mxu0 0.0
    %6414 = vmatpush1.msra.mxu0 0.0
    %6415 = vmatprep.subr.mxu0 0.0
    %6416 = vmatpush1.msra.mxu0 0.0
    %6417 = vmatprep.subr.mxu0 0.0
    %6418 = vmatpush1.msra.mxu0 0.0
    %6419 = vmatprep.subr.mxu0 0.0
    %6420 = vmatpush1.msra.mxu0 0.0
    %6421 = vmatprep.subr.mxu0 0.0
    %6422 = vmatpush1.msra.mxu0 0.0
    %6423 = vmatprep.subr.mxu0 0.0
    %6424 = vmatpush1.msra.mxu0 %v289
    %6425 = vmatprep.subr.mxu0 0.0
    %6426 = vmatpush1.msra.mxu0 %v288
    %6427 = vmatprep.subr.mxu0 0.0
    %6428 = vmatpush1.msra.mxu0 %v287
    %6429 = vmatprep.subr.mxu0 0.0
    %6430 = vmatpush1.msra.mxu0 %v286
    %6431 = vmatprep.subr.mxu0 0.0
    %6432 = vmatpush2.msra.mxu0 0.0
    %6433 = vmatprep.subr.mxu0 0.0
    %6434 = vmatpush2.msra.mxu0 0.0
    %6435 = vmatprep.subr.mxu0 0.0
    %6436 = vmatpush2.msra.mxu0 0.0
    %6437 = vmatprep.subr.mxu0 0.0
    %6438 = vmatpush2.msra.mxu0 0.0
    %6439 = vmatprep.subr.mxu0 0.0
    %6440 = vmatpush2.msra.mxu0 0.0
    %6441 = vmatprep.subr.mxu0 0.0
    %6442 = vmatpush2.msra.mxu0 0.0
    %6443 = vmatprep.subr.mxu0 0.0
    %6444 = vmatpush2.msra.mxu0 0.0
    %6445 = vmatprep.subr.mxu0 0.0
    %6446 = vmatpush2.msra.mxu0 0.0
    %6447 = vmatprep.subr.mxu0 0.0
    %6448 = vmatpush2.msra.mxu0 0.0
    %6449 = vmatprep.subr.mxu0 0.0
    %6450 = vmatpush2.msra.mxu0 0.0
    %6451 = vmatprep.subr.mxu0 0.0
    %6452 = vmatpush2.msra.mxu0 0.0
    %6453 = vmatprep.subr.mxu0 0.0
    %6454 = vmatpush2.msra.mxu0 0.0
    %6455 = vmatprep.subr.mxu0 0.0
    %6456 = vmatpush2.msra.mxu0 0.0
    %6457 = vmatprep.subr.mxu0 0.0
    %6458 = vmatpush2.msra.mxu0 0.0
    %6459 = vmatprep.subr.mxu0 0.0
    %6460 = vmatpush2.msra.mxu0 0.0
    %6461 = vmatprep.subr.mxu0 0.0
    %6462 = vmatpush2.msra.mxu0 0.0
    %6463 = vmatprep.mubr.f32.mxu0 0.0
    %6464 = vmatmul.mubr.f32.gmra.mxu0 %v5943
    %v6465 = vpop.f32.mrf.mxu0
    %v6466 = vadd.f32 %v342, %v6465
    %v6467 = vpop.f32.mrf.mxu0
    %6468 = vdwg.mxu0
    %6469 = vmatprep.subr.mxu0 0.0
    %6470 = vmatpush1.msra.mxu0 0.0
    %6471 = vmatprep.subr.mxu0 0.0
    %6472 = vmatpush1.msra.mxu0 0.0
    %6473 = vmatprep.subr.mxu0 0.0
    %6474 = vmatpush1.msra.mxu0 0.0
    %6475 = vmatprep.subr.mxu0 0.0
    %6476 = vmatpush1.msra.mxu0 0.0
    %6477 = vmatprep.subr.mxu0 0.0
    %6478 = vmatpush1.msra.mxu0 0.0
    %6479 = vmatprep.subr.mxu0 0.0
    %6480 = vmatpush1.msra.mxu0 0.0
    %6481 = vmatprep.subr.mxu0 0.0
    %6482 = vmatpush1.msra.mxu0 0.0
    %6483 = vmatprep.subr.mxu0 0.0
    %6484 = vmatpush1.msra.mxu0 0.0
    %6485 = vmatprep.subr.mxu0 0.0
    %6486 = vmatpush1.msra.mxu0 0.0
    %6487 = vmatprep.subr.mxu0 0.0
    %6488 = vmatpush1.msra.mxu0 0.0
    %6489 = vmatprep.subr.mxu0 0.0
    %6490 = vmatpush1.msra.mxu0 0.0
    %6491 = vmatprep.subr.mxu0 0.0
    %6492 = vmatpush1.msra.mxu0 0.0
    %6493 = vmatprep.subr.mxu0 0.0
    %6494 = vmatpush1.msra.mxu0 %v293
    %6495 = vmatprep.subr.mxu0 0.0
    %6496 = vmatpush1.msra.mxu0 %v292
    %6497 = vmatprep.subr.mxu0 0.0
    %6498 = vmatpush1.msra.mxu0 %v291
    %6499 = vmatprep.subr.mxu0 0.0
    %6500 = vmatpush1.msra.mxu0 %v290
    %6501 = vmatprep.subr.mxu0 0.0
    %6502 = vmatpush2.msra.mxu0 0.0
    %6503 = vmatprep.subr.mxu0 0.0
    %6504 = vmatpush2.msra.mxu0 0.0
    %6505 = vmatprep.subr.mxu0 0.0
    %6506 = vmatpush2.msra.mxu0 0.0
    %6507 = vmatprep.subr.mxu0 0.0
    %6508 = vmatpush2.msra.mxu0 0.0
    %6509 = vmatprep.subr.mxu0 0.0
    %6510 = vmatpush2.msra.mxu0 0.0
    %6511 = vmatprep.subr.mxu0 0.0
    %6512 = vmatpush2.msra.mxu0 0.0
    %6513 = vmatprep.subr.mxu0 0.0
    %6514 = vmatpush2.msra.mxu0 0.0
    %6515 = vmatprep.subr.mxu0 0.0
    %6516 = vmatpush2.msra.mxu0 0.0
    %6517 = vmatprep.subr.mxu0 0.0
    %6518 = vmatpush2.msra.mxu0 0.0
    %6519 = vmatprep.subr.mxu0 0.0
    %6520 = vmatpush2.msra.mxu0 0.0
    %6521 = vmatprep.subr.mxu0 0.0
    %6522 = vmatpush2.msra.mxu0 0.0
    %6523 = vmatprep.subr.mxu0 0.0
    %6524 = vmatpush2.msra.mxu0 0.0
    %6525 = vmatprep.subr.mxu0 0.0
    %6526 = vmatpush2.msra.mxu0 0.0
    %6527 = vmatprep.subr.mxu0 0.0
    %6528 = vmatpush2.msra.mxu0 0.0
    %6529 = vmatprep.subr.mxu0 0.0
    %6530 = vmatpush2.msra.mxu0 0.0
    %6531 = vmatprep.subr.mxu0 0.0
    %6532 = vmatpush2.msra.mxu0 0.0
    %6533 = vmatprep.mubr.f32.mxu0 0.0
    %6534 = vmatmul.mubr.f32.gmra.mxu0 %v5943
    %v6535 = vpop.f32.mrf.mxu0
    %v6536 = vadd.f32 %v349, %v6535
    %v6537 = vpop.f32.mrf.mxu0
    %6538 = vdwg.mxu0
    %v6539 = vadd.f32 %v6186, %v6396
    %v6540 = vxor.u32 %v6539, 2147483648
    %v6541 = vmul.f32 %v6540, 1.442695
    %v6542 = vpow.pop %v6541
    %v6543 = vadd.f32 %v6542, 1.0
    %v6544 = vrcp.pop %v6543
    %v6545 = vmul.f32 1.0, %v6544
    %v6546 = vadd.f32 %v6256, %v6466
    %v6547 = vxor.u32 %v6546, 2147483648
    %v6548 = vmul.f32 %v6547, 1.442695
    %v6549 = vpow.pop %v6548
    %v6550 = vadd.f32 %v6549, 1.0
    %v6551 = vrcp.pop %v6550
    %v6552 = vmul.f32 1.0, %v6551
    %v6553 = vmul.f32 %v6545, %v6536
    %v6554 = vadd.f32 %v6326, %v6553
    %v6555 = vtanh.pop %v6554
    %v6556 = vsub.f32 1.0, %v6552
    %v6557 = vmul.f32 %v6556, %v6555
    %v6558 = vmul.f32 %v6552, %v5747
    %v6559 = vadd.f32 %v6557, %v6558
    %v6562 = vunpack.c.l.s4 1966171168
    %v6563 = vunpack.c.0.s8 %v6562
    %v6564 = vlaneseq
    %v6565 = vshrl.u32 %v6564, 7
    %v6566 = vsub.s32 %v6563, %v6565
    %v6567 = vrot.slane %v6559, %v6566
    %v6568 = vcombine.high %v6567, %v6567
    %v6570 = vunpack.c.l.s4 1966171168
    %v6571 = vunpack.c.0.s8 %v6570
    %v6572 = vlaneseq
    %v6573 = vshrl.u32 %v6572, 7
    %v6574 = vsub.s32 %v6571, %v6573
    %v6575 = vrot.slane %v6567, %v6574
    %v6577 = vunpack.c.l.s4 1966171168
    %v6578 = vunpack.c.0.s8 %v6577
    %v6579 = vlaneseq
    %v6580 = vshrl.u32 %v6579, 7
    %v6581 = vsub.s32 %v6578, %v6580
    %v6582 = vrot.slane %v6568, %v6581
    %v6583 = vlaneseq
    %v6584 = vshrl.u32 %v6583, 7
    %v6585 = vsub.s32 0, %v6584
    %v6586 = vrot.slane %v6575, %v6585
    %v6587 = vlaneseq
    %v6588 = vshrl.u32 %v6587, 7
    %v6589 = vsub.s32 0, %v6588
    %v6590 = vrot.slane %v6582, %v6589
    %v6593 = vmul.f32 %v529, %v6586
    %v6594 = vmul.f32 %v534, %v6590
    %v6595 = vsel %vm370, %v6593, 0.0
    %6596 = vadd.xlane.f32.xlu0 %v6595
    %v6597 = vpop.xlane.xlu0 %6596
    %v6598 = vsel %vm370, %v6594, 0.0
    %6599 = vadd.xlane.f32.xlu0 %v6598
    %v6600 = vpop.xlane.xlu0 %6599
    %v6603 = vlaneseq
    %v6604 = vshrl.u32 %v6603, 7
    %v6605 = vsub.s32 %v2540, %v6604
    %v6606 = vrot.slane %v6597, %v6605
    %v6607 = vlaneseq
    %v6608 = vshrl.u32 %v6607, 7
    %v6609 = vsub.s32 %v2540, %v6608
    %v6610 = vrot.slane %v6600, %v6609
    %v6611 = vsel %vm1122, %v6610, %v6606
    %v6613 = vsel %vm2551, %v6611, -inf
    %6614 = vmax.xlane.f32.xlu0 %v6613
    %v6615 = vpop.xlane.xlu0 %6614
    %v6617 = vlaneseq
    %v6618 = vshrl.u32 %v6617, 7
    %v6619 = vsub.s32 0, %v6618
    %v6620 = vrot.slane %v6615, %v6619
    %v6621 = vlaneseq
    %v6622 = vshrl.u32 %v6621, 7
    %v6623 = vsub.s32 1, %v6622
    %v6624 = vrot.slane %v6615, %v6623
    %v6627 = vsub.f32 %v6597, %v6620
    %v6628 = vsub.f32 %v6600, %v6624
    %v6629 = vmul.f32 %v6627, 1.442695
    %v6630 = vpow.pop %v6629
    %v6631 = vmul.f32 %v6628, 1.442695
    %v6632 = vpow.pop %v6631
    %6634 = vset.pattern.permute.xlu0 0
    %6635 = vperm.xlu0 %6634, %v6630
    %v6636 = vpop.permute.xlu0 %6635
    %6639 = vset.pattern.permute.xlu0 0
    %6640 = vperm.xlu0 %6639, %v6632
    %v6641 = vpop.permute.xlu0 %6640
    %v6643 = vmul.f32 %v529, %v6636
    %v6644 = vmul.f32 %v534, %v6641
    %v6645 = vsel %vm370, %v6643, 0.0
    %v6646 = vrot.slane %v6645, 4
    %v6647 = vadd.f32 %v6645, %v6646
    %v6648 = vrot.slane %v6647, 2
    %v6649 = vadd.f32 %v6647, %v6648
    %v6650 = vrot.slane %v6649, 1
    %v6651 = vadd.f32 %v6649, %v6650
    %v6652 = vsel %vm370, %v6644, 0.0
    %v6653 = vrot.slane %v6652, 4
    %v6654 = vadd.f32 %v6652, %v6653
    %v6655 = vrot.slane %v6654, 2
    %v6656 = vadd.f32 %v6654, %v6655
    %v6657 = vrot.slane %v6656, 1
    %v6658 = vadd.f32 %v6656, %v6657
    %v6659 = vlaneseq
    %v6660 = vshrl.u32 %v6659, 7
    %v6661 = vsub.s32 %v2540, %v6660
    %v6662 = vrot.slane %v6636, %v6661
    %v6663 = vlaneseq
    %v6664 = vshrl.u32 %v6663, 7
    %v6665 = vsub.s32 %v2540, %v6664
    %v6666 = vrot.slane %v6641, %v6665
    %v6667 = vsel %vm1122, %v6666, %v6662
    %v6669 = vsel %vm2551, %v6667, 0.0
    %6670 = vadd.xlane.f32.xlu0 %v6669
    %v6671 = vpop.xlane.xlu0 %6670
    %v6672 = vrcp.pop %v6671
    %v6674 = vrot.slane %v6672, 1
    %v6677 = vmul.f32 %v6651, %v6672
    %v6678 = vmul.f32 %v6658, %v6674
    %v6681 = vrot.slane %v6678, 7
    %v6682 = vsel %vm1122, %v6681, %v6677
    %v6683 = vsel %vm370, %v6682, 0
    %6685 = vmatprep.subr.mxu0 0.0
    %6686 = vmatpush1.msra.mxu0 0.0
    %6687 = vmatprep.subr.mxu0 0.0
    %6688 = vmatpush1.msra.mxu0 0.0
    %6689 = vmatprep.subr.mxu0 0.0
    %6690 = vmatpush1.msra.mxu0 0.0
    %6691 = vmatprep.subr.mxu0 0.0
    %6692 = vmatpush1.msra.mxu0 0.0
    %6693 = vmatprep.subr.mxu0 0.0
    %6694 = vmatpush1.msra.mxu0 0.0
    %6695 = vmatprep.subr.mxu0 0.0
    %6696 = vmatpush1.msra.mxu0 0.0
    %6697 = vmatprep.subr.mxu0 0.0
    %6698 = vmatpush1.msra.mxu0 0.0
    %6699 = vmatprep.subr.mxu0 0.0
    %6700 = vmatpush1.msra.mxu0 0.0
    %6701 = vmatprep.subr.mxu0 0.0
    %6702 = vmatpush1.msra.mxu0 0.0
    %6703 = vmatprep.subr.mxu0 0.0
    %6704 = vmatpush1.msra.mxu0 0.0
    %6705 = vmatprep.subr.mxu0 0.0
    %6706 = vmatpush1.msra.mxu0 0.0
    %6707 = vmatprep.subr.mxu0 0.0
    %6708 = vmatpush1.msra.mxu0 0.0
    %6709 = vmatprep.subr.mxu0 0.0
    %6710 = vmatpush1.msra.mxu0 %v301
    %6711 = vmatprep.subr.mxu0 0.0
    %6712 = vmatpush1.msra.mxu0 %v300
    %6713 = vmatprep.subr.mxu0 0.0
    %6714 = vmatpush1.msra.mxu0 %v299
    %6715 = vmatprep.subr.mxu0 0.0
    %6716 = vmatpush1.msra.mxu0 %v298
    %6717 = vmatprep.subr.mxu0 0.0
    %6718 = vmatpush2.msra.mxu0 0.0
    %6719 = vmatprep.subr.mxu0 0.0
    %6720 = vmatpush2.msra.mxu0 0.0
    %6721 = vmatprep.subr.mxu0 0.0
    %6722 = vmatpush2.msra.mxu0 0.0
    %6723 = vmatprep.subr.mxu0 0.0
    %6724 = vmatpush2.msra.mxu0 0.0
    %6725 = vmatprep.subr.mxu0 0.0
    %6726 = vmatpush2.msra.mxu0 0.0
    %6727 = vmatprep.subr.mxu0 0.0
    %6728 = vmatpush2.msra.mxu0 0.0
    %6729 = vmatprep.subr.mxu0 0.0
    %6730 = vmatpush2.msra.mxu0 0.0
    %6731 = vmatprep.subr.mxu0 0.0
    %6732 = vmatpush2.msra.mxu0 0.0
    %6733 = vmatprep.subr.mxu0 0.0
    %6734 = vmatpush2.msra.mxu0 0.0
    %6735 = vmatprep.subr.mxu0 0.0
    %6736 = vmatpush2.msra.mxu0 0.0
    %6737 = vmatprep.subr.mxu0 0.0
    %6738 = vmatpush2.msra.mxu0 0.0
    %6739 = vmatprep.subr.mxu0 0.0
    %6740 = vmatpush2.msra.mxu0 0.0
    %6741 = vmatprep.subr.mxu0 0.0
    %6742 = vmatpush2.msra.mxu0 0.0
    %6743 = vmatprep.subr.mxu0 0.0
    %6744 = vmatpush2.msra.mxu0 0.0
    %6745 = vmatprep.subr.mxu0 0.0
    %6746 = vmatpush2.msra.mxu0 0.0
    %6747 = vmatprep.subr.mxu0 0.0
    %6748 = vmatpush2.msra.mxu0 0.0
    %6749 = vmatprep.mubr.f32.mxu0 0.0
    %6750 = vmatmul.mubr.f32.gmra.mxu0 %v6683
    %v6751 = vpop.f32.mrf.mxu0
    %v6752 = vadd.f32 0.0, %v6751
    %v6753 = vpop.f32.mrf.mxu0
    %6754 = vdwg.mxu0
    %v6755 = vsel %vm370, %v6559, 0
    %6757 = vmatprep.subr.mxu0 0.0
    %6758 = vmatpush1.msra.mxu0 0.0
    %6759 = vmatprep.subr.mxu0 0.0
    %6760 = vmatpush1.msra.mxu0 0.0
    %6761 = vmatprep.subr.mxu0 0.0
    %6762 = vmatpush1.msra.mxu0 0.0
    %6763 = vmatprep.subr.mxu0 0.0
    %6764 = vmatpush1.msra.mxu0 0.0
    %6765 = vmatprep.subr.mxu0 0.0
    %6766 = vmatpush1.msra.mxu0 0.0
    %6767 = vmatprep.subr.mxu0 0.0
    %6768 = vmatpush1.msra.mxu0 0.0
    %6769 = vmatprep.subr.mxu0 0.0
    %6770 = vmatpush1.msra.mxu0 0.0
    %6771 = vmatprep.subr.mxu0 0.0
    %6772 = vmatpush1.msra.mxu0 0.0
    %6773 = vmatprep.subr.mxu0 0.0
    %6774 = vmatpush1.msra.mxu0 0.0
    %6775 = vmatprep.subr.mxu0 0.0
    %6776 = vmatpush1.msra.mxu0 0.0
    %6777 = vmatprep.subr.mxu0 0.0
    %6778 = vmatpush1.msra.mxu0 0.0
    %6779 = vmatprep.subr.mxu0 0.0
    %6780 = vmatpush1.msra.mxu0 0.0
    %6781 = vmatprep.subr.mxu0 0.0
    %6782 = vmatpush1.msra.mxu0 %v297
    %6783 = vmatprep.subr.mxu0 0.0
    %6784 = vmatpush1.msra.mxu0 %v296
    %6785 = vmatprep.subr.mxu0 0.0
    %6786 = vmatpush1.msra.mxu0 %v295
    %6787 = vmatprep.subr.mxu0 0.0
    %6788 = vmatpush1.msra.mxu0 %v294
    %6789 = vmatprep.subr.mxu0 0.0
    %6790 = vmatpush2.msra.mxu0 0.0
    %6791 = vmatprep.subr.mxu0 0.0
    %6792 = vmatpush2.msra.mxu0 0.0
    %6793 = vmatprep.subr.mxu0 0.0
    %6794 = vmatpush2.msra.mxu0 0.0
    %6795 = vmatprep.subr.mxu0 0.0
    %6796 = vmatpush2.msra.mxu0 0.0
    %6797 = vmatprep.subr.mxu0 0.0
    %6798 = vmatpush2.msra.mxu0 0.0
    %6799 = vmatprep.subr.mxu0 0.0
    %6800 = vmatpush2.msra.mxu0 0.0
    %6801 = vmatprep.subr.mxu0 0.0
    %6802 = vmatpush2.msra.mxu0 0.0
    %6803 = vmatprep.subr.mxu0 0.0
    %6804 = vmatpush2.msra.mxu0 0.0
    %6805 = vmatprep.subr.mxu0 0.0
    %6806 = vmatpush2.msra.mxu0 0.0
    %6807 = vmatprep.subr.mxu0 0.0
    %6808 = vmatpush2.msra.mxu0 0.0
    %6809 = vmatprep.subr.mxu0 0.0
    %6810 = vmatpush2.msra.mxu0 0.0
    %6811 = vmatprep.subr.mxu0 0.0
    %6812 = vmatpush2.msra.mxu0 0.0
    %6813 = vmatprep.subr.mxu0 0.0
    %6814 = vmatpush2.msra.mxu0 0.0
    %6815 = vmatprep.subr.mxu0 0.0
    %6816 = vmatpush2.msra.mxu0 0.0
    %6817 = vmatprep.subr.mxu0 0.0
    %6818 = vmatpush2.msra.mxu0 0.0
    %6819 = vmatprep.subr.mxu0 0.0
    %6820 = vmatpush2.msra.mxu0 0.0
    %6821 = vmatprep.mubr.f32.mxu0 0.0
    %6822 = vmatmul.mubr.f32.gmra.mxu0 %v6755
    %v6823 = vpop.f32.mrf.mxu0
    %v6824 = vadd.f32 %v6752, %v6823
    %v6825 = vpop.f32.mrf.mxu0
    %6826 = vdwg.mxu0
    %v6827 = vadd.f32 %v6824, %v356
    %v6830 = vunpack.c.l.s4 1966171168
    %v6831 = vunpack.c.0.s8 %v6830
    %v6832 = vlaneseq
    %v6833 = vshrl.u32 %v6832, 7
    %v6834 = vsub.s32 %v6831, %v6833
    %v6835 = vrot.slane %v6827, %v6834
    %v6836 = vcombine.high %v6835, %v6835
    %v6838 = vunpack.c.l.s4 1966171168
    %v6839 = vunpack.c.0.s8 %v6838
    %v6840 = vlaneseq
    %v6841 = vshrl.u32 %v6840, 7
    %v6842 = vsub.s32 %v6839, %v6841
    %v6843 = vrot.slane %v6835, %v6842
    %v6845 = vunpack.c.l.s4 1966171168
    %v6846 = vunpack.c.0.s8 %v6845
    %v6847 = vlaneseq
    %v6848 = vshrl.u32 %v6847, 7
    %v6849 = vsub.s32 %v6846, %v6848
    %v6850 = vrot.slane %v6836, %v6849
    %6853 = vst.msk [vmem:[%s24 + $0x5] sm:$0x1] %vm2792, %v6843
    %6854 = vst.msk [vmem:[%s24 + $0xd] sm:$0x1] %vm2792, %v6850
    // Predicated region
    $region162: #{tpu_custom_call.1} parent=1 // pred_check
      _
    $region163: #{tpu_custom_call.1} parent=1 // pred_check_branch
      %6856 = sbr.rel (0) target = $region165
    $region164: #{tpu_custom_call.1} parent=1 // pred_region
      _
    $region165: #{tpu_custom_call.1} parent=1 // pred_fallthru
      _
    // Predicated region
    $region166: #{tpu_custom_call.1} parent=1 // pred_check
      _
    $region167: #{tpu_custom_call.1} parent=1 // pred_check_branch
      %6858 = sbr.rel (0) target = $region169
    $region168: #{tpu_custom_call.1} parent=1 // pred_region
      _
    $region169: #{tpu_custom_call.1} parent=1 // pred_fallthru
      _
    %6859 = vsyncpa [#allocation3], 1
    %6860 = vsyncpa [#allocation5], 1
    %6861 = vsyncpa [#allocation8], 1
    %6862 = vsyncpa [#allocation11], 1
    %6863 = vsyncpa [#allocation14], 1
    %6864 = vsyncpa [#allocation17], 1
    %6865 = vsyncpa [#allocation20], 1
    %6866 = vsyncpa [#allocation23], 1
    %6867 = vsyncpa [#allocation26], 1

</llo_original>
